<compile_context>
chip_gen: v5e
topology: v5e:2x2
jax: 0.10.0
libtpu: 0.0.40
codegen_flags: <defaults>
</compile_context>

<pallas_src>
import numpy as np

import jax
import jax.numpy as jnp
from jax.experimental import pallas as pl
from jax.experimental.pallas import tpu as pltpu

# ----------------------------- Config --------------------------------------
INPUT_SEQUENCE = 5
FUTURE_STEPS = 4
NUM_LAYERS = 2
HIDDEN_DIM = 8          # must equal input channels (see NOTE above)
CHANNELS = HIDDEN_DIM
DEC_MID = 32            # fixed middle width of the decoder in the module
HEIGHT = 16
WIDTH = 16


# ----------------------------- Pallas kernel --------------------------------

def _fused_forward_kernel(x_ref, wc_ref, bc_ref, wd1_ref, bd1_ref, wd2_ref,
                          bd2_ref, o_ref):
    # x_ref  : (1, T, H, W*C)        per-batch input sequence, lane-dense
    # wc_ref : (L, 3, 2*W*C, W*C)    cell weights: [input-part ; hidden-part]
    # bc_ref : (L, 1, W*C)
    # wd1_ref: (3, W*C, W*MID)       decoder conv1 weights
    # bd1_ref: (1, W*MID)
    # wd2_ref: (3, W*MID, W*C)       decoder conv2 weights
    # bd2_ref: (1, W*C)
    # o_ref  : (1, F, H, W*C)
    H = HEIGHT

    def conv3x3(z, w0, w1, w2, b):
        # z: (H, K) lane-dense activation rows.  w_kh: (K, N) block matrices
        # that already encode the kw taps and the width zero-padding, so one
        # matmul per kernel row; the kh taps become sublane-shifted adds.
        q0 = jnp.dot(z, w0, preferred_element_type=jnp.float32)
        q1 = jnp.dot(z, w1, preferred_element_type=jnp.float32)
        q2 = jnp.dot(z, w2, preferred_element_type=jnp.float32)
        zrow = jnp.zeros((1, q0.shape[-1]), jnp.float32)
        acc = q1
        acc = acc + jnp.concatenate([zrow, q0[:H - 1]], axis=0)   # kh = 0 tap
        acc = acc + jnp.concatenate([q2[1:], zrow], axis=0)       # kh = 2 tap
        return acc + b

    # --- ConvLSTM recurrence: states live in vregs, loops fully unrolled ---
    h = [jnp.zeros((H, WIDTH * HIDDEN_DIM), jnp.float32)
         for _ in range(NUM_LAYERS)]
    for t in range(INPUT_SEQUENCE):
        inp = x_ref[0, t]                                  # (16, 128)
        for l in range(NUM_LAYERS):
            z = jnp.concatenate([inp, h[l]], axis=1)       # (16, 256)
            h[l] = jnp.tanh(conv3x3(z, wc_ref[l, 0], wc_ref[l, 1],
                                    wc_ref[l, 2], bc_ref[l]))
            inp = h[l]

    # --- Decoder rollout: dec1 + ReLU + dec2 fused per future step ---
    cur = h[-1]
    for f in range(FUTURE_STEPS):
        mid = conv3x3(cur, wd1_ref[0], wd1_ref[1], wd1_ref[2], bd1_ref[...])
        mid = jnp.maximum(mid, 0.0)                        # (16, 512)
        cur = conv3x3(mid, wd2_ref[0], wd2_ref[1], wd2_ref[2], bd2_ref[...])
        o_ref[0, f] = cur.astype(o_ref.dtype)


# ------------------------------ Wrapper --------------------------------------

def convlstm_forward(x, params):
    """Mirrors ConvLSTM.forward.  x: (B, T, C, H, W) -> (B, F, C, H, W)."""
    B, T, C, Hh, Ww = x.shape
    assert (T, C, Hh, Ww) == (INPUT_SEQUENCE, CHANNELS, HEIGHT, WIDTH)
    x_ld = jnp.transpose(x, (0, 1, 3, 4, 2)).reshape(B, T, Hh, Ww * C)
    x_ld = x_ld.astype(jnp.float32)

    wc, bc = params["wc"], params["bc"]
    wd1, bd1 = params["wd1"], params["bd1"]
    wd2, bd2 = params["wd2"], params["bd2"]

    def replicated(arr):
        n = arr.ndim
        return pl.BlockSpec(arr.shape, lambda b: (0,) * n)

    out = pl.pallas_call(
        _fused_forward_kernel,
        out_shape=jax.ShapeDtypeStruct((B, FUTURE_STEPS, Hh, Ww * C),
                                       jnp.float32),
        grid=(B,),
        in_specs=[
            pl.BlockSpec((1, T, Hh, Ww * C), lambda b: (b, 0, 0, 0)),
            replicated(wc), replicated(bc),
            replicated(wd1), replicated(bd1),
            replicated(wd2), replicated(bd2),
        ],
        out_specs=pl.BlockSpec((1, FUTURE_STEPS, Hh, Ww * C),
                               lambda b: (b, 0, 0, 0)),
        compiler_params=pltpu.CompilerParams(
            dimension_semantics=("parallel",)),
    )(x_ld, wc, bc, wd1, bd1, wd2, bd2)

    out = out.reshape(B, FUTURE_STEPS, Hh, Ww, C)
    return jnp.transpose(out, (0, 1, 4, 2, 3))             # (B, F, C, H, W)


# --------------------------- Parameter setup --------------------------------

def init_raw_params(key):
    """Deterministic PyTorch-shaped Conv3d parameters."""
    ks = jax.random.split(key, 2 * NUM_LAYERS + 4)

    def rnd(k, shape, scale=0.1):
        return scale * jax.random.normal(k, shape, jnp.float32)

    raw = {"lstm": []}
    for i in range(NUM_LAYERS):
        cin = CHANNELS if i == 0 else HIDDEN_DIM
        w = rnd(ks[2 * i], (HIDDEN_DIM, cin, 3, 3, 3))
        b = rnd(ks[2 * i + 1], (HIDDEN_DIM,), 0.05)
        raw["lstm"].append((w, b))
    raw["dec1"] = (rnd(ks[-4], (DEC_MID, HIDDEN_DIM, 3, 3, 3)),
                   rnd(ks[-3], (DEC_MID,), 0.05))
    raw["dec2"] = (rnd(ks[-2], (CHANNELS, DEC_MID, 3, 3, 3)),
                   rnd(ks[-1], (CHANNELS,), 0.05))
    return raw


def _pack_conv2d_weight(w):
    """(3, 3, Cin, Cout) spatial weight -> (3, W*Cin, W*Cout) block matrices.

    P[kh][xi*Cin + i, x*Cout + o] = w[kh, xi-x+1, i, o] when 0 <= xi-x+1 < 3,
    else 0 -- the kw taps and the width-direction zero padding are folded into
    the weight so one image row-block convolves as a single lane-dense matmul.
    """
    _, _, cin, cout = w.shape
    p = np.zeros((3, WIDTH * cin, WIDTH * cout), np.float32)
    for kh in range(3):
        for kw in range(3):
            for x in range(WIDTH):
                xi = x + kw - 1
                if 0 <= xi < WIDTH:
                    p[kh, xi * cin:(xi + 1) * cin,
                      x * cout:(x + 1) * cout] = w[kh, kw]
    return p


def convert_params(raw):
    """Pack Conv3d parameters into the kernel's lane-dense block weights."""
    wc, bc = [], []
    for w3, b in raw["lstm"]:
        w3, b = np.asarray(w3), np.asarray(b)
        # Conv3d weight (O, I, kd, kh, kw); output depth -1 sees depth taps
        # 0 (layer input) and 1 (hidden state).
        wx = np.transpose(w3[:, :, 0], (2, 3, 1, 0))       # (3, 3, I, O)
        wh = np.transpose(w3[:, :, 1], (2, 3, 1, 0))       # (3, 3, I, O)
        wc.append(np.concatenate([_pack_conv2d_weight(wx),
                                  _pack_conv2d_weight(wh)], axis=1))
        bc.append(np.tile(b, WIDTH)[None, :])
    w1, b1 = (np.asarray(a) for a in raw["dec1"])
    w2, b2 = (np.asarray(a) for a in raw["dec2"])
    # Depth-1 decoder input with padding 1 -> only depth tap 1 contributes.
    return {
        "wc": jnp.asarray(np.stack(wc)),                   # (L, 3, 2*W*C, W*C)
        "bc": jnp.asarray(np.stack(bc)),                   # (L, 1, W*C)
        "wd1": jnp.asarray(_pack_conv2d_weight(
            np.transpose(w1[:, :, 1], (2, 3, 1, 0)))),     # (3, W*C, W*MID)
        "bd1": jnp.asarray(np.tile(b1, WIDTH)[None, :]),   # (1, W*MID)
        "wd2": jnp.asarray(_pack_conv2d_weight(
            np.transpose(w2[:, :, 1], (2, 3, 1, 0)))),     # (3, W*MID, W*C)
        "bd2": jnp.asarray(np.tile(b2, WIDTH)[None, :]),   # (1, W*C)
    }


# -------------------------- Pure-JAX reference -------------------------------

def _conv3d_ref(x, w, b):
    y = jax.lax.conv_general_dilated(
        x, w, window_strides=(1, 1, 1),
        padding=((1, 1), (1, 1), (1, 1)),
        dimension_numbers=("NCDHW", "OIDHW", "NCDHW"))
    return y + b[None, :, None, None, None]


def reference_forward(x, raw):
    B, T, C, H, W = x.shape
    h = [jnp.zeros((B, HIDDEN_DIM, H, W), jnp.float32) for _ in range(NUM_LAYERS)]
    for t in range(T):
        for layer in range(NUM_LAYERS):
            inp = x[:, t] if layer == 0 else h[layer - 1]
            w3, b3 = raw["lstm"][layer]
            z = jnp.concatenate([inp[:, :, None], h[layer][:, :, None]], axis=2)
            h[layer] = jnp.tanh(_conv3d_ref(z, w3, b3)[:, :, -1])
    cur = h[-1]
    w1, b1 = raw["dec1"]
    w2, b2 = raw["dec2"]
    outs = []
    for _ in range(FUTURE_STEPS):
        y = jax.nn.relu(_conv3d_ref(cur[:, :, None], w1, b1))
        cur = _conv3d_ref(y, w2, b2)[:, :, 0]
        outs.append(cur)
    return jnp.stack(outs, axis=1)


# --------------------------------- Main --------------------------------------

if __name__ == "__main__":
    B, T, H, W = 2, INPUT_SEQUENCE, HEIGHT, WIDTH
    key = jax.random.PRNGKey(0)
    k_x, k_p = jax.random.split(key)

    x = jax.random.normal(k_x, (B, T, CHANNELS, H, W), jnp.float32)
    raw = init_raw_params(k_p)
    params = convert_params(raw)

    out = jax.jit(convlstm_forward)(x, params)
    out = jax.block_until_ready(out)
    assert out.shape == (B, FUTURE_STEPS, CHANNELS, H, W), out.shape

    ref = jax.block_until_ready(reference_forward(x, raw))
    err = float(jnp.max(jnp.abs(out - ref)))
    assert err < 1e-3, f"max abs error vs reference: {err}"

    print("KERNEL_OK")
</pallas_src>

<mosaic_0001>
module attributes {stable_mosaic.version = 11 : i64} {
  func.func @_fused_forward_kernel(%arg0: i32, %arg1: memref<1x5x16x128xf32, #tpu.memory_space<vmem>>, %arg2: memref<2x3x256x128xf32, #tpu.memory_space<vmem>>, %arg3: memref<2x1x128xf32, #tpu.memory_space<vmem>>, %arg4: memref<3x128x512xf32, #tpu.memory_space<vmem>>, %arg5: memref<1x512xf32, #tpu.memory_space<vmem>>, %arg6: memref<3x512x128xf32, #tpu.memory_space<vmem>>, %arg7: memref<1x128xf32, #tpu.memory_space<vmem>>, %arg8: memref<1x4x16x128xf32, #tpu.memory_space<vmem>>) attributes {dimension_semantics = [#tpu.dimension_semantics<parallel>], iteration_bounds = array<i64: 2>, scalar_prefetch = 0 : i64, scratch_operands = 0 : i64, tpu.core_type = #tpu.core_type<tc>, window_params = [{transform_indices = @transform_0, window_bounds = array<i64: 1, 5, 16, 128>}, {pipeline_mode = #tpu.pipeline_mode<synchronous>, transform_indices = @transform_1, window_bounds = array<i64: 2, 3, 256, 128>}, {pipeline_mode = #tpu.pipeline_mode<synchronous>, transform_indices = @transform_2, window_bounds = array<i64: 2, 1, 128>}, {pipeline_mode = #tpu.pipeline_mode<synchronous>, transform_indices = @transform_3, window_bounds = array<i64: 3, 128, 512>}, {pipeline_mode = #tpu.pipeline_mode<synchronous>, transform_indices = @transform_4, window_bounds = array<i64: 1, 512>}, {pipeline_mode = #tpu.pipeline_mode<synchronous>, transform_indices = @transform_5, window_bounds = array<i64: 3, 512, 128>}, {pipeline_mode = #tpu.pipeline_mode<synchronous>, transform_indices = @transform_6, window_bounds = array<i64: 1, 128>}, {transform_indices = @transform_7, window_bounds = array<i64: 1, 4, 16, 128>}]} {
    %cst = arith.constant 0.000000e+00 : f32
    %0 = vector.broadcast %cst : f32 to vector<16x128xf32>
    %cst_0 = arith.constant 0.000000e+00 : f32
    %1 = vector.broadcast %cst_0 : f32 to vector<16x128xf32>
    %c0 = arith.constant 0 : index
    %c0_1 = arith.constant 0 : index
    %c0_2 = arith.constant 0 : index
    %c0_3 = arith.constant 0 : index
    %2 = vector.load %arg1[%c0, %c0_1, %c0_2, %c0_3] : memref<1x5x16x128xf32, #tpu.memory_space<vmem>>, vector<1x1x16x128xf32>
    %3 = vector.shape_cast %2 : vector<1x1x16x128xf32> to vector<16x128xf32>
    %4 = tpu.concatenate %3, %0 in 1 : vector<16x128xf32>, vector<16x128xf32> -> vector<16x256xf32>
    %c0_4 = arith.constant 0 : index
    %c0_5 = arith.constant 0 : index
    %c0_6 = arith.constant 0 : index
    %c0_7 = arith.constant 0 : index
    %5 = vector.load %arg2[%c0_4, %c0_5, %c0_6, %c0_7] : memref<2x3x256x128xf32, #tpu.memory_space<vmem>>, vector<1x1x256x128xf32>
    %6 = vector.shape_cast %5 : vector<1x1x256x128xf32> to vector<256x128xf32>
    %c0_8 = arith.constant 0 : index
    %c1 = arith.constant 1 : index
    %c0_9 = arith.constant 0 : index
    %c0_10 = arith.constant 0 : index
    %7 = vector.load %arg2[%c0_8, %c1, %c0_9, %c0_10] : memref<2x3x256x128xf32, #tpu.memory_space<vmem>>, vector<1x1x256x128xf32>
    %8 = vector.shape_cast %7 : vector<1x1x256x128xf32> to vector<256x128xf32>
    %c0_11 = arith.constant 0 : index
    %c2 = arith.constant 2 : index
    %c0_12 = arith.constant 0 : index
    %c0_13 = arith.constant 0 : index
    %9 = vector.load %arg2[%c0_11, %c2, %c0_12, %c0_13] : memref<2x3x256x128xf32, #tpu.memory_space<vmem>>, vector<1x1x256x128xf32>
    %10 = vector.shape_cast %9 : vector<1x1x256x128xf32> to vector<256x128xf32>
    %c0_14 = arith.constant 0 : index
    %c0_15 = arith.constant 0 : index
    %c0_16 = arith.constant 0 : index
    %11 = vector.load %arg3[%c0_14, %c0_15, %c0_16] : memref<2x1x128xf32, #tpu.memory_space<vmem>>, vector<1x1x128xf32>
    %12 = vector.shape_cast %11 : vector<1x1x128xf32> to vector<1x128xf32>
    %cst_17 = arith.constant dense<0.000000e+00> : vector<16x128xf32>
    %13 = tpu.matmul %4, %6, %cst_17 {dimension_numbers = #tpu.dot_dimension_numbers<[1], [0], [0], [1], [0, 0, 1, 1], [], []>} : vector<16x256xf32>, vector<256x128xf32>, vector<16x128xf32> -> vector<16x128xf32>
    %cst_18 = arith.constant dense<0.000000e+00> : vector<16x128xf32>
    %14 = tpu.matmul %4, %8, %cst_18 {dimension_numbers = #tpu.dot_dimension_numbers<[1], [0], [0], [1], [0, 0, 1, 1], [], []>} : vector<16x256xf32>, vector<256x128xf32>, vector<16x128xf32> -> vector<16x128xf32>
    %cst_19 = arith.constant dense<0.000000e+00> : vector<16x128xf32>
    %15 = tpu.matmul %4, %10, %cst_19 {dimension_numbers = #tpu.dot_dimension_numbers<[1], [0], [0], [1], [0, 0, 1, 1], [], []>} : vector<16x256xf32>, vector<256x128xf32>, vector<16x128xf32> -> vector<16x128xf32>
    %cst_20 = arith.constant 0.000000e+00 : f32
    %16 = vector.broadcast %cst_20 : f32 to vector<1x128xf32>
    %17 = vector.extract_strided_slice %13 {offsets = [0, 0], sizes = [15, 128], strides = [1, 1]} : vector<16x128xf32> to vector<15x128xf32>
    %18 = tpu.concatenate %16, %17 in 0 : vector<1x128xf32>, vector<15x128xf32> -> vector<16x128xf32>
    %19 = arith.addf %14, %18 : vector<16x128xf32>
    %20 = vector.extract_strided_slice %15 {offsets = [1, 0], sizes = [15, 128], strides = [1, 1]} : vector<16x128xf32> to vector<15x128xf32>
    %21 = tpu.concatenate %20, %16 in 0 : vector<15x128xf32>, vector<1x128xf32> -> vector<16x128xf32>
    %22 = arith.addf %19, %21 : vector<16x128xf32>
    %23 = vector.broadcast %12 : vector<1x128xf32> to vector<16x128xf32>
    %24 = arith.addf %22, %23 : vector<16x128xf32>
    %25 = math.tanh %24 : vector<16x128xf32>
    %26 = tpu.concatenate %25, %1 in 1 : vector<16x128xf32>, vector<16x128xf32> -> vector<16x256xf32>
    %c1_21 = arith.constant 1 : index
    %c0_22 = arith.constant 0 : index
    %c0_23 = arith.constant 0 : index
    %c0_24 = arith.constant 0 : index
    %27 = vector.load %arg2[%c1_21, %c0_22, %c0_23, %c0_24] : memref<2x3x256x128xf32, #tpu.memory_space<vmem>>, vector<1x1x256x128xf32>
    %28 = vector.shape_cast %27 : vector<1x1x256x128xf32> to vector<256x128xf32>
    %c1_25 = arith.constant 1 : index
    %c1_26 = arith.constant 1 : index
    %c0_27 = arith.constant 0 : index
    %c0_28 = arith.constant 0 : index
    %29 = vector.load %arg2[%c1_25, %c1_26, %c0_27, %c0_28] : memref<2x3x256x128xf32, #tpu.memory_space<vmem>>, vector<1x1x256x128xf32>
    %30 = vector.shape_cast %29 : vector<1x1x256x128xf32> to vector<256x128xf32>
    %c1_29 = arith.constant 1 : index
    %c2_30 = arith.constant 2 : index
    %c0_31 = arith.constant 0 : index
    %c0_32 = arith.constant 0 : index
    %31 = vector.load %arg2[%c1_29, %c2_30, %c0_31, %c0_32] : memref<2x3x256x128xf32, #tpu.memory_space<vmem>>, vector<1x1x256x128xf32>
    %32 = vector.shape_cast %31 : vector<1x1x256x128xf32> to vector<256x128xf32>
    %c1_33 = arith.constant 1 : index
    %c0_34 = arith.constant 0 : index
    %c0_35 = arith.constant 0 : index
    %33 = vector.load %arg3[%c1_33, %c0_34, %c0_35] : memref<2x1x128xf32, #tpu.memory_space<vmem>>, vector<1x1x128xf32>
    %34 = vector.shape_cast %33 : vector<1x1x128xf32> to vector<1x128xf32>
    %cst_36 = arith.constant dense<0.000000e+00> : vector<16x128xf32>
    %35 = tpu.matmul %26, %28, %cst_36 {dimension_numbers = #tpu.dot_dimension_numbers<[1], [0], [0], [1], [0, 0, 1, 1], [], []>} : vector<16x256xf32>, vector<256x128xf32>, vector<16x128xf32> -> vector<16x128xf32>
    %cst_37 = arith.constant dense<0.000000e+00> : vector<16x128xf32>
    %36 = tpu.matmul %26, %30, %cst_37 {dimension_numbers = #tpu.dot_dimension_numbers<[1], [0], [0], [1], [0, 0, 1, 1], [], []>} : vector<16x256xf32>, vector<256x128xf32>, vector<16x128xf32> -> vector<16x128xf32>
    %cst_38 = arith.constant dense<0.000000e+00> : vector<16x128xf32>
    %37 = tpu.matmul %26, %32, %cst_38 {dimension_numbers = #tpu.dot_dimension_numbers<[1], [0], [0], [1], [0, 0, 1, 1], [], []>} : vector<16x256xf32>, vector<256x128xf32>, vector<16x128xf32> -> vector<16x128xf32>
    %cst_39 = arith.constant 0.000000e+00 : f32
    %38 = vector.broadcast %cst_39 : f32 to vector<1x128xf32>
    %39 = vector.extract_strided_slice %35 {offsets = [0, 0], sizes = [15, 128], strides = [1, 1]} : vector<16x128xf32> to vector<15x128xf32>
    %40 = tpu.concatenate %38, %39 in 0 : vector<1x128xf32>, vector<15x128xf32> -> vector<16x128xf32>
    %41 = arith.addf %36, %40 : vector<16x128xf32>
    %42 = vector.extract_strided_slice %37 {offsets = [1, 0], sizes = [15, 128], strides = [1, 1]} : vector<16x128xf32> to vector<15x128xf32>
    %43 = tpu.concatenate %42, %38 in 0 : vector<15x128xf32>, vector<1x128xf32> -> vector<16x128xf32>
    %44 = arith.addf %41, %43 : vector<16x128xf32>
    %45 = vector.broadcast %34 : vector<1x128xf32> to vector<16x128xf32>
    %46 = arith.addf %44, %45 : vector<16x128xf32>
    %47 = math.tanh %46 : vector<16x128xf32>
    %c0_40 = arith.constant 0 : index
    %c1_41 = arith.constant 1 : index
    %c0_42 = arith.constant 0 : index
    %c0_43 = arith.constant 0 : index
    %48 = vector.load %arg1[%c0_40, %c1_41, %c0_42, %c0_43] : memref<1x5x16x128xf32, #tpu.memory_space<vmem>>, vector<1x1x16x128xf32>
    %49 = vector.shape_cast %48 : vector<1x1x16x128xf32> to vector<16x128xf32>
    %50 = tpu.concatenate %49, %25 in 1 : vector<16x128xf32>, vector<16x128xf32> -> vector<16x256xf32>
    %c0_44 = arith.constant 0 : index
    %c0_45 = arith.constant 0 : index
    %c0_46 = arith.constant 0 : index
    %c0_47 = arith.constant 0 : index
    %51 = vector.load %arg2[%c0_44, %c0_45, %c0_46, %c0_47] : memref<2x3x256x128xf32, #tpu.memory_space<vmem>>, vector<1x1x256x128xf32>
    %52 = vector.shape_cast %51 : vector<1x1x256x128xf32> to vector<256x128xf32>
    %c0_48 = arith.constant 0 : index
    %c1_49 = arith.constant 1 : index
    %c0_50 = arith.constant 0 : index
    %c0_51 = arith.constant 0 : index
    %53 = vector.load %arg2[%c0_48, %c1_49, %c0_50, %c0_51] : memref<2x3x256x128xf32, #tpu.memory_space<vmem>>, vector<1x1x256x128xf32>
    %54 = vector.shape_cast %53 : vector<1x1x256x128xf32> to vector<256x128xf32>
    %c0_52 = arith.constant 0 : index
    %c2_53 = arith.constant 2 : index
    %c0_54 = arith.constant 0 : index
    %c0_55 = arith.constant 0 : index
    %55 = vector.load %arg2[%c0_52, %c2_53, %c0_54, %c0_55] : memref<2x3x256x128xf32, #tpu.memory_space<vmem>>, vector<1x1x256x128xf32>
    %56 = vector.shape_cast %55 : vector<1x1x256x128xf32> to vector<256x128xf32>
    %c0_56 = arith.constant 0 : index
    %c0_57 = arith.constant 0 : index
    %c0_58 = arith.constant 0 : index
    %57 = vector.load %arg3[%c0_56, %c0_57, %c0_58] : memref<2x1x128xf32, #tpu.memory_space<vmem>>, vector<1x1x128xf32>
    %58 = vector.shape_cast %57 : vector<1x1x128xf32> to vector<1x128xf32>
    %cst_59 = arith.constant dense<0.000000e+00> : vector<16x128xf32>
    %59 = tpu.matmul %50, %52, %cst_59 {dimension_numbers = #tpu.dot_dimension_numbers<[1], [0], [0], [1], [0, 0, 1, 1], [], []>} : vector<16x256xf32>, vector<256x128xf32>, vector<16x128xf32> -> vector<16x128xf32>
    %cst_60 = arith.constant dense<0.000000e+00> : vector<16x128xf32>
    %60 = tpu.matmul %50, %54, %cst_60 {dimension_numbers = #tpu.dot_dimension_numbers<[1], [0], [0], [1], [0, 0, 1, 1], [], []>} : vector<16x256xf32>, vector<256x128xf32>, vector<16x128xf32> -> vector<16x128xf32>
    %cst_61 = arith.constant dense<0.000000e+00> : vector<16x128xf32>
    %61 = tpu.matmul %50, %56, %cst_61 {dimension_numbers = #tpu.dot_dimension_numbers<[1], [0], [0], [1], [0, 0, 1, 1], [], []>} : vector<16x256xf32>, vector<256x128xf32>, vector<16x128xf32> -> vector<16x128xf32>
    %cst_62 = arith.constant 0.000000e+00 : f32
    %62 = vector.broadcast %cst_62 : f32 to vector<1x128xf32>
    %63 = vector.extract_strided_slice %59 {offsets = [0, 0], sizes = [15, 128], strides = [1, 1]} : vector<16x128xf32> to vector<15x128xf32>
    %64 = tpu.concatenate %62, %63 in 0 : vector<1x128xf32>, vector<15x128xf32> -> vector<16x128xf32>
    %65 = arith.addf %60, %64 : vector<16x128xf32>
    %66 = vector.extract_strided_slice %61 {offsets = [1, 0], sizes = [15, 128], strides = [1, 1]} : vector<16x128xf32> to vector<15x128xf32>
    %67 = tpu.concatenate %66, %62 in 0 : vector<15x128xf32>, vector<1x128xf32> -> vector<16x128xf32>
    %68 = arith.addf %65, %67 : vector<16x128xf32>
    %69 = vector.broadcast %58 : vector<1x128xf32> to vector<16x128xf32>
    %70 = arith.addf %68, %69 : vector<16x128xf32>
    %71 = math.tanh %70 : vector<16x128xf32>
    %72 = tpu.concatenate %71, %47 in 1 : vector<16x128xf32>, vector<16x128xf32> -> vector<16x256xf32>
    %c1_63 = arith.constant 1 : index
    %c0_64 = arith.constant 0 : index
    %c0_65 = arith.constant 0 : index
    %c0_66 = arith.constant 0 : index
    %73 = vector.load %arg2[%c1_63, %c0_64, %c0_65, %c0_66] : memref<2x3x256x128xf32, #tpu.memory_space<vmem>>, vector<1x1x256x128xf32>
    %74 = vector.shape_cast %73 : vector<1x1x256x128xf32> to vector<256x128xf32>
    %c1_67 = arith.constant 1 : index
    %c1_68 = arith.constant 1 : index
    %c0_69 = arith.constant 0 : index
    %c0_70 = arith.constant 0 : index
    %75 = vector.load %arg2[%c1_67, %c1_68, %c0_69, %c0_70] : memref<2x3x256x128xf32, #tpu.memory_space<vmem>>, vector<1x1x256x128xf32>
    %76 = vector.shape_cast %75 : vector<1x1x256x128xf32> to vector<256x128xf32>
    %c1_71 = arith.constant 1 : index
    %c2_72 = arith.constant 2 : index
    %c0_73 = arith.constant 0 : index
    %c0_74 = arith.constant 0 : index
    %77 = vector.load %arg2[%c1_71, %c2_72, %c0_73, %c0_74] : memref<2x3x256x128xf32, #tpu.memory_space<vmem>>, vector<1x1x256x128xf32>
    %78 = vector.shape_cast %77 : vector<1x1x256x128xf32> to vector<256x128xf32>
    %c1_75 = arith.constant 1 : index
    %c0_76 = arith.constant 0 : index
    %c0_77 = arith.constant 0 : index
    %79 = vector.load %arg3[%c1_75, %c0_76, %c0_77] : memref<2x1x128xf32, #tpu.memory_space<vmem>>, vector<1x1x128xf32>
    %80 = vector.shape_cast %79 : vector<1x1x128xf32> to vector<1x128xf32>
    %cst_78 = arith.constant dense<0.000000e+00> : vector<16x128xf32>
    %81 = tpu.matmul %72, %74, %cst_78 {dimension_numbers = #tpu.dot_dimension_numbers<[1], [0], [0], [1], [0, 0, 1, 1], [], []>} : vector<16x256xf32>, vector<256x128xf32>, vector<16x128xf32> -> vector<16x128xf32>
    %cst_79 = arith.constant dense<0.000000e+00> : vector<16x128xf32>
    %82 = tpu.matmul %72, %76, %cst_79 {dimension_numbers = #tpu.dot_dimension_numbers<[1], [0], [0], [1], [0, 0, 1, 1], [], []>} : vector<16x256xf32>, vector<256x128xf32>, vector<16x128xf32> -> vector<16x128xf32>
    %cst_80 = arith.constant dense<0.000000e+00> : vector<16x128xf32>
    %83 = tpu.matmul %72, %78, %cst_80 {dimension_numbers = #tpu.dot_dimension_numbers<[1], [0], [0], [1], [0, 0, 1, 1], [], []>} : vector<16x256xf32>, vector<256x128xf32>, vector<16x128xf32> -> vector<16x128xf32>
    %cst_81 = arith.constant 0.000000e+00 : f32
    %84 = vector.broadcast %cst_81 : f32 to vector<1x128xf32>
    %85 = vector.extract_strided_slice %81 {offsets = [0, 0], sizes = [15, 128], strides = [1, 1]} : vector<16x128xf32> to vector<15x128xf32>
    %86 = tpu.concatenate %84, %85 in 0 : vector<1x128xf32>, vector<15x128xf32> -> vector<16x128xf32>
    %87 = arith.addf %82, %86 : vector<16x128xf32>
    %88 = vector.extract_strided_slice %83 {offsets = [1, 0], sizes = [15, 128], strides = [1, 1]} : vector<16x128xf32> to vector<15x128xf32>
    %89 = tpu.concatenate %88, %84 in 0 : vector<15x128xf32>, vector<1x128xf32> -> vector<16x128xf32>
    %90 = arith.addf %87, %89 : vector<16x128xf32>
    %91 = vector.broadcast %80 : vector<1x128xf32> to vector<16x128xf32>
    %92 = arith.addf %90, %91 : vector<16x128xf32>
    %93 = math.tanh %92 : vector<16x128xf32>
    %c0_82 = arith.constant 0 : index
    %c2_83 = arith.constant 2 : index
    %c0_84 = arith.constant 0 : index
    %c0_85 = arith.constant 0 : index
    %94 = vector.load %arg1[%c0_82, %c2_83, %c0_84, %c0_85] : memref<1x5x16x128xf32, #tpu.memory_space<vmem>>, vector<1x1x16x128xf32>
    %95 = vector.shape_cast %94 : vector<1x1x16x128xf32> to vector<16x128xf32>
    %96 = tpu.concatenate %95, %71 in 1 : vector<16x128xf32>, vector<16x128xf32> -> vector<16x256xf32>
    %c0_86 = arith.constant 0 : index
    %c0_87 = arith.constant 0 : index
    %c0_88 = arith.constant 0 : index
    %c0_89 = arith.constant 0 : index
    %97 = vector.load %arg2[%c0_86, %c0_87, %c0_88, %c0_89] : memref<2x3x256x128xf32, #tpu.memory_space<vmem>>, vector<1x1x256x128xf32>
    %98 = vector.shape_cast %97 : vector<1x1x256x128xf32> to vector<256x128xf32>
    %c0_90 = arith.constant 0 : index
    %c1_91 = arith.constant 1 : index
    %c0_92 = arith.constant 0 : index
    %c0_93 = arith.constant 0 : index
    %99 = vector.load %arg2[%c0_90, %c1_91, %c0_92, %c0_93] : memref<2x3x256x128xf32, #tpu.memory_space<vmem>>, vector<1x1x256x128xf32>
    %100 = vector.shape_cast %99 : vector<1x1x256x128xf32> to vector<256x128xf32>
    %c0_94 = arith.constant 0 : index
    %c2_95 = arith.constant 2 : index
    %c0_96 = arith.constant 0 : index
    %c0_97 = arith.constant 0 : index
    %101 = vector.load %arg2[%c0_94, %c2_95, %c0_96, %c0_97] : memref<2x3x256x128xf32, #tpu.memory_space<vmem>>, vector<1x1x256x128xf32>
    %102 = vector.shape_cast %101 : vector<1x1x256x128xf32> to vector<256x128xf32>
    %c0_98 = arith.constant 0 : index
    %c0_99 = arith.constant 0 : index
    %c0_100 = arith.constant 0 : index
    %103 = vector.load %arg3[%c0_98, %c0_99, %c0_100] : memref<2x1x128xf32, #tpu.memory_space<vmem>>, vector<1x1x128xf32>
    %104 = vector.shape_cast %103 : vector<1x1x128xf32> to vector<1x128xf32>
    %cst_101 = arith.constant dense<0.000000e+00> : vector<16x128xf32>
    %105 = tpu.matmul %96, %98, %cst_101 {dimension_numbers = #tpu.dot_dimension_numbers<[1], [0], [0], [1], [0, 0, 1, 1], [], []>} : vector<16x256xf32>, vector<256x128xf32>, vector<16x128xf32> -> vector<16x128xf32>
    %cst_102 = arith.constant dense<0.000000e+00> : vector<16x128xf32>
    %106 = tpu.matmul %96, %100, %cst_102 {dimension_numbers = #tpu.dot_dimension_numbers<[1], [0], [0], [1], [0, 0, 1, 1], [], []>} : vector<16x256xf32>, vector<256x128xf32>, vector<16x128xf32> -> vector<16x128xf32>
    %cst_103 = arith.constant dense<0.000000e+00> : vector<16x128xf32>
    %107 = tpu.matmul %96, %102, %cst_103 {dimension_numbers = #tpu.dot_dimension_numbers<[1], [0], [0], [1], [0, 0, 1, 1], [], []>} : vector<16x256xf32>, vector<256x128xf32>, vector<16x128xf32> -> vector<16x128xf32>
    %cst_104 = arith.constant 0.000000e+00 : f32
    %108 = vector.broadcast %cst_104 : f32 to vector<1x128xf32>
    %109 = vector.extract_strided_slice %105 {offsets = [0, 0], sizes = [15, 128], strides = [1, 1]} : vector<16x128xf32> to vector<15x128xf32>
    %110 = tpu.concatenate %108, %109 in 0 : vector<1x128xf32>, vector<15x128xf32> -> vector<16x128xf32>
    %111 = arith.addf %106, %110 : vector<16x128xf32>
    %112 = vector.extract_strided_slice %107 {offsets = [1, 0], sizes = [15, 128], strides = [1, 1]} : vector<16x128xf32> to vector<15x128xf32>
    %113 = tpu.concatenate %112, %108 in 0 : vector<15x128xf32>, vector<1x128xf32> -> vector<16x128xf32>
    %114 = arith.addf %111, %113 : vector<16x128xf32>
    %115 = vector.broadcast %104 : vector<1x128xf32> to vector<16x128xf32>
    %116 = arith.addf %114, %115 : vector<16x128xf32>
    %117 = math.tanh %116 : vector<16x128xf32>
    %118 = tpu.concatenate %117, %93 in 1 : vector<16x128xf32>, vector<16x128xf32> -> vector<16x256xf32>
    %c1_105 = arith.constant 1 : index
    %c0_106 = arith.constant 0 : index
    %c0_107 = arith.constant 0 : index
    %c0_108 = arith.constant 0 : index
    %119 = vector.load %arg2[%c1_105, %c0_106, %c0_107, %c0_108] : memref<2x3x256x128xf32, #tpu.memory_space<vmem>>, vector<1x1x256x128xf32>
    %120 = vector.shape_cast %119 : vector<1x1x256x128xf32> to vector<256x128xf32>
    %c1_109 = arith.constant 1 : index
    %c1_110 = arith.constant 1 : index
    %c0_111 = arith.constant 0 : index
    %c0_112 = arith.constant 0 : index
    %121 = vector.load %arg2[%c1_109, %c1_110, %c0_111, %c0_112] : memref<2x3x256x128xf32, #tpu.memory_space<vmem>>, vector<1x1x256x128xf32>
    %122 = vector.shape_cast %121 : vector<1x1x256x128xf32> to vector<256x128xf32>
    %c1_113 = arith.constant 1 : index
    %c2_114 = arith.constant 2 : index
    %c0_115 = arith.constant 0 : index
    %c0_116 = arith.constant 0 : index
    %123 = vector.load %arg2[%c1_113, %c2_114, %c0_115, %c0_116] : memref<2x3x256x128xf32, #tpu.memory_space<vmem>>, vector<1x1x256x128xf32>
    %124 = vector.shape_cast %123 : vector<1x1x256x128xf32> to vector<256x128xf32>
    %c1_117 = arith.constant 1 : index
    %c0_118 = arith.constant 0 : index
    %c0_119 = arith.constant 0 : index
    %125 = vector.load %arg3[%c1_117, %c0_118, %c0_119] : memref<2x1x128xf32, #tpu.memory_space<vmem>>, vector<1x1x128xf32>
    %126 = vector.shape_cast %125 : vector<1x1x128xf32> to vector<1x128xf32>
    %cst_120 = arith.constant dense<0.000000e+00> : vector<16x128xf32>
    %127 = tpu.matmul %118, %120, %cst_120 {dimension_numbers = #tpu.dot_dimension_numbers<[1], [0], [0], [1], [0, 0, 1, 1], [], []>} : vector<16x256xf32>, vector<256x128xf32>, vector<16x128xf32> -> vector<16x128xf32>
    %cst_121 = arith.constant dense<0.000000e+00> : vector<16x128xf32>
    %128 = tpu.matmul %118, %122, %cst_121 {dimension_numbers = #tpu.dot_dimension_numbers<[1], [0], [0], [1], [0, 0, 1, 1], [], []>} : vector<16x256xf32>, vector<256x128xf32>, vector<16x128xf32> -> vector<16x128xf32>
    %cst_122 = arith.constant dense<0.000000e+00> : vector<16x128xf32>
    %129 = tpu.matmul %118, %124, %cst_122 {dimension_numbers = #tpu.dot_dimension_numbers<[1], [0], [0], [1], [0, 0, 1, 1], [], []>} : vector<16x256xf32>, vector<256x128xf32>, vector<16x128xf32> -> vector<16x128xf32>
    %cst_123 = arith.constant 0.000000e+00 : f32
    %130 = vector.broadcast %cst_123 : f32 to vector<1x128xf32>
    %131 = vector.extract_strided_slice %127 {offsets = [0, 0], sizes = [15, 128], strides = [1, 1]} : vector<16x128xf32> to vector<15x128xf32>
    %132 = tpu.concatenate %130, %131 in 0 : vector<1x128xf32>, vector<15x128xf32> -> vector<16x128xf32>
    %133 = arith.addf %128, %132 : vector<16x128xf32>
    %134 = vector.extract_strided_slice %129 {offsets = [1, 0], sizes = [15, 128], strides = [1, 1]} : vector<16x128xf32> to vector<15x128xf32>
    %135 = tpu.concatenate %134, %130 in 0 : vector<15x128xf32>, vector<1x128xf32> -> vector<16x128xf32>
    %136 = arith.addf %133, %135 : vector<16x128xf32>
    %137 = vector.broadcast %126 : vector<1x128xf32> to vector<16x128xf32>
    %138 = arith.addf %136, %137 : vector<16x128xf32>
    %139 = math.tanh %138 : vector<16x128xf32>
    %c0_124 = arith.constant 0 : index
    %c3 = arith.constant 3 : index
    %c0_125 = arith.constant 0 : index
    %c0_126 = arith.constant 0 : index
    %140 = vector.load %arg1[%c0_124, %c3, %c0_125, %c0_126] : memref<1x5x16x128xf32, #tpu.memory_space<vmem>>, vector<1x1x16x128xf32>
    %141 = vector.shape_cast %140 : vector<1x1x16x128xf32> to vector<16x128xf32>
    %142 = tpu.concatenate %141, %117 in 1 : vector<16x128xf32>, vector<16x128xf32> -> vector<16x256xf32>
    %c0_127 = arith.constant 0 : index
    %c0_128 = arith.constant 0 : index
    %c0_129 = arith.constant 0 : index
    %c0_130 = arith.constant 0 : index
    %143 = vector.load %arg2[%c0_127, %c0_128, %c0_129, %c0_130] : memref<2x3x256x128xf32, #tpu.memory_space<vmem>>, vector<1x1x256x128xf32>
    %144 = vector.shape_cast %143 : vector<1x1x256x128xf32> to vector<256x128xf32>
    %c0_131 = arith.constant 0 : index
    %c1_132 = arith.constant 1 : index
    %c0_133 = arith.constant 0 : index
    %c0_134 = arith.constant 0 : index
    %145 = vector.load %arg2[%c0_131, %c1_132, %c0_133, %c0_134] : memref<2x3x256x128xf32, #tpu.memory_space<vmem>>, vector<1x1x256x128xf32>
    %146 = vector.shape_cast %145 : vector<1x1x256x128xf32> to vector<256x128xf32>
    %c0_135 = arith.constant 0 : index
    %c2_136 = arith.constant 2 : index
    %c0_137 = arith.constant 0 : index
    %c0_138 = arith.constant 0 : index
    %147 = vector.load %arg2[%c0_135, %c2_136, %c0_137, %c0_138] : memref<2x3x256x128xf32, #tpu.memory_space<vmem>>, vector<1x1x256x128xf32>
    %148 = vector.shape_cast %147 : vector<1x1x256x128xf32> to vector<256x128xf32>
    %c0_139 = arith.constant 0 : index
    %c0_140 = arith.constant 0 : index
    %c0_141 = arith.constant 0 : index
    %149 = vector.load %arg3[%c0_139, %c0_140, %c0_141] : memref<2x1x128xf32, #tpu.memory_space<vmem>>, vector<1x1x128xf32>
    %150 = vector.shape_cast %149 : vector<1x1x128xf32> to vector<1x128xf32>
    %cst_142 = arith.constant dense<0.000000e+00> : vector<16x128xf32>
    %151 = tpu.matmul %142, %144, %cst_142 {dimension_numbers = #tpu.dot_dimension_numbers<[1], [0], [0], [1], [0, 0, 1, 1], [], []>} : vector<16x256xf32>, vector<256x128xf32>, vector<16x128xf32> -> vector<16x128xf32>
    %cst_143 = arith.constant dense<0.000000e+00> : vector<16x128xf32>
    %152 = tpu.matmul %142, %146, %cst_143 {dimension_numbers = #tpu.dot_dimension_numbers<[1], [0], [0], [1], [0, 0, 1, 1], [], []>} : vector<16x256xf32>, vector<256x128xf32>, vector<16x128xf32> -> vector<16x128xf32>
    %cst_144 = arith.constant dense<0.000000e+00> : vector<16x128xf32>
    %153 = tpu.matmul %142, %148, %cst_144 {dimension_numbers = #tpu.dot_dimension_numbers<[1], [0], [0], [1], [0, 0, 1, 1], [], []>} : vector<16x256xf32>, vector<256x128xf32>, vector<16x128xf32> -> vector<16x128xf32>
    %cst_145 = arith.constant 0.000000e+00 : f32
    %154 = vector.broadcast %cst_145 : f32 to vector<1x128xf32>
    %155 = vector.extract_strided_slice %151 {offsets = [0, 0], sizes = [15, 128], strides = [1, 1]} : vector<16x128xf32> to vector<15x128xf32>
    %156 = tpu.concatenate %154, %155 in 0 : vector<1x128xf32>, vector<15x128xf32> -> vector<16x128xf32>
    %157 = arith.addf %152, %156 : vector<16x128xf32>
    %158 = vector.extract_strided_slice %153 {offsets = [1, 0], sizes = [15, 128], strides = [1, 1]} : vector<16x128xf32> to vector<15x128xf32>
    %159 = tpu.concatenate %158, %154 in 0 : vector<15x128xf32>, vector<1x128xf32> -> vector<16x128xf32>
    %160 = arith.addf %157, %159 : vector<16x128xf32>
    %161 = vector.broadcast %150 : vector<1x128xf32> to vector<16x128xf32>
    %162 = arith.addf %160, %161 : vector<16x128xf32>
    %163 = math.tanh %162 : vector<16x128xf32>
    %164 = tpu.concatenate %163, %139 in 1 : vector<16x128xf32>, vector<16x128xf32> -> vector<16x256xf32>
    %c1_146 = arith.constant 1 : index
    %c0_147 = arith.constant 0 : index
    %c0_148 = arith.constant 0 : index
    %c0_149 = arith.constant 0 : index
    %165 = vector.load %arg2[%c1_146, %c0_147, %c0_148, %c0_149] : memref<2x3x256x128xf32, #tpu.memory_space<vmem>>, vector<1x1x256x128xf32>
    %166 = vector.shape_cast %165 : vector<1x1x256x128xf32> to vector<256x128xf32>
    %c1_150 = arith.constant 1 : index
    %c1_151 = arith.constant 1 : index
    %c0_152 = arith.constant 0 : index
    %c0_153 = arith.constant 0 : index
    %167 = vector.load %arg2[%c1_150, %c1_151, %c0_152, %c0_153] : memref<2x3x256x128xf32, #tpu.memory_space<vmem>>, vector<1x1x256x128xf32>
    %168 = vector.shape_cast %167 : vector<1x1x256x128xf32> to vector<256x128xf32>
    %c1_154 = arith.constant 1 : index
    %c2_155 = arith.constant 2 : index
    %c0_156 = arith.constant 0 : index
    %c0_157 = arith.constant 0 : index
    %169 = vector.load %arg2[%c1_154, %c2_155, %c0_156, %c0_157] : memref<2x3x256x128xf32, #tpu.memory_space<vmem>>, vector<1x1x256x128xf32>
    %170 = vector.shape_cast %169 : vector<1x1x256x128xf32> to vector<256x128xf32>
    %c1_158 = arith.constant 1 : index
    %c0_159 = arith.constant 0 : index
    %c0_160 = arith.constant 0 : index
    %171 = vector.load %arg3[%c1_158, %c0_159, %c0_160] : memref<2x1x128xf32, #tpu.memory_space<vmem>>, vector<1x1x128xf32>
    %172 = vector.shape_cast %171 : vector<1x1x128xf32> to vector<1x128xf32>
    %cst_161 = arith.constant dense<0.000000e+00> : vector<16x128xf32>
    %173 = tpu.matmul %164, %166, %cst_161 {dimension_numbers = #tpu.dot_dimension_numbers<[1], [0], [0], [1], [0, 0, 1, 1], [], []>} : vector<16x256xf32>, vector<256x128xf32>, vector<16x128xf32> -> vector<16x128xf32>
    %cst_162 = arith.constant dense<0.000000e+00> : vector<16x128xf32>
    %174 = tpu.matmul %164, %168, %cst_162 {dimension_numbers = #tpu.dot_dimension_numbers<[1], [0], [0], [1], [0, 0, 1, 1], [], []>} : vector<16x256xf32>, vector<256x128xf32>, vector<16x128xf32> -> vector<16x128xf32>
    %cst_163 = arith.constant dense<0.000000e+00> : vector<16x128xf32>
    %175 = tpu.matmul %164, %170, %cst_163 {dimension_numbers = #tpu.dot_dimension_numbers<[1], [0], [0], [1], [0, 0, 1, 1], [], []>} : vector<16x256xf32>, vector<256x128xf32>, vector<16x128xf32> -> vector<16x128xf32>
    %cst_164 = arith.constant 0.000000e+00 : f32
    %176 = vector.broadcast %cst_164 : f32 to vector<1x128xf32>
    %177 = vector.extract_strided_slice %173 {offsets = [0, 0], sizes = [15, 128], strides = [1, 1]} : vector<16x128xf32> to vector<15x128xf32>
    %178 = tpu.concatenate %176, %177 in 0 : vector<1x128xf32>, vector<15x128xf32> -> vector<16x128xf32>
    %179 = arith.addf %174, %178 : vector<16x128xf32>
    %180 = vector.extract_strided_slice %175 {offsets = [1, 0], sizes = [15, 128], strides = [1, 1]} : vector<16x128xf32> to vector<15x128xf32>
    %181 = tpu.concatenate %180, %176 in 0 : vector<15x128xf32>, vector<1x128xf32> -> vector<16x128xf32>
    %182 = arith.addf %179, %181 : vector<16x128xf32>
    %183 = vector.broadcast %172 : vector<1x128xf32> to vector<16x128xf32>
    %184 = arith.addf %182, %183 : vector<16x128xf32>
    %185 = math.tanh %184 : vector<16x128xf32>
    %c0_165 = arith.constant 0 : index
    %c4 = arith.constant 4 : index
    %c0_166 = arith.constant 0 : index
    %c0_167 = arith.constant 0 : index
    %186 = vector.load %arg1[%c0_165, %c4, %c0_166, %c0_167] : memref<1x5x16x128xf32, #tpu.memory_space<vmem>>, vector<1x1x16x128xf32>
    %187 = vector.shape_cast %186 : vector<1x1x16x128xf32> to vector<16x128xf32>
    %188 = tpu.concatenate %187, %163 in 1 : vector<16x128xf32>, vector<16x128xf32> -> vector<16x256xf32>
    %c0_168 = arith.constant 0 : index
    %c0_169 = arith.constant 0 : index
    %c0_170 = arith.constant 0 : index
    %c0_171 = arith.constant 0 : index
    %189 = vector.load %arg2[%c0_168, %c0_169, %c0_170, %c0_171] : memref<2x3x256x128xf32, #tpu.memory_space<vmem>>, vector<1x1x256x128xf32>
    %190 = vector.shape_cast %189 : vector<1x1x256x128xf32> to vector<256x128xf32>
    %c0_172 = arith.constant 0 : index
    %c1_173 = arith.constant 1 : index
    %c0_174 = arith.constant 0 : index
    %c0_175 = arith.constant 0 : index
    %191 = vector.load %arg2[%c0_172, %c1_173, %c0_174, %c0_175] : memref<2x3x256x128xf32, #tpu.memory_space<vmem>>, vector<1x1x256x128xf32>
    %192 = vector.shape_cast %191 : vector<1x1x256x128xf32> to vector<256x128xf32>
    %c0_176 = arith.constant 0 : index
    %c2_177 = arith.constant 2 : index
    %c0_178 = arith.constant 0 : index
    %c0_179 = arith.constant 0 : index
    %193 = vector.load %arg2[%c0_176, %c2_177, %c0_178, %c0_179] : memref<2x3x256x128xf32, #tpu.memory_space<vmem>>, vector<1x1x256x128xf32>
    %194 = vector.shape_cast %193 : vector<1x1x256x128xf32> to vector<256x128xf32>
    %c0_180 = arith.constant 0 : index
    %c0_181 = arith.constant 0 : index
    %c0_182 = arith.constant 0 : index
    %195 = vector.load %arg3[%c0_180, %c0_181, %c0_182] : memref<2x1x128xf32, #tpu.memory_space<vmem>>, vector<1x1x128xf32>
    %196 = vector.shape_cast %195 : vector<1x1x128xf32> to vector<1x128xf32>
    %cst_183 = arith.constant dense<0.000000e+00> : vector<16x128xf32>
    %197 = tpu.matmul %188, %190, %cst_183 {dimension_numbers = #tpu.dot_dimension_numbers<[1], [0], [0], [1], [0, 0, 1, 1], [], []>} : vector<16x256xf32>, vector<256x128xf32>, vector<16x128xf32> -> vector<16x128xf32>
    %cst_184 = arith.constant dense<0.000000e+00> : vector<16x128xf32>
    %198 = tpu.matmul %188, %192, %cst_184 {dimension_numbers = #tpu.dot_dimension_numbers<[1], [0], [0], [1], [0, 0, 1, 1], [], []>} : vector<16x256xf32>, vector<256x128xf32>, vector<16x128xf32> -> vector<16x128xf32>
    %cst_185 = arith.constant dense<0.000000e+00> : vector<16x128xf32>
    %199 = tpu.matmul %188, %194, %cst_185 {dimension_numbers = #tpu.dot_dimension_numbers<[1], [0], [0], [1], [0, 0, 1, 1], [], []>} : vector<16x256xf32>, vector<256x128xf32>, vector<16x128xf32> -> vector<16x128xf32>
    %cst_186 = arith.constant 0.000000e+00 : f32
    %200 = vector.broadcast %cst_186 : f32 to vector<1x128xf32>
    %201 = vector.extract_strided_slice %197 {offsets = [0, 0], sizes = [15, 128], strides = [1, 1]} : vector<16x128xf32> to vector<15x128xf32>
    %202 = tpu.concatenate %200, %201 in 0 : vector<1x128xf32>, vector<15x128xf32> -> vector<16x128xf32>
    %203 = arith.addf %198, %202 : vector<16x128xf32>
    %204 = vector.extract_strided_slice %199 {offsets = [1, 0], sizes = [15, 128], strides = [1, 1]} : vector<16x128xf32> to vector<15x128xf32>
    %205 = tpu.concatenate %204, %200 in 0 : vector<15x128xf32>, vector<1x128xf32> -> vector<16x128xf32>
    %206 = arith.addf %203, %205 : vector<16x128xf32>
    %207 = vector.broadcast %196 : vector<1x128xf32> to vector<16x128xf32>
    %208 = arith.addf %206, %207 : vector<16x128xf32>
    %209 = math.tanh %208 : vector<16x128xf32>
    %210 = tpu.concatenate %209, %185 in 1 : vector<16x128xf32>, vector<16x128xf32> -> vector<16x256xf32>
    %c1_187 = arith.constant 1 : index
    %c0_188 = arith.constant 0 : index
    %c0_189 = arith.constant 0 : index
    %c0_190 = arith.constant 0 : index
    %211 = vector.load %arg2[%c1_187, %c0_188, %c0_189, %c0_190] : memref<2x3x256x128xf32, #tpu.memory_space<vmem>>, vector<1x1x256x128xf32>
    %212 = vector.shape_cast %211 : vector<1x1x256x128xf32> to vector<256x128xf32>
    %c1_191 = arith.constant 1 : index
    %c1_192 = arith.constant 1 : index
    %c0_193 = arith.constant 0 : index
    %c0_194 = arith.constant 0 : index
    %213 = vector.load %arg2[%c1_191, %c1_192, %c0_193, %c0_194] : memref<2x3x256x128xf32, #tpu.memory_space<vmem>>, vector<1x1x256x128xf32>
    %214 = vector.shape_cast %213 : vector<1x1x256x128xf32> to vector<256x128xf32>
    %c1_195 = arith.constant 1 : index
    %c2_196 = arith.constant 2 : index
    %c0_197 = arith.constant 0 : index
    %c0_198 = arith.constant 0 : index
    %215 = vector.load %arg2[%c1_195, %c2_196, %c0_197, %c0_198] : memref<2x3x256x128xf32, #tpu.memory_space<vmem>>, vector<1x1x256x128xf32>
    %216 = vector.shape_cast %215 : vector<1x1x256x128xf32> to vector<256x128xf32>
    %c1_199 = arith.constant 1 : index
    %c0_200 = arith.constant 0 : index
    %c0_201 = arith.constant 0 : index
    %217 = vector.load %arg3[%c1_199, %c0_200, %c0_201] : memref<2x1x128xf32, #tpu.memory_space<vmem>>, vector<1x1x128xf32>
    %218 = vector.shape_cast %217 : vector<1x1x128xf32> to vector<1x128xf32>
    %cst_202 = arith.constant dense<0.000000e+00> : vector<16x128xf32>
    %219 = tpu.matmul %210, %212, %cst_202 {dimension_numbers = #tpu.dot_dimension_numbers<[1], [0], [0], [1], [0, 0, 1, 1], [], []>} : vector<16x256xf32>, vector<256x128xf32>, vector<16x128xf32> -> vector<16x128xf32>
    %cst_203 = arith.constant dense<0.000000e+00> : vector<16x128xf32>
    %220 = tpu.matmul %210, %214, %cst_203 {dimension_numbers = #tpu.dot_dimension_numbers<[1], [0], [0], [1], [0, 0, 1, 1], [], []>} : vector<16x256xf32>, vector<256x128xf32>, vector<16x128xf32> -> vector<16x128xf32>
    %cst_204 = arith.constant dense<0.000000e+00> : vector<16x128xf32>
    %221 = tpu.matmul %210, %216, %cst_204 {dimension_numbers = #tpu.dot_dimension_numbers<[1], [0], [0], [1], [0, 0, 1, 1], [], []>} : vector<16x256xf32>, vector<256x128xf32>, vector<16x128xf32> -> vector<16x128xf32>
    %cst_205 = arith.constant 0.000000e+00 : f32
    %222 = vector.broadcast %cst_205 : f32 to vector<1x128xf32>
    %223 = vector.extract_strided_slice %219 {offsets = [0, 0], sizes = [15, 128], strides = [1, 1]} : vector<16x128xf32> to vector<15x128xf32>
    %224 = tpu.concatenate %222, %223 in 0 : vector<1x128xf32>, vector<15x128xf32> -> vector<16x128xf32>
    %225 = arith.addf %220, %224 : vector<16x128xf32>
    %226 = vector.extract_strided_slice %221 {offsets = [1, 0], sizes = [15, 128], strides = [1, 1]} : vector<16x128xf32> to vector<15x128xf32>
    %227 = tpu.concatenate %226, %222 in 0 : vector<15x128xf32>, vector<1x128xf32> -> vector<16x128xf32>
    %228 = arith.addf %225, %227 : vector<16x128xf32>
    %229 = vector.broadcast %218 : vector<1x128xf32> to vector<16x128xf32>
    %230 = arith.addf %228, %229 : vector<16x128xf32>
    %231 = math.tanh %230 : vector<16x128xf32>
    %c0_206 = arith.constant 0 : index
    %c0_207 = arith.constant 0 : index
    %c0_208 = arith.constant 0 : index
    %232 = vector.load %arg4[%c0_206, %c0_207, %c0_208] : memref<3x128x512xf32, #tpu.memory_space<vmem>>, vector<1x128x512xf32>
    %233 = vector.shape_cast %232 : vector<1x128x512xf32> to vector<128x512xf32>
    %c1_209 = arith.constant 1 : index
    %c0_210 = arith.constant 0 : index
    %c0_211 = arith.constant 0 : index
    %234 = vector.load %arg4[%c1_209, %c0_210, %c0_211] : memref<3x128x512xf32, #tpu.memory_space<vmem>>, vector<1x128x512xf32>
    %235 = vector.shape_cast %234 : vector<1x128x512xf32> to vector<128x512xf32>
    %c2_212 = arith.constant 2 : index
    %c0_213 = arith.constant 0 : index
    %c0_214 = arith.constant 0 : index
    %236 = vector.load %arg4[%c2_212, %c0_213, %c0_214] : memref<3x128x512xf32, #tpu.memory_space<vmem>>, vector<1x128x512xf32>
    %237 = vector.shape_cast %236 : vector<1x128x512xf32> to vector<128x512xf32>
    %c0_215 = arith.constant 0 : index
    %c0_216 = arith.constant 0 : index
    %238 = vector.load %arg5[%c0_215, %c0_216] : memref<1x512xf32, #tpu.memory_space<vmem>>, vector<1x512xf32>
    %cst_217 = arith.constant dense<0.000000e+00> : vector<16x512xf32>
    %239 = tpu.matmul %231, %233, %cst_217 {dimension_numbers = #tpu.dot_dimension_numbers<[1], [0], [0], [1], [0, 0, 1, 1], [], []>} : vector<16x128xf32>, vector<128x512xf32>, vector<16x512xf32> -> vector<16x512xf32>
    %cst_218 = arith.constant dense<0.000000e+00> : vector<16x512xf32>
    %240 = tpu.matmul %231, %235, %cst_218 {dimension_numbers = #tpu.dot_dimension_numbers<[1], [0], [0], [1], [0, 0, 1, 1], [], []>} : vector<16x128xf32>, vector<128x512xf32>, vector<16x512xf32> -> vector<16x512xf32>
    %cst_219 = arith.constant dense<0.000000e+00> : vector<16x512xf32>
    %241 = tpu.matmul %231, %237, %cst_219 {dimension_numbers = #tpu.dot_dimension_numbers<[1], [0], [0], [1], [0, 0, 1, 1], [], []>} : vector<16x128xf32>, vector<128x512xf32>, vector<16x512xf32> -> vector<16x512xf32>
    %cst_220 = arith.constant 0.000000e+00 : f32
    %242 = vector.broadcast %cst_220 : f32 to vector<1x512xf32>
    %243 = vector.extract_strided_slice %239 {offsets = [0, 0], sizes = [15, 512], strides = [1, 1]} : vector<16x512xf32> to vector<15x512xf32>
    %244 = tpu.concatenate %242, %243 in 0 : vector<1x512xf32>, vector<15x512xf32> -> vector<16x512xf32>
    %245 = arith.addf %240, %244 : vector<16x512xf32>
    %246 = vector.extract_strided_slice %241 {offsets = [1, 0], sizes = [15, 512], strides = [1, 1]} : vector<16x512xf32> to vector<15x512xf32>
    %247 = tpu.concatenate %246, %242 in 0 : vector<15x512xf32>, vector<1x512xf32> -> vector<16x512xf32>
    %248 = arith.addf %245, %247 : vector<16x512xf32>
    %249 = vector.broadcast %238 : vector<1x512xf32> to vector<16x512xf32>
    %250 = arith.addf %248, %249 : vector<16x512xf32>
    %cst_221 = arith.constant 0.000000e+00 : f32
    %251 = vector.broadcast %cst_221 : f32 to vector<16x512xf32>
    %252 = arith.maximumf %250, %251 : vector<16x512xf32>
    %c0_222 = arith.constant 0 : index
    %c0_223 = arith.constant 0 : index
    %c0_224 = arith.constant 0 : index
    %253 = vector.load %arg6[%c0_222, %c0_223, %c0_224] : memref<3x512x128xf32, #tpu.memory_space<vmem>>, vector<1x512x128xf32>
    %254 = vector.shape_cast %253 : vector<1x512x128xf32> to vector<512x128xf32>
    %c1_225 = arith.constant 1 : index
    %c0_226 = arith.constant 0 : index
    %c0_227 = arith.constant 0 : index
    %255 = vector.load %arg6[%c1_225, %c0_226, %c0_227] : memref<3x512x128xf32, #tpu.memory_space<vmem>>, vector<1x512x128xf32>
    %256 = vector.shape_cast %255 : vector<1x512x128xf32> to vector<512x128xf32>
    %c2_228 = arith.constant 2 : index
    %c0_229 = arith.constant 0 : index
    %c0_230 = arith.constant 0 : index
    %257 = vector.load %arg6[%c2_228, %c0_229, %c0_230] : memref<3x512x128xf32, #tpu.memory_space<vmem>>, vector<1x512x128xf32>
    %258 = vector.shape_cast %257 : vector<1x512x128xf32> to vector<512x128xf32>
    %c0_231 = arith.constant 0 : index
    %c0_232 = arith.constant 0 : index
    %259 = vector.load %arg7[%c0_231, %c0_232] : memref<1x128xf32, #tpu.memory_space<vmem>>, vector<1x128xf32>
    %cst_233 = arith.constant dense<0.000000e+00> : vector<16x128xf32>
    %260 = tpu.matmul %252, %254, %cst_233 {dimension_numbers = #tpu.dot_dimension_numbers<[1], [0], [0], [1], [0, 0, 1, 1], [], []>} : vector<16x512xf32>, vector<512x128xf32>, vector<16x128xf32> -> vector<16x128xf32>
    %cst_234 = arith.constant dense<0.000000e+00> : vector<16x128xf32>
    %261 = tpu.matmul %252, %256, %cst_234 {dimension_numbers = #tpu.dot_dimension_numbers<[1], [0], [0], [1], [0, 0, 1, 1], [], []>} : vector<16x512xf32>, vector<512x128xf32>, vector<16x128xf32> -> vector<16x128xf32>
    %cst_235 = arith.constant dense<0.000000e+00> : vector<16x128xf32>
    %262 = tpu.matmul %252, %258, %cst_235 {dimension_numbers = #tpu.dot_dimension_numbers<[1], [0], [0], [1], [0, 0, 1, 1], [], []>} : vector<16x512xf32>, vector<512x128xf32>, vector<16x128xf32> -> vector<16x128xf32>
    %cst_236 = arith.constant 0.000000e+00 : f32
    %263 = vector.broadcast %cst_236 : f32 to vector<1x128xf32>
    %264 = vector.extract_strided_slice %260 {offsets = [0, 0], sizes = [15, 128], strides = [1, 1]} : vector<16x128xf32> to vector<15x128xf32>
    %265 = tpu.concatenate %263, %264 in 0 : vector<1x128xf32>, vector<15x128xf32> -> vector<16x128xf32>
    %266 = arith.addf %261, %265 : vector<16x128xf32>
    %267 = vector.extract_strided_slice %262 {offsets = [1, 0], sizes = [15, 128], strides = [1, 1]} : vector<16x128xf32> to vector<15x128xf32>
    %268 = tpu.concatenate %267, %263 in 0 : vector<15x128xf32>, vector<1x128xf32> -> vector<16x128xf32>
    %269 = arith.addf %266, %268 : vector<16x128xf32>
    %270 = vector.broadcast %259 : vector<1x128xf32> to vector<16x128xf32>
    %271 = arith.addf %269, %270 : vector<16x128xf32>
    %c0_237 = arith.constant 0 : index
    %c0_238 = arith.constant 0 : index
    %c0_239 = arith.constant 0 : index
    %c0_240 = arith.constant 0 : index
    %272 = vector.load %arg8[%c0_237, %c0_238, %c0_239, %c0_240] : memref<1x4x16x128xf32, #tpu.memory_space<vmem>>, vector<1x1x16x128xf32>
    %273 = vector.shape_cast %272 : vector<1x1x16x128xf32> to vector<16x128xf32>
    %274 = vector.shape_cast %271 : vector<16x128xf32> to vector<1x1x16x128xf32>
    tpu.vector_store %arg8[%c0_237, %c0_238, %c0_239, %c0_240], %274 {strides = array<i32>} : memref<1x4x16x128xf32, #tpu.memory_space<vmem>>, vector<1x1x16x128xf32>,
    %c0_241 = arith.constant 0 : index
    %c0_242 = arith.constant 0 : index
    %c0_243 = arith.constant 0 : index
    %275 = vector.load %arg4[%c0_241, %c0_242, %c0_243] : memref<3x128x512xf32, #tpu.memory_space<vmem>>, vector<1x128x512xf32>
    %276 = vector.shape_cast %275 : vector<1x128x512xf32> to vector<128x512xf32>
    %c1_244 = arith.constant 1 : index
    %c0_245 = arith.constant 0 : index
    %c0_246 = arith.constant 0 : index
    %277 = vector.load %arg4[%c1_244, %c0_245, %c0_246] : memref<3x128x512xf32, #tpu.memory_space<vmem>>, vector<1x128x512xf32>
    %278 = vector.shape_cast %277 : vector<1x128x512xf32> to vector<128x512xf32>
    %c2_247 = arith.constant 2 : index
    %c0_248 = arith.constant 0 : index
    %c0_249 = arith.constant 0 : index
    %279 = vector.load %arg4[%c2_247, %c0_248, %c0_249] : memref<3x128x512xf32, #tpu.memory_space<vmem>>, vector<1x128x512xf32>
    %280 = vector.shape_cast %279 : vector<1x128x512xf32> to vector<128x512xf32>
    %c0_250 = arith.constant 0 : index
    %c0_251 = arith.constant 0 : index
    %281 = vector.load %arg5[%c0_250, %c0_251] : memref<1x512xf32, #tpu.memory_space<vmem>>, vector<1x512xf32>
    %cst_252 = arith.constant dense<0.000000e+00> : vector<16x512xf32>
    %282 = tpu.matmul %271, %276, %cst_252 {dimension_numbers = #tpu.dot_dimension_numbers<[1], [0], [0], [1], [0, 0, 1, 1], [], []>} : vector<16x128xf32>, vector<128x512xf32>, vector<16x512xf32> -> vector<16x512xf32>
    %cst_253 = arith.constant dense<0.000000e+00> : vector<16x512xf32>
    %283 = tpu.matmul %271, %278, %cst_253 {dimension_numbers = #tpu.dot_dimension_numbers<[1], [0], [0], [1], [0, 0, 1, 1], [], []>} : vector<16x128xf32>, vector<128x512xf32>, vector<16x512xf32> -> vector<16x512xf32>
    %cst_254 = arith.constant dense<0.000000e+00> : vector<16x512xf32>
    %284 = tpu.matmul %271, %280, %cst_254 {dimension_numbers = #tpu.dot_dimension_numbers<[1], [0], [0], [1], [0, 0, 1, 1], [], []>} : vector<16x128xf32>, vector<128x512xf32>, vector<16x512xf32> -> vector<16x512xf32>
    %cst_255 = arith.constant 0.000000e+00 : f32
    %285 = vector.broadcast %cst_255 : f32 to vector<1x512xf32>
    %286 = vector.extract_strided_slice %282 {offsets = [0, 0], sizes = [15, 512], strides = [1, 1]} : vector<16x512xf32> to vector<15x512xf32>
    %287 = tpu.concatenate %285, %286 in 0 : vector<1x512xf32>, vector<15x512xf32> -> vector<16x512xf32>
    %288 = arith.addf %283, %287 : vector<16x512xf32>
    %289 = vector.extract_strided_slice %284 {offsets = [1, 0], sizes = [15, 512], strides = [1, 1]} : vector<16x512xf32> to vector<15x512xf32>
    %290 = tpu.concatenate %289, %285 in 0 : vector<15x512xf32>, vector<1x512xf32> -> vector<16x512xf32>
    %291 = arith.addf %288, %290 : vector<16x512xf32>
    %292 = vector.broadcast %281 : vector<1x512xf32> to vector<16x512xf32>
    %293 = arith.addf %291, %292 : vector<16x512xf32>
    %cst_256 = arith.constant 0.000000e+00 : f32
    %294 = vector.broadcast %cst_256 : f32 to vector<16x512xf32>
    %295 = arith.maximumf %293, %294 : vector<16x512xf32>
    %c0_257 = arith.constant 0 : index
    %c0_258 = arith.constant 0 : index
    %c0_259 = arith.constant 0 : index
    %296 = vector.load %arg6[%c0_257, %c0_258, %c0_259] : memref<3x512x128xf32, #tpu.memory_space<vmem>>, vector<1x512x128xf32>
    %297 = vector.shape_cast %296 : vector<1x512x128xf32> to vector<512x128xf32>
    %c1_260 = arith.constant 1 : index
    %c0_261 = arith.constant 0 : index
    %c0_262 = arith.constant 0 : index
    %298 = vector.load %arg6[%c1_260, %c0_261, %c0_262] : memref<3x512x128xf32, #tpu.memory_space<vmem>>, vector<1x512x128xf32>
    %299 = vector.shape_cast %298 : vector<1x512x128xf32> to vector<512x128xf32>
    %c2_263 = arith.constant 2 : index
    %c0_264 = arith.constant 0 : index
    %c0_265 = arith.constant 0 : index
    %300 = vector.load %arg6[%c2_263, %c0_264, %c0_265] : memref<3x512x128xf32, #tpu.memory_space<vmem>>, vector<1x512x128xf32>
    %301 = vector.shape_cast %300 : vector<1x512x128xf32> to vector<512x128xf32>
    %c0_266 = arith.constant 0 : index
    %c0_267 = arith.constant 0 : index
    %302 = vector.load %arg7[%c0_266, %c0_267] : memref<1x128xf32, #tpu.memory_space<vmem>>, vector<1x128xf32>
    %cst_268 = arith.constant dense<0.000000e+00> : vector<16x128xf32>
    %303 = tpu.matmul %295, %297, %cst_268 {dimension_numbers = #tpu.dot_dimension_numbers<[1], [0], [0], [1], [0, 0, 1, 1], [], []>} : vector<16x512xf32>, vector<512x128xf32>, vector<16x128xf32> -> vector<16x128xf32>
    %cst_269 = arith.constant dense<0.000000e+00> : vector<16x128xf32>
    %304 = tpu.matmul %295, %299, %cst_269 {dimension_numbers = #tpu.dot_dimension_numbers<[1], [0], [0], [1], [0, 0, 1, 1], [], []>} : vector<16x512xf32>, vector<512x128xf32>, vector<16x128xf32> -> vector<16x128xf32>
    %cst_270 = arith.constant dense<0.000000e+00> : vector<16x128xf32>
    %305 = tpu.matmul %295, %301, %cst_270 {dimension_numbers = #tpu.dot_dimension_numbers<[1], [0], [0], [1], [0, 0, 1, 1], [], []>} : vector<16x512xf32>, vector<512x128xf32>, vector<16x128xf32> -> vector<16x128xf32>
    %cst_271 = arith.constant 0.000000e+00 : f32
    %306 = vector.broadcast %cst_271 : f32 to vector<1x128xf32>
    %307 = vector.extract_strided_slice %303 {offsets = [0, 0], sizes = [15, 128], strides = [1, 1]} : vector<16x128xf32> to vector<15x128xf32>
    %308 = tpu.concatenate %306, %307 in 0 : vector<1x128xf32>, vector<15x128xf32> -> vector<16x128xf32>
    %309 = arith.addf %304, %308 : vector<16x128xf32>
    %310 = vector.extract_strided_slice %305 {offsets = [1, 0], sizes = [15, 128], strides = [1, 1]} : vector<16x128xf32> to vector<15x128xf32>
    %311 = tpu.concatenate %310, %306 in 0 : vector<15x128xf32>, vector<1x128xf32> -> vector<16x128xf32>
    %312 = arith.addf %309, %311 : vector<16x128xf32>
    %313 = vector.broadcast %302 : vector<1x128xf32> to vector<16x128xf32>
    %314 = arith.addf %312, %313 : vector<16x128xf32>
    %c0_272 = arith.constant 0 : index
    %c1_273 = arith.constant 1 : index
    %c0_274 = arith.constant 0 : index
    %c0_275 = arith.constant 0 : index
    %315 = vector.load %arg8[%c0_272, %c1_273, %c0_274, %c0_275] : memref<1x4x16x128xf32, #tpu.memory_space<vmem>>, vector<1x1x16x128xf32>
    %316 = vector.shape_cast %315 : vector<1x1x16x128xf32> to vector<16x128xf32>
    %317 = vector.shape_cast %314 : vector<16x128xf32> to vector<1x1x16x128xf32>
    tpu.vector_store %arg8[%c0_272, %c1_273, %c0_274, %c0_275], %317 {strides = array<i32>} : memref<1x4x16x128xf32, #tpu.memory_space<vmem>>, vector<1x1x16x128xf32>,
    %c0_276 = arith.constant 0 : index
    %c0_277 = arith.constant 0 : index
    %c0_278 = arith.constant 0 : index
    %318 = vector.load %arg4[%c0_276, %c0_277, %c0_278] : memref<3x128x512xf32, #tpu.memory_space<vmem>>, vector<1x128x512xf32>
    %319 = vector.shape_cast %318 : vector<1x128x512xf32> to vector<128x512xf32>
    %c1_279 = arith.constant 1 : index
    %c0_280 = arith.constant 0 : index
    %c0_281 = arith.constant 0 : index
    %320 = vector.load %arg4[%c1_279, %c0_280, %c0_281] : memref<3x128x512xf32, #tpu.memory_space<vmem>>, vector<1x128x512xf32>
    %321 = vector.shape_cast %320 : vector<1x128x512xf32> to vector<128x512xf32>
    %c2_282 = arith.constant 2 : index
    %c0_283 = arith.constant 0 : index
    %c0_284 = arith.constant 0 : index
    %322 = vector.load %arg4[%c2_282, %c0_283, %c0_284] : memref<3x128x512xf32, #tpu.memory_space<vmem>>, vector<1x128x512xf32>
    %323 = vector.shape_cast %322 : vector<1x128x512xf32> to vector<128x512xf32>
    %c0_285 = arith.constant 0 : index
    %c0_286 = arith.constant 0 : index
    %324 = vector.load %arg5[%c0_285, %c0_286] : memref<1x512xf32, #tpu.memory_space<vmem>>, vector<1x512xf32>
    %cst_287 = arith.constant dense<0.000000e+00> : vector<16x512xf32>
    %325 = tpu.matmul %314, %319, %cst_287 {dimension_numbers = #tpu.dot_dimension_numbers<[1], [0], [0], [1], [0, 0, 1, 1], [], []>} : vector<16x128xf32>, vector<128x512xf32>, vector<16x512xf32> -> vector<16x512xf32>
    %cst_288 = arith.constant dense<0.000000e+00> : vector<16x512xf32>
    %326 = tpu.matmul %314, %321, %cst_288 {dimension_numbers = #tpu.dot_dimension_numbers<[1], [0], [0], [1], [0, 0, 1, 1], [], []>} : vector<16x128xf32>, vector<128x512xf32>, vector<16x512xf32> -> vector<16x512xf32>
    %cst_289 = arith.constant dense<0.000000e+00> : vector<16x512xf32>
    %327 = tpu.matmul %314, %323, %cst_289 {dimension_numbers = #tpu.dot_dimension_numbers<[1], [0], [0], [1], [0, 0, 1, 1], [], []>} : vector<16x128xf32>, vector<128x512xf32>, vector<16x512xf32> -> vector<16x512xf32>
    %cst_290 = arith.constant 0.000000e+00 : f32
    %328 = vector.broadcast %cst_290 : f32 to vector<1x512xf32>
    %329 = vector.extract_strided_slice %325 {offsets = [0, 0], sizes = [15, 512], strides = [1, 1]} : vector<16x512xf32> to vector<15x512xf32>
    %330 = tpu.concatenate %328, %329 in 0 : vector<1x512xf32>, vector<15x512xf32> -> vector<16x512xf32>
    %331 = arith.addf %326, %330 : vector<16x512xf32>
    %332 = vector.extract_strided_slice %327 {offsets = [1, 0], sizes = [15, 512], strides = [1, 1]} : vector<16x512xf32> to vector<15x512xf32>
    %333 = tpu.concatenate %332, %328 in 0 : vector<15x512xf32>, vector<1x512xf32> -> vector<16x512xf32>
    %334 = arith.addf %331, %333 : vector<16x512xf32>
    %335 = vector.broadcast %324 : vector<1x512xf32> to vector<16x512xf32>
    %336 = arith.addf %334, %335 : vector<16x512xf32>
    %cst_291 = arith.constant 0.000000e+00 : f32
    %337 = vector.broadcast %cst_291 : f32 to vector<16x512xf32>
    %338 = arith.maximumf %336, %337 : vector<16x512xf32>
    %c0_292 = arith.constant 0 : index
    %c0_293 = arith.constant 0 : index
    %c0_294 = arith.constant 0 : index
    %339 = vector.load %arg6[%c0_292, %c0_293, %c0_294] : memref<3x512x128xf32, #tpu.memory_space<vmem>>, vector<1x512x128xf32>
    %340 = vector.shape_cast %339 : vector<1x512x128xf32> to vector<512x128xf32>
    %c1_295 = arith.constant 1 : index
    %c0_296 = arith.constant 0 : index
    %c0_297 = arith.constant 0 : index
    %341 = vector.load %arg6[%c1_295, %c0_296, %c0_297] : memref<3x512x128xf32, #tpu.memory_space<vmem>>, vector<1x512x128xf32>
    %342 = vector.shape_cast %341 : vector<1x512x128xf32> to vector<512x128xf32>
    %c2_298 = arith.constant 2 : index
    %c0_299 = arith.constant 0 : index
    %c0_300 = arith.constant 0 : index
    %343 = vector.load %arg6[%c2_298, %c0_299, %c0_300] : memref<3x512x128xf32, #tpu.memory_space<vmem>>, vector<1x512x128xf32>
    %344 = vector.shape_cast %343 : vector<1x512x128xf32> to vector<512x128xf32>
    %c0_301 = arith.constant 0 : index
    %c0_302 = arith.constant 0 : index
    %345 = vector.load %arg7[%c0_301, %c0_302] : memref<1x128xf32, #tpu.memory_space<vmem>>, vector<1x128xf32>
    %cst_303 = arith.constant dense<0.000000e+00> : vector<16x128xf32>
    %346 = tpu.matmul %338, %340, %cst_303 {dimension_numbers = #tpu.dot_dimension_numbers<[1], [0], [0], [1], [0, 0, 1, 1], [], []>} : vector<16x512xf32>, vector<512x128xf32>, vector<16x128xf32> -> vector<16x128xf32>
    %cst_304 = arith.constant dense<0.000000e+00> : vector<16x128xf32>
    %347 = tpu.matmul %338, %342, %cst_304 {dimension_numbers = #tpu.dot_dimension_numbers<[1], [0], [0], [1], [0, 0, 1, 1], [], []>} : vector<16x512xf32>, vector<512x128xf32>, vector<16x128xf32> -> vector<16x128xf32>
    %cst_305 = arith.constant dense<0.000000e+00> : vector<16x128xf32>
    %348 = tpu.matmul %338, %344, %cst_305 {dimension_numbers = #tpu.dot_dimension_numbers<[1], [0], [0], [1], [0, 0, 1, 1], [], []>} : vector<16x512xf32>, vector<512x128xf32>, vector<16x128xf32> -> vector<16x128xf32>
    %cst_306 = arith.constant 0.000000e+00 : f32
    %349 = vector.broadcast %cst_306 : f32 to vector<1x128xf32>
    %350 = vector.extract_strided_slice %346 {offsets = [0, 0], sizes = [15, 128], strides = [1, 1]} : vector<16x128xf32> to vector<15x128xf32>
    %351 = tpu.concatenate %349, %350 in 0 : vector<1x128xf32>, vector<15x128xf32> -> vector<16x128xf32>
    %352 = arith.addf %347, %351 : vector<16x128xf32>
    %353 = vector.extract_strided_slice %348 {offsets = [1, 0], sizes = [15, 128], strides = [1, 1]} : vector<16x128xf32> to vector<15x128xf32>
    %354 = tpu.concatenate %353, %349 in 0 : vector<15x128xf32>, vector<1x128xf32> -> vector<16x128xf32>
    %355 = arith.addf %352, %354 : vector<16x128xf32>
    %356 = vector.broadcast %345 : vector<1x128xf32> to vector<16x128xf32>
    %357 = arith.addf %355, %356 : vector<16x128xf32>
    %c0_307 = arith.constant 0 : index
    %c2_308 = arith.constant 2 : index
    %c0_309 = arith.constant 0 : index
    %c0_310 = arith.constant 0 : index
    %358 = vector.load %arg8[%c0_307, %c2_308, %c0_309, %c0_310] : memref<1x4x16x128xf32, #tpu.memory_space<vmem>>, vector<1x1x16x128xf32>
    %359 = vector.shape_cast %358 : vector<1x1x16x128xf32> to vector<16x128xf32>
    %360 = vector.shape_cast %357 : vector<16x128xf32> to vector<1x1x16x128xf32>
    tpu.vector_store %arg8[%c0_307, %c2_308, %c0_309, %c0_310], %360 {strides = array<i32>} : memref<1x4x16x128xf32, #tpu.memory_space<vmem>>, vector<1x1x16x128xf32>,
    %c0_311 = arith.constant 0 : index
    %c0_312 = arith.constant 0 : index
    %c0_313 = arith.constant 0 : index
    %361 = vector.load %arg4[%c0_311, %c0_312, %c0_313] : memref<3x128x512xf32, #tpu.memory_space<vmem>>, vector<1x128x512xf32>
    %362 = vector.shape_cast %361 : vector<1x128x512xf32> to vector<128x512xf32>
    %c1_314 = arith.constant 1 : index
    %c0_315 = arith.constant 0 : index
    %c0_316 = arith.constant 0 : index
    %363 = vector.load %arg4[%c1_314, %c0_315, %c0_316] : memref<3x128x512xf32, #tpu.memory_space<vmem>>, vector<1x128x512xf32>
    %364 = vector.shape_cast %363 : vector<1x128x512xf32> to vector<128x512xf32>
    %c2_317 = arith.constant 2 : index
    %c0_318 = arith.constant 0 : index
    %c0_319 = arith.constant 0 : index
    %365 = vector.load %arg4[%c2_317, %c0_318, %c0_319] : memref<3x128x512xf32, #tpu.memory_space<vmem>>, vector<1x128x512xf32>
    %366 = vector.shape_cast %365 : vector<1x128x512xf32> to vector<128x512xf32>
    %c0_320 = arith.constant 0 : index
    %c0_321 = arith.constant 0 : index
    %367 = vector.load %arg5[%c0_320, %c0_321] : memref<1x512xf32, #tpu.memory_space<vmem>>, vector<1x512xf32>
    %cst_322 = arith.constant dense<0.000000e+00> : vector<16x512xf32>
    %368 = tpu.matmul %357, %362, %cst_322 {dimension_numbers = #tpu.dot_dimension_numbers<[1], [0], [0], [1], [0, 0, 1, 1], [], []>} : vector<16x128xf32>, vector<128x512xf32>, vector<16x512xf32> -> vector<16x512xf32>
    %cst_323 = arith.constant dense<0.000000e+00> : vector<16x512xf32>
    %369 = tpu.matmul %357, %364, %cst_323 {dimension_numbers = #tpu.dot_dimension_numbers<[1], [0], [0], [1], [0, 0, 1, 1], [], []>} : vector<16x128xf32>, vector<128x512xf32>, vector<16x512xf32> -> vector<16x512xf32>
    %cst_324 = arith.constant dense<0.000000e+00> : vector<16x512xf32>
    %370 = tpu.matmul %357, %366, %cst_324 {dimension_numbers = #tpu.dot_dimension_numbers<[1], [0], [0], [1], [0, 0, 1, 1], [], []>} : vector<16x128xf32>, vector<128x512xf32>, vector<16x512xf32> -> vector<16x512xf32>
    %cst_325 = arith.constant 0.000000e+00 : f32
    %371 = vector.broadcast %cst_325 : f32 to vector<1x512xf32>
    %372 = vector.extract_strided_slice %368 {offsets = [0, 0], sizes = [15, 512], strides = [1, 1]} : vector<16x512xf32> to vector<15x512xf32>
    %373 = tpu.concatenate %371, %372 in 0 : vector<1x512xf32>, vector<15x512xf32> -> vector<16x512xf32>
    %374 = arith.addf %369, %373 : vector<16x512xf32>
    %375 = vector.extract_strided_slice %370 {offsets = [1, 0], sizes = [15, 512], strides = [1, 1]} : vector<16x512xf32> to vector<15x512xf32>
    %376 = tpu.concatenate %375, %371 in 0 : vector<15x512xf32>, vector<1x512xf32> -> vector<16x512xf32>
    %377 = arith.addf %374, %376 : vector<16x512xf32>
    %378 = vector.broadcast %367 : vector<1x512xf32> to vector<16x512xf32>
    %379 = arith.addf %377, %378 : vector<16x512xf32>
    %cst_326 = arith.constant 0.000000e+00 : f32
    %380 = vector.broadcast %cst_326 : f32 to vector<16x512xf32>
    %381 = arith.maximumf %379, %380 : vector<16x512xf32>
    %c0_327 = arith.constant 0 : index
    %c0_328 = arith.constant 0 : index
    %c0_329 = arith.constant 0 : index
    %382 = vector.load %arg6[%c0_327, %c0_328, %c0_329] : memref<3x512x128xf32, #tpu.memory_space<vmem>>, vector<1x512x128xf32>
    %383 = vector.shape_cast %382 : vector<1x512x128xf32> to vector<512x128xf32>
    %c1_330 = arith.constant 1 : index
    %c0_331 = arith.constant 0 : index
    %c0_332 = arith.constant 0 : index
    %384 = vector.load %arg6[%c1_330, %c0_331, %c0_332] : memref<3x512x128xf32, #tpu.memory_space<vmem>>, vector<1x512x128xf32>
    %385 = vector.shape_cast %384 : vector<1x512x128xf32> to vector<512x128xf32>
    %c2_333 = arith.constant 2 : index
    %c0_334 = arith.constant 0 : index
    %c0_335 = arith.constant 0 : index
    %386 = vector.load %arg6[%c2_333, %c0_334, %c0_335] : memref<3x512x128xf32, #tpu.memory_space<vmem>>, vector<1x512x128xf32>
    %387 = vector.shape_cast %386 : vector<1x512x128xf32> to vector<512x128xf32>
    %c0_336 = arith.constant 0 : index
    %c0_337 = arith.constant 0 : index
    %388 = vector.load %arg7[%c0_336, %c0_337] : memref<1x128xf32, #tpu.memory_space<vmem>>, vector<1x128xf32>
    %cst_338 = arith.constant dense<0.000000e+00> : vector<16x128xf32>
    %389 = tpu.matmul %381, %383, %cst_338 {dimension_numbers = #tpu.dot_dimension_numbers<[1], [0], [0], [1], [0, 0, 1, 1], [], []>} : vector<16x512xf32>, vector<512x128xf32>, vector<16x128xf32> -> vector<16x128xf32>
    %cst_339 = arith.constant dense<0.000000e+00> : vector<16x128xf32>
    %390 = tpu.matmul %381, %385, %cst_339 {dimension_numbers = #tpu.dot_dimension_numbers<[1], [0], [0], [1], [0, 0, 1, 1], [], []>} : vector<16x512xf32>, vector<512x128xf32>, vector<16x128xf32> -> vector<16x128xf32>
    %cst_340 = arith.constant dense<0.000000e+00> : vector<16x128xf32>
    %391 = tpu.matmul %381, %387, %cst_340 {dimension_numbers = #tpu.dot_dimension_numbers<[1], [0], [0], [1], [0, 0, 1, 1], [], []>} : vector<16x512xf32>, vector<512x128xf32>, vector<16x128xf32> -> vector<16x128xf32>
    %cst_341 = arith.constant 0.000000e+00 : f32
    %392 = vector.broadcast %cst_341 : f32 to vector<1x128xf32>
    %393 = vector.extract_strided_slice %389 {offsets = [0, 0], sizes = [15, 128], strides = [1, 1]} : vector<16x128xf32> to vector<15x128xf32>
    %394 = tpu.concatenate %392, %393 in 0 : vector<1x128xf32>, vector<15x128xf32> -> vector<16x128xf32>
    %395 = arith.addf %390, %394 : vector<16x128xf32>
    %396 = vector.extract_strided_slice %391 {offsets = [1, 0], sizes = [15, 128], strides = [1, 1]} : vector<16x128xf32> to vector<15x128xf32>
    %397 = tpu.concatenate %396, %392 in 0 : vector<15x128xf32>, vector<1x128xf32> -> vector<16x128xf32>
    %398 = arith.addf %395, %397 : vector<16x128xf32>
    %399 = vector.broadcast %388 : vector<1x128xf32> to vector<16x128xf32>
    %400 = arith.addf %398, %399 : vector<16x128xf32>
    %c0_342 = arith.constant 0 : index
    %c3_343 = arith.constant 3 : index
    %c0_344 = arith.constant 0 : index
    %c0_345 = arith.constant 0 : index
    %401 = vector.load %arg8[%c0_342, %c3_343, %c0_344, %c0_345] : memref<1x4x16x128xf32, #tpu.memory_space<vmem>>, vector<1x1x16x128xf32>
    %402 = vector.shape_cast %401 : vector<1x1x16x128xf32> to vector<16x128xf32>
    %403 = vector.shape_cast %400 : vector<16x128xf32> to vector<1x1x16x128xf32>
    tpu.vector_store %arg8[%c0_342, %c3_343, %c0_344, %c0_345], %403 {strides = array<i32>} : memref<1x4x16x128xf32, #tpu.memory_space<vmem>>, vector<1x1x16x128xf32>,
    return
  }
  func.func @transform_0(%arg0: i32) -> (i32, i32, i32, i32) {
    %c0_i32 = arith.constant 0 : i32
    %c0_i32_0 = arith.constant 0 : i32
    %c0_i32_1 = arith.constant 0 : i32
    %c0_i32_2 = arith.constant 0 : i32
    return %arg0, %c0_i32, %c0_i32_0, %c0_i32_1 : i32, i32, i32, i32
  }
  func.func @transform_1(%arg0: i32) -> (i32, i32, i32, i32) {
    %c0_i32 = arith.constant 0 : i32
    %c0_i32_0 = arith.constant 0 : i32
    %c0_i32_1 = arith.constant 0 : i32
    %c0_i32_2 = arith.constant 0 : i32
    %c0_i32_3 = arith.constant 0 : i32
    return %c0_i32, %c0_i32_0, %c0_i32_1, %c0_i32_2 : i32, i32, i32, i32
  }
  func.func @transform_2(%arg0: i32) -> (i32, i32, i32) {
    %c0_i32 = arith.constant 0 : i32
    %c0_i32_0 = arith.constant 0 : i32
    %c0_i32_1 = arith.constant 0 : i32
    %c0_i32_2 = arith.constant 0 : i32
    return %c0_i32, %c0_i32_0, %c0_i32_1 : i32, i32, i32
  }
  func.func @transform_3(%arg0: i32) -> (i32, i32, i32) {
    %c0_i32 = arith.constant 0 : i32
    %c0_i32_0 = arith.constant 0 : i32
    %c0_i32_1 = arith.constant 0 : i32
    %c0_i32_2 = arith.constant 0 : i32
    return %c0_i32, %c0_i32_0, %c0_i32_1 : i32, i32, i32
  }
  func.func @transform_4(%arg0: i32) -> (i32, i32) {
    %c0_i32 = arith.constant 0 : i32
    %c0_i32_0 = arith.constant 0 : i32
    %c0_i32_1 = arith.constant 0 : i32
    return %c0_i32, %c0_i32_0 : i32, i32
  }
  func.func @transform_5(%arg0: i32) -> (i32, i32, i32) {
    %c0_i32 = arith.constant 0 : i32
    %c0_i32_0 = arith.constant 0 : i32
    %c0_i32_1 = arith.constant 0 : i32
    %c0_i32_2 = arith.constant 0 : i32
    return %c0_i32, %c0_i32_0, %c0_i32_1 : i32, i32, i32
  }
  func.func @transform_6(%arg0: i32) -> (i32, i32) {
    %c0_i32 = arith.constant 0 : i32
    %c0_i32_0 = arith.constant 0 : i32
    %c0_i32_1 = arith.constant 0 : i32
    return %c0_i32, %c0_i32_0 : i32, i32
  }
  func.func @transform_7(%arg0: i32) -> (i32, i32, i32, i32) {
    %c0_i32 = arith.constant 0 : i32
    %c0_i32_0 = arith.constant 0 : i32
    %c0_i32_1 = arith.constant 0 : i32
    %c0_i32_2 = arith.constant 0 : i32
    return %arg0, %c0_i32, %c0_i32_0, %c0_i32_1 : i32, i32, i32, i32
  }
}

</mosaic_0001>

<llo_original>
// kernel: convlstm_forward.1
$region0: #{convlstm_forward.1}
  #allocation0 [shape = 'u32[]', space=smem, size = 0x4, offset = 0x4, fixed_abs, tag = 'smem constant byte address 0x4 - core index']
  #allocation1 [shape = 'u32[72,128]{1,0:T(1,128)}', space=vmem, size = 0x9000, scoped, tag = 'internal scratch']
  %s0 = inlined_call_operand.vmem [shape: f32[2,5,16,128], index: 0, kind: input, shape index: {}]
  %s1 = inlined_call_operand.vmem [shape: f32[2,3,256,128], index: 1, kind: input, shape index: {}]
  %s2 = inlined_call_operand.vmem [shape: f32[2,1,128], index: 2, kind: input, shape index: {}]
  %s3 = inlined_call_operand.vmem [shape: f32[3,128,512], index: 3, kind: input, shape index: {}]
  %s4 = inlined_call_operand.vmem [shape: f32[1,512], index: 4, kind: input, shape index: {}]
  %s5 = inlined_call_operand.hbm [shape: f32[3,512,128], index: 5, kind: input, shape index: {}]
  %s6 = inlined_call_operand.vmem [shape: f32[1,128], index: 6, kind: input, shape index: {}]
  %s7 = inlined_call_operand.vmem [shape: f32[2,4,16,128], index: 7, kind: output, shape index: {}]
  %s8 = sld [smem:[#allocation0]]
  $region65: #{convlstm_forward.1} parent=0
    _
  %s10 = ssub.s32 1, %s8
  %s11 = scalar_select 0, %s10, %s8
  $region1: #{convlstm_forward.1} parent=0
    #allocation2 [shape = 'u8[786432]{0}', space=vmem, size = 0xc0000, scoped, tag = 'input window, operand 5, single buffered']
    #allocation3 [shape = 's32[2]{0}', space=sflag, size = 0x8, scoped, tag = 'scoped memory for convlstm_forward.1']
    %12 = vsyncpa [#allocation3], 0
    loop: start=0, step=1, limit=4
    $region2: #{convlstm_forward.1} parent=1 // loop_pre_header
      _
    $region3: #{convlstm_forward.1} parent=1 // loop_header
      %s14 = sphi 0, %s18
      %p15 = scmp.ge.s32.totalorder %s14, 4
      %s24 = sphi 0, %s26
      %s27 = sphi 0, %s24
      %s28 = sphi 0, %s27
      %s44 = sphi 0, %s28
      %s48 = sphi 0, %s48
      %s50 = sphi 0, %s48
      %s51 = sphi 0, %s50
      %s65 = sphi 0, %s51
      %s69 = sphi 0, %s69
      %s71 = sphi 0, %s69
      %s72 = sphi 0, %s71
      %s86 = sphi 0, %s72
      %s90 = sphi 0, %s90
      %s92 = sphi 0, %s90
      %s93 = sphi 0, %s92
      %s107 = sphi 0, %s93
      %s111 = sphi 0, %s111
      %s113 = sphi 0, %s111
      %s114 = sphi 0, %s113
      %s128 = sphi 0, %s114
      %s132 = sphi 0, %s132
      %s134 = sphi 0, %s132
      %s135 = sphi 0, %s134
      %s149 = sphi 0, %s135
      %s153 = sphi 0, %s153
      %s155 = sphi 0, %s153
      %s156 = sphi 0, %s155
      %s170 = sphi 0, %s156
      %s176 = sphi 0, %s178
      %s179 = sphi 0, %s176
      %s180 = sphi 0, %s179
      %s196 = sphi 0, %s180
    $region4: #{convlstm_forward.1} parent=1 // loop_header_branch
      %17 = sbr.rel (%p15) target = $region8
    $region5: #{convlstm_forward.1} parent=1 // loop_body
      %s19 = ssub.s32 %s14, 1
      %s20 = ssub.s32 %s14, 2
      %s21 = sadd.s32 %s14, 1
      %s22 = ssub.s32 %s14, %s21
      %p23 = scmp.eq.s32.totalorder %s22, 0
      %s25 = sadd.s32 %s24, 1
      %s26 = scalar_select %p23, %s24, %s25
      %p29 = pneg %p23
      %p30 = scmp.eq.s32.totalorder %s14, 1
      %p31 = por %p29, %p30
      %p32 = scmp.ne.s32.totalorder %s24, %s27
      %p33 = scmp.eq.s32.totalorder %s14, 0
      %p34 = por %p32, %p33
      %p35 = scmp.ne.s32.totalorder %s24, %s27
      %p36 = scmp.eq.s32.totalorder %s19, 1
      %p37 = por %p35, %p36
      %p38 = scmp.ne.s32.totalorder %s27, %s28
      %p39 = scmp.eq.s32.totalorder %s19, 0
      %p40 = por %p38, %p39
      %p41 = scmp.ne.s32.totalorder %s27, %s28
      %p42 = scmp.eq.s32.totalorder %s20, 1
      %p43 = por %p41, %p42
      %p45 = scmp.ne.s32.totalorder %s28, %s44
      %p46 = scmp.eq.s32.totalorder %s20, 0
      %p47 = por %p45, %p46
      %s49 = sadd.s32 %s48, 1
      %p52 = scmp.eq.s32.totalorder %s14, 1
      %p53 = scmp.ne.s32.totalorder %s48, %s50
      %p54 = scmp.eq.s32.totalorder %s14, 0
      %p55 = por %p53, %p54
      %p56 = scmp.ne.s32.totalorder %s48, %s50
      %p57 = scmp.eq.s32.totalorder %s19, 1
      %p58 = por %p56, %p57
      %p59 = scmp.ne.s32.totalorder %s50, %s51
      %p60 = scmp.eq.s32.totalorder %s19, 0
      %p61 = por %p59, %p60
      %p62 = scmp.ne.s32.totalorder %s50, %s51
      %p63 = scmp.eq.s32.totalorder %s20, 1
      %p64 = por %p62, %p63
      %p66 = scmp.ne.s32.totalorder %s51, %s65
      %p67 = scmp.eq.s32.totalorder %s20, 0
      %p68 = por %p66, %p67
      %s70 = sadd.s32 %s69, 1
      %p73 = scmp.eq.s32.totalorder %s14, 1
      %p74 = scmp.ne.s32.totalorder %s69, %s71
      %p75 = scmp.eq.s32.totalorder %s14, 0
      %p76 = por %p74, %p75
      %p77 = scmp.ne.s32.totalorder %s69, %s71
      %p78 = scmp.eq.s32.totalorder %s19, 1
      %p79 = por %p77, %p78
      %p80 = scmp.ne.s32.totalorder %s71, %s72
      %p81 = scmp.eq.s32.totalorder %s19, 0
      %p82 = por %p80, %p81
      %p83 = scmp.ne.s32.totalorder %s71, %s72
      %p84 = scmp.eq.s32.totalorder %s20, 1
      %p85 = por %p83, %p84
      %p87 = scmp.ne.s32.totalorder %s72, %s86
      %p88 = scmp.eq.s32.totalorder %s20, 0
      %p89 = por %p87, %p88
      %s91 = sadd.s32 %s90, 1
      %p94 = scmp.eq.s32.totalorder %s14, 1
      %p95 = scmp.ne.s32.totalorder %s90, %s92
      %p96 = scmp.eq.s32.totalorder %s14, 0
      %p97 = por %p95, %p96
      %p98 = scmp.ne.s32.totalorder %s90, %s92
      %p99 = scmp.eq.s32.totalorder %s19, 1
      %p100 = por %p98, %p99
      %p101 = scmp.ne.s32.totalorder %s92, %s93
      %p102 = scmp.eq.s32.totalorder %s19, 0
      %p103 = por %p101, %p102
      %p104 = scmp.ne.s32.totalorder %s92, %s93
      %p105 = scmp.eq.s32.totalorder %s20, 1
      %p106 = por %p104, %p105
      %p108 = scmp.ne.s32.totalorder %s93, %s107
      %p109 = scmp.eq.s32.totalorder %s20, 0
      %p110 = por %p108, %p109
      %s112 = sadd.s32 %s111, 1
      %p115 = scmp.eq.s32.totalorder %s14, 1
      %p116 = scmp.ne.s32.totalorder %s111, %s113
      %p117 = scmp.eq.s32.totalorder %s14, 0
      %p118 = por %p116, %p117
      %p119 = scmp.ne.s32.totalorder %s111, %s113
      %p120 = scmp.eq.s32.totalorder %s19, 1
      %p121 = por %p119, %p120
      %p122 = scmp.ne.s32.totalorder %s113, %s114
      %p123 = scmp.eq.s32.totalorder %s19, 0
      %p124 = por %p122, %p123
      %p125 = scmp.ne.s32.totalorder %s113, %s114
      %p126 = scmp.eq.s32.totalorder %s20, 1
      %p127 = por %p125, %p126
      %p129 = scmp.ne.s32.totalorder %s114, %s128
      %p130 = scmp.eq.s32.totalorder %s20, 0
      %p131 = por %p129, %p130
      %s133 = sadd.s32 %s132, 1
      %p136 = scmp.eq.s32.totalorder %s14, 1
      %p137 = scmp.ne.s32.totalorder %s132, %s134
      %p138 = scmp.eq.s32.totalorder %s14, 0
      %p139 = por %p137, %p138
      %p140 = scmp.ne.s32.totalorder %s132, %s134
      %p141 = scmp.eq.s32.totalorder %s19, 1
      %p142 = por %p140, %p141
      %p143 = scmp.ne.s32.totalorder %s134, %s135
      %p144 = scmp.eq.s32.totalorder %s19, 0
      %p145 = por %p143, %p144
      %p146 = scmp.ne.s32.totalorder %s134, %s135
      %p147 = scmp.eq.s32.totalorder %s20, 1
      %p148 = por %p146, %p147
      %p150 = scmp.ne.s32.totalorder %s135, %s149
      %p151 = scmp.eq.s32.totalorder %s20, 0
      %p152 = por %p150, %p151
      %s154 = sadd.s32 %s153, 1
      %p157 = scmp.eq.s32.totalorder %s14, 1
      %p158 = scmp.ne.s32.totalorder %s153, %s155
      %p159 = scmp.eq.s32.totalorder %s14, 0
      %p160 = por %p158, %p159
      %p161 = scmp.ne.s32.totalorder %s153, %s155
      %p162 = scmp.eq.s32.totalorder %s19, 1
      %p163 = por %p161, %p162
      %p164 = scmp.ne.s32.totalorder %s155, %s156
      %p165 = scmp.eq.s32.totalorder %s19, 0
      %p166 = por %p164, %p165
      %p167 = scmp.ne.s32.totalorder %s155, %s156
      %p168 = scmp.eq.s32.totalorder %s20, 1
      %p169 = por %p167, %p168
      %p171 = scmp.ne.s32.totalorder %s156, %s170
      %p172 = scmp.eq.s32.totalorder %s20, 0
      %p173 = por %p171, %p172
      %s174 = ssub.s32 %s14, %s21
      %p175 = scmp.eq.s32.totalorder %s174, 0
      %s177 = sadd.s32 %s176, 1
      %s178 = scalar_select %p175, %s176, %s177
      %p181 = pneg %p175
      %p182 = scmp.eq.s32.totalorder %s14, 1
      %p183 = por %p181, %p182
      %p184 = scmp.ne.s32.totalorder %s176, %s179
      %p185 = scmp.eq.s32.totalorder %s14, 0
      %p186 = por %p184, %p185
      %p187 = scmp.ne.s32.totalorder %s176, %s179
      %p188 = scmp.eq.s32.totalorder %s19, 1
      %p189 = por %p187, %p188
      %p190 = scmp.ne.s32.totalorder %s179, %s180
      %p191 = scmp.eq.s32.totalorder %s19, 0
      %p192 = por %p190, %p191
      %p193 = scmp.ne.s32.totalorder %s179, %s180
      %p194 = scmp.eq.s32.totalorder %s20, 1
      %p195 = por %p193, %p194
      %p197 = scmp.ne.s32.totalorder %s180, %s196
      %p198 = scmp.eq.s32.totalorder %s20, 0
      %p199 = por %p197, %p198
      %p200 = scmp.le.s32.totalorder 1, %s14
      %p201 = scmp.lt.s32.totalorder %s14, 3
      %p202 = pnand %p200, %p201
      %p203 = pneg %p202
      // Predicated region
      $region9: #{convlstm_forward.1} parent=5 // pred_check
        _
      $region10: #{convlstm_forward.1} parent=5 // pred_check_branch
        %205 = sbr.rel (%p202) target = $region12
      $region11: #{convlstm_forward.1} parent=5 // pred_region
        %s206 = ssub.s32 %s14, 1
        // Predicated region
        $region13: #{convlstm_forward.1} parent=11 // pred_check
          %p207 = pneg %p61
        $region14: #{convlstm_forward.1} parent=11 // pred_check_branch
          %209 = sbr.rel (%p207) target = $region16
        $region15: #{convlstm_forward.1} parent=11 // pred_region
          _
        $region16: #{convlstm_forward.1} parent=11 // pred_fallthru
          _
        // Predicated region
        $region17: #{convlstm_forward.1} parent=11 // pred_check
          %p210 = pneg %p82
        $region18: #{convlstm_forward.1} parent=11 // pred_check_branch
          %212 = sbr.rel (%p210) target = $region20
        $region19: #{convlstm_forward.1} parent=11 // pred_region
          _
        $region20: #{convlstm_forward.1} parent=11 // pred_fallthru
          _
        // Predicated region
        $region21: #{convlstm_forward.1} parent=11 // pred_check
          %p213 = pneg %p103
        $region22: #{convlstm_forward.1} parent=11 // pred_check_branch
          %215 = sbr.rel (%p213) target = $region24
        $region23: #{convlstm_forward.1} parent=11 // pred_region
          _
        $region24: #{convlstm_forward.1} parent=11 // pred_fallthru
          _
        // Predicated region
        $region25: #{convlstm_forward.1} parent=11 // pred_check
          %p216 = pneg %p124
        $region26: #{convlstm_forward.1} parent=11 // pred_check_branch
          %218 = sbr.rel (%p216) target = $region28
        $region27: #{convlstm_forward.1} parent=11 // pred_region
          _
        $region28: #{convlstm_forward.1} parent=11 // pred_fallthru
          _
        // Predicated region
        $region29: #{convlstm_forward.1} parent=11 // pred_check
          %p219 = pneg %p145
        $region30: #{convlstm_forward.1} parent=11 // pred_check_branch
          %221 = sbr.rel (%p219) target = $region32
        $region31: #{convlstm_forward.1} parent=11 // pred_region
          %223 = vsyncadd [#allocation3], 0
          %s224 = sshll.u32 %s5, 4
          %s225 = int_to_ptr.hbm [resolvable:$true] %s224
          %s226 = sshll.u32 [#allocation2], 4
          %s227 = int_to_ptr.vmem [resolvable:$true] %s226
          %232 = dma.hbm_to_vmem [thread:$0]  %s225, 24576, %s227, [#allocation3], 128, 128, 8
        $region32: #{convlstm_forward.1} parent=11 // pred_fallthru
          _
        // Predicated region
        $region33: #{convlstm_forward.1} parent=11 // pred_check
          %p233 = pneg %p166
        $region34: #{convlstm_forward.1} parent=11 // pred_check_branch
          %235 = sbr.rel (%p233) target = $region36
        $region35: #{convlstm_forward.1} parent=11 // pred_region
          _
        $region36: #{convlstm_forward.1} parent=11 // pred_fallthru
          _
      $region12: #{convlstm_forward.1} parent=5 // pred_fallthru
        _
      %p236 = scmp.lt.s32.totalorder %s14, 2
      // Predicated region
      $region37: #{convlstm_forward.1} parent=5 // pred_check
        %p237 = pneg %p236
      $region38: #{convlstm_forward.1} parent=5 // pred_check_branch
        %239 = sbr.rel (%p237) target = $region40
      $region39: #{convlstm_forward.1} parent=5 // pred_region
        // Predicated region
        $region41: #{convlstm_forward.1} parent=39 // pred_check
          %p240 = pneg %p34
        $region42: #{convlstm_forward.1} parent=39 // pred_check_branch
          %242 = sbr.rel (%p240) target = $region44
        $region43: #{convlstm_forward.1} parent=39 // pred_region
          %p243 = scmp.lt.s32.totalorder %s14, 1
          %s244 = scalar_select %p243, %s14, 1
          %s245 = smul.addr %s244, 10
          %s246 = smul.addr %s245, 8
          %s247 = scalar_lea.vmem %s0, %s246
        $region44: #{convlstm_forward.1} parent=39 // pred_fallthru
          _
      $region40: #{convlstm_forward.1} parent=5 // pred_fallthru
        _
      %p248 = scmp.le.s32.totalorder 1, %s14
      %p249 = scmp.lt.s32.totalorder %s14, 3
      %p250 = pnand %p248, %p249
      %p251 = pneg %p250
      // Predicated region
      $region45: #{convlstm_forward.1} parent=5 // pred_check
        _
      $region46: #{convlstm_forward.1} parent=5 // pred_check_branch
        %253 = sbr.rel (%p250) target = $region48
      $region47: #{convlstm_forward.1} parent=5 // pred_region
        %s254 = ssub.s32 %s14, 1
        // Predicated region
        $region49: #{convlstm_forward.1} parent=47 // pred_check
          %p255 = pneg %p145
        $region50: #{convlstm_forward.1} parent=47 // pred_check_branch
          %257 = sbr.rel (%p255) target = $region52
        $region51: #{convlstm_forward.1} parent=47 // pred_region
          %259 = dma.done [#allocation3], 24576
        $region52: #{convlstm_forward.1} parent=47 // pred_fallthru
          _
        %p260 = scmp.lt.s32.totalorder %s19, 1
        %s261 = scalar_select %p260, %s19, 1
        %s262 = smul.addr %s261, 10
        %s263 = smul.addr %s262, 8
        %s264 = scalar_lea.vmem %s0, %s263
        %p265 = pneg %p40
        %p266 = pneg %p37
        %p267 = pneg %p61
        %p268 = pneg %p58
        %p269 = pneg %p82
        %p270 = pneg %p79
        %p271 = pneg %p103
        %p272 = pneg %p100
        %p273 = pneg %p124
        %p274 = pneg %p121
        %p275 = pneg %p145
        %p276 = pneg %p142
        %p277 = pneg %p166
        %p278 = pneg %p163
        %p279 = pneg %p192
        %p280 = pneg %p189
        %p281 = scmp.lt.s32.totalorder %s19, 1
        %s282 = scalar_select %p281, %s19, 1
        %s283 = smul.addr %s282, 8
        %s284 = smul.addr %s283, 8
        %s285 = scalar_lea.vmem %s7, %s284
        %p286 = scmp.lt.s32.totalorder %s19, 1
        %s287 = scalar_select %p286, %s19, 1
        %s288 = smul.addr %s287, 10
        %s289 = smul.addr %s288, 8
        %s290 = scalar_lea.vmem %s0, %s289
        %p291 = scmp.lt.s32.totalorder %s19, 1
        %s292 = scalar_select %p291, %s19, 1
        %s293 = smul.addr %s292, 8
        %s294 = smul.addr %s293, 8
        %s295 = scalar_lea.vmem %s7, %s294
        %v296 = vld [vmem:[%s290] sm:$0xff]
        %v297 = vld [vmem:[%s290 + $0x8] sm:$0xff]
        %v298 = vld [vmem:[%s1] sm:$0xff]
        %v299 = vld [vmem:[%s1 + $0x8] sm:$0xff]
        %v300 = vld [vmem:[%s1 + $0x10] sm:$0xff]
        %v301 = vld [vmem:[%s1 + $0x18] sm:$0xff]
        %v302 = vld [vmem:[%s1 + $0x20] sm:$0xff]
        %v303 = vld [vmem:[%s1 + $0x28] sm:$0xff]
        %v304 = vld [vmem:[%s1 + $0x30] sm:$0xff]
        %v305 = vld [vmem:[%s1 + $0x38] sm:$0xff]
        %v306 = vld [vmem:[%s1 + $0x40] sm:$0xff]
        %v307 = vld [vmem:[%s1 + $0x48] sm:$0xff]
        %v308 = vld [vmem:[%s1 + $0x50] sm:$0xff]
        %v309 = vld [vmem:[%s1 + $0x58] sm:$0xff]
        %v310 = vld [vmem:[%s1 + $0x60] sm:$0xff]
        %v311 = vld [vmem:[%s1 + $0x68] sm:$0xff]
        %v312 = vld [vmem:[%s1 + $0x70] sm:$0xff]
        %v313 = vld [vmem:[%s1 + $0x78] sm:$0xff]
        %v314 = vld [vmem:[%s1 + $0x80] sm:$0xff]
        %v315 = vld [vmem:[%s1 + $0x88] sm:$0xff]
        %v316 = vld [vmem:[%s1 + $0x90] sm:$0xff]
        %v317 = vld [vmem:[%s1 + $0x98] sm:$0xff]
        %v318 = vld [vmem:[%s1 + $0xa0] sm:$0xff]
        %v319 = vld [vmem:[%s1 + $0xa8] sm:$0xff]
        %v320 = vld [vmem:[%s1 + $0xb0] sm:$0xff]
        %v321 = vld [vmem:[%s1 + $0xb8] sm:$0xff]
        %v322 = vld [vmem:[%s1 + $0xc0] sm:$0xff]
        %v323 = vld [vmem:[%s1 + $0xc8] sm:$0xff]
        %v324 = vld [vmem:[%s1 + $0xd0] sm:$0xff]
        %v325 = vld [vmem:[%s1 + $0xd8] sm:$0xff]
        %v326 = vld [vmem:[%s1 + $0xe0] sm:$0xff]
        %v327 = vld [vmem:[%s1 + $0xe8] sm:$0xff]
        %v328 = vld [vmem:[%s1 + $0xf0] sm:$0xff]
        %v329 = vld [vmem:[%s1 + $0xf8] sm:$0xff]
        %s330 = scalar_lea.vmem %s1, 256
        %v331 = vld [vmem:[%s330] sm:$0xff]
        %v332 = vld [vmem:[%s330 + $0x8] sm:$0xff]
        %v333 = vld [vmem:[%s330 + $0x10] sm:$0xff]
        %v334 = vld [vmem:[%s330 + $0x18] sm:$0xff]
        %v335 = vld [vmem:[%s330 + $0x20] sm:$0xff]
        %v336 = vld [vmem:[%s330 + $0x28] sm:$0xff]
        %v337 = vld [vmem:[%s330 + $0x30] sm:$0xff]
        %v338 = vld [vmem:[%s330 + $0x38] sm:$0xff]
        %v339 = vld [vmem:[%s330 + $0x40] sm:$0xff]
        %v340 = vld [vmem:[%s330 + $0x48] sm:$0xff]
        %v341 = vld [vmem:[%s330 + $0x50] sm:$0xff]
        %v342 = vld [vmem:[%s330 + $0x58] sm:$0xff]
        %v343 = vld [vmem:[%s330 + $0x60] sm:$0xff]
        %v344 = vld [vmem:[%s330 + $0x68] sm:$0xff]
        %v345 = vld [vmem:[%s330 + $0x70] sm:$0xff]
        %v346 = vld [vmem:[%s330 + $0x78] sm:$0xff]
        %v347 = vld [vmem:[%s330 + $0x80] sm:$0xff]
        %v348 = vld [vmem:[%s330 + $0x88] sm:$0xff]
        %v349 = vld [vmem:[%s330 + $0x90] sm:$0xff]
        %v350 = vld [vmem:[%s330 + $0x98] sm:$0xff]
        %v351 = vld [vmem:[%s330 + $0xa0] sm:$0xff]
        %v352 = vld [vmem:[%s330 + $0xa8] sm:$0xff]
        %v353 = vld [vmem:[%s330 + $0xb0] sm:$0xff]
        %v354 = vld [vmem:[%s330 + $0xb8] sm:$0xff]
        %v355 = vld [vmem:[%s330 + $0xc0] sm:$0xff]
        %v356 = vld [vmem:[%s330 + $0xc8] sm:$0xff]
        %v357 = vld [vmem:[%s330 + $0xd0] sm:$0xff]
        %v358 = vld [vmem:[%s330 + $0xd8] sm:$0xff]
        %v359 = vld [vmem:[%s330 + $0xe0] sm:$0xff]
        %v360 = vld [vmem:[%s330 + $0xe8] sm:$0xff]
        %v361 = vld [vmem:[%s330 + $0xf0] sm:$0xff]
        %v362 = vld [vmem:[%s330 + $0xf8] sm:$0xff]
        %s363 = scalar_lea.vmem %s1, 512
        %v364 = vld [vmem:[%s363] sm:$0xff]
        %v365 = vld [vmem:[%s363 + $0x8] sm:$0xff]
        %v366 = vld [vmem:[%s363 + $0x10] sm:$0xff]
        %v367 = vld [vmem:[%s363 + $0x18] sm:$0xff]
        %v368 = vld [vmem:[%s363 + $0x20] sm:$0xff]
        %v369 = vld [vmem:[%s363 + $0x28] sm:$0xff]
        %v370 = vld [vmem:[%s363 + $0x30] sm:$0xff]
        %v371 = vld [vmem:[%s363 + $0x38] sm:$0xff]
        %v372 = vld [vmem:[%s363 + $0x40] sm:$0xff]
        %v373 = vld [vmem:[%s363 + $0x48] sm:$0xff]
        %v374 = vld [vmem:[%s363 + $0x50] sm:$0xff]
        %v375 = vld [vmem:[%s363 + $0x58] sm:$0xff]
        %v376 = vld [vmem:[%s363 + $0x60] sm:$0xff]
        %v377 = vld [vmem:[%s363 + $0x68] sm:$0xff]
        %v378 = vld [vmem:[%s363 + $0x70] sm:$0xff]
        %v379 = vld [vmem:[%s363 + $0x78] sm:$0xff]
        %v380 = vld [vmem:[%s363 + $0x80] sm:$0xff]
        %v381 = vld [vmem:[%s363 + $0x88] sm:$0xff]
        %v382 = vld [vmem:[%s363 + $0x90] sm:$0xff]
        %v383 = vld [vmem:[%s363 + $0x98] sm:$0xff]
        %v384 = vld [vmem:[%s363 + $0xa0] sm:$0xff]
        %v385 = vld [vmem:[%s363 + $0xa8] sm:$0xff]
        %v386 = vld [vmem:[%s363 + $0xb0] sm:$0xff]
        %v387 = vld [vmem:[%s363 + $0xb8] sm:$0xff]
        %v388 = vld [vmem:[%s363 + $0xc0] sm:$0xff]
        %v389 = vld [vmem:[%s363 + $0xc8] sm:$0xff]
        %v390 = vld [vmem:[%s363 + $0xd0] sm:$0xff]
        %v391 = vld [vmem:[%s363 + $0xd8] sm:$0xff]
        %v392 = vld [vmem:[%s363 + $0xe0] sm:$0xff]
        %v393 = vld [vmem:[%s363 + $0xe8] sm:$0xff]
        %v394 = vld [vmem:[%s363 + $0xf0] sm:$0xff]
        %v395 = vld [vmem:[%s363 + $0xf8] sm:$0xff]
        %v396 = vld [vmem:[%s2] sm:$0x1]
        %397 = vmatpush.msra.mxu0 %v313
        %398 = vmatpush.msra.mxu0 %v312
        %399 = vmatpush.msra.mxu0 %v311
        %400 = vmatpush.msra.mxu0 %v310
        %401 = vmatpush.msra.mxu0 %v309
        %402 = vmatpush.msra.mxu0 %v308
        %403 = vmatpush.msra.mxu0 %v307
        %404 = vmatpush.msra.mxu0 %v306
        %405 = vmatpush.msra.mxu0 %v305
        %406 = vmatpush.msra.mxu0 %v304
        %407 = vmatpush.msra.mxu0 %v303
        %408 = vmatpush.msra.mxu0 %v302
        %409 = vmatpush.msra.mxu0 %v301
        %410 = vmatpush.msra.mxu0 %v300
        %411 = vmatpush.msra.mxu0 %v299
        %412 = vmatpush.msra.mxu0 %v298
        %413 = vmatmul.f32.gmra.mxu0 %v296
        %v414 = vpop.f32.mrf.mxu0
        %v415 = vadd.f32 0.0, %v414
        %416 = vmatmul.f32.gmra.mxu0 %v297
        %v417 = vpop.f32.mrf.mxu0
        %v418 = vadd.f32 0.0, %v417
        %419 = vdwg.mxu0
        %420 = vmatpush.msra.mxu0 %v329
        %421 = vmatpush.msra.mxu0 %v328
        %422 = vmatpush.msra.mxu0 %v327
        %423 = vmatpush.msra.mxu0 %v326
        %424 = vmatpush.msra.mxu0 %v325
        %425 = vmatpush.msra.mxu0 %v324
        %426 = vmatpush.msra.mxu0 %v323
        %427 = vmatpush.msra.mxu0 %v322
        %428 = vmatpush.msra.mxu0 %v321
        %429 = vmatpush.msra.mxu0 %v320
        %430 = vmatpush.msra.mxu0 %v319
        %431 = vmatpush.msra.mxu0 %v318
        %432 = vmatpush.msra.mxu0 %v317
        %433 = vmatpush.msra.mxu0 %v316
        %434 = vmatpush.msra.mxu0 %v315
        %435 = vmatpush.msra.mxu0 %v314
        %436 = vmatmul.f32.gmra.mxu0 0.0
        %v437 = vpop.f32.mrf.mxu0
        %v438 = vadd.f32 %v415, %v437
        %439 = vmatmul.f32.gmra.mxu0 0.0
        %v440 = vpop.f32.mrf.mxu0
        %v441 = vadd.f32 %v418, %v440
        %442 = vdwg.mxu0
        %443 = vmatpush.msra.mxu0 %v379
        %444 = vmatpush.msra.mxu0 %v378
        %445 = vmatpush.msra.mxu0 %v377
        %446 = vmatpush.msra.mxu0 %v376
        %447 = vmatpush.msra.mxu0 %v375
        %448 = vmatpush.msra.mxu0 %v374
        %449 = vmatpush.msra.mxu0 %v373
        %450 = vmatpush.msra.mxu0 %v372
        %451 = vmatpush.msra.mxu0 %v371
        %452 = vmatpush.msra.mxu0 %v370
        %453 = vmatpush.msra.mxu0 %v369
        %454 = vmatpush.msra.mxu0 %v368
        %455 = vmatpush.msra.mxu0 %v367
        %456 = vmatpush.msra.mxu0 %v366
        %457 = vmatpush.msra.mxu0 %v365
        %458 = vmatpush.msra.mxu0 %v364
        %459 = vmatmul.f32.gmra.mxu0 %v296
        %v460 = vpop.f32.mrf.mxu0
        %v461 = vadd.f32 0.0, %v460
        %462 = vmatmul.f32.gmra.mxu0 %v297
        %v463 = vpop.f32.mrf.mxu0
        %v464 = vadd.f32 0.0, %v463
        %465 = vdwg.mxu0
        %466 = vmatpush.msra.mxu0 %v395
        %467 = vmatpush.msra.mxu0 %v394
        %468 = vmatpush.msra.mxu0 %v393
        %469 = vmatpush.msra.mxu0 %v392
        %470 = vmatpush.msra.mxu0 %v391
        %471 = vmatpush.msra.mxu0 %v390
        %472 = vmatpush.msra.mxu0 %v389
        %473 = vmatpush.msra.mxu0 %v388
        %474 = vmatpush.msra.mxu0 %v387
        %475 = vmatpush.msra.mxu0 %v386
        %476 = vmatpush.msra.mxu0 %v385
        %477 = vmatpush.msra.mxu0 %v384
        %478 = vmatpush.msra.mxu0 %v383
        %479 = vmatpush.msra.mxu0 %v382
        %480 = vmatpush.msra.mxu0 %v381
        %481 = vmatpush.msra.mxu0 %v380
        %482 = vmatmul.f32.gmra.mxu0 0.0
        %v483 = vpop.f32.mrf.mxu0
        %v484 = vadd.f32 %v461, %v483
        %485 = vmatmul.f32.gmra.mxu0 0.0
        %v486 = vpop.f32.mrf.mxu0
        %v487 = vadd.f32 %v464, %v486
        %488 = vdwg.mxu0
        %vm491 = vcmask 1040384
        %v492 = vrot.slane %v438, 7
        %v493 = vrot.slane %v441, 7
        %v494 = vsel %vm491, %v492, %v493
        %v497 = vsel %vm491, 0.0, %v492
        %498 = vmatpush.msra.mxu0 %v346
        %499 = vmatpush.msra.mxu0 %v345
        %500 = vmatpush.msra.mxu0 %v344
        %501 = vmatpush.msra.mxu0 %v343
        %502 = vmatpush.msra.mxu0 %v342
        %503 = vmatpush.msra.mxu0 %v341
        %504 = vmatpush.msra.mxu0 %v340
        %505 = vmatpush.msra.mxu0 %v339
        %506 = vmatpush.msra.mxu0 %v338
        %507 = vmatpush.msra.mxu0 %v337
        %508 = vmatpush.msra.mxu0 %v336
        %509 = vmatpush.msra.mxu0 %v335
        %510 = vmatpush.msra.mxu0 %v334
        %511 = vmatpush.msra.mxu0 %v333
        %512 = vmatpush.msra.mxu0 %v332
        %513 = vmatpush.msra.mxu0 %v331
        %514 = vmatmul.f32.gmra.mxu0 %v296
        %v515 = vpop.f32.mrf.mxu0
        %v516 = vadd.f32 %v497, %v515
        %517 = vmatmul.f32.gmra.mxu0 %v297
        %v518 = vpop.f32.mrf.mxu0
        %v519 = vadd.f32 %v494, %v518
        %520 = vdwg.mxu0
        %521 = vmatpush.msra.mxu0 %v362
        %522 = vmatpush.msra.mxu0 %v361
        %523 = vmatpush.msra.mxu0 %v360
        %524 = vmatpush.msra.mxu0 %v359
        %525 = vmatpush.msra.mxu0 %v358
        %526 = vmatpush.msra.mxu0 %v357
        %527 = vmatpush.msra.mxu0 %v356
        %528 = vmatpush.msra.mxu0 %v355
        %529 = vmatpush.msra.mxu0 %v354
        %530 = vmatpush.msra.mxu0 %v353
        %531 = vmatpush.msra.mxu0 %v352
        %532 = vmatpush.msra.mxu0 %v351
        %533 = vmatpush.msra.mxu0 %v350
        %534 = vmatpush.msra.mxu0 %v349
        %535 = vmatpush.msra.mxu0 %v348
        %536 = vmatpush.msra.mxu0 %v347
        %537 = vmatmul.f32.gmra.mxu0 0.0
        %v538 = vpop.f32.mrf.mxu0
        %v539 = vadd.f32 %v516, %v538
        %540 = vmatmul.f32.gmra.mxu0 0.0
        %v541 = vpop.f32.mrf.mxu0
        %v542 = vadd.f32 %v519, %v541
        %543 = vdwg.mxu0
        %vm546 = vcmask 1046528
        %v547 = vrot.slane %v484, 1
        %v548 = vrot.slane %v487, 1
        %v549 = vsel %vm546, %v547, %v548
        %v552 = vsel %vm546, %v548, 0.0
        %v553 = vadd.f32 %v539, %v549
        %v554 = vadd.f32 %v542, %v552
        %v556 = vperm.slane %v396, 0
        %v558 = vadd.f32 %v553, %v556
        %v559 = vadd.f32 %v554, %v556
        %v560 = vtanh.pop %v558
        %v561 = vtanh.pop %v559
        %s562 = scalar_lea.vmem %s1, 768
        %v563 = vld [vmem:[%s562] sm:$0xff]
        %v564 = vld [vmem:[%s562 + $0x8] sm:$0xff]
        %v565 = vld [vmem:[%s562 + $0x10] sm:$0xff]
        %v566 = vld [vmem:[%s562 + $0x18] sm:$0xff]
        %v567 = vld [vmem:[%s562 + $0x20] sm:$0xff]
        %v568 = vld [vmem:[%s562 + $0x28] sm:$0xff]
        %v569 = vld [vmem:[%s562 + $0x30] sm:$0xff]
        %v570 = vld [vmem:[%s562 + $0x38] sm:$0xff]
        %v571 = vld [vmem:[%s562 + $0x40] sm:$0xff]
        %v572 = vld [vmem:[%s562 + $0x48] sm:$0xff]
        %v573 = vld [vmem:[%s562 + $0x50] sm:$0xff]
        %v574 = vld [vmem:[%s562 + $0x58] sm:$0xff]
        %v575 = vld [vmem:[%s562 + $0x60] sm:$0xff]
        %v576 = vld [vmem:[%s562 + $0x68] sm:$0xff]
        %v577 = vld [vmem:[%s562 + $0x70] sm:$0xff]
        %v578 = vld [vmem:[%s562 + $0x78] sm:$0xff]
        %v579 = vld [vmem:[%s562 + $0x80] sm:$0xff]
        %v580 = vld [vmem:[%s562 + $0x88] sm:$0xff]
        %v581 = vld [vmem:[%s562 + $0x90] sm:$0xff]
        %v582 = vld [vmem:[%s562 + $0x98] sm:$0xff]
        %v583 = vld [vmem:[%s562 + $0xa0] sm:$0xff]
        %v584 = vld [vmem:[%s562 + $0xa8] sm:$0xff]
        %v585 = vld [vmem:[%s562 + $0xb0] sm:$0xff]
        %v586 = vld [vmem:[%s562 + $0xb8] sm:$0xff]
        %v587 = vld [vmem:[%s562 + $0xc0] sm:$0xff]
        %v588 = vld [vmem:[%s562 + $0xc8] sm:$0xff]
        %v589 = vld [vmem:[%s562 + $0xd0] sm:$0xff]
        %v590 = vld [vmem:[%s562 + $0xd8] sm:$0xff]
        %v591 = vld [vmem:[%s562 + $0xe0] sm:$0xff]
        %v592 = vld [vmem:[%s562 + $0xe8] sm:$0xff]
        %v593 = vld [vmem:[%s562 + $0xf0] sm:$0xff]
        %v594 = vld [vmem:[%s562 + $0xf8] sm:$0xff]
        %s595 = scalar_lea.vmem %s1, 1024
        %v596 = vld [vmem:[%s595] sm:$0xff]
        %v597 = vld [vmem:[%s595 + $0x8] sm:$0xff]
        %v598 = vld [vmem:[%s595 + $0x10] sm:$0xff]
        %v599 = vld [vmem:[%s595 + $0x18] sm:$0xff]
        %v600 = vld [vmem:[%s595 + $0x20] sm:$0xff]
        %v601 = vld [vmem:[%s595 + $0x28] sm:$0xff]
        %v602 = vld [vmem:[%s595 + $0x30] sm:$0xff]
        %v603 = vld [vmem:[%s595 + $0x38] sm:$0xff]
        %v604 = vld [vmem:[%s595 + $0x40] sm:$0xff]
        %v605 = vld [vmem:[%s595 + $0x48] sm:$0xff]
        %v606 = vld [vmem:[%s595 + $0x50] sm:$0xff]
        %v607 = vld [vmem:[%s595 + $0x58] sm:$0xff]
        %v608 = vld [vmem:[%s595 + $0x60] sm:$0xff]
        %v609 = vld [vmem:[%s595 + $0x68] sm:$0xff]
        %v610 = vld [vmem:[%s595 + $0x70] sm:$0xff]
        %v611 = vld [vmem:[%s595 + $0x78] sm:$0xff]
        %v612 = vld [vmem:[%s595 + $0x80] sm:$0xff]
        %v613 = vld [vmem:[%s595 + $0x88] sm:$0xff]
        %v614 = vld [vmem:[%s595 + $0x90] sm:$0xff]
        %v615 = vld [vmem:[%s595 + $0x98] sm:$0xff]
        %v616 = vld [vmem:[%s595 + $0xa0] sm:$0xff]
        %v617 = vld [vmem:[%s595 + $0xa8] sm:$0xff]
        %v618 = vld [vmem:[%s595 + $0xb0] sm:$0xff]
        %v619 = vld [vmem:[%s595 + $0xb8] sm:$0xff]
        %v620 = vld [vmem:[%s595 + $0xc0] sm:$0xff]
        %v621 = vld [vmem:[%s595 + $0xc8] sm:$0xff]
        %v622 = vld [vmem:[%s595 + $0xd0] sm:$0xff]
        %v623 = vld [vmem:[%s595 + $0xd8] sm:$0xff]
        %v624 = vld [vmem:[%s595 + $0xe0] sm:$0xff]
        %v625 = vld [vmem:[%s595 + $0xe8] sm:$0xff]
        %v626 = vld [vmem:[%s595 + $0xf0] sm:$0xff]
        %v627 = vld [vmem:[%s595 + $0xf8] sm:$0xff]
        %s628 = scalar_lea.vmem %s1, 1280
        %v629 = vld [vmem:[%s628] sm:$0xff]
        %v630 = vld [vmem:[%s628 + $0x8] sm:$0xff]
        %v631 = vld [vmem:[%s628 + $0x10] sm:$0xff]
        %v632 = vld [vmem:[%s628 + $0x18] sm:$0xff]
        %v633 = vld [vmem:[%s628 + $0x20] sm:$0xff]
        %v634 = vld [vmem:[%s628 + $0x28] sm:$0xff]
        %v635 = vld [vmem:[%s628 + $0x30] sm:$0xff]
        %v636 = vld [vmem:[%s628 + $0x38] sm:$0xff]
        %v637 = vld [vmem:[%s628 + $0x40] sm:$0xff]
        %v638 = vld [vmem:[%s628 + $0x48] sm:$0xff]
        %v639 = vld [vmem:[%s628 + $0x50] sm:$0xff]
        %v640 = vld [vmem:[%s628 + $0x58] sm:$0xff]
        %v641 = vld [vmem:[%s628 + $0x60] sm:$0xff]
        %v642 = vld [vmem:[%s628 + $0x68] sm:$0xff]
        %v643 = vld [vmem:[%s628 + $0x70] sm:$0xff]
        %v644 = vld [vmem:[%s628 + $0x78] sm:$0xff]
        %v645 = vld [vmem:[%s628 + $0x80] sm:$0xff]
        %v646 = vld [vmem:[%s628 + $0x88] sm:$0xff]
        %v647 = vld [vmem:[%s628 + $0x90] sm:$0xff]
        %v648 = vld [vmem:[%s628 + $0x98] sm:$0xff]
        %v649 = vld [vmem:[%s628 + $0xa0] sm:$0xff]
        %v650 = vld [vmem:[%s628 + $0xa8] sm:$0xff]
        %v651 = vld [vmem:[%s628 + $0xb0] sm:$0xff]
        %v652 = vld [vmem:[%s628 + $0xb8] sm:$0xff]
        %v653 = vld [vmem:[%s628 + $0xc0] sm:$0xff]
        %v654 = vld [vmem:[%s628 + $0xc8] sm:$0xff]
        %v655 = vld [vmem:[%s628 + $0xd0] sm:$0xff]
        %v656 = vld [vmem:[%s628 + $0xd8] sm:$0xff]
        %v657 = vld [vmem:[%s628 + $0xe0] sm:$0xff]
        %v658 = vld [vmem:[%s628 + $0xe8] sm:$0xff]
        %v659 = vld [vmem:[%s628 + $0xf0] sm:$0xff]
        %v660 = vld [vmem:[%s628 + $0xf8] sm:$0xff]
        %s661 = scalar_lea.vmem %s2, 1
        %v662 = vld [vmem:[%s661] sm:$0x1]
        %663 = vmatpush.msra.mxu0 %v578
        %664 = vmatpush.msra.mxu0 %v577
        %665 = vmatpush.msra.mxu0 %v576
        %666 = vmatpush.msra.mxu0 %v575
        %667 = vmatpush.msra.mxu0 %v574
        %668 = vmatpush.msra.mxu0 %v573
        %669 = vmatpush.msra.mxu0 %v572
        %670 = vmatpush.msra.mxu0 %v571
        %671 = vmatpush.msra.mxu0 %v570
        %672 = vmatpush.msra.mxu0 %v569
        %673 = vmatpush.msra.mxu0 %v568
        %674 = vmatpush.msra.mxu0 %v567
        %675 = vmatpush.msra.mxu0 %v566
        %676 = vmatpush.msra.mxu0 %v565
        %677 = vmatpush.msra.mxu0 %v564
        %678 = vmatpush.msra.mxu0 %v563
        %679 = vmatmul.f32.gmra.mxu0 %v560
        %v680 = vpop.f32.mrf.mxu0
        %v681 = vadd.f32 0.0, %v680
        %682 = vmatmul.f32.gmra.mxu0 %v561
        %v683 = vpop.f32.mrf.mxu0
        %v684 = vadd.f32 0.0, %v683
        %685 = vdwg.mxu0
        %686 = vmatpush.msra.mxu0 %v594
        %687 = vmatpush.msra.mxu0 %v593
        %688 = vmatpush.msra.mxu0 %v592
        %689 = vmatpush.msra.mxu0 %v591
        %690 = vmatpush.msra.mxu0 %v590
        %691 = vmatpush.msra.mxu0 %v589
        %692 = vmatpush.msra.mxu0 %v588
        %693 = vmatpush.msra.mxu0 %v587
        %694 = vmatpush.msra.mxu0 %v586
        %695 = vmatpush.msra.mxu0 %v585
        %696 = vmatpush.msra.mxu0 %v584
        %697 = vmatpush.msra.mxu0 %v583
        %698 = vmatpush.msra.mxu0 %v582
        %699 = vmatpush.msra.mxu0 %v581
        %700 = vmatpush.msra.mxu0 %v580
        %701 = vmatpush.msra.mxu0 %v579
        %702 = vmatmul.f32.gmra.mxu0 0.0
        %v703 = vpop.f32.mrf.mxu0
        %v704 = vadd.f32 %v681, %v703
        %705 = vmatmul.f32.gmra.mxu0 0.0
        %v706 = vpop.f32.mrf.mxu0
        %v707 = vadd.f32 %v684, %v706
        %708 = vdwg.mxu0
        %709 = vmatpush.msra.mxu0 %v644
        %710 = vmatpush.msra.mxu0 %v643
        %711 = vmatpush.msra.mxu0 %v642
        %712 = vmatpush.msra.mxu0 %v641
        %713 = vmatpush.msra.mxu0 %v640
        %714 = vmatpush.msra.mxu0 %v639
        %715 = vmatpush.msra.mxu0 %v638
        %716 = vmatpush.msra.mxu0 %v637
        %717 = vmatpush.msra.mxu0 %v636
        %718 = vmatpush.msra.mxu0 %v635
        %719 = vmatpush.msra.mxu0 %v634
        %720 = vmatpush.msra.mxu0 %v633
        %721 = vmatpush.msra.mxu0 %v632
        %722 = vmatpush.msra.mxu0 %v631
        %723 = vmatpush.msra.mxu0 %v630
        %724 = vmatpush.msra.mxu0 %v629
        %725 = vmatmul.f32.gmra.mxu0 %v560
        %v726 = vpop.f32.mrf.mxu0
        %v727 = vadd.f32 0.0, %v726
        %728 = vmatmul.f32.gmra.mxu0 %v561
        %v729 = vpop.f32.mrf.mxu0
        %v730 = vadd.f32 0.0, %v729
        %731 = vdwg.mxu0
        %732 = vmatpush.msra.mxu0 %v660
        %733 = vmatpush.msra.mxu0 %v659
        %734 = vmatpush.msra.mxu0 %v658
        %735 = vmatpush.msra.mxu0 %v657
        %736 = vmatpush.msra.mxu0 %v656
        %737 = vmatpush.msra.mxu0 %v655
        %738 = vmatpush.msra.mxu0 %v654
        %739 = vmatpush.msra.mxu0 %v653
        %740 = vmatpush.msra.mxu0 %v652
        %741 = vmatpush.msra.mxu0 %v651
        %742 = vmatpush.msra.mxu0 %v650
        %743 = vmatpush.msra.mxu0 %v649
        %744 = vmatpush.msra.mxu0 %v648
        %745 = vmatpush.msra.mxu0 %v647
        %746 = vmatpush.msra.mxu0 %v646
        %747 = vmatpush.msra.mxu0 %v645
        %748 = vmatmul.f32.gmra.mxu0 0.0
        %v749 = vpop.f32.mrf.mxu0
        %v750 = vadd.f32 %v727, %v749
        %751 = vmatmul.f32.gmra.mxu0 0.0
        %v752 = vpop.f32.mrf.mxu0
        %v753 = vadd.f32 %v730, %v752
        %754 = vdwg.mxu0
        %v757 = vrot.slane %v704, 7
        %v758 = vrot.slane %v707, 7
        %v759 = vsel %vm491, %v757, %v758
        %v762 = vsel %vm491, 0.0, %v757
        %763 = vmatpush.msra.mxu0 %v611
        %764 = vmatpush.msra.mxu0 %v610
        %765 = vmatpush.msra.mxu0 %v609
        %766 = vmatpush.msra.mxu0 %v608
        %767 = vmatpush.msra.mxu0 %v607
        %768 = vmatpush.msra.mxu0 %v606
        %769 = vmatpush.msra.mxu0 %v605
        %770 = vmatpush.msra.mxu0 %v604
        %771 = vmatpush.msra.mxu0 %v603
        %772 = vmatpush.msra.mxu0 %v602
        %773 = vmatpush.msra.mxu0 %v601
        %774 = vmatpush.msra.mxu0 %v600
        %775 = vmatpush.msra.mxu0 %v599
        %776 = vmatpush.msra.mxu0 %v598
        %777 = vmatpush.msra.mxu0 %v597
        %778 = vmatpush.msra.mxu0 %v596
        %779 = vmatmul.f32.gmra.mxu0 %v560
        %v780 = vpop.f32.mrf.mxu0
        %v781 = vadd.f32 %v762, %v780
        %782 = vmatmul.f32.gmra.mxu0 %v561
        %v783 = vpop.f32.mrf.mxu0
        %v784 = vadd.f32 %v759, %v783
        %785 = vdwg.mxu0
        %786 = vmatpush.msra.mxu0 %v627
        %787 = vmatpush.msra.mxu0 %v626
        %788 = vmatpush.msra.mxu0 %v625
        %789 = vmatpush.msra.mxu0 %v624
        %790 = vmatpush.msra.mxu0 %v623
        %791 = vmatpush.msra.mxu0 %v622
        %792 = vmatpush.msra.mxu0 %v621
        %793 = vmatpush.msra.mxu0 %v620
        %794 = vmatpush.msra.mxu0 %v619
        %795 = vmatpush.msra.mxu0 %v618
        %796 = vmatpush.msra.mxu0 %v617
        %797 = vmatpush.msra.mxu0 %v616
        %798 = vmatpush.msra.mxu0 %v615
        %799 = vmatpush.msra.mxu0 %v614
        %800 = vmatpush.msra.mxu0 %v613
        %801 = vmatpush.msra.mxu0 %v612
        %802 = vmatmul.f32.gmra.mxu0 0.0
        %v803 = vpop.f32.mrf.mxu0
        %v804 = vadd.f32 %v781, %v803
        %805 = vmatmul.f32.gmra.mxu0 0.0
        %v806 = vpop.f32.mrf.mxu0
        %v807 = vadd.f32 %v784, %v806
        %808 = vdwg.mxu0
        %v811 = vrot.slane %v750, 1
        %v812 = vrot.slane %v753, 1
        %v813 = vsel %vm546, %v811, %v812
        %v816 = vsel %vm546, %v812, 0.0
        %v817 = vadd.f32 %v804, %v813
        %v818 = vadd.f32 %v807, %v816
        %v820 = vperm.slane %v662, 0
        %v822 = vadd.f32 %v817, %v820
        %v823 = vadd.f32 %v818, %v820
        %v824 = vtanh.pop %v822
        %v825 = vtanh.pop %v823
        %s826 = scalar_lea.vmem %s290, 16
        %v827 = vld [vmem:[%s826] sm:$0xff]
        %v828 = vld [vmem:[%s826 + $0x8] sm:$0xff]
        %829 = vmatpush.msra.mxu0 %v313
        %830 = vmatpush.msra.mxu0 %v312
        %831 = vmatpush.msra.mxu0 %v311
        %832 = vmatpush.msra.mxu0 %v310
        %833 = vmatpush.msra.mxu0 %v309
        %834 = vmatpush.msra.mxu0 %v308
        %835 = vmatpush.msra.mxu0 %v307
        %836 = vmatpush.msra.mxu0 %v306
        %837 = vmatpush.msra.mxu0 %v305
        %838 = vmatpush.msra.mxu0 %v304
        %839 = vmatpush.msra.mxu0 %v303
        %840 = vmatpush.msra.mxu0 %v302
        %841 = vmatpush.msra.mxu0 %v301
        %842 = vmatpush.msra.mxu0 %v300
        %843 = vmatpush.msra.mxu0 %v299
        %844 = vmatpush.msra.mxu0 %v298
        %845 = vmatmul.f32.gmra.mxu0 %v827
        %v846 = vpop.f32.mrf.mxu0
        %v847 = vadd.f32 0.0, %v846
        %848 = vmatmul.f32.gmra.mxu0 %v828
        %v849 = vpop.f32.mrf.mxu0
        %v850 = vadd.f32 0.0, %v849
        %851 = vdwg.mxu0
        %852 = vmatpush.msra.mxu0 %v329
        %853 = vmatpush.msra.mxu0 %v328
        %854 = vmatpush.msra.mxu0 %v327
        %855 = vmatpush.msra.mxu0 %v326
        %856 = vmatpush.msra.mxu0 %v325
        %857 = vmatpush.msra.mxu0 %v324
        %858 = vmatpush.msra.mxu0 %v323
        %859 = vmatpush.msra.mxu0 %v322
        %860 = vmatpush.msra.mxu0 %v321
        %861 = vmatpush.msra.mxu0 %v320
        %862 = vmatpush.msra.mxu0 %v319
        %863 = vmatpush.msra.mxu0 %v318
        %864 = vmatpush.msra.mxu0 %v317
        %865 = vmatpush.msra.mxu0 %v316
        %866 = vmatpush.msra.mxu0 %v315
        %867 = vmatpush.msra.mxu0 %v314
        %868 = vmatmul.f32.gmra.mxu0 %v560
        %v869 = vpop.f32.mrf.mxu0
        %v870 = vadd.f32 %v847, %v869
        %871 = vmatmul.f32.gmra.mxu0 %v561
        %v872 = vpop.f32.mrf.mxu0
        %v873 = vadd.f32 %v850, %v872
        %874 = vdwg.mxu0
        %875 = vmatpush.msra.mxu0 %v379
        %876 = vmatpush.msra.mxu0 %v378
        %877 = vmatpush.msra.mxu0 %v377
        %878 = vmatpush.msra.mxu0 %v376
        %879 = vmatpush.msra.mxu0 %v375
        %880 = vmatpush.msra.mxu0 %v374
        %881 = vmatpush.msra.mxu0 %v373
        %882 = vmatpush.msra.mxu0 %v372
        %883 = vmatpush.msra.mxu0 %v371
        %884 = vmatpush.msra.mxu0 %v370
        %885 = vmatpush.msra.mxu0 %v369
        %886 = vmatpush.msra.mxu0 %v368
        %887 = vmatpush.msra.mxu0 %v367
        %888 = vmatpush.msra.mxu0 %v366
        %889 = vmatpush.msra.mxu0 %v365
        %890 = vmatpush.msra.mxu0 %v364
        %891 = vmatmul.f32.gmra.mxu0 %v827
        %v892 = vpop.f32.mrf.mxu0
        %v893 = vadd.f32 0.0, %v892
        %894 = vmatmul.f32.gmra.mxu0 %v828
        %v895 = vpop.f32.mrf.mxu0
        %v896 = vadd.f32 0.0, %v895
        %897 = vdwg.mxu0
        %898 = vmatpush.msra.mxu0 %v395
        %899 = vmatpush.msra.mxu0 %v394
        %900 = vmatpush.msra.mxu0 %v393
        %901 = vmatpush.msra.mxu0 %v392
        %902 = vmatpush.msra.mxu0 %v391
        %903 = vmatpush.msra.mxu0 %v390
        %904 = vmatpush.msra.mxu0 %v389
        %905 = vmatpush.msra.mxu0 %v388
        %906 = vmatpush.msra.mxu0 %v387
        %907 = vmatpush.msra.mxu0 %v386
        %908 = vmatpush.msra.mxu0 %v385
        %909 = vmatpush.msra.mxu0 %v384
        %910 = vmatpush.msra.mxu0 %v383
        %911 = vmatpush.msra.mxu0 %v382
        %912 = vmatpush.msra.mxu0 %v381
        %913 = vmatpush.msra.mxu0 %v380
        %914 = vmatmul.f32.gmra.mxu0 %v560
        %v915 = vpop.f32.mrf.mxu0
        %v916 = vadd.f32 %v893, %v915
        %917 = vmatmul.f32.gmra.mxu0 %v561
        %v918 = vpop.f32.mrf.mxu0
        %v919 = vadd.f32 %v896, %v918
        %920 = vdwg.mxu0
        %v923 = vrot.slane %v870, 7
        %v924 = vrot.slane %v873, 7
        %v925 = vsel %vm491, %v923, %v924
        %v928 = vsel %vm491, 0.0, %v923
        %929 = vmatpush.msra.mxu0 %v346
        %930 = vmatpush.msra.mxu0 %v345
        %931 = vmatpush.msra.mxu0 %v344
        %932 = vmatpush.msra.mxu0 %v343
        %933 = vmatpush.msra.mxu0 %v342
        %934 = vmatpush.msra.mxu0 %v341
        %935 = vmatpush.msra.mxu0 %v340
        %936 = vmatpush.msra.mxu0 %v339
        %937 = vmatpush.msra.mxu0 %v338
        %938 = vmatpush.msra.mxu0 %v337
        %939 = vmatpush.msra.mxu0 %v336
        %940 = vmatpush.msra.mxu0 %v335
        %941 = vmatpush.msra.mxu0 %v334
        %942 = vmatpush.msra.mxu0 %v333
        %943 = vmatpush.msra.mxu0 %v332
        %944 = vmatpush.msra.mxu0 %v331
        %945 = vmatmul.f32.gmra.mxu0 %v827
        %v946 = vpop.f32.mrf.mxu0
        %v947 = vadd.f32 %v928, %v946
        %948 = vmatmul.f32.gmra.mxu0 %v828
        %v949 = vpop.f32.mrf.mxu0
        %v950 = vadd.f32 %v925, %v949
        %951 = vdwg.mxu0
        %952 = vmatpush.msra.mxu0 %v362
        %953 = vmatpush.msra.mxu0 %v361
        %954 = vmatpush.msra.mxu0 %v360
        %955 = vmatpush.msra.mxu0 %v359
        %956 = vmatpush.msra.mxu0 %v358
        %957 = vmatpush.msra.mxu0 %v357
        %958 = vmatpush.msra.mxu0 %v356
        %959 = vmatpush.msra.mxu0 %v355
        %960 = vmatpush.msra.mxu0 %v354
        %961 = vmatpush.msra.mxu0 %v353
        %962 = vmatpush.msra.mxu0 %v352
        %963 = vmatpush.msra.mxu0 %v351
        %964 = vmatpush.msra.mxu0 %v350
        %965 = vmatpush.msra.mxu0 %v349
        %966 = vmatpush.msra.mxu0 %v348
        %967 = vmatpush.msra.mxu0 %v347
        %968 = vmatmul.f32.gmra.mxu0 %v560
        %v969 = vpop.f32.mrf.mxu0
        %v970 = vadd.f32 %v947, %v969
        %971 = vmatmul.f32.gmra.mxu0 %v561
        %v972 = vpop.f32.mrf.mxu0
        %v973 = vadd.f32 %v950, %v972
        %974 = vdwg.mxu0
        %v977 = vrot.slane %v916, 1
        %v978 = vrot.slane %v919, 1
        %v979 = vsel %vm546, %v977, %v978
        %v982 = vsel %vm546, %v978, 0.0
        %v983 = vadd.f32 %v970, %v979
        %v984 = vadd.f32 %v973, %v982
        %v985 = vadd.f32 %v983, %v556
        %v986 = vadd.f32 %v984, %v556
        %v987 = vtanh.pop %v985
        %v988 = vtanh.pop %v986
        %989 = vmatpush.msra.mxu0 %v578
        %990 = vmatpush.msra.mxu0 %v577
        %991 = vmatpush.msra.mxu0 %v576
        %992 = vmatpush.msra.mxu0 %v575
        %993 = vmatpush.msra.mxu0 %v574
        %994 = vmatpush.msra.mxu0 %v573
        %995 = vmatpush.msra.mxu0 %v572
        %996 = vmatpush.msra.mxu0 %v571
        %997 = vmatpush.msra.mxu0 %v570
        %998 = vmatpush.msra.mxu0 %v569
        %999 = vmatpush.msra.mxu0 %v568
        %1000 = vmatpush.msra.mxu0 %v567
        %1001 = vmatpush.msra.mxu0 %v566
        %1002 = vmatpush.msra.mxu0 %v565
        %1003 = vmatpush.msra.mxu0 %v564
        %1004 = vmatpush.msra.mxu0 %v563
        %1005 = vmatmul.f32.gmra.mxu0 %v987
        %v1006 = vpop.f32.mrf.mxu0
        %v1007 = vadd.f32 0.0, %v1006
        %1008 = vmatmul.f32.gmra.mxu0 %v988
        %v1009 = vpop.f32.mrf.mxu0
        %v1010 = vadd.f32 0.0, %v1009
        %1011 = vdwg.mxu0
        %1012 = vmatpush.msra.mxu0 %v594
        %1013 = vmatpush.msra.mxu0 %v593
        %1014 = vmatpush.msra.mxu0 %v592
        %1015 = vmatpush.msra.mxu0 %v591
        %1016 = vmatpush.msra.mxu0 %v590
        %1017 = vmatpush.msra.mxu0 %v589
        %1018 = vmatpush.msra.mxu0 %v588
        %1019 = vmatpush.msra.mxu0 %v587
        %1020 = vmatpush.msra.mxu0 %v586
        %1021 = vmatpush.msra.mxu0 %v585
        %1022 = vmatpush.msra.mxu0 %v584
        %1023 = vmatpush.msra.mxu0 %v583
        %1024 = vmatpush.msra.mxu0 %v582
        %1025 = vmatpush.msra.mxu0 %v581
        %1026 = vmatpush.msra.mxu0 %v580
        %1027 = vmatpush.msra.mxu0 %v579
        %1028 = vmatmul.f32.gmra.mxu0 %v824
        %v1029 = vpop.f32.mrf.mxu0
        %v1030 = vadd.f32 %v1007, %v1029
        %1031 = vmatmul.f32.gmra.mxu0 %v825
        %v1032 = vpop.f32.mrf.mxu0
        %v1033 = vadd.f32 %v1010, %v1032
        %1034 = vdwg.mxu0
        %1035 = vmatpush.msra.mxu0 %v644
        %1036 = vmatpush.msra.mxu0 %v643
        %1037 = vmatpush.msra.mxu0 %v642
        %1038 = vmatpush.msra.mxu0 %v641
        %1039 = vmatpush.msra.mxu0 %v640
        %1040 = vmatpush.msra.mxu0 %v639
        %1041 = vmatpush.msra.mxu0 %v638
        %1042 = vmatpush.msra.mxu0 %v637
        %1043 = vmatpush.msra.mxu0 %v636
        %1044 = vmatpush.msra.mxu0 %v635
        %1045 = vmatpush.msra.mxu0 %v634
        %1046 = vmatpush.msra.mxu0 %v633
        %1047 = vmatpush.msra.mxu0 %v632
        %1048 = vmatpush.msra.mxu0 %v631
        %1049 = vmatpush.msra.mxu0 %v630
        %1050 = vmatpush.msra.mxu0 %v629
        %1051 = vmatmul.f32.gmra.mxu0 %v987
        %v1052 = vpop.f32.mrf.mxu0
        %v1053 = vadd.f32 0.0, %v1052
        %1054 = vmatmul.f32.gmra.mxu0 %v988
        %v1055 = vpop.f32.mrf.mxu0
        %v1056 = vadd.f32 0.0, %v1055
        %1057 = vdwg.mxu0
        %1058 = vmatpush.msra.mxu0 %v660
        %1059 = vmatpush.msra.mxu0 %v659
        %1060 = vmatpush.msra.mxu0 %v658
        %1061 = vmatpush.msra.mxu0 %v657
        %1062 = vmatpush.msra.mxu0 %v656
        %1063 = vmatpush.msra.mxu0 %v655
        %1064 = vmatpush.msra.mxu0 %v654
        %1065 = vmatpush.msra.mxu0 %v653
        %1066 = vmatpush.msra.mxu0 %v652
        %1067 = vmatpush.msra.mxu0 %v651
        %1068 = vmatpush.msra.mxu0 %v650
        %1069 = vmatpush.msra.mxu0 %v649
        %1070 = vmatpush.msra.mxu0 %v648
        %1071 = vmatpush.msra.mxu0 %v647
        %1072 = vmatpush.msra.mxu0 %v646
        %1073 = vmatpush.msra.mxu0 %v645
        %1074 = vmatmul.f32.gmra.mxu0 %v824
        %v1075 = vpop.f32.mrf.mxu0
        %v1076 = vadd.f32 %v1053, %v1075
        %1077 = vmatmul.f32.gmra.mxu0 %v825
        %v1078 = vpop.f32.mrf.mxu0
        %v1079 = vadd.f32 %v1056, %v1078
        %1080 = vdwg.mxu0
        %v1083 = vrot.slane %v1030, 7
        %v1084 = vrot.slane %v1033, 7
        %v1085 = vsel %vm491, %v1083, %v1084
        %v1088 = vsel %vm491, 0.0, %v1083
        %1089 = vmatpush.msra.mxu0 %v611
        %1090 = vmatpush.msra.mxu0 %v610
        %1091 = vmatpush.msra.mxu0 %v609
        %1092 = vmatpush.msra.mxu0 %v608
        %1093 = vmatpush.msra.mxu0 %v607
        %1094 = vmatpush.msra.mxu0 %v606
        %1095 = vmatpush.msra.mxu0 %v605
        %1096 = vmatpush.msra.mxu0 %v604
        %1097 = vmatpush.msra.mxu0 %v603
        %1098 = vmatpush.msra.mxu0 %v602
        %1099 = vmatpush.msra.mxu0 %v601
        %1100 = vmatpush.msra.mxu0 %v600
        %1101 = vmatpush.msra.mxu0 %v599
        %1102 = vmatpush.msra.mxu0 %v598
        %1103 = vmatpush.msra.mxu0 %v597
        %1104 = vmatpush.msra.mxu0 %v596
        %1105 = vmatmul.f32.gmra.mxu0 %v987
        %v1106 = vpop.f32.mrf.mxu0
        %v1107 = vadd.f32 %v1088, %v1106
        %1108 = vmatmul.f32.gmra.mxu0 %v988
        %v1109 = vpop.f32.mrf.mxu0
        %v1110 = vadd.f32 %v1085, %v1109
        %1111 = vdwg.mxu0
        %1112 = vmatpush.msra.mxu0 %v627
        %1113 = vmatpush.msra.mxu0 %v626
        %1114 = vmatpush.msra.mxu0 %v625
        %1115 = vmatpush.msra.mxu0 %v624
        %1116 = vmatpush.msra.mxu0 %v623
        %1117 = vmatpush.msra.mxu0 %v622
        %1118 = vmatpush.msra.mxu0 %v621
        %1119 = vmatpush.msra.mxu0 %v620
        %1120 = vmatpush.msra.mxu0 %v619
        %1121 = vmatpush.msra.mxu0 %v618
        %1122 = vmatpush.msra.mxu0 %v617
        %1123 = vmatpush.msra.mxu0 %v616
        %1124 = vmatpush.msra.mxu0 %v615
        %1125 = vmatpush.msra.mxu0 %v614
        %1126 = vmatpush.msra.mxu0 %v613
        %1127 = vmatpush.msra.mxu0 %v612
        %1128 = vmatmul.f32.gmra.mxu0 %v824
        %v1129 = vpop.f32.mrf.mxu0
        %v1130 = vadd.f32 %v1107, %v1129
        %1131 = vmatmul.f32.gmra.mxu0 %v825
        %v1132 = vpop.f32.mrf.mxu0
        %v1133 = vadd.f32 %v1110, %v1132
        %1134 = vdwg.mxu0
        %v1137 = vrot.slane %v1076, 1
        %v1138 = vrot.slane %v1079, 1
        %v1139 = vsel %vm546, %v1137, %v1138
        %v1142 = vsel %vm546, %v1138, 0.0
        %v1143 = vadd.f32 %v1130, %v1139
        %v1144 = vadd.f32 %v1133, %v1142
        %v1145 = vadd.f32 %v1143, %v820
        %v1146 = vadd.f32 %v1144, %v820
        %v1147 = vtanh.pop %v1145
        %v1148 = vtanh.pop %v1146
        %s1149 = scalar_lea.vmem %s290, 32
        %v1150 = vld [vmem:[%s1149] sm:$0xff]
        %v1151 = vld [vmem:[%s1149 + $0x8] sm:$0xff]
        %1152 = vmatpush.msra.mxu0 %v313
        %1153 = vmatpush.msra.mxu0 %v312
        %1154 = vmatpush.msra.mxu0 %v311
        %1155 = vmatpush.msra.mxu0 %v310
        %1156 = vmatpush.msra.mxu0 %v309
        %1157 = vmatpush.msra.mxu0 %v308
        %1158 = vmatpush.msra.mxu0 %v307
        %1159 = vmatpush.msra.mxu0 %v306
        %1160 = vmatpush.msra.mxu0 %v305
        %1161 = vmatpush.msra.mxu0 %v304
        %1162 = vmatpush.msra.mxu0 %v303
        %1163 = vmatpush.msra.mxu0 %v302
        %1164 = vmatpush.msra.mxu0 %v301
        %1165 = vmatpush.msra.mxu0 %v300
        %1166 = vmatpush.msra.mxu0 %v299
        %1167 = vmatpush.msra.mxu0 %v298
        %1168 = vmatmul.f32.gmra.mxu0 %v1150
        %v1169 = vpop.f32.mrf.mxu0
        %v1170 = vadd.f32 0.0, %v1169
        %1171 = vmatmul.f32.gmra.mxu0 %v1151
        %v1172 = vpop.f32.mrf.mxu0
        %v1173 = vadd.f32 0.0, %v1172
        %1174 = vdwg.mxu0
        %1175 = vmatpush.msra.mxu0 %v329
        %1176 = vmatpush.msra.mxu0 %v328
        %1177 = vmatpush.msra.mxu0 %v327
        %1178 = vmatpush.msra.mxu0 %v326
        %1179 = vmatpush.msra.mxu0 %v325
        %1180 = vmatpush.msra.mxu0 %v324
        %1181 = vmatpush.msra.mxu0 %v323
        %1182 = vmatpush.msra.mxu0 %v322
        %1183 = vmatpush.msra.mxu0 %v321
        %1184 = vmatpush.msra.mxu0 %v320
        %1185 = vmatpush.msra.mxu0 %v319
        %1186 = vmatpush.msra.mxu0 %v318
        %1187 = vmatpush.msra.mxu0 %v317
        %1188 = vmatpush.msra.mxu0 %v316
        %1189 = vmatpush.msra.mxu0 %v315
        %1190 = vmatpush.msra.mxu0 %v314
        %1191 = vmatmul.f32.gmra.mxu0 %v987
        %v1192 = vpop.f32.mrf.mxu0
        %v1193 = vadd.f32 %v1170, %v1192
        %1194 = vmatmul.f32.gmra.mxu0 %v988
        %v1195 = vpop.f32.mrf.mxu0
        %v1196 = vadd.f32 %v1173, %v1195
        %1197 = vdwg.mxu0
        %1198 = vmatpush.msra.mxu0 %v379
        %1199 = vmatpush.msra.mxu0 %v378
        %1200 = vmatpush.msra.mxu0 %v377
        %1201 = vmatpush.msra.mxu0 %v376
        %1202 = vmatpush.msra.mxu0 %v375
        %1203 = vmatpush.msra.mxu0 %v374
        %1204 = vmatpush.msra.mxu0 %v373
        %1205 = vmatpush.msra.mxu0 %v372
        %1206 = vmatpush.msra.mxu0 %v371
        %1207 = vmatpush.msra.mxu0 %v370
        %1208 = vmatpush.msra.mxu0 %v369
        %1209 = vmatpush.msra.mxu0 %v368
        %1210 = vmatpush.msra.mxu0 %v367
        %1211 = vmatpush.msra.mxu0 %v366
        %1212 = vmatpush.msra.mxu0 %v365
        %1213 = vmatpush.msra.mxu0 %v364
        %1214 = vmatmul.f32.gmra.mxu0 %v1150
        %v1215 = vpop.f32.mrf.mxu0
        %v1216 = vadd.f32 0.0, %v1215
        %1217 = vmatmul.f32.gmra.mxu0 %v1151
        %v1218 = vpop.f32.mrf.mxu0
        %v1219 = vadd.f32 0.0, %v1218
        %1220 = vdwg.mxu0
        %1221 = vmatpush.msra.mxu0 %v395
        %1222 = vmatpush.msra.mxu0 %v394
        %1223 = vmatpush.msra.mxu0 %v393
        %1224 = vmatpush.msra.mxu0 %v392
        %1225 = vmatpush.msra.mxu0 %v391
        %1226 = vmatpush.msra.mxu0 %v390
        %1227 = vmatpush.msra.mxu0 %v389
        %1228 = vmatpush.msra.mxu0 %v388
        %1229 = vmatpush.msra.mxu0 %v387
        %1230 = vmatpush.msra.mxu0 %v386
        %1231 = vmatpush.msra.mxu0 %v385
        %1232 = vmatpush.msra.mxu0 %v384
        %1233 = vmatpush.msra.mxu0 %v383
        %1234 = vmatpush.msra.mxu0 %v382
        %1235 = vmatpush.msra.mxu0 %v381
        %1236 = vmatpush.msra.mxu0 %v380
        %1237 = vmatmul.f32.gmra.mxu0 %v987
        %v1238 = vpop.f32.mrf.mxu0
        %v1239 = vadd.f32 %v1216, %v1238
        %1240 = vmatmul.f32.gmra.mxu0 %v988
        %v1241 = vpop.f32.mrf.mxu0
        %v1242 = vadd.f32 %v1219, %v1241
        %1243 = vdwg.mxu0
        %v1246 = vrot.slane %v1193, 7
        %v1247 = vrot.slane %v1196, 7
        %v1248 = vsel %vm491, %v1246, %v1247
        %v1251 = vsel %vm491, 0.0, %v1246
        %1252 = vmatpush.msra.mxu0 %v346
        %1253 = vmatpush.msra.mxu0 %v345
        %1254 = vmatpush.msra.mxu0 %v344
        %1255 = vmatpush.msra.mxu0 %v343
        %1256 = vmatpush.msra.mxu0 %v342
        %1257 = vmatpush.msra.mxu0 %v341
        %1258 = vmatpush.msra.mxu0 %v340
        %1259 = vmatpush.msra.mxu0 %v339
        %1260 = vmatpush.msra.mxu0 %v338
        %1261 = vmatpush.msra.mxu0 %v337
        %1262 = vmatpush.msra.mxu0 %v336
        %1263 = vmatpush.msra.mxu0 %v335
        %1264 = vmatpush.msra.mxu0 %v334
        %1265 = vmatpush.msra.mxu0 %v333
        %1266 = vmatpush.msra.mxu0 %v332
        %1267 = vmatpush.msra.mxu0 %v331
        %1268 = vmatmul.f32.gmra.mxu0 %v1150
        %v1269 = vpop.f32.mrf.mxu0
        %v1270 = vadd.f32 %v1251, %v1269
        %1271 = vmatmul.f32.gmra.mxu0 %v1151
        %v1272 = vpop.f32.mrf.mxu0
        %v1273 = vadd.f32 %v1248, %v1272
        %1274 = vdwg.mxu0
        %1275 = vmatpush.msra.mxu0 %v362
        %1276 = vmatpush.msra.mxu0 %v361
        %1277 = vmatpush.msra.mxu0 %v360
        %1278 = vmatpush.msra.mxu0 %v359
        %1279 = vmatpush.msra.mxu0 %v358
        %1280 = vmatpush.msra.mxu0 %v357
        %1281 = vmatpush.msra.mxu0 %v356
        %1282 = vmatpush.msra.mxu0 %v355
        %1283 = vmatpush.msra.mxu0 %v354
        %1284 = vmatpush.msra.mxu0 %v353
        %1285 = vmatpush.msra.mxu0 %v352
        %1286 = vmatpush.msra.mxu0 %v351
        %1287 = vmatpush.msra.mxu0 %v350
        %1288 = vmatpush.msra.mxu0 %v349
        %1289 = vmatpush.msra.mxu0 %v348
        %1290 = vmatpush.msra.mxu0 %v347
        %1291 = vmatmul.f32.gmra.mxu0 %v987
        %v1292 = vpop.f32.mrf.mxu0
        %v1293 = vadd.f32 %v1270, %v1292
        %1294 = vmatmul.f32.gmra.mxu0 %v988
        %v1295 = vpop.f32.mrf.mxu0
        %v1296 = vadd.f32 %v1273, %v1295
        %1297 = vdwg.mxu0
        %v1300 = vrot.slane %v1239, 1
        %v1301 = vrot.slane %v1242, 1
        %v1302 = vsel %vm546, %v1300, %v1301
        %v1305 = vsel %vm546, %v1301, 0.0
        %v1306 = vadd.f32 %v1293, %v1302
        %v1307 = vadd.f32 %v1296, %v1305
        %v1308 = vadd.f32 %v1306, %v556
        %v1309 = vadd.f32 %v1307, %v556
        %v1310 = vtanh.pop %v1308
        %v1311 = vtanh.pop %v1309
        %1312 = vmatpush.msra.mxu0 %v578
        %1313 = vmatpush.msra.mxu0 %v577
        %1314 = vmatpush.msra.mxu0 %v576
        %1315 = vmatpush.msra.mxu0 %v575
        %1316 = vmatpush.msra.mxu0 %v574
        %1317 = vmatpush.msra.mxu0 %v573
        %1318 = vmatpush.msra.mxu0 %v572
        %1319 = vmatpush.msra.mxu0 %v571
        %1320 = vmatpush.msra.mxu0 %v570
        %1321 = vmatpush.msra.mxu0 %v569
        %1322 = vmatpush.msra.mxu0 %v568
        %1323 = vmatpush.msra.mxu0 %v567
        %1324 = vmatpush.msra.mxu0 %v566
        %1325 = vmatpush.msra.mxu0 %v565
        %1326 = vmatpush.msra.mxu0 %v564
        %1327 = vmatpush.msra.mxu0 %v563
        %1328 = vmatmul.f32.gmra.mxu0 %v1310
        %v1329 = vpop.f32.mrf.mxu0
        %v1330 = vadd.f32 0.0, %v1329
        %1331 = vmatmul.f32.gmra.mxu0 %v1311
        %v1332 = vpop.f32.mrf.mxu0
        %v1333 = vadd.f32 0.0, %v1332
        %1334 = vdwg.mxu0
        %1335 = vmatpush.msra.mxu0 %v594
        %1336 = vmatpush.msra.mxu0 %v593
        %1337 = vmatpush.msra.mxu0 %v592
        %1338 = vmatpush.msra.mxu0 %v591
        %1339 = vmatpush.msra.mxu0 %v590
        %1340 = vmatpush.msra.mxu0 %v589
        %1341 = vmatpush.msra.mxu0 %v588
        %1342 = vmatpush.msra.mxu0 %v587
        %1343 = vmatpush.msra.mxu0 %v586
        %1344 = vmatpush.msra.mxu0 %v585
        %1345 = vmatpush.msra.mxu0 %v584
        %1346 = vmatpush.msra.mxu0 %v583
        %1347 = vmatpush.msra.mxu0 %v582
        %1348 = vmatpush.msra.mxu0 %v581
        %1349 = vmatpush.msra.mxu0 %v580
        %1350 = vmatpush.msra.mxu0 %v579
        %1351 = vmatmul.f32.gmra.mxu0 %v1147
        %v1352 = vpop.f32.mrf.mxu0
        %v1353 = vadd.f32 %v1330, %v1352
        %1354 = vmatmul.f32.gmra.mxu0 %v1148
        %v1355 = vpop.f32.mrf.mxu0
        %v1356 = vadd.f32 %v1333, %v1355
        %1357 = vdwg.mxu0
        %1358 = vmatpush.msra.mxu0 %v644
        %1359 = vmatpush.msra.mxu0 %v643
        %1360 = vmatpush.msra.mxu0 %v642
        %1361 = vmatpush.msra.mxu0 %v641
        %1362 = vmatpush.msra.mxu0 %v640
        %1363 = vmatpush.msra.mxu0 %v639
        %1364 = vmatpush.msra.mxu0 %v638
        %1365 = vmatpush.msra.mxu0 %v637
        %1366 = vmatpush.msra.mxu0 %v636
        %1367 = vmatpush.msra.mxu0 %v635
        %1368 = vmatpush.msra.mxu0 %v634
        %1369 = vmatpush.msra.mxu0 %v633
        %1370 = vmatpush.msra.mxu0 %v632
        %1371 = vmatpush.msra.mxu0 %v631
        %1372 = vmatpush.msra.mxu0 %v630
        %1373 = vmatpush.msra.mxu0 %v629
        %1374 = vmatmul.f32.gmra.mxu0 %v1310
        %v1375 = vpop.f32.mrf.mxu0
        %v1376 = vadd.f32 0.0, %v1375
        %1377 = vmatmul.f32.gmra.mxu0 %v1311
        %v1378 = vpop.f32.mrf.mxu0
        %v1379 = vadd.f32 0.0, %v1378
        %1380 = vdwg.mxu0
        %1381 = vmatpush.msra.mxu0 %v660
        %1382 = vmatpush.msra.mxu0 %v659
        %1383 = vmatpush.msra.mxu0 %v658
        %1384 = vmatpush.msra.mxu0 %v657
        %1385 = vmatpush.msra.mxu0 %v656
        %1386 = vmatpush.msra.mxu0 %v655
        %1387 = vmatpush.msra.mxu0 %v654
        %1388 = vmatpush.msra.mxu0 %v653
        %1389 = vmatpush.msra.mxu0 %v652
        %1390 = vmatpush.msra.mxu0 %v651
        %1391 = vmatpush.msra.mxu0 %v650
        %1392 = vmatpush.msra.mxu0 %v649
        %1393 = vmatpush.msra.mxu0 %v648
        %1394 = vmatpush.msra.mxu0 %v647
        %1395 = vmatpush.msra.mxu0 %v646
        %1396 = vmatpush.msra.mxu0 %v645
        %1397 = vmatmul.f32.gmra.mxu0 %v1147
        %v1398 = vpop.f32.mrf.mxu0
        %v1399 = vadd.f32 %v1376, %v1398
        %1400 = vmatmul.f32.gmra.mxu0 %v1148
        %v1401 = vpop.f32.mrf.mxu0
        %v1402 = vadd.f32 %v1379, %v1401
        %1403 = vdwg.mxu0
        %v1406 = vrot.slane %v1353, 7
        %v1407 = vrot.slane %v1356, 7
        %v1408 = vsel %vm491, %v1406, %v1407
        %v1411 = vsel %vm491, 0.0, %v1406
        %1412 = vmatpush.msra.mxu0 %v611
        %1413 = vmatpush.msra.mxu0 %v610
        %1414 = vmatpush.msra.mxu0 %v609
        %1415 = vmatpush.msra.mxu0 %v608
        %1416 = vmatpush.msra.mxu0 %v607
        %1417 = vmatpush.msra.mxu0 %v606
        %1418 = vmatpush.msra.mxu0 %v605
        %1419 = vmatpush.msra.mxu0 %v604
        %1420 = vmatpush.msra.mxu0 %v603
        %1421 = vmatpush.msra.mxu0 %v602
        %1422 = vmatpush.msra.mxu0 %v601
        %1423 = vmatpush.msra.mxu0 %v600
        %1424 = vmatpush.msra.mxu0 %v599
        %1425 = vmatpush.msra.mxu0 %v598
        %1426 = vmatpush.msra.mxu0 %v597
        %1427 = vmatpush.msra.mxu0 %v596
        %1428 = vmatmul.f32.gmra.mxu0 %v1310
        %v1429 = vpop.f32.mrf.mxu0
        %v1430 = vadd.f32 %v1411, %v1429
        %1431 = vmatmul.f32.gmra.mxu0 %v1311
        %v1432 = vpop.f32.mrf.mxu0
        %v1433 = vadd.f32 %v1408, %v1432
        %1434 = vdwg.mxu0
        %1435 = vmatpush.msra.mxu0 %v627
        %1436 = vmatpush.msra.mxu0 %v626
        %1437 = vmatpush.msra.mxu0 %v625
        %1438 = vmatpush.msra.mxu0 %v624
        %1439 = vmatpush.msra.mxu0 %v623
        %1440 = vmatpush.msra.mxu0 %v622
        %1441 = vmatpush.msra.mxu0 %v621
        %1442 = vmatpush.msra.mxu0 %v620
        %1443 = vmatpush.msra.mxu0 %v619
        %1444 = vmatpush.msra.mxu0 %v618
        %1445 = vmatpush.msra.mxu0 %v617
        %1446 = vmatpush.msra.mxu0 %v616
        %1447 = vmatpush.msra.mxu0 %v615
        %1448 = vmatpush.msra.mxu0 %v614
        %1449 = vmatpush.msra.mxu0 %v613
        %1450 = vmatpush.msra.mxu0 %v612
        %1451 = vmatmul.f32.gmra.mxu0 %v1147
        %v1452 = vpop.f32.mrf.mxu0
        %v1453 = vadd.f32 %v1430, %v1452
        %1454 = vmatmul.f32.gmra.mxu0 %v1148
        %v1455 = vpop.f32.mrf.mxu0
        %v1456 = vadd.f32 %v1433, %v1455
        %1457 = vdwg.mxu0
        %v1460 = vrot.slane %v1399, 1
        %v1461 = vrot.slane %v1402, 1
        %v1462 = vsel %vm546, %v1460, %v1461
        %v1465 = vsel %vm546, %v1461, 0.0
        %v1466 = vadd.f32 %v1453, %v1462
        %v1467 = vadd.f32 %v1456, %v1465
        %v1468 = vadd.f32 %v1466, %v820
        %v1469 = vadd.f32 %v1467, %v820
        %v1470 = vtanh.pop %v1468
        %v1471 = vtanh.pop %v1469
        %s1472 = scalar_lea.vmem %s290, 48
        %v1473 = vld [vmem:[%s1472] sm:$0xff]
        %v1474 = vld [vmem:[%s1472 + $0x8] sm:$0xff]
        %1475 = vmatpush.msra.mxu0 %v313
        %1476 = vmatpush.msra.mxu0 %v312
        %1477 = vmatpush.msra.mxu0 %v311
        %1478 = vmatpush.msra.mxu0 %v310
        %1479 = vmatpush.msra.mxu0 %v309
        %1480 = vmatpush.msra.mxu0 %v308
        %1481 = vmatpush.msra.mxu0 %v307
        %1482 = vmatpush.msra.mxu0 %v306
        %1483 = vmatpush.msra.mxu0 %v305
        %1484 = vmatpush.msra.mxu0 %v304
        %1485 = vmatpush.msra.mxu0 %v303
        %1486 = vmatpush.msra.mxu0 %v302
        %1487 = vmatpush.msra.mxu0 %v301
        %1488 = vmatpush.msra.mxu0 %v300
        %1489 = vmatpush.msra.mxu0 %v299
        %1490 = vmatpush.msra.mxu0 %v298
        %1491 = vmatmul.f32.gmra.mxu0 %v1473
        %v1492 = vpop.f32.mrf.mxu0
        %v1493 = vadd.f32 0.0, %v1492
        %1494 = vmatmul.f32.gmra.mxu0 %v1474
        %v1495 = vpop.f32.mrf.mxu0
        %v1496 = vadd.f32 0.0, %v1495
        %1497 = vdwg.mxu0
        %1498 = vmatpush.msra.mxu0 %v329
        %1499 = vmatpush.msra.mxu0 %v328
        %1500 = vmatpush.msra.mxu0 %v327
        %1501 = vmatpush.msra.mxu0 %v326
        %1502 = vmatpush.msra.mxu0 %v325
        %1503 = vmatpush.msra.mxu0 %v324
        %1504 = vmatpush.msra.mxu0 %v323
        %1505 = vmatpush.msra.mxu0 %v322
        %1506 = vmatpush.msra.mxu0 %v321
        %1507 = vmatpush.msra.mxu0 %v320
        %1508 = vmatpush.msra.mxu0 %v319
        %1509 = vmatpush.msra.mxu0 %v318
        %1510 = vmatpush.msra.mxu0 %v317
        %1511 = vmatpush.msra.mxu0 %v316
        %1512 = vmatpush.msra.mxu0 %v315
        %1513 = vmatpush.msra.mxu0 %v314
        %1514 = vmatmul.f32.gmra.mxu0 %v1310
        %v1515 = vpop.f32.mrf.mxu0
        %v1516 = vadd.f32 %v1493, %v1515
        %1517 = vmatmul.f32.gmra.mxu0 %v1311
        %v1518 = vpop.f32.mrf.mxu0
        %v1519 = vadd.f32 %v1496, %v1518
        %1520 = vdwg.mxu0
        %1521 = vmatpush.msra.mxu0 %v379
        %1522 = vmatpush.msra.mxu0 %v378
        %1523 = vmatpush.msra.mxu0 %v377
        %1524 = vmatpush.msra.mxu0 %v376
        %1525 = vmatpush.msra.mxu0 %v375
        %1526 = vmatpush.msra.mxu0 %v374
        %1527 = vmatpush.msra.mxu0 %v373
        %1528 = vmatpush.msra.mxu0 %v372
        %1529 = vmatpush.msra.mxu0 %v371
        %1530 = vmatpush.msra.mxu0 %v370
        %1531 = vmatpush.msra.mxu0 %v369
        %1532 = vmatpush.msra.mxu0 %v368
        %1533 = vmatpush.msra.mxu0 %v367
        %1534 = vmatpush.msra.mxu0 %v366
        %1535 = vmatpush.msra.mxu0 %v365
        %1536 = vmatpush.msra.mxu0 %v364
        %1537 = vmatmul.f32.gmra.mxu0 %v1473
        %v1538 = vpop.f32.mrf.mxu0
        %v1539 = vadd.f32 0.0, %v1538
        %1540 = vmatmul.f32.gmra.mxu0 %v1474
        %v1541 = vpop.f32.mrf.mxu0
        %v1542 = vadd.f32 0.0, %v1541
        %1543 = vdwg.mxu0
        %1544 = vmatpush.msra.mxu0 %v395
        %1545 = vmatpush.msra.mxu0 %v394
        %1546 = vmatpush.msra.mxu0 %v393
        %1547 = vmatpush.msra.mxu0 %v392
        %1548 = vmatpush.msra.mxu0 %v391
        %1549 = vmatpush.msra.mxu0 %v390
        %1550 = vmatpush.msra.mxu0 %v389
        %1551 = vmatpush.msra.mxu0 %v388
        %1552 = vmatpush.msra.mxu0 %v387
        %1553 = vmatpush.msra.mxu0 %v386
        %1554 = vmatpush.msra.mxu0 %v385
        %1555 = vmatpush.msra.mxu0 %v384
        %1556 = vmatpush.msra.mxu0 %v383
        %1557 = vmatpush.msra.mxu0 %v382
        %1558 = vmatpush.msra.mxu0 %v381
        %1559 = vmatpush.msra.mxu0 %v380
        %1560 = vmatmul.f32.gmra.mxu0 %v1310
        %v1561 = vpop.f32.mrf.mxu0
        %v1562 = vadd.f32 %v1539, %v1561
        %1563 = vmatmul.f32.gmra.mxu0 %v1311
        %v1564 = vpop.f32.mrf.mxu0
        %v1565 = vadd.f32 %v1542, %v1564
        %1566 = vdwg.mxu0
        %v1569 = vrot.slane %v1516, 7
        %v1570 = vrot.slane %v1519, 7
        %v1571 = vsel %vm491, %v1569, %v1570
        %v1574 = vsel %vm491, 0.0, %v1569
        %1575 = vmatpush.msra.mxu0 %v346
        %1576 = vmatpush.msra.mxu0 %v345
        %1577 = vmatpush.msra.mxu0 %v344
        %1578 = vmatpush.msra.mxu0 %v343
        %1579 = vmatpush.msra.mxu0 %v342
        %1580 = vmatpush.msra.mxu0 %v341
        %1581 = vmatpush.msra.mxu0 %v340
        %1582 = vmatpush.msra.mxu0 %v339
        %1583 = vmatpush.msra.mxu0 %v338
        %1584 = vmatpush.msra.mxu0 %v337
        %1585 = vmatpush.msra.mxu0 %v336
        %1586 = vmatpush.msra.mxu0 %v335
        %1587 = vmatpush.msra.mxu0 %v334
        %1588 = vmatpush.msra.mxu0 %v333
        %1589 = vmatpush.msra.mxu0 %v332
        %1590 = vmatpush.msra.mxu0 %v331
        %1591 = vmatmul.f32.gmra.mxu0 %v1473
        %v1592 = vpop.f32.mrf.mxu0
        %v1593 = vadd.f32 %v1574, %v1592
        %1594 = vmatmul.f32.gmra.mxu0 %v1474
        %v1595 = vpop.f32.mrf.mxu0
        %v1596 = vadd.f32 %v1571, %v1595
        %1597 = vdwg.mxu0
        %1598 = vmatpush.msra.mxu0 %v362
        %1599 = vmatpush.msra.mxu0 %v361
        %1600 = vmatpush.msra.mxu0 %v360
        %1601 = vmatpush.msra.mxu0 %v359
        %1602 = vmatpush.msra.mxu0 %v358
        %1603 = vmatpush.msra.mxu0 %v357
        %1604 = vmatpush.msra.mxu0 %v356
        %1605 = vmatpush.msra.mxu0 %v355
        %1606 = vmatpush.msra.mxu0 %v354
        %1607 = vmatpush.msra.mxu0 %v353
        %1608 = vmatpush.msra.mxu0 %v352
        %1609 = vmatpush.msra.mxu0 %v351
        %1610 = vmatpush.msra.mxu0 %v350
        %1611 = vmatpush.msra.mxu0 %v349
        %1612 = vmatpush.msra.mxu0 %v348
        %1613 = vmatpush.msra.mxu0 %v347
        %1614 = vmatmul.f32.gmra.mxu0 %v1310
        %v1615 = vpop.f32.mrf.mxu0
        %v1616 = vadd.f32 %v1593, %v1615
        %1617 = vmatmul.f32.gmra.mxu0 %v1311
        %v1618 = vpop.f32.mrf.mxu0
        %v1619 = vadd.f32 %v1596, %v1618
        %1620 = vdwg.mxu0
        %v1623 = vrot.slane %v1562, 1
        %v1624 = vrot.slane %v1565, 1
        %v1625 = vsel %vm546, %v1623, %v1624
        %v1628 = vsel %vm546, %v1624, 0.0
        %v1629 = vadd.f32 %v1616, %v1625
        %v1630 = vadd.f32 %v1619, %v1628
        %v1631 = vadd.f32 %v1629, %v556
        %v1632 = vadd.f32 %v1630, %v556
        %v1633 = vtanh.pop %v1631
        %v1634 = vtanh.pop %v1632
        %1635 = vmatpush.msra.mxu0 %v578
        %1636 = vmatpush.msra.mxu0 %v577
        %1637 = vmatpush.msra.mxu0 %v576
        %1638 = vmatpush.msra.mxu0 %v575
        %1639 = vmatpush.msra.mxu0 %v574
        %1640 = vmatpush.msra.mxu0 %v573
        %1641 = vmatpush.msra.mxu0 %v572
        %1642 = vmatpush.msra.mxu0 %v571
        %1643 = vmatpush.msra.mxu0 %v570
        %1644 = vmatpush.msra.mxu0 %v569
        %1645 = vmatpush.msra.mxu0 %v568
        %1646 = vmatpush.msra.mxu0 %v567
        %1647 = vmatpush.msra.mxu0 %v566
        %1648 = vmatpush.msra.mxu0 %v565
        %1649 = vmatpush.msra.mxu0 %v564
        %1650 = vmatpush.msra.mxu0 %v563
        %1651 = vmatmul.f32.gmra.mxu0 %v1633
        %v1652 = vpop.f32.mrf.mxu0
        %v1653 = vadd.f32 0.0, %v1652
        %1654 = vmatmul.f32.gmra.mxu0 %v1634
        %v1655 = vpop.f32.mrf.mxu0
        %v1656 = vadd.f32 0.0, %v1655
        %1657 = vdwg.mxu0
        %1658 = vmatpush.msra.mxu0 %v594
        %1659 = vmatpush.msra.mxu0 %v593
        %1660 = vmatpush.msra.mxu0 %v592
        %1661 = vmatpush.msra.mxu0 %v591
        %1662 = vmatpush.msra.mxu0 %v590
        %1663 = vmatpush.msra.mxu0 %v589
        %1664 = vmatpush.msra.mxu0 %v588
        %1665 = vmatpush.msra.mxu0 %v587
        %1666 = vmatpush.msra.mxu0 %v586
        %1667 = vmatpush.msra.mxu0 %v585
        %1668 = vmatpush.msra.mxu0 %v584
        %1669 = vmatpush.msra.mxu0 %v583
        %1670 = vmatpush.msra.mxu0 %v582
        %1671 = vmatpush.msra.mxu0 %v581
        %1672 = vmatpush.msra.mxu0 %v580
        %1673 = vmatpush.msra.mxu0 %v579
        %1674 = vmatmul.f32.gmra.mxu0 %v1470
        %v1675 = vpop.f32.mrf.mxu0
        %v1676 = vadd.f32 %v1653, %v1675
        %1677 = vmatmul.f32.gmra.mxu0 %v1471
        %v1678 = vpop.f32.mrf.mxu0
        %v1679 = vadd.f32 %v1656, %v1678
        %1680 = vdwg.mxu0
        %1681 = vmatpush.msra.mxu0 %v644
        %1682 = vmatpush.msra.mxu0 %v643
        %1683 = vmatpush.msra.mxu0 %v642
        %1684 = vmatpush.msra.mxu0 %v641
        %1685 = vmatpush.msra.mxu0 %v640
        %1686 = vmatpush.msra.mxu0 %v639
        %1687 = vmatpush.msra.mxu0 %v638
        %1688 = vmatpush.msra.mxu0 %v637
        %1689 = vmatpush.msra.mxu0 %v636
        %1690 = vmatpush.msra.mxu0 %v635
        %1691 = vmatpush.msra.mxu0 %v634
        %1692 = vmatpush.msra.mxu0 %v633
        %1693 = vmatpush.msra.mxu0 %v632
        %1694 = vmatpush.msra.mxu0 %v631
        %1695 = vmatpush.msra.mxu0 %v630
        %1696 = vmatpush.msra.mxu0 %v629
        %1697 = vmatmul.f32.gmra.mxu0 %v1633
        %v1698 = vpop.f32.mrf.mxu0
        %v1699 = vadd.f32 0.0, %v1698
        %1700 = vmatmul.f32.gmra.mxu0 %v1634
        %v1701 = vpop.f32.mrf.mxu0
        %v1702 = vadd.f32 0.0, %v1701
        %1703 = vdwg.mxu0
        %1704 = vmatpush.msra.mxu0 %v660
        %1705 = vmatpush.msra.mxu0 %v659
        %1706 = vmatpush.msra.mxu0 %v658
        %1707 = vmatpush.msra.mxu0 %v657
        %1708 = vmatpush.msra.mxu0 %v656
        %1709 = vmatpush.msra.mxu0 %v655
        %1710 = vmatpush.msra.mxu0 %v654
        %1711 = vmatpush.msra.mxu0 %v653
        %1712 = vmatpush.msra.mxu0 %v652
        %1713 = vmatpush.msra.mxu0 %v651
        %1714 = vmatpush.msra.mxu0 %v650
        %1715 = vmatpush.msra.mxu0 %v649
        %1716 = vmatpush.msra.mxu0 %v648
        %1717 = vmatpush.msra.mxu0 %v647
        %1718 = vmatpush.msra.mxu0 %v646
        %1719 = vmatpush.msra.mxu0 %v645
        %1720 = vmatmul.f32.gmra.mxu0 %v1470
        %v1721 = vpop.f32.mrf.mxu0
        %v1722 = vadd.f32 %v1699, %v1721
        %1723 = vmatmul.f32.gmra.mxu0 %v1471
        %v1724 = vpop.f32.mrf.mxu0
        %v1725 = vadd.f32 %v1702, %v1724
        %1726 = vdwg.mxu0
        %v1729 = vrot.slane %v1676, 7
        %v1730 = vrot.slane %v1679, 7
        %v1731 = vsel %vm491, %v1729, %v1730
        %v1734 = vsel %vm491, 0.0, %v1729
        %1735 = vmatpush.msra.mxu0 %v611
        %1736 = vmatpush.msra.mxu0 %v610
        %1737 = vmatpush.msra.mxu0 %v609
        %1738 = vmatpush.msra.mxu0 %v608
        %1739 = vmatpush.msra.mxu0 %v607
        %1740 = vmatpush.msra.mxu0 %v606
        %1741 = vmatpush.msra.mxu0 %v605
        %1742 = vmatpush.msra.mxu0 %v604
        %1743 = vmatpush.msra.mxu0 %v603
        %1744 = vmatpush.msra.mxu0 %v602
        %1745 = vmatpush.msra.mxu0 %v601
        %1746 = vmatpush.msra.mxu0 %v600
        %1747 = vmatpush.msra.mxu0 %v599
        %1748 = vmatpush.msra.mxu0 %v598
        %1749 = vmatpush.msra.mxu0 %v597
        %1750 = vmatpush.msra.mxu0 %v596
        %1751 = vmatmul.f32.gmra.mxu0 %v1633
        %v1752 = vpop.f32.mrf.mxu0
        %v1753 = vadd.f32 %v1734, %v1752
        %1754 = vmatmul.f32.gmra.mxu0 %v1634
        %v1755 = vpop.f32.mrf.mxu0
        %v1756 = vadd.f32 %v1731, %v1755
        %1757 = vdwg.mxu0
        %1758 = vmatpush.msra.mxu0 %v627
        %1759 = vmatpush.msra.mxu0 %v626
        %1760 = vmatpush.msra.mxu0 %v625
        %1761 = vmatpush.msra.mxu0 %v624
        %1762 = vmatpush.msra.mxu0 %v623
        %1763 = vmatpush.msra.mxu0 %v622
        %1764 = vmatpush.msra.mxu0 %v621
        %1765 = vmatpush.msra.mxu0 %v620
        %1766 = vmatpush.msra.mxu0 %v619
        %1767 = vmatpush.msra.mxu0 %v618
        %1768 = vmatpush.msra.mxu0 %v617
        %1769 = vmatpush.msra.mxu0 %v616
        %1770 = vmatpush.msra.mxu0 %v615
        %1771 = vmatpush.msra.mxu0 %v614
        %1772 = vmatpush.msra.mxu0 %v613
        %1773 = vmatpush.msra.mxu0 %v612
        %1774 = vmatmul.f32.gmra.mxu0 %v1470
        %v1775 = vpop.f32.mrf.mxu0
        %v1776 = vadd.f32 %v1753, %v1775
        %1777 = vmatmul.f32.gmra.mxu0 %v1471
        %v1778 = vpop.f32.mrf.mxu0
        %v1779 = vadd.f32 %v1756, %v1778
        %1780 = vdwg.mxu0
        %v1783 = vrot.slane %v1722, 1
        %v1784 = vrot.slane %v1725, 1
        %v1785 = vsel %vm546, %v1783, %v1784
        %v1788 = vsel %vm546, %v1784, 0.0
        %v1789 = vadd.f32 %v1776, %v1785
        %v1790 = vadd.f32 %v1779, %v1788
        %v1791 = vadd.f32 %v1789, %v820
        %v1792 = vadd.f32 %v1790, %v820
        %v1793 = vtanh.pop %v1791
        %v1794 = vtanh.pop %v1792
        %s1795 = scalar_lea.vmem %s290, 64
        %v1796 = vld [vmem:[%s1795] sm:$0xff]
        %v1797 = vld [vmem:[%s1795 + $0x8] sm:$0xff]
        %1798 = vmatpush.msra.mxu0 %v313
        %1799 = vmatpush.msra.mxu0 %v312
        %1800 = vmatpush.msra.mxu0 %v311
        %1801 = vmatpush.msra.mxu0 %v310
        %1802 = vmatpush.msra.mxu0 %v309
        %1803 = vmatpush.msra.mxu0 %v308
        %1804 = vmatpush.msra.mxu0 %v307
        %1805 = vmatpush.msra.mxu0 %v306
        %1806 = vmatpush.msra.mxu0 %v305
        %1807 = vmatpush.msra.mxu0 %v304
        %1808 = vmatpush.msra.mxu0 %v303
        %1809 = vmatpush.msra.mxu0 %v302
        %1810 = vmatpush.msra.mxu0 %v301
        %1811 = vmatpush.msra.mxu0 %v300
        %1812 = vmatpush.msra.mxu0 %v299
        %1813 = vmatpush.msra.mxu0 %v298
        %1814 = vmatmul.f32.gmra.mxu0 %v1796
        %v1815 = vpop.f32.mrf.mxu0
        %v1816 = vadd.f32 0.0, %v1815
        %1817 = vmatmul.f32.gmra.mxu0 %v1797
        %v1818 = vpop.f32.mrf.mxu0
        %v1819 = vadd.f32 0.0, %v1818
        %1820 = vdwg.mxu0
        %1821 = vmatpush.msra.mxu0 %v329
        %1822 = vmatpush.msra.mxu0 %v328
        %1823 = vmatpush.msra.mxu0 %v327
        %1824 = vmatpush.msra.mxu0 %v326
        %1825 = vmatpush.msra.mxu0 %v325
        %1826 = vmatpush.msra.mxu0 %v324
        %1827 = vmatpush.msra.mxu0 %v323
        %1828 = vmatpush.msra.mxu0 %v322
        %1829 = vmatpush.msra.mxu0 %v321
        %1830 = vmatpush.msra.mxu0 %v320
        %1831 = vmatpush.msra.mxu0 %v319
        %1832 = vmatpush.msra.mxu0 %v318
        %1833 = vmatpush.msra.mxu0 %v317
        %1834 = vmatpush.msra.mxu0 %v316
        %1835 = vmatpush.msra.mxu0 %v315
        %1836 = vmatpush.msra.mxu0 %v314
        %1837 = vmatmul.f32.gmra.mxu0 %v1633
        %v1838 = vpop.f32.mrf.mxu0
        %v1839 = vadd.f32 %v1816, %v1838
        %1840 = vmatmul.f32.gmra.mxu0 %v1634
        %v1841 = vpop.f32.mrf.mxu0
        %v1842 = vadd.f32 %v1819, %v1841
        %1843 = vdwg.mxu0
        %1844 = vmatpush.msra.mxu0 %v379
        %1845 = vmatpush.msra.mxu0 %v378
        %1846 = vmatpush.msra.mxu0 %v377
        %1847 = vmatpush.msra.mxu0 %v376
        %1848 = vmatpush.msra.mxu0 %v375
        %1849 = vmatpush.msra.mxu0 %v374
        %1850 = vmatpush.msra.mxu0 %v373
        %1851 = vmatpush.msra.mxu0 %v372
        %1852 = vmatpush.msra.mxu0 %v371
        %1853 = vmatpush.msra.mxu0 %v370
        %1854 = vmatpush.msra.mxu0 %v369
        %1855 = vmatpush.msra.mxu0 %v368
        %1856 = vmatpush.msra.mxu0 %v367
        %1857 = vmatpush.msra.mxu0 %v366
        %1858 = vmatpush.msra.mxu0 %v365
        %1859 = vmatpush.msra.mxu0 %v364
        %1860 = vmatmul.f32.gmra.mxu0 %v1796
        %v1861 = vpop.f32.mrf.mxu0
        %v1862 = vadd.f32 0.0, %v1861
        %1863 = vmatmul.f32.gmra.mxu0 %v1797
        %v1864 = vpop.f32.mrf.mxu0
        %v1865 = vadd.f32 0.0, %v1864
        %1866 = vdwg.mxu0
        %1867 = vmatpush.msra.mxu0 %v395
        %1868 = vmatpush.msra.mxu0 %v394
        %1869 = vmatpush.msra.mxu0 %v393
        %1870 = vmatpush.msra.mxu0 %v392
        %1871 = vmatpush.msra.mxu0 %v391
        %1872 = vmatpush.msra.mxu0 %v390
        %1873 = vmatpush.msra.mxu0 %v389
        %1874 = vmatpush.msra.mxu0 %v388
        %1875 = vmatpush.msra.mxu0 %v387
        %1876 = vmatpush.msra.mxu0 %v386
        %1877 = vmatpush.msra.mxu0 %v385
        %1878 = vmatpush.msra.mxu0 %v384
        %1879 = vmatpush.msra.mxu0 %v383
        %1880 = vmatpush.msra.mxu0 %v382
        %1881 = vmatpush.msra.mxu0 %v381
        %1882 = vmatpush.msra.mxu0 %v380
        %1883 = vmatmul.f32.gmra.mxu0 %v1633
        %v1884 = vpop.f32.mrf.mxu0
        %v1885 = vadd.f32 %v1862, %v1884
        %1886 = vmatmul.f32.gmra.mxu0 %v1634
        %v1887 = vpop.f32.mrf.mxu0
        %v1888 = vadd.f32 %v1865, %v1887
        %1889 = vdwg.mxu0
        %v1892 = vrot.slane %v1839, 7
        %v1893 = vrot.slane %v1842, 7
        %v1894 = vsel %vm491, %v1892, %v1893
        %v1897 = vsel %vm491, 0.0, %v1892
        %1898 = vmatpush.msra.mxu0 %v346
        %1899 = vmatpush.msra.mxu0 %v345
        %1900 = vmatpush.msra.mxu0 %v344
        %1901 = vmatpush.msra.mxu0 %v343
        %1902 = vmatpush.msra.mxu0 %v342
        %1903 = vmatpush.msra.mxu0 %v341
        %1904 = vmatpush.msra.mxu0 %v340
        %1905 = vmatpush.msra.mxu0 %v339
        %1906 = vmatpush.msra.mxu0 %v338
        %1907 = vmatpush.msra.mxu0 %v337
        %1908 = vmatpush.msra.mxu0 %v336
        %1909 = vmatpush.msra.mxu0 %v335
        %1910 = vmatpush.msra.mxu0 %v334
        %1911 = vmatpush.msra.mxu0 %v333
        %1912 = vmatpush.msra.mxu0 %v332
        %1913 = vmatpush.msra.mxu0 %v331
        %1914 = vmatmul.f32.gmra.mxu0 %v1796
        %v1915 = vpop.f32.mrf.mxu0
        %v1916 = vadd.f32 %v1897, %v1915
        %1917 = vmatmul.f32.gmra.mxu0 %v1797
        %v1918 = vpop.f32.mrf.mxu0
        %v1919 = vadd.f32 %v1894, %v1918
        %1920 = vdwg.mxu0
        %1921 = vmatpush.msra.mxu0 %v362
        %1922 = vmatpush.msra.mxu0 %v361
        %1923 = vmatpush.msra.mxu0 %v360
        %1924 = vmatpush.msra.mxu0 %v359
        %1925 = vmatpush.msra.mxu0 %v358
        %1926 = vmatpush.msra.mxu0 %v357
        %1927 = vmatpush.msra.mxu0 %v356
        %1928 = vmatpush.msra.mxu0 %v355
        %1929 = vmatpush.msra.mxu0 %v354
        %1930 = vmatpush.msra.mxu0 %v353
        %1931 = vmatpush.msra.mxu0 %v352
        %1932 = vmatpush.msra.mxu0 %v351
        %1933 = vmatpush.msra.mxu0 %v350
        %1934 = vmatpush.msra.mxu0 %v349
        %1935 = vmatpush.msra.mxu0 %v348
        %1936 = vmatpush.msra.mxu0 %v347
        %1937 = vmatmul.f32.gmra.mxu0 %v1633
        %v1938 = vpop.f32.mrf.mxu0
        %v1939 = vadd.f32 %v1916, %v1938
        %1940 = vmatmul.f32.gmra.mxu0 %v1634
        %v1941 = vpop.f32.mrf.mxu0
        %v1942 = vadd.f32 %v1919, %v1941
        %1943 = vdwg.mxu0
        %v1946 = vrot.slane %v1885, 1
        %v1947 = vrot.slane %v1888, 1
        %v1948 = vsel %vm546, %v1946, %v1947
        %v1951 = vsel %vm546, %v1947, 0.0
        %v1952 = vadd.f32 %v1939, %v1948
        %v1953 = vadd.f32 %v1942, %v1951
        %v1954 = vadd.f32 %v1952, %v556
        %v1955 = vadd.f32 %v1953, %v556
        %v1956 = vtanh.pop %v1954
        %v1957 = vtanh.pop %v1955
        %1958 = vmatpush.msra.mxu0 %v578
        %1959 = vmatpush.msra.mxu0 %v577
        %1960 = vmatpush.msra.mxu0 %v576
        %1961 = vmatpush.msra.mxu0 %v575
        %1962 = vmatpush.msra.mxu0 %v574
        %1963 = vmatpush.msra.mxu0 %v573
        %1964 = vmatpush.msra.mxu0 %v572
        %1965 = vmatpush.msra.mxu0 %v571
        %1966 = vmatpush.msra.mxu0 %v570
        %1967 = vmatpush.msra.mxu0 %v569
        %1968 = vmatpush.msra.mxu0 %v568
        %1969 = vmatpush.msra.mxu0 %v567
        %1970 = vmatpush.msra.mxu0 %v566
        %1971 = vmatpush.msra.mxu0 %v565
        %1972 = vmatpush.msra.mxu0 %v564
        %1973 = vmatpush.msra.mxu0 %v563
        %1974 = vmatmul.f32.gmra.mxu0 %v1956
        %v1975 = vpop.f32.mrf.mxu0
        %v1976 = vadd.f32 0.0, %v1975
        %1977 = vmatmul.f32.gmra.mxu0 %v1957
        %v1978 = vpop.f32.mrf.mxu0
        %v1979 = vadd.f32 0.0, %v1978
        %1980 = vdwg.mxu0
        %1981 = vmatpush.msra.mxu0 %v594
        %1982 = vmatpush.msra.mxu0 %v593
        %1983 = vmatpush.msra.mxu0 %v592
        %1984 = vmatpush.msra.mxu0 %v591
        %1985 = vmatpush.msra.mxu0 %v590
        %1986 = vmatpush.msra.mxu0 %v589
        %1987 = vmatpush.msra.mxu0 %v588
        %1988 = vmatpush.msra.mxu0 %v587
        %1989 = vmatpush.msra.mxu0 %v586
        %1990 = vmatpush.msra.mxu0 %v585
        %1991 = vmatpush.msra.mxu0 %v584
        %1992 = vmatpush.msra.mxu0 %v583
        %1993 = vmatpush.msra.mxu0 %v582
        %1994 = vmatpush.msra.mxu0 %v581
        %1995 = vmatpush.msra.mxu0 %v580
        %1996 = vmatpush.msra.mxu0 %v579
        %1997 = vmatmul.f32.gmra.mxu0 %v1793
        %v1998 = vpop.f32.mrf.mxu0
        %v1999 = vadd.f32 %v1976, %v1998
        %2000 = vmatmul.f32.gmra.mxu0 %v1794
        %v2001 = vpop.f32.mrf.mxu0
        %v2002 = vadd.f32 %v1979, %v2001
        %2003 = vdwg.mxu0
        %2004 = vmatpush.msra.mxu0 %v644
        %2005 = vmatpush.msra.mxu0 %v643
        %2006 = vmatpush.msra.mxu0 %v642
        %2007 = vmatpush.msra.mxu0 %v641
        %2008 = vmatpush.msra.mxu0 %v640
        %2009 = vmatpush.msra.mxu0 %v639
        %2010 = vmatpush.msra.mxu0 %v638
        %2011 = vmatpush.msra.mxu0 %v637
        %2012 = vmatpush.msra.mxu0 %v636
        %2013 = vmatpush.msra.mxu0 %v635
        %2014 = vmatpush.msra.mxu0 %v634
        %2015 = vmatpush.msra.mxu0 %v633
        %2016 = vmatpush.msra.mxu0 %v632
        %2017 = vmatpush.msra.mxu0 %v631
        %2018 = vmatpush.msra.mxu0 %v630
        %2019 = vmatpush.msra.mxu0 %v629
        %2020 = vmatmul.f32.gmra.mxu0 %v1956
        %v2021 = vpop.f32.mrf.mxu0
        %v2022 = vadd.f32 0.0, %v2021
        %2023 = vmatmul.f32.gmra.mxu0 %v1957
        %v2024 = vpop.f32.mrf.mxu0
        %v2025 = vadd.f32 0.0, %v2024
        %2026 = vdwg.mxu0
        %2027 = vmatpush.msra.mxu0 %v660
        %2028 = vmatpush.msra.mxu0 %v659
        %2029 = vmatpush.msra.mxu0 %v658
        %2030 = vmatpush.msra.mxu0 %v657
        %2031 = vmatpush.msra.mxu0 %v656
        %2032 = vmatpush.msra.mxu0 %v655
        %2033 = vmatpush.msra.mxu0 %v654
        %2034 = vmatpush.msra.mxu0 %v653
        %2035 = vmatpush.msra.mxu0 %v652
        %2036 = vmatpush.msra.mxu0 %v651
        %2037 = vmatpush.msra.mxu0 %v650
        %2038 = vmatpush.msra.mxu0 %v649
        %2039 = vmatpush.msra.mxu0 %v648
        %2040 = vmatpush.msra.mxu0 %v647
        %2041 = vmatpush.msra.mxu0 %v646
        %2042 = vmatpush.msra.mxu0 %v645
        %2043 = vmatmul.f32.gmra.mxu0 %v1793
        %v2044 = vpop.f32.mrf.mxu0
        %v2045 = vadd.f32 %v2022, %v2044
        %2046 = vmatmul.f32.gmra.mxu0 %v1794
        %v2047 = vpop.f32.mrf.mxu0
        %v2048 = vadd.f32 %v2025, %v2047
        %2049 = vdwg.mxu0
        %v2052 = vrot.slane %v1999, 7
        %v2053 = vrot.slane %v2002, 7
        %v2054 = vsel %vm491, %v2052, %v2053
        %v2057 = vsel %vm491, 0.0, %v2052
        %2058 = vmatpush.msra.mxu0 %v611
        %2059 = vmatpush.msra.mxu0 %v610
        %2060 = vmatpush.msra.mxu0 %v609
        %2061 = vmatpush.msra.mxu0 %v608
        %2062 = vmatpush.msra.mxu0 %v607
        %2063 = vmatpush.msra.mxu0 %v606
        %2064 = vmatpush.msra.mxu0 %v605
        %2065 = vmatpush.msra.mxu0 %v604
        %2066 = vmatpush.msra.mxu0 %v603
        %2067 = vmatpush.msra.mxu0 %v602
        %2068 = vmatpush.msra.mxu0 %v601
        %2069 = vmatpush.msra.mxu0 %v600
        %2070 = vmatpush.msra.mxu0 %v599
        %2071 = vmatpush.msra.mxu0 %v598
        %2072 = vmatpush.msra.mxu0 %v597
        %2073 = vmatpush.msra.mxu0 %v596
        %2074 = vmatmul.f32.gmra.mxu0 %v1956
        %v2075 = vpop.f32.mrf.mxu0
        %v2076 = vadd.f32 %v2057, %v2075
        %2077 = vmatmul.f32.gmra.mxu0 %v1957
        %v2078 = vpop.f32.mrf.mxu0
        %v2079 = vadd.f32 %v2054, %v2078
        %2080 = vdwg.mxu0
        %2081 = vmatpush.msra.mxu0 %v627
        %2082 = vmatpush.msra.mxu0 %v626
        %2083 = vmatpush.msra.mxu0 %v625
        %2084 = vmatpush.msra.mxu0 %v624
        %2085 = vmatpush.msra.mxu0 %v623
        %2086 = vmatpush.msra.mxu0 %v622
        %2087 = vmatpush.msra.mxu0 %v621
        %2088 = vmatpush.msra.mxu0 %v620
        %2089 = vmatpush.msra.mxu0 %v619
        %2090 = vmatpush.msra.mxu0 %v618
        %2091 = vmatpush.msra.mxu0 %v617
        %2092 = vmatpush.msra.mxu0 %v616
        %2093 = vmatpush.msra.mxu0 %v615
        %2094 = vmatpush.msra.mxu0 %v614
        %2095 = vmatpush.msra.mxu0 %v613
        %2096 = vmatpush.msra.mxu0 %v612
        %2097 = vmatmul.f32.gmra.mxu0 %v1793
        %v2098 = vpop.f32.mrf.mxu0
        %v2099 = vadd.f32 %v2076, %v2098
        %2100 = vmatmul.f32.gmra.mxu0 %v1794
        %v2101 = vpop.f32.mrf.mxu0
        %v2102 = vadd.f32 %v2079, %v2101
        %2103 = vdwg.mxu0
        %v2106 = vrot.slane %v2045, 1
        %v2107 = vrot.slane %v2048, 1
        %v2108 = vsel %vm546, %v2106, %v2107
        %v2111 = vsel %vm546, %v2107, 0.0
        %v2112 = vadd.f32 %v2099, %v2108
        %v2113 = vadd.f32 %v2102, %v2111
        %v2114 = vadd.f32 %v2112, %v820
        %v2115 = vadd.f32 %v2113, %v820
        %v2116 = vtanh.pop %v2114
        %v2117 = vtanh.pop %v2115
        %v2118 = vld [vmem:[%s3] sm:$0xff]
        %v2119 = vld [vmem:[%s3 + $0x8] sm:$0xff]
        %v2120 = vld [vmem:[%s3 + $0x10] sm:$0xff]
        %v2121 = vld [vmem:[%s3 + $0x18] sm:$0xff]
        %v2122 = vld [vmem:[%s3 + $0x20] sm:$0xff]
        %v2123 = vld [vmem:[%s3 + $0x28] sm:$0xff]
        %v2124 = vld [vmem:[%s3 + $0x30] sm:$0xff]
        %v2125 = vld [vmem:[%s3 + $0x38] sm:$0xff]
        %v2126 = vld [vmem:[%s3 + $0x40] sm:$0xff]
        %v2127 = vld [vmem:[%s3 + $0x48] sm:$0xff]
        %v2128 = vld [vmem:[%s3 + $0x50] sm:$0xff]
        %v2129 = vld [vmem:[%s3 + $0x58] sm:$0xff]
        %v2130 = vld [vmem:[%s3 + $0x60] sm:$0xff]
        %v2131 = vld [vmem:[%s3 + $0x68] sm:$0xff]
        %v2132 = vld [vmem:[%s3 + $0x70] sm:$0xff]
        %v2133 = vld [vmem:[%s3 + $0x78] sm:$0xff]
        %v2134 = vld [vmem:[%s3 + $0x80] sm:$0xff]
        %v2135 = vld [vmem:[%s3 + $0x88] sm:$0xff]
        %v2136 = vld [vmem:[%s3 + $0x90] sm:$0xff]
        %v2137 = vld [vmem:[%s3 + $0x98] sm:$0xff]
        %v2138 = vld [vmem:[%s3 + $0xa0] sm:$0xff]
        %v2139 = vld [vmem:[%s3 + $0xa8] sm:$0xff]
        %v2140 = vld [vmem:[%s3 + $0xb0] sm:$0xff]
        %v2141 = vld [vmem:[%s3 + $0xb8] sm:$0xff]
        %v2142 = vld [vmem:[%s3 + $0xc0] sm:$0xff]
        %v2143 = vld [vmem:[%s3 + $0xc8] sm:$0xff]
        %v2144 = vld [vmem:[%s3 + $0xd0] sm:$0xff]
        %v2145 = vld [vmem:[%s3 + $0xd8] sm:$0xff]
        %v2146 = vld [vmem:[%s3 + $0xe0] sm:$0xff]
        %v2147 = vld [vmem:[%s3 + $0xe8] sm:$0xff]
        %v2148 = vld [vmem:[%s3 + $0xf0] sm:$0xff]
        %v2149 = vld [vmem:[%s3 + $0xf8] sm:$0xff]
        %v2150 = vld [vmem:[%s3 + $0x100] sm:$0xff]
        %v2151 = vld [vmem:[%s3 + $0x108] sm:$0xff]
        %v2152 = vld [vmem:[%s3 + $0x110] sm:$0xff]
        %v2153 = vld [vmem:[%s3 + $0x118] sm:$0xff]
        %v2154 = vld [vmem:[%s3 + $0x120] sm:$0xff]
        %v2155 = vld [vmem:[%s3 + $0x128] sm:$0xff]
        %v2156 = vld [vmem:[%s3 + $0x130] sm:$0xff]
        %v2157 = vld [vmem:[%s3 + $0x138] sm:$0xff]
        %v2158 = vld [vmem:[%s3 + $0x140] sm:$0xff]
        %v2159 = vld [vmem:[%s3 + $0x148] sm:$0xff]
        %v2160 = vld [vmem:[%s3 + $0x150] sm:$0xff]
        %v2161 = vld [vmem:[%s3 + $0x158] sm:$0xff]
        %v2162 = vld [vmem:[%s3 + $0x160] sm:$0xff]
        %v2163 = vld [vmem:[%s3 + $0x168] sm:$0xff]
        %v2164 = vld [vmem:[%s3 + $0x170] sm:$0xff]
        %v2165 = vld [vmem:[%s3 + $0x178] sm:$0xff]
        %v2166 = vld [vmem:[%s3 + $0x180] sm:$0xff]
        %v2167 = vld [vmem:[%s3 + $0x188] sm:$0xff]
        %v2168 = vld [vmem:[%s3 + $0x190] sm:$0xff]
        %v2169 = vld [vmem:[%s3 + $0x198] sm:$0xff]
        %v2170 = vld [vmem:[%s3 + $0x1a0] sm:$0xff]
        %v2171 = vld [vmem:[%s3 + $0x1a8] sm:$0xff]
        %v2172 = vld [vmem:[%s3 + $0x1b0] sm:$0xff]
        %v2173 = vld [vmem:[%s3 + $0x1b8] sm:$0xff]
        %v2174 = vld [vmem:[%s3 + $0x1c0] sm:$0xff]
        %v2175 = vld [vmem:[%s3 + $0x1c8] sm:$0xff]
        %v2176 = vld [vmem:[%s3 + $0x1d0] sm:$0xff]
        %v2177 = vld [vmem:[%s3 + $0x1d8] sm:$0xff]
        %v2178 = vld [vmem:[%s3 + $0x1e0] sm:$0xff]
        %v2179 = vld [vmem:[%s3 + $0x1e8] sm:$0xff]
        %v2180 = vld [vmem:[%s3 + $0x1f0] sm:$0xff]
        %v2181 = vld [vmem:[%s3 + $0x1f8] sm:$0xff]
        %s2182 = scalar_lea.vmem %s3, 512
        %v2183 = vld [vmem:[%s2182] sm:$0xff]
        %v2184 = vld [vmem:[%s2182 + $0x8] sm:$0xff]
        %v2185 = vld [vmem:[%s2182 + $0x10] sm:$0xff]
        %v2186 = vld [vmem:[%s2182 + $0x18] sm:$0xff]
        %v2187 = vld [vmem:[%s2182 + $0x20] sm:$0xff]
        %v2188 = vld [vmem:[%s2182 + $0x28] sm:$0xff]
        %v2189 = vld [vmem:[%s2182 + $0x30] sm:$0xff]
        %v2190 = vld [vmem:[%s2182 + $0x38] sm:$0xff]
        %v2191 = vld [vmem:[%s2182 + $0x40] sm:$0xff]
        %v2192 = vld [vmem:[%s2182 + $0x48] sm:$0xff]
        %v2193 = vld [vmem:[%s2182 + $0x50] sm:$0xff]
        %v2194 = vld [vmem:[%s2182 + $0x58] sm:$0xff]
        %v2195 = vld [vmem:[%s2182 + $0x60] sm:$0xff]
        %v2196 = vld [vmem:[%s2182 + $0x68] sm:$0xff]
        %v2197 = vld [vmem:[%s2182 + $0x70] sm:$0xff]
        %v2198 = vld [vmem:[%s2182 + $0x78] sm:$0xff]
        %v2199 = vld [vmem:[%s2182 + $0x80] sm:$0xff]
        %v2200 = vld [vmem:[%s2182 + $0x88] sm:$0xff]
        %v2201 = vld [vmem:[%s2182 + $0x90] sm:$0xff]
        %v2202 = vld [vmem:[%s2182 + $0x98] sm:$0xff]
        %v2203 = vld [vmem:[%s2182 + $0xa0] sm:$0xff]
        %v2204 = vld [vmem:[%s2182 + $0xa8] sm:$0xff]
        %v2205 = vld [vmem:[%s2182 + $0xb0] sm:$0xff]
        %v2206 = vld [vmem:[%s2182 + $0xb8] sm:$0xff]
        %v2207 = vld [vmem:[%s2182 + $0xc0] sm:$0xff]
        %v2208 = vld [vmem:[%s2182 + $0xc8] sm:$0xff]
        %v2209 = vld [vmem:[%s2182 + $0xd0] sm:$0xff]
        %v2210 = vld [vmem:[%s2182 + $0xd8] sm:$0xff]
        %v2211 = vld [vmem:[%s2182 + $0xe0] sm:$0xff]
        %v2212 = vld [vmem:[%s2182 + $0xe8] sm:$0xff]
        %v2213 = vld [vmem:[%s2182 + $0xf0] sm:$0xff]
        %v2214 = vld [vmem:[%s2182 + $0xf8] sm:$0xff]
        %v2215 = vld [vmem:[%s2182 + $0x100] sm:$0xff]
        %v2216 = vld [vmem:[%s2182 + $0x108] sm:$0xff]
        %v2217 = vld [vmem:[%s2182 + $0x110] sm:$0xff]
        %v2218 = vld [vmem:[%s2182 + $0x118] sm:$0xff]
        %v2219 = vld [vmem:[%s2182 + $0x120] sm:$0xff]
        %v2220 = vld [vmem:[%s2182 + $0x128] sm:$0xff]
        %v2221 = vld [vmem:[%s2182 + $0x130] sm:$0xff]
        %v2222 = vld [vmem:[%s2182 + $0x138] sm:$0xff]
        %v2223 = vld [vmem:[%s2182 + $0x140] sm:$0xff]
        %v2224 = vld [vmem:[%s2182 + $0x148] sm:$0xff]
        %v2225 = vld [vmem:[%s2182 + $0x150] sm:$0xff]
        %v2226 = vld [vmem:[%s2182 + $0x158] sm:$0xff]
        %v2227 = vld [vmem:[%s2182 + $0x160] sm:$0xff]
        %v2228 = vld [vmem:[%s2182 + $0x168] sm:$0xff]
        %v2229 = vld [vmem:[%s2182 + $0x170] sm:$0xff]
        %v2230 = vld [vmem:[%s2182 + $0x178] sm:$0xff]
        %v2231 = vld [vmem:[%s2182 + $0x180] sm:$0xff]
        %v2232 = vld [vmem:[%s2182 + $0x188] sm:$0xff]
        %v2233 = vld [vmem:[%s2182 + $0x190] sm:$0xff]
        %v2234 = vld [vmem:[%s2182 + $0x198] sm:$0xff]
        %v2235 = vld [vmem:[%s2182 + $0x1a0] sm:$0xff]
        %v2236 = vld [vmem:[%s2182 + $0x1a8] sm:$0xff]
        %v2237 = vld [vmem:[%s2182 + $0x1b0] sm:$0xff]
        %v2238 = vld [vmem:[%s2182 + $0x1b8] sm:$0xff]
        %v2239 = vld [vmem:[%s2182 + $0x1c0] sm:$0xff]
        %v2240 = vld [vmem:[%s2182 + $0x1c8] sm:$0xff]
        %v2241 = vld [vmem:[%s2182 + $0x1d0] sm:$0xff]
        %v2242 = vld [vmem:[%s2182 + $0x1d8] sm:$0xff]
        %v2243 = vld [vmem:[%s2182 + $0x1e0] sm:$0xff]
        %v2244 = vld [vmem:[%s2182 + $0x1e8] sm:$0xff]
        %v2245 = vld [vmem:[%s2182 + $0x1f0] sm:$0xff]
        %v2246 = vld [vmem:[%s2182 + $0x1f8] sm:$0xff]
        %s2247 = scalar_lea.vmem %s3, 1024
        %v2248 = vld [vmem:[%s2247] sm:$0xff]
        %v2249 = vld [vmem:[%s2247 + $0x8] sm:$0xff]
        %v2250 = vld [vmem:[%s2247 + $0x10] sm:$0xff]
        %v2251 = vld [vmem:[%s2247 + $0x18] sm:$0xff]
        %v2252 = vld [vmem:[%s2247 + $0x20] sm:$0xff]
        %v2253 = vld [vmem:[%s2247 + $0x28] sm:$0xff]
        %v2254 = vld [vmem:[%s2247 + $0x30] sm:$0xff]
        %v2255 = vld [vmem:[%s2247 + $0x38] sm:$0xff]
        %v2256 = vld [vmem:[%s2247 + $0x40] sm:$0xff]
        %v2257 = vld [vmem:[%s2247 + $0x48] sm:$0xff]
        %v2258 = vld [vmem:[%s2247 + $0x50] sm:$0xff]
        %v2259 = vld [vmem:[%s2247 + $0x58] sm:$0xff]
        %v2260 = vld [vmem:[%s2247 + $0x60] sm:$0xff]
        %v2261 = vld [vmem:[%s2247 + $0x68] sm:$0xff]
        %v2262 = vld [vmem:[%s2247 + $0x70] sm:$0xff]
        %v2263 = vld [vmem:[%s2247 + $0x78] sm:$0xff]
        %v2264 = vld [vmem:[%s2247 + $0x80] sm:$0xff]
        %v2265 = vld [vmem:[%s2247 + $0x88] sm:$0xff]
        %v2266 = vld [vmem:[%s2247 + $0x90] sm:$0xff]
        %v2267 = vld [vmem:[%s2247 + $0x98] sm:$0xff]
        %v2268 = vld [vmem:[%s2247 + $0xa0] sm:$0xff]
        %v2269 = vld [vmem:[%s2247 + $0xa8] sm:$0xff]
        %v2270 = vld [vmem:[%s2247 + $0xb0] sm:$0xff]
        %v2271 = vld [vmem:[%s2247 + $0xb8] sm:$0xff]
        %v2272 = vld [vmem:[%s2247 + $0xc0] sm:$0xff]
        %v2273 = vld [vmem:[%s2247 + $0xc8] sm:$0xff]
        %v2274 = vld [vmem:[%s2247 + $0xd0] sm:$0xff]
        %v2275 = vld [vmem:[%s2247 + $0xd8] sm:$0xff]
        %v2276 = vld [vmem:[%s2247 + $0xe0] sm:$0xff]
        %v2277 = vld [vmem:[%s2247 + $0xe8] sm:$0xff]
        %v2278 = vld [vmem:[%s2247 + $0xf0] sm:$0xff]
        %v2279 = vld [vmem:[%s2247 + $0xf8] sm:$0xff]
        %v2280 = vld [vmem:[%s2247 + $0x100] sm:$0xff]
        %v2281 = vld [vmem:[%s2247 + $0x108] sm:$0xff]
        %v2282 = vld [vmem:[%s2247 + $0x110] sm:$0xff]
        %v2283 = vld [vmem:[%s2247 + $0x118] sm:$0xff]
        %v2284 = vld [vmem:[%s2247 + $0x120] sm:$0xff]
        %v2285 = vld [vmem:[%s2247 + $0x128] sm:$0xff]
        %v2286 = vld [vmem:[%s2247 + $0x130] sm:$0xff]
        %v2287 = vld [vmem:[%s2247 + $0x138] sm:$0xff]
        %v2288 = vld [vmem:[%s2247 + $0x140] sm:$0xff]
        %v2289 = vld [vmem:[%s2247 + $0x148] sm:$0xff]
        %v2290 = vld [vmem:[%s2247 + $0x150] sm:$0xff]
        %v2291 = vld [vmem:[%s2247 + $0x158] sm:$0xff]
        %v2292 = vld [vmem:[%s2247 + $0x160] sm:$0xff]
        %v2293 = vld [vmem:[%s2247 + $0x168] sm:$0xff]
        %v2294 = vld [vmem:[%s2247 + $0x170] sm:$0xff]
        %v2295 = vld [vmem:[%s2247 + $0x178] sm:$0xff]
        %v2296 = vld [vmem:[%s2247 + $0x180] sm:$0xff]
        %v2297 = vld [vmem:[%s2247 + $0x188] sm:$0xff]
        %v2298 = vld [vmem:[%s2247 + $0x190] sm:$0xff]
        %v2299 = vld [vmem:[%s2247 + $0x198] sm:$0xff]
        %v2300 = vld [vmem:[%s2247 + $0x1a0] sm:$0xff]
        %v2301 = vld [vmem:[%s2247 + $0x1a8] sm:$0xff]
        %v2302 = vld [vmem:[%s2247 + $0x1b0] sm:$0xff]
        %v2303 = vld [vmem:[%s2247 + $0x1b8] sm:$0xff]
        %v2304 = vld [vmem:[%s2247 + $0x1c0] sm:$0xff]
        %v2305 = vld [vmem:[%s2247 + $0x1c8] sm:$0xff]
        %v2306 = vld [vmem:[%s2247 + $0x1d0] sm:$0xff]
        %v2307 = vld [vmem:[%s2247 + $0x1d8] sm:$0xff]
        %v2308 = vld [vmem:[%s2247 + $0x1e0] sm:$0xff]
        %v2309 = vld [vmem:[%s2247 + $0x1e8] sm:$0xff]
        %v2310 = vld [vmem:[%s2247 + $0x1f0] sm:$0xff]
        %v2311 = vld [vmem:[%s2247 + $0x1f8] sm:$0xff]
        %v2312 = vld [vmem:[%s4] sm:$0xf]
        %2313 = vmatpush.msra.mxu0 %v2178
        %2314 = vmatpush.msra.mxu0 %v2174
        %2315 = vmatpush.msra.mxu0 %v2170
        %2316 = vmatpush.msra.mxu0 %v2166
        %2317 = vmatpush.msra.mxu0 %v2162
        %2318 = vmatpush.msra.mxu0 %v2158
        %2319 = vmatpush.msra.mxu0 %v2154
        %2320 = vmatpush.msra.mxu0 %v2150
        %2321 = vmatpush.msra.mxu0 %v2146
        %2322 = vmatpush.msra.mxu0 %v2142
        %2323 = vmatpush.msra.mxu0 %v2138
        %2324 = vmatpush.msra.mxu0 %v2134
        %2325 = vmatpush.msra.mxu0 %v2130
        %2326 = vmatpush.msra.mxu0 %v2126
        %2327 = vmatpush.msra.mxu0 %v2122
        %2328 = vmatpush.msra.mxu0 %v2118
        %2329 = vmatmul.f32.gmra.mxu0 %v2116
        %v2330 = vpop.f32.mrf.mxu0
        %v2331 = vadd.f32 0.0, %v2330
        %2332 = vmatmul.f32.gmra.mxu0 %v2117
        %v2333 = vpop.f32.mrf.mxu0
        %v2334 = vadd.f32 0.0, %v2333
        %2335 = vdwg.mxu0
        %2336 = vmatpush.msra.mxu0 %v2179
        %2337 = vmatpush.msra.mxu0 %v2175
        %2338 = vmatpush.msra.mxu0 %v2171
        %2339 = vmatpush.msra.mxu0 %v2167
        %2340 = vmatpush.msra.mxu0 %v2163
        %2341 = vmatpush.msra.mxu0 %v2159
        %2342 = vmatpush.msra.mxu0 %v2155
        %2343 = vmatpush.msra.mxu0 %v2151
        %2344 = vmatpush.msra.mxu0 %v2147
        %2345 = vmatpush.msra.mxu0 %v2143
        %2346 = vmatpush.msra.mxu0 %v2139
        %2347 = vmatpush.msra.mxu0 %v2135
        %2348 = vmatpush.msra.mxu0 %v2131
        %2349 = vmatpush.msra.mxu0 %v2127
        %2350 = vmatpush.msra.mxu0 %v2123
        %2351 = vmatpush.msra.mxu0 %v2119
        %2352 = vmatmul.f32.gmra.mxu0 %v2116
        %v2353 = vpop.f32.mrf.mxu0
        %v2354 = vadd.f32 0.0, %v2353
        %2355 = vmatmul.f32.gmra.mxu0 %v2117
        %v2356 = vpop.f32.mrf.mxu0
        %v2357 = vadd.f32 0.0, %v2356
        %2358 = vdwg.mxu0
        %2359 = vmatpush.msra.mxu0 %v2180
        %2360 = vmatpush.msra.mxu0 %v2176
        %2361 = vmatpush.msra.mxu0 %v2172
        %2362 = vmatpush.msra.mxu0 %v2168
        %2363 = vmatpush.msra.mxu0 %v2164
        %2364 = vmatpush.msra.mxu0 %v2160
        %2365 = vmatpush.msra.mxu0 %v2156
        %2366 = vmatpush.msra.mxu0 %v2152
        %2367 = vmatpush.msra.mxu0 %v2148
        %2368 = vmatpush.msra.mxu0 %v2144
        %2369 = vmatpush.msra.mxu0 %v2140
        %2370 = vmatpush.msra.mxu0 %v2136
        %2371 = vmatpush.msra.mxu0 %v2132
        %2372 = vmatpush.msra.mxu0 %v2128
        %2373 = vmatpush.msra.mxu0 %v2124
        %2374 = vmatpush.msra.mxu0 %v2120
        %2375 = vmatmul.f32.gmra.mxu0 %v2116
        %v2376 = vpop.f32.mrf.mxu0
        %v2377 = vadd.f32 0.0, %v2376
        %2378 = vmatmul.f32.gmra.mxu0 %v2117
        %v2379 = vpop.f32.mrf.mxu0
        %v2380 = vadd.f32 0.0, %v2379
        %2381 = vdwg.mxu0
        %2382 = vmatpush.msra.mxu0 %v2181
        %2383 = vmatpush.msra.mxu0 %v2177
        %2384 = vmatpush.msra.mxu0 %v2173
        %2385 = vmatpush.msra.mxu0 %v2169
        %2386 = vmatpush.msra.mxu0 %v2165
        %2387 = vmatpush.msra.mxu0 %v2161
        %2388 = vmatpush.msra.mxu0 %v2157
        %2389 = vmatpush.msra.mxu0 %v2153
        %2390 = vmatpush.msra.mxu0 %v2149
        %2391 = vmatpush.msra.mxu0 %v2145
        %2392 = vmatpush.msra.mxu0 %v2141
        %2393 = vmatpush.msra.mxu0 %v2137
        %2394 = vmatpush.msra.mxu0 %v2133
        %2395 = vmatpush.msra.mxu0 %v2129
        %2396 = vmatpush.msra.mxu0 %v2125
        %2397 = vmatpush.msra.mxu0 %v2121
        %2398 = vmatmul.f32.gmra.mxu0 %v2116
        %v2399 = vpop.f32.mrf.mxu0
        %v2400 = vadd.f32 0.0, %v2399
        %2401 = vmatmul.f32.gmra.mxu0 %v2117
        %v2402 = vpop.f32.mrf.mxu0
        %v2403 = vadd.f32 0.0, %v2402
        %2404 = vdwg.mxu0
        %2405 = vmatpush.msra.mxu0 %v2308
        %2406 = vmatpush.msra.mxu0 %v2304
        %2407 = vmatpush.msra.mxu0 %v2300
        %2408 = vmatpush.msra.mxu0 %v2296
        %2409 = vmatpush.msra.mxu0 %v2292
        %2410 = vmatpush.msra.mxu0 %v2288
        %2411 = vmatpush.msra.mxu0 %v2284
        %2412 = vmatpush.msra.mxu0 %v2280
        %2413 = vmatpush.msra.mxu0 %v2276
        %2414 = vmatpush.msra.mxu0 %v2272
        %2415 = vmatpush.msra.mxu0 %v2268
        %2416 = vmatpush.msra.mxu0 %v2264
        %2417 = vmatpush.msra.mxu0 %v2260
        %2418 = vmatpush.msra.mxu0 %v2256
        %2419 = vmatpush.msra.mxu0 %v2252
        %2420 = vmatpush.msra.mxu0 %v2248
        %2421 = vmatmul.f32.gmra.mxu0 %v2116
        %v2422 = vpop.f32.mrf.mxu0
        %v2423 = vadd.f32 0.0, %v2422
        %2424 = vmatmul.f32.gmra.mxu0 %v2117
        %v2425 = vpop.f32.mrf.mxu0
        %v2426 = vadd.f32 0.0, %v2425
        %2427 = vdwg.mxu0
        %2428 = vmatpush.msra.mxu0 %v2309
        %2429 = vmatpush.msra.mxu0 %v2305
        %2430 = vmatpush.msra.mxu0 %v2301
        %2431 = vmatpush.msra.mxu0 %v2297
        %2432 = vmatpush.msra.mxu0 %v2293
        %2433 = vmatpush.msra.mxu0 %v2289
        %2434 = vmatpush.msra.mxu0 %v2285
        %2435 = vmatpush.msra.mxu0 %v2281
        %2436 = vmatpush.msra.mxu0 %v2277
        %2437 = vmatpush.msra.mxu0 %v2273
        %2438 = vmatpush.msra.mxu0 %v2269
        %2439 = vmatpush.msra.mxu0 %v2265
        %2440 = vmatpush.msra.mxu0 %v2261
        %2441 = vmatpush.msra.mxu0 %v2257
        %2442 = vmatpush.msra.mxu0 %v2253
        %2443 = vmatpush.msra.mxu0 %v2249
        %2444 = vmatmul.f32.gmra.mxu0 %v2116
        %v2445 = vpop.f32.mrf.mxu0
        %v2446 = vadd.f32 0.0, %v2445
        %2447 = vmatmul.f32.gmra.mxu0 %v2117
        %v2448 = vpop.f32.mrf.mxu0
        %v2449 = vadd.f32 0.0, %v2448
        %2450 = vdwg.mxu0
        %2451 = vmatpush.msra.mxu0 %v2310
        %2452 = vmatpush.msra.mxu0 %v2306
        %2453 = vmatpush.msra.mxu0 %v2302
        %2454 = vmatpush.msra.mxu0 %v2298
        %2455 = vmatpush.msra.mxu0 %v2294
        %2456 = vmatpush.msra.mxu0 %v2290
        %2457 = vmatpush.msra.mxu0 %v2286
        %2458 = vmatpush.msra.mxu0 %v2282
        %2459 = vmatpush.msra.mxu0 %v2278
        %2460 = vmatpush.msra.mxu0 %v2274
        %2461 = vmatpush.msra.mxu0 %v2270
        %2462 = vmatpush.msra.mxu0 %v2266
        %2463 = vmatpush.msra.mxu0 %v2262
        %2464 = vmatpush.msra.mxu0 %v2258
        %2465 = vmatpush.msra.mxu0 %v2254
        %2466 = vmatpush.msra.mxu0 %v2250
        %2467 = vmatmul.f32.gmra.mxu0 %v2116
        %v2468 = vpop.f32.mrf.mxu0
        %v2469 = vadd.f32 0.0, %v2468
        %2470 = vmatmul.f32.gmra.mxu0 %v2117
        %v2471 = vpop.f32.mrf.mxu0
        %v2472 = vadd.f32 0.0, %v2471
        %2473 = vdwg.mxu0
        %2474 = vmatpush.msra.mxu0 %v2311
        %2475 = vmatpush.msra.mxu0 %v2307
        %2476 = vmatpush.msra.mxu0 %v2303
        %2477 = vmatpush.msra.mxu0 %v2299
        %2478 = vmatpush.msra.mxu0 %v2295
        %2479 = vmatpush.msra.mxu0 %v2291
        %2480 = vmatpush.msra.mxu0 %v2287
        %2481 = vmatpush.msra.mxu0 %v2283
        %2482 = vmatpush.msra.mxu0 %v2279
        %2483 = vmatpush.msra.mxu0 %v2275
        %2484 = vmatpush.msra.mxu0 %v2271
        %2485 = vmatpush.msra.mxu0 %v2267
        %2486 = vmatpush.msra.mxu0 %v2263
        %2487 = vmatpush.msra.mxu0 %v2259
        %2488 = vmatpush.msra.mxu0 %v2255
        %2489 = vmatpush.msra.mxu0 %v2251
        %2490 = vmatmul.f32.gmra.mxu0 %v2116
        %v2491 = vpop.f32.mrf.mxu0
        %v2492 = vadd.f32 0.0, %v2491
        %2493 = vmatmul.f32.gmra.mxu0 %v2117
        %v2494 = vpop.f32.mrf.mxu0
        %v2495 = vadd.f32 0.0, %v2494
        %2496 = vdwg.mxu0
        %v2505 = vrot.slane %v2331, 7
        %v2506 = vrot.slane %v2354, 7
        %v2507 = vrot.slane %v2377, 7
        %v2508 = vrot.slane %v2400, 7
        %v2509 = vrot.slane %v2334, 7
        %v2510 = vsel %vm491, %v2505, %v2509
        %v2511 = vrot.slane %v2357, 7
        %v2512 = vsel %vm491, %v2506, %v2511
        %v2513 = vrot.slane %v2380, 7
        %v2514 = vsel %vm491, %v2507, %v2513
        %v2515 = vrot.slane %v2403, 7
        %v2516 = vsel %vm491, %v2508, %v2515
        %v2525 = vsel %vm491, 0.0, %v2505
        %v2526 = vsel %vm491, 0.0, %v2506
        %v2527 = vsel %vm491, 0.0, %v2507
        %v2528 = vsel %vm491, 0.0, %v2508
        %2529 = vmatpush.msra.mxu0 %v2243
        %2530 = vmatpush.msra.mxu0 %v2239
        %2531 = vmatpush.msra.mxu0 %v2235
        %2532 = vmatpush.msra.mxu0 %v2231
        %2533 = vmatpush.msra.mxu0 %v2227
        %2534 = vmatpush.msra.mxu0 %v2223
        %2535 = vmatpush.msra.mxu0 %v2219
        %2536 = vmatpush.msra.mxu0 %v2215
        %2537 = vmatpush.msra.mxu0 %v2211
        %2538 = vmatpush.msra.mxu0 %v2207
        %2539 = vmatpush.msra.mxu0 %v2203
        %2540 = vmatpush.msra.mxu0 %v2199
        %2541 = vmatpush.msra.mxu0 %v2195
        %2542 = vmatpush.msra.mxu0 %v2191
        %2543 = vmatpush.msra.mxu0 %v2187
        %2544 = vmatpush.msra.mxu0 %v2183
        %2545 = vmatmul.f32.gmra.mxu0 %v2116
        %v2546 = vpop.f32.mrf.mxu0
        %v2547 = vadd.f32 %v2525, %v2546
        %2548 = vmatmul.f32.gmra.mxu0 %v2117
        %v2549 = vpop.f32.mrf.mxu0
        %v2550 = vadd.f32 %v2510, %v2549
        %2551 = vdwg.mxu0
        %2552 = vmatpush.msra.mxu0 %v2244
        %2553 = vmatpush.msra.mxu0 %v2240
        %2554 = vmatpush.msra.mxu0 %v2236
        %2555 = vmatpush.msra.mxu0 %v2232
        %2556 = vmatpush.msra.mxu0 %v2228
        %2557 = vmatpush.msra.mxu0 %v2224
        %2558 = vmatpush.msra.mxu0 %v2220
        %2559 = vmatpush.msra.mxu0 %v2216
        %2560 = vmatpush.msra.mxu0 %v2212
        %2561 = vmatpush.msra.mxu0 %v2208
        %2562 = vmatpush.msra.mxu0 %v2204
        %2563 = vmatpush.msra.mxu0 %v2200
        %2564 = vmatpush.msra.mxu0 %v2196
        %2565 = vmatpush.msra.mxu0 %v2192
        %2566 = vmatpush.msra.mxu0 %v2188
        %2567 = vmatpush.msra.mxu0 %v2184
        %2568 = vmatmul.f32.gmra.mxu0 %v2116
        %v2569 = vpop.f32.mrf.mxu0
        %v2570 = vadd.f32 %v2526, %v2569
        %2571 = vmatmul.f32.gmra.mxu0 %v2117
        %v2572 = vpop.f32.mrf.mxu0
        %v2573 = vadd.f32 %v2512, %v2572
        %2574 = vdwg.mxu0
        %2575 = vmatpush.msra.mxu0 %v2245
        %2576 = vmatpush.msra.mxu0 %v2241
        %2577 = vmatpush.msra.mxu0 %v2237
        %2578 = vmatpush.msra.mxu0 %v2233
        %2579 = vmatpush.msra.mxu0 %v2229
        %2580 = vmatpush.msra.mxu0 %v2225
        %2581 = vmatpush.msra.mxu0 %v2221
        %2582 = vmatpush.msra.mxu0 %v2217
        %2583 = vmatpush.msra.mxu0 %v2213
        %2584 = vmatpush.msra.mxu0 %v2209
        %2585 = vmatpush.msra.mxu0 %v2205
        %2586 = vmatpush.msra.mxu0 %v2201
        %2587 = vmatpush.msra.mxu0 %v2197
        %2588 = vmatpush.msra.mxu0 %v2193
        %2589 = vmatpush.msra.mxu0 %v2189
        %2590 = vmatpush.msra.mxu0 %v2185
        %2591 = vmatmul.f32.gmra.mxu0 %v2116
        %v2592 = vpop.f32.mrf.mxu0
        %v2593 = vadd.f32 %v2527, %v2592
        %2594 = vmatmul.f32.gmra.mxu0 %v2117
        %v2595 = vpop.f32.mrf.mxu0
        %v2596 = vadd.f32 %v2514, %v2595
        %2597 = vdwg.mxu0
        %2598 = vmatpush.msra.mxu0 %v2246
        %2599 = vmatpush.msra.mxu0 %v2242
        %2600 = vmatpush.msra.mxu0 %v2238
        %2601 = vmatpush.msra.mxu0 %v2234
        %2602 = vmatpush.msra.mxu0 %v2230
        %2603 = vmatpush.msra.mxu0 %v2226
        %2604 = vmatpush.msra.mxu0 %v2222
        %2605 = vmatpush.msra.mxu0 %v2218
        %2606 = vmatpush.msra.mxu0 %v2214
        %2607 = vmatpush.msra.mxu0 %v2210
        %2608 = vmatpush.msra.mxu0 %v2206
        %2609 = vmatpush.msra.mxu0 %v2202
        %2610 = vmatpush.msra.mxu0 %v2198
        %2611 = vmatpush.msra.mxu0 %v2194
        %2612 = vmatpush.msra.mxu0 %v2190
        %2613 = vmatpush.msra.mxu0 %v2186
        %2614 = vmatmul.f32.gmra.mxu0 %v2116
        %v2615 = vpop.f32.mrf.mxu0
        %v2616 = vadd.f32 %v2528, %v2615
        %2617 = vmatmul.f32.gmra.mxu0 %v2117
        %v2618 = vpop.f32.mrf.mxu0
        %v2619 = vadd.f32 %v2516, %v2618
        %2620 = vdwg.mxu0
        %v2629 = vrot.slane %v2423, 1
        %v2630 = vrot.slane %v2426, 1
        %v2631 = vsel %vm546, %v2629, %v2630
        %v2632 = vrot.slane %v2446, 1
        %v2633 = vrot.slane %v2449, 1
        %v2634 = vsel %vm546, %v2632, %v2633
        %v2635 = vrot.slane %v2469, 1
        %v2636 = vrot.slane %v2472, 1
        %v2637 = vsel %vm546, %v2635, %v2636
        %v2638 = vrot.slane %v2492, 1
        %v2639 = vrot.slane %v2495, 1
        %v2640 = vsel %vm546, %v2638, %v2639
        %v2649 = vsel %vm546, %v2630, 0.0
        %v2650 = vsel %vm546, %v2633, 0.0
        %v2651 = vsel %vm546, %v2636, 0.0
        %v2652 = vsel %vm546, %v2639, 0.0
        %v2653 = vadd.f32 %v2547, %v2631
        %v2654 = vadd.f32 %v2570, %v2634
        %v2655 = vadd.f32 %v2593, %v2637
        %v2656 = vadd.f32 %v2616, %v2640
        %v2657 = vadd.f32 %v2550, %v2649
        %v2658 = vadd.f32 %v2573, %v2650
        %v2659 = vadd.f32 %v2596, %v2651
        %v2660 = vadd.f32 %v2619, %v2652
        %v2662 = vperm.slane %v2312, 0
        %v2663 = vperm.slane %v2312, 1
        %v2664 = vperm.slane %v2312, 2
        %v2665 = vperm.slane %v2312, 3
        %v2670 = vadd.f32 %v2653, %v2662
        %v2671 = vadd.f32 %v2654, %v2663
        %v2672 = vadd.f32 %v2655, %v2664
        %v2673 = vadd.f32 %v2656, %v2665
        %v2674 = vadd.f32 %v2657, %v2662
        %v2675 = vadd.f32 %v2658, %v2663
        %v2676 = vadd.f32 %v2659, %v2664
        %v2677 = vadd.f32 %v2660, %v2665
        %v2678 = vmax.f32 %v2670, 0.0
        %v2679 = vmax.f32 %v2671, 0.0
        %v2680 = vmax.f32 %v2672, 0.0
        %v2681 = vmax.f32 %v2673, 0.0
        %v2682 = vmax.f32 %v2674, 0.0
        %v2683 = vmax.f32 %v2675, 0.0
        %v2684 = vmax.f32 %v2676, 0.0
        %v2685 = vmax.f32 %v2677, 0.0
        %v2686 = vld [vmem:[#allocation2] sm:$0xff]
        %v2687 = vld [vmem:[#allocation2 + $0x8] sm:$0xff]
        %v2688 = vld [vmem:[#allocation2 + $0x10] sm:$0xff]
        %v2689 = vld [vmem:[#allocation2 + $0x18] sm:$0xff]
        %v2690 = vld [vmem:[#allocation2 + $0x20] sm:$0xff]
        %v2691 = vld [vmem:[#allocation2 + $0x28] sm:$0xff]
        %v2692 = vld [vmem:[#allocation2 + $0x30] sm:$0xff]
        %v2693 = vld [vmem:[#allocation2 + $0x38] sm:$0xff]
        %v2694 = vld [vmem:[#allocation2 + $0x40] sm:$0xff]
        %v2695 = vld [vmem:[#allocation2 + $0x48] sm:$0xff]
        %v2696 = vld [vmem:[#allocation2 + $0x50] sm:$0xff]
        %v2697 = vld [vmem:[#allocation2 + $0x58] sm:$0xff]
        %v2698 = vld [vmem:[#allocation2 + $0x60] sm:$0xff]
        %v2699 = vld [vmem:[#allocation2 + $0x68] sm:$0xff]
        %v2700 = vld [vmem:[#allocation2 + $0x70] sm:$0xff]
        %v2701 = vld [vmem:[#allocation2 + $0x78] sm:$0xff]
        %v2702 = vld [vmem:[#allocation2 + $0x80] sm:$0xff]
        %v2703 = vld [vmem:[#allocation2 + $0x88] sm:$0xff]
        %v2704 = vld [vmem:[#allocation2 + $0x90] sm:$0xff]
        %v2705 = vld [vmem:[#allocation2 + $0x98] sm:$0xff]
        %v2706 = vld [vmem:[#allocation2 + $0xa0] sm:$0xff]
        %v2707 = vld [vmem:[#allocation2 + $0xa8] sm:$0xff]
        %v2708 = vld [vmem:[#allocation2 + $0xb0] sm:$0xff]
        %v2709 = vld [vmem:[#allocation2 + $0xb8] sm:$0xff]
        %v2710 = vld [vmem:[#allocation2 + $0xc0] sm:$0xff]
        %v2711 = vld [vmem:[#allocation2 + $0xc8] sm:$0xff]
        %v2712 = vld [vmem:[#allocation2 + $0xd0] sm:$0xff]
        %v2713 = vld [vmem:[#allocation2 + $0xd8] sm:$0xff]
        %v2714 = vld [vmem:[#allocation2 + $0xe0] sm:$0xff]
        %v2715 = vld [vmem:[#allocation2 + $0xe8] sm:$0xff]
        %v2716 = vld [vmem:[#allocation2 + $0xf0] sm:$0xff]
        %v2717 = vld [vmem:[#allocation2 + $0xf8] sm:$0xff]
        %v2718 = vld [vmem:[#allocation2 + $0x100] sm:$0xff]
        %v2719 = vld [vmem:[#allocation2 + $0x108] sm:$0xff]
        %v2720 = vld [vmem:[#allocation2 + $0x110] sm:$0xff]
        %v2721 = vld [vmem:[#allocation2 + $0x118] sm:$0xff]
        %v2722 = vld [vmem:[#allocation2 + $0x120] sm:$0xff]
        %v2723 = vld [vmem:[#allocation2 + $0x128] sm:$0xff]
        %v2724 = vld [vmem:[#allocation2 + $0x130] sm:$0xff]
        %v2725 = vld [vmem:[#allocation2 + $0x138] sm:$0xff]
        %v2726 = vld [vmem:[#allocation2 + $0x140] sm:$0xff]
        %v2727 = vld [vmem:[#allocation2 + $0x148] sm:$0xff]
        %v2728 = vld [vmem:[#allocation2 + $0x150] sm:$0xff]
        %v2729 = vld [vmem:[#allocation2 + $0x158] sm:$0xff]
        %v2730 = vld [vmem:[#allocation2 + $0x160] sm:$0xff]
        %v2731 = vld [vmem:[#allocation2 + $0x168] sm:$0xff]
        %v2732 = vld [vmem:[#allocation2 + $0x170] sm:$0xff]
        %v2733 = vld [vmem:[#allocation2 + $0x178] sm:$0xff]
        %v2734 = vld [vmem:[#allocation2 + $0x180] sm:$0xff]
        %v2735 = vld [vmem:[#allocation2 + $0x188] sm:$0xff]
        %v2736 = vld [vmem:[#allocation2 + $0x190] sm:$0xff]
        %v2737 = vld [vmem:[#allocation2 + $0x198] sm:$0xff]
        %v2738 = vld [vmem:[#allocation2 + $0x1a0] sm:$0xff]
        %v2739 = vld [vmem:[#allocation2 + $0x1a8] sm:$0xff]
        %v2740 = vld [vmem:[#allocation2 + $0x1b0] sm:$0xff]
        %v2741 = vld [vmem:[#allocation2 + $0x1b8] sm:$0xff]
        %v2742 = vld [vmem:[#allocation2 + $0x1c0] sm:$0xff]
        %v2743 = vld [vmem:[#allocation2 + $0x1c8] sm:$0xff]
        %v2744 = vld [vmem:[#allocation2 + $0x1d0] sm:$0xff]
        %v2745 = vld [vmem:[#allocation2 + $0x1d8] sm:$0xff]
        %v2746 = vld [vmem:[#allocation2 + $0x1e0] sm:$0xff]
        %v2747 = vld [vmem:[#allocation2 + $0x1e8] sm:$0xff]
        %v2748 = vld [vmem:[#allocation2 + $0x1f0] sm:$0xff]
        %v2749 = vld [vmem:[#allocation2 + $0x1f8] sm:$0xff]
        %s2750 = scalar_lea.vmem [#allocation2], 512
        %v2751 = vld [vmem:[%s2750] sm:$0xff]
        %v2752 = vld [vmem:[%s2750 + $0x8] sm:$0xff]
        %v2753 = vld [vmem:[%s2750 + $0x10] sm:$0xff]
        %v2754 = vld [vmem:[%s2750 + $0x18] sm:$0xff]
        %v2755 = vld [vmem:[%s2750 + $0x20] sm:$0xff]
        %v2756 = vld [vmem:[%s2750 + $0x28] sm:$0xff]
        %v2757 = vld [vmem:[%s2750 + $0x30] sm:$0xff]
        %v2758 = vld [vmem:[%s2750 + $0x38] sm:$0xff]
        %v2759 = vld [vmem:[%s2750 + $0x40] sm:$0xff]
        %v2760 = vld [vmem:[%s2750 + $0x48] sm:$0xff]
        %v2761 = vld [vmem:[%s2750 + $0x50] sm:$0xff]
        %v2762 = vld [vmem:[%s2750 + $0x58] sm:$0xff]
        %v2763 = vld [vmem:[%s2750 + $0x60] sm:$0xff]
        %v2764 = vld [vmem:[%s2750 + $0x68] sm:$0xff]
        %v2765 = vld [vmem:[%s2750 + $0x70] sm:$0xff]
        %v2766 = vld [vmem:[%s2750 + $0x78] sm:$0xff]
        %v2767 = vld [vmem:[%s2750 + $0x80] sm:$0xff]
        %v2768 = vld [vmem:[%s2750 + $0x88] sm:$0xff]
        %v2769 = vld [vmem:[%s2750 + $0x90] sm:$0xff]
        %v2770 = vld [vmem:[%s2750 + $0x98] sm:$0xff]
        %v2771 = vld [vmem:[%s2750 + $0xa0] sm:$0xff]
        %v2772 = vld [vmem:[%s2750 + $0xa8] sm:$0xff]
        %v2773 = vld [vmem:[%s2750 + $0xb0] sm:$0xff]
        %v2774 = vld [vmem:[%s2750 + $0xb8] sm:$0xff]
        %v2775 = vld [vmem:[%s2750 + $0xc0] sm:$0xff]
        %v2776 = vld [vmem:[%s2750 + $0xc8] sm:$0xff]
        %v2777 = vld [vmem:[%s2750 + $0xd0] sm:$0xff]
        %v2778 = vld [vmem:[%s2750 + $0xd8] sm:$0xff]
        %v2779 = vld [vmem:[%s2750 + $0xe0] sm:$0xff]
        %v2780 = vld [vmem:[%s2750 + $0xe8] sm:$0xff]
        %v2781 = vld [vmem:[%s2750 + $0xf0] sm:$0xff]
        %v2782 = vld [vmem:[%s2750 + $0xf8] sm:$0xff]
        %v2783 = vld [vmem:[%s2750 + $0x100] sm:$0xff]
        %v2784 = vld [vmem:[%s2750 + $0x108] sm:$0xff]
        %v2785 = vld [vmem:[%s2750 + $0x110] sm:$0xff]
        %v2786 = vld [vmem:[%s2750 + $0x118] sm:$0xff]
        %v2787 = vld [vmem:[%s2750 + $0x120] sm:$0xff]
        %v2788 = vld [vmem:[%s2750 + $0x128] sm:$0xff]
        %v2789 = vld [vmem:[%s2750 + $0x130] sm:$0xff]
        %v2790 = vld [vmem:[%s2750 + $0x138] sm:$0xff]
        %v2791 = vld [vmem:[%s2750 + $0x140] sm:$0xff]
        %v2792 = vld [vmem:[%s2750 + $0x148] sm:$0xff]
        %v2793 = vld [vmem:[%s2750 + $0x150] sm:$0xff]
        %v2794 = vld [vmem:[%s2750 + $0x158] sm:$0xff]
        %v2795 = vld [vmem:[%s2750 + $0x160] sm:$0xff]
        %v2796 = vld [vmem:[%s2750 + $0x168] sm:$0xff]
        %v2797 = vld [vmem:[%s2750 + $0x170] sm:$0xff]
        %v2798 = vld [vmem:[%s2750 + $0x178] sm:$0xff]
        %v2799 = vld [vmem:[%s2750 + $0x180] sm:$0xff]
        %v2800 = vld [vmem:[%s2750 + $0x188] sm:$0xff]
        %v2801 = vld [vmem:[%s2750 + $0x190] sm:$0xff]
        %v2802 = vld [vmem:[%s2750 + $0x198] sm:$0xff]
        %v2803 = vld [vmem:[%s2750 + $0x1a0] sm:$0xff]
        %v2804 = vld [vmem:[%s2750 + $0x1a8] sm:$0xff]
        %v2805 = vld [vmem:[%s2750 + $0x1b0] sm:$0xff]
        %v2806 = vld [vmem:[%s2750 + $0x1b8] sm:$0xff]
        %v2807 = vld [vmem:[%s2750 + $0x1c0] sm:$0xff]
        %v2808 = vld [vmem:[%s2750 + $0x1c8] sm:$0xff]
        %v2809 = vld [vmem:[%s2750 + $0x1d0] sm:$0xff]
        %v2810 = vld [vmem:[%s2750 + $0x1d8] sm:$0xff]
        %v2811 = vld [vmem:[%s2750 + $0x1e0] sm:$0xff]
        %v2812 = vld [vmem:[%s2750 + $0x1e8] sm:$0xff]
        %v2813 = vld [vmem:[%s2750 + $0x1f0] sm:$0xff]
        %v2814 = vld [vmem:[%s2750 + $0x1f8] sm:$0xff]
        %s2815 = scalar_lea.vmem [#allocation2], 1024
        %v2816 = vld [vmem:[%s2815] sm:$0xff]
        %v2817 = vld [vmem:[%s2815 + $0x8] sm:$0xff]
        %v2818 = vld [vmem:[%s2815 + $0x10] sm:$0xff]
        %v2819 = vld [vmem:[%s2815 + $0x18] sm:$0xff]
        %v2820 = vld [vmem:[%s2815 + $0x20] sm:$0xff]
        %v2821 = vld [vmem:[%s2815 + $0x28] sm:$0xff]
        %v2822 = vld [vmem:[%s2815 + $0x30] sm:$0xff]
        %v2823 = vld [vmem:[%s2815 + $0x38] sm:$0xff]
        %v2824 = vld [vmem:[%s2815 + $0x40] sm:$0xff]
        %v2825 = vld [vmem:[%s2815 + $0x48] sm:$0xff]
        %v2826 = vld [vmem:[%s2815 + $0x50] sm:$0xff]
        %v2827 = vld [vmem:[%s2815 + $0x58] sm:$0xff]
        %v2828 = vld [vmem:[%s2815 + $0x60] sm:$0xff]
        %v2829 = vld [vmem:[%s2815 + $0x68] sm:$0xff]
        %v2830 = vld [vmem:[%s2815 + $0x70] sm:$0xff]
        %v2831 = vld [vmem:[%s2815 + $0x78] sm:$0xff]
        %v2832 = vld [vmem:[%s2815 + $0x80] sm:$0xff]
        %v2833 = vld [vmem:[%s2815 + $0x88] sm:$0xff]
        %v2834 = vld [vmem:[%s2815 + $0x90] sm:$0xff]
        %v2835 = vld [vmem:[%s2815 + $0x98] sm:$0xff]
        %v2836 = vld [vmem:[%s2815 + $0xa0] sm:$0xff]
        %v2837 = vld [vmem:[%s2815 + $0xa8] sm:$0xff]
        %v2838 = vld [vmem:[%s2815 + $0xb0] sm:$0xff]
        %v2839 = vld [vmem:[%s2815 + $0xb8] sm:$0xff]
        %v2840 = vld [vmem:[%s2815 + $0xc0] sm:$0xff]
        %v2841 = vld [vmem:[%s2815 + $0xc8] sm:$0xff]
        %v2842 = vld [vmem:[%s2815 + $0xd0] sm:$0xff]
        %v2843 = vld [vmem:[%s2815 + $0xd8] sm:$0xff]
        %v2844 = vld [vmem:[%s2815 + $0xe0] sm:$0xff]
        %v2845 = vld [vmem:[%s2815 + $0xe8] sm:$0xff]
        %v2846 = vld [vmem:[%s2815 + $0xf0] sm:$0xff]
        %v2847 = vld [vmem:[%s2815 + $0xf8] sm:$0xff]
        %v2848 = vld [vmem:[%s2815 + $0x100] sm:$0xff]
        %v2849 = vld [vmem:[%s2815 + $0x108] sm:$0xff]
        %v2850 = vld [vmem:[%s2815 + $0x110] sm:$0xff]
        %v2851 = vld [vmem:[%s2815 + $0x118] sm:$0xff]
        %v2852 = vld [vmem:[%s2815 + $0x120] sm:$0xff]
        %v2853 = vld [vmem:[%s2815 + $0x128] sm:$0xff]
        %v2854 = vld [vmem:[%s2815 + $0x130] sm:$0xff]
        %v2855 = vld [vmem:[%s2815 + $0x138] sm:$0xff]
        %v2856 = vld [vmem:[%s2815 + $0x140] sm:$0xff]
        %v2857 = vld [vmem:[%s2815 + $0x148] sm:$0xff]
        %v2858 = vld [vmem:[%s2815 + $0x150] sm:$0xff]
        %v2859 = vld [vmem:[%s2815 + $0x158] sm:$0xff]
        %v2860 = vld [vmem:[%s2815 + $0x160] sm:$0xff]
        %v2861 = vld [vmem:[%s2815 + $0x168] sm:$0xff]
        %v2862 = vld [vmem:[%s2815 + $0x170] sm:$0xff]
        %v2863 = vld [vmem:[%s2815 + $0x178] sm:$0xff]
        %v2864 = vld [vmem:[%s2815 + $0x180] sm:$0xff]
        %v2865 = vld [vmem:[%s2815 + $0x188] sm:$0xff]
        %v2866 = vld [vmem:[%s2815 + $0x190] sm:$0xff]
        %v2867 = vld [vmem:[%s2815 + $0x198] sm:$0xff]
        %v2868 = vld [vmem:[%s2815 + $0x1a0] sm:$0xff]
        %v2869 = vld [vmem:[%s2815 + $0x1a8] sm:$0xff]
        %v2870 = vld [vmem:[%s2815 + $0x1b0] sm:$0xff]
        %v2871 = vld [vmem:[%s2815 + $0x1b8] sm:$0xff]
        %v2872 = vld [vmem:[%s2815 + $0x1c0] sm:$0xff]
        %v2873 = vld [vmem:[%s2815 + $0x1c8] sm:$0xff]
        %v2874 = vld [vmem:[%s2815 + $0x1d0] sm:$0xff]
        %v2875 = vld [vmem:[%s2815 + $0x1d8] sm:$0xff]
        %v2876 = vld [vmem:[%s2815 + $0x1e0] sm:$0xff]
        %v2877 = vld [vmem:[%s2815 + $0x1e8] sm:$0xff]
        %v2878 = vld [vmem:[%s2815 + $0x1f0] sm:$0xff]
        %v2879 = vld [vmem:[%s2815 + $0x1f8] sm:$0xff]
        %v2880 = vld [vmem:[%s6] sm:$0x1]
        %2881 = vmatpush.msra.mxu0 %v2701
        %2882 = vmatpush.msra.mxu0 %v2700
        %2883 = vmatpush.msra.mxu0 %v2699
        %2884 = vmatpush.msra.mxu0 %v2698
        %2885 = vmatpush.msra.mxu0 %v2697
        %2886 = vmatpush.msra.mxu0 %v2696
        %2887 = vmatpush.msra.mxu0 %v2695
        %2888 = vmatpush.msra.mxu0 %v2694
        %2889 = vmatpush.msra.mxu0 %v2693
        %2890 = vmatpush.msra.mxu0 %v2692
        %2891 = vmatpush.msra.mxu0 %v2691
        %2892 = vmatpush.msra.mxu0 %v2690
        %2893 = vmatpush.msra.mxu0 %v2689
        %2894 = vmatpush.msra.mxu0 %v2688
        %2895 = vmatpush.msra.mxu0 %v2687
        %2896 = vmatpush.msra.mxu0 %v2686
        %2897 = vmatmul.f32.gmra.mxu0 %v2678
        %v2898 = vpop.f32.mrf.mxu0
        %v2899 = vadd.f32 0.0, %v2898
        %2900 = vmatmul.f32.gmra.mxu0 %v2682
        %v2901 = vpop.f32.mrf.mxu0
        %v2902 = vadd.f32 0.0, %v2901
        %2903 = vdwg.mxu0
        %2904 = vmatpush.msra.mxu0 %v2717
        %2905 = vmatpush.msra.mxu0 %v2716
        %2906 = vmatpush.msra.mxu0 %v2715
        %2907 = vmatpush.msra.mxu0 %v2714
        %2908 = vmatpush.msra.mxu0 %v2713
        %2909 = vmatpush.msra.mxu0 %v2712
        %2910 = vmatpush.msra.mxu0 %v2711
        %2911 = vmatpush.msra.mxu0 %v2710
        %2912 = vmatpush.msra.mxu0 %v2709
        %2913 = vmatpush.msra.mxu0 %v2708
        %2914 = vmatpush.msra.mxu0 %v2707
        %2915 = vmatpush.msra.mxu0 %v2706
        %2916 = vmatpush.msra.mxu0 %v2705
        %2917 = vmatpush.msra.mxu0 %v2704
        %2918 = vmatpush.msra.mxu0 %v2703
        %2919 = vmatpush.msra.mxu0 %v2702
        %2920 = vmatmul.f32.gmra.mxu0 %v2679
        %v2921 = vpop.f32.mrf.mxu0
        %v2922 = vadd.f32 %v2899, %v2921
        %2923 = vmatmul.f32.gmra.mxu0 %v2683
        %v2924 = vpop.f32.mrf.mxu0
        %v2925 = vadd.f32 %v2902, %v2924
        %2926 = vdwg.mxu0
        %2927 = vmatpush.msra.mxu0 %v2733
        %2928 = vmatpush.msra.mxu0 %v2732
        %2929 = vmatpush.msra.mxu0 %v2731
        %2930 = vmatpush.msra.mxu0 %v2730
        %2931 = vmatpush.msra.mxu0 %v2729
        %2932 = vmatpush.msra.mxu0 %v2728
        %2933 = vmatpush.msra.mxu0 %v2727
        %2934 = vmatpush.msra.mxu0 %v2726
        %2935 = vmatpush.msra.mxu0 %v2725
        %2936 = vmatpush.msra.mxu0 %v2724
        %2937 = vmatpush.msra.mxu0 %v2723
        %2938 = vmatpush.msra.mxu0 %v2722
        %2939 = vmatpush.msra.mxu0 %v2721
        %2940 = vmatpush.msra.mxu0 %v2720
        %2941 = vmatpush.msra.mxu0 %v2719
        %2942 = vmatpush.msra.mxu0 %v2718
        %2943 = vmatmul.f32.gmra.mxu0 %v2680
        %v2944 = vpop.f32.mrf.mxu0
        %v2945 = vadd.f32 %v2922, %v2944
        %2946 = vmatmul.f32.gmra.mxu0 %v2684
        %v2947 = vpop.f32.mrf.mxu0
        %v2948 = vadd.f32 %v2925, %v2947
        %2949 = vdwg.mxu0
        %2950 = vmatpush.msra.mxu0 %v2749
        %2951 = vmatpush.msra.mxu0 %v2748
        %2952 = vmatpush.msra.mxu0 %v2747
        %2953 = vmatpush.msra.mxu0 %v2746
        %2954 = vmatpush.msra.mxu0 %v2745
        %2955 = vmatpush.msra.mxu0 %v2744
        %2956 = vmatpush.msra.mxu0 %v2743
        %2957 = vmatpush.msra.mxu0 %v2742
        %2958 = vmatpush.msra.mxu0 %v2741
        %2959 = vmatpush.msra.mxu0 %v2740
        %2960 = vmatpush.msra.mxu0 %v2739
        %2961 = vmatpush.msra.mxu0 %v2738
        %2962 = vmatpush.msra.mxu0 %v2737
        %2963 = vmatpush.msra.mxu0 %v2736
        %2964 = vmatpush.msra.mxu0 %v2735
        %2965 = vmatpush.msra.mxu0 %v2734
        %2966 = vmatmul.f32.gmra.mxu0 %v2681
        %v2967 = vpop.f32.mrf.mxu0
        %v2968 = vadd.f32 %v2945, %v2967
        %2969 = vmatmul.f32.gmra.mxu0 %v2685
        %v2970 = vpop.f32.mrf.mxu0
        %v2971 = vadd.f32 %v2948, %v2970
        %2972 = vdwg.mxu0
        %2973 = vmatpush.msra.mxu0 %v2831
        %2974 = vmatpush.msra.mxu0 %v2830
        %2975 = vmatpush.msra.mxu0 %v2829
        %2976 = vmatpush.msra.mxu0 %v2828
        %2977 = vmatpush.msra.mxu0 %v2827
        %2978 = vmatpush.msra.mxu0 %v2826
        %2979 = vmatpush.msra.mxu0 %v2825
        %2980 = vmatpush.msra.mxu0 %v2824
        %2981 = vmatpush.msra.mxu0 %v2823
        %2982 = vmatpush.msra.mxu0 %v2822
        %2983 = vmatpush.msra.mxu0 %v2821
        %2984 = vmatpush.msra.mxu0 %v2820
        %2985 = vmatpush.msra.mxu0 %v2819
        %2986 = vmatpush.msra.mxu0 %v2818
        %2987 = vmatpush.msra.mxu0 %v2817
        %2988 = vmatpush.msra.mxu0 %v2816
        %2989 = vmatmul.f32.gmra.mxu0 %v2678
        %v2990 = vpop.f32.mrf.mxu0
        %v2991 = vadd.f32 0.0, %v2990
        %2992 = vmatmul.f32.gmra.mxu0 %v2682
        %v2993 = vpop.f32.mrf.mxu0
        %v2994 = vadd.f32 0.0, %v2993
        %2995 = vdwg.mxu0
        %2996 = vmatpush.msra.mxu0 %v2847
        %2997 = vmatpush.msra.mxu0 %v2846
        %2998 = vmatpush.msra.mxu0 %v2845
        %2999 = vmatpush.msra.mxu0 %v2844
        %3000 = vmatpush.msra.mxu0 %v2843
        %3001 = vmatpush.msra.mxu0 %v2842
        %3002 = vmatpush.msra.mxu0 %v2841
        %3003 = vmatpush.msra.mxu0 %v2840
        %3004 = vmatpush.msra.mxu0 %v2839
        %3005 = vmatpush.msra.mxu0 %v2838
        %3006 = vmatpush.msra.mxu0 %v2837
        %3007 = vmatpush.msra.mxu0 %v2836
        %3008 = vmatpush.msra.mxu0 %v2835
        %3009 = vmatpush.msra.mxu0 %v2834
        %3010 = vmatpush.msra.mxu0 %v2833
        %3011 = vmatpush.msra.mxu0 %v2832
        %3012 = vmatmul.f32.gmra.mxu0 %v2679
        %v3013 = vpop.f32.mrf.mxu0
        %v3014 = vadd.f32 %v2991, %v3013
        %3015 = vmatmul.f32.gmra.mxu0 %v2683
        %v3016 = vpop.f32.mrf.mxu0
        %v3017 = vadd.f32 %v2994, %v3016
        %3018 = vdwg.mxu0
        %3019 = vmatpush.msra.mxu0 %v2863
        %3020 = vmatpush.msra.mxu0 %v2862
        %3021 = vmatpush.msra.mxu0 %v2861
        %3022 = vmatpush.msra.mxu0 %v2860
        %3023 = vmatpush.msra.mxu0 %v2859
        %3024 = vmatpush.msra.mxu0 %v2858
        %3025 = vmatpush.msra.mxu0 %v2857
        %3026 = vmatpush.msra.mxu0 %v2856
        %3027 = vmatpush.msra.mxu0 %v2855
        %3028 = vmatpush.msra.mxu0 %v2854
        %3029 = vmatpush.msra.mxu0 %v2853
        %3030 = vmatpush.msra.mxu0 %v2852
        %3031 = vmatpush.msra.mxu0 %v2851
        %3032 = vmatpush.msra.mxu0 %v2850
        %3033 = vmatpush.msra.mxu0 %v2849
        %3034 = vmatpush.msra.mxu0 %v2848
        %3035 = vmatmul.f32.gmra.mxu0 %v2680
        %v3036 = vpop.f32.mrf.mxu0
        %v3037 = vadd.f32 %v3014, %v3036
        %3038 = vmatmul.f32.gmra.mxu0 %v2684
        %v3039 = vpop.f32.mrf.mxu0
        %v3040 = vadd.f32 %v3017, %v3039
        %3041 = vdwg.mxu0
        %3042 = vmatpush.msra.mxu0 %v2879
        %3043 = vmatpush.msra.mxu0 %v2878
        %3044 = vmatpush.msra.mxu0 %v2877
        %3045 = vmatpush.msra.mxu0 %v2876
        %3046 = vmatpush.msra.mxu0 %v2875
        %3047 = vmatpush.msra.mxu0 %v2874
        %3048 = vmatpush.msra.mxu0 %v2873
        %3049 = vmatpush.msra.mxu0 %v2872
        %3050 = vmatpush.msra.mxu0 %v2871
        %3051 = vmatpush.msra.mxu0 %v2870
        %3052 = vmatpush.msra.mxu0 %v2869
        %3053 = vmatpush.msra.mxu0 %v2868
        %3054 = vmatpush.msra.mxu0 %v2867
        %3055 = vmatpush.msra.mxu0 %v2866
        %3056 = vmatpush.msra.mxu0 %v2865
        %3057 = vmatpush.msra.mxu0 %v2864
        %3058 = vmatmul.f32.gmra.mxu0 %v2681
        %v3059 = vpop.f32.mrf.mxu0
        %v3060 = vadd.f32 %v3037, %v3059
        %3061 = vmatmul.f32.gmra.mxu0 %v2685
        %v3062 = vpop.f32.mrf.mxu0
        %v3063 = vadd.f32 %v3040, %v3062
        %3064 = vdwg.mxu0
        %v3067 = vrot.slane %v2968, 7
        %v3068 = vrot.slane %v2971, 7
        %v3069 = vsel %vm491, %v3067, %v3068
        %v3072 = vsel %vm491, 0.0, %v3067
        %3073 = vmatpush.msra.mxu0 %v2766
        %3074 = vmatpush.msra.mxu0 %v2765
        %3075 = vmatpush.msra.mxu0 %v2764
        %3076 = vmatpush.msra.mxu0 %v2763
        %3077 = vmatpush.msra.mxu0 %v2762
        %3078 = vmatpush.msra.mxu0 %v2761
        %3079 = vmatpush.msra.mxu0 %v2760
        %3080 = vmatpush.msra.mxu0 %v2759
        %3081 = vmatpush.msra.mxu0 %v2758
        %3082 = vmatpush.msra.mxu0 %v2757
        %3083 = vmatpush.msra.mxu0 %v2756
        %3084 = vmatpush.msra.mxu0 %v2755
        %3085 = vmatpush.msra.mxu0 %v2754
        %3086 = vmatpush.msra.mxu0 %v2753
        %3087 = vmatpush.msra.mxu0 %v2752
        %3088 = vmatpush.msra.mxu0 %v2751
        %3089 = vmatmul.f32.gmra.mxu0 %v2678
        %v3090 = vpop.f32.mrf.mxu0
        %v3091 = vadd.f32 %v3072, %v3090
        %3092 = vmatmul.f32.gmra.mxu0 %v2682
        %v3093 = vpop.f32.mrf.mxu0
        %v3094 = vadd.f32 %v3069, %v3093
        %3095 = vdwg.mxu0
        %3096 = vmatpush.msra.mxu0 %v2782
        %3097 = vmatpush.msra.mxu0 %v2781
        %3098 = vmatpush.msra.mxu0 %v2780
        %3099 = vmatpush.msra.mxu0 %v2779
        %3100 = vmatpush.msra.mxu0 %v2778
        %3101 = vmatpush.msra.mxu0 %v2777
        %3102 = vmatpush.msra.mxu0 %v2776
        %3103 = vmatpush.msra.mxu0 %v2775
        %3104 = vmatpush.msra.mxu0 %v2774
        %3105 = vmatpush.msra.mxu0 %v2773
        %3106 = vmatpush.msra.mxu0 %v2772
        %3107 = vmatpush.msra.mxu0 %v2771
        %3108 = vmatpush.msra.mxu0 %v2770
        %3109 = vmatpush.msra.mxu0 %v2769
        %3110 = vmatpush.msra.mxu0 %v2768
        %3111 = vmatpush.msra.mxu0 %v2767
        %3112 = vmatmul.f32.gmra.mxu0 %v2679
        %v3113 = vpop.f32.mrf.mxu0
        %v3114 = vadd.f32 %v3091, %v3113
        %3115 = vmatmul.f32.gmra.mxu0 %v2683
        %v3116 = vpop.f32.mrf.mxu0
        %v3117 = vadd.f32 %v3094, %v3116
        %3118 = vdwg.mxu0
        %3119 = vmatpush.msra.mxu0 %v2798
        %3120 = vmatpush.msra.mxu0 %v2797
        %3121 = vmatpush.msra.mxu0 %v2796
        %3122 = vmatpush.msra.mxu0 %v2795
        %3123 = vmatpush.msra.mxu0 %v2794
        %3124 = vmatpush.msra.mxu0 %v2793
        %3125 = vmatpush.msra.mxu0 %v2792
        %3126 = vmatpush.msra.mxu0 %v2791
        %3127 = vmatpush.msra.mxu0 %v2790
        %3128 = vmatpush.msra.mxu0 %v2789
        %3129 = vmatpush.msra.mxu0 %v2788
        %3130 = vmatpush.msra.mxu0 %v2787
        %3131 = vmatpush.msra.mxu0 %v2786
        %3132 = vmatpush.msra.mxu0 %v2785
        %3133 = vmatpush.msra.mxu0 %v2784
        %3134 = vmatpush.msra.mxu0 %v2783
        %3135 = vmatmul.f32.gmra.mxu0 %v2680
        %v3136 = vpop.f32.mrf.mxu0
        %v3137 = vadd.f32 %v3114, %v3136
        %3138 = vmatmul.f32.gmra.mxu0 %v2684
        %v3139 = vpop.f32.mrf.mxu0
        %v3140 = vadd.f32 %v3117, %v3139
        %3141 = vdwg.mxu0
        %3142 = vmatpush.msra.mxu0 %v2814
        %3143 = vmatpush.msra.mxu0 %v2813
        %3144 = vmatpush.msra.mxu0 %v2812
        %3145 = vmatpush.msra.mxu0 %v2811
        %3146 = vmatpush.msra.mxu0 %v2810
        %3147 = vmatpush.msra.mxu0 %v2809
        %3148 = vmatpush.msra.mxu0 %v2808
        %3149 = vmatpush.msra.mxu0 %v2807
        %3150 = vmatpush.msra.mxu0 %v2806
        %3151 = vmatpush.msra.mxu0 %v2805
        %3152 = vmatpush.msra.mxu0 %v2804
        %3153 = vmatpush.msra.mxu0 %v2803
        %3154 = vmatpush.msra.mxu0 %v2802
        %3155 = vmatpush.msra.mxu0 %v2801
        %3156 = vmatpush.msra.mxu0 %v2800
        %3157 = vmatpush.msra.mxu0 %v2799
        %3158 = vmatmul.f32.gmra.mxu0 %v2681
        %v3159 = vpop.f32.mrf.mxu0
        %v3160 = vadd.f32 %v3137, %v3159
        %3161 = vmatmul.f32.gmra.mxu0 %v2685
        %v3162 = vpop.f32.mrf.mxu0
        %v3163 = vadd.f32 %v3140, %v3162
        %3164 = vdwg.mxu0
        %v3167 = vrot.slane %v3060, 1
        %v3168 = vrot.slane %v3063, 1
        %v3169 = vsel %vm546, %v3167, %v3168
        %v3172 = vsel %vm546, %v3168, 0.0
        %v3173 = vadd.f32 %v3160, %v3169
        %v3174 = vadd.f32 %v3163, %v3172
        %v3176 = vperm.slane %v2880, 0
        %v3178 = vadd.f32 %v3173, %v3176
        %v3179 = vadd.f32 %v3174, %v3176
        %3180 = vst [vmem:[%s295] sm:$0xff] %v3178
        %3181 = vst [vmem:[%s295 + $0x8] sm:$0xff] %v3179
        %v3182 = vld [vmem:[%s3] sm:$0xff]
        %v3183 = vld [vmem:[%s3 + $0x8] sm:$0xff]
        %v3184 = vld [vmem:[%s3 + $0x10] sm:$0xff]
        %v3185 = vld [vmem:[%s3 + $0x18] sm:$0xff]
        %v3186 = vld [vmem:[%s3 + $0x20] sm:$0xff]
        %v3187 = vld [vmem:[%s3 + $0x28] sm:$0xff]
        %v3188 = vld [vmem:[%s3 + $0x30] sm:$0xff]
        %v3189 = vld [vmem:[%s3 + $0x38] sm:$0xff]
        %v3190 = vld [vmem:[%s3 + $0x40] sm:$0xff]
        %v3191 = vld [vmem:[%s3 + $0x48] sm:$0xff]
        %v3192 = vld [vmem:[%s3 + $0x50] sm:$0xff]
        %v3193 = vld [vmem:[%s3 + $0x58] sm:$0xff]
        %v3194 = vld [vmem:[%s3 + $0x60] sm:$0xff]
        %v3195 = vld [vmem:[%s3 + $0x68] sm:$0xff]
        %v3196 = vld [vmem:[%s3 + $0x70] sm:$0xff]
        %v3197 = vld [vmem:[%s3 + $0x78] sm:$0xff]
        %v3198 = vld [vmem:[%s3 + $0x80] sm:$0xff]
        %v3199 = vld [vmem:[%s3 + $0x88] sm:$0xff]
        %v3200 = vld [vmem:[%s3 + $0x90] sm:$0xff]
        %v3201 = vld [vmem:[%s3 + $0x98] sm:$0xff]
        %v3202 = vld [vmem:[%s3 + $0xa0] sm:$0xff]
        %v3203 = vld [vmem:[%s3 + $0xa8] sm:$0xff]
        %v3204 = vld [vmem:[%s3 + $0xb0] sm:$0xff]
        %v3205 = vld [vmem:[%s3 + $0xb8] sm:$0xff]
        %v3206 = vld [vmem:[%s3 + $0xc0] sm:$0xff]
        %v3207 = vld [vmem:[%s3 + $0xc8] sm:$0xff]
        %v3208 = vld [vmem:[%s3 + $0xd0] sm:$0xff]
        %v3209 = vld [vmem:[%s3 + $0xd8] sm:$0xff]
        %v3210 = vld [vmem:[%s3 + $0xe0] sm:$0xff]
        %v3211 = vld [vmem:[%s3 + $0xe8] sm:$0xff]
        %v3212 = vld [vmem:[%s3 + $0xf0] sm:$0xff]
        %v3213 = vld [vmem:[%s3 + $0xf8] sm:$0xff]
        %v3214 = vld [vmem:[%s3 + $0x100] sm:$0xff]
        %v3215 = vld [vmem:[%s3 + $0x108] sm:$0xff]
        %v3216 = vld [vmem:[%s3 + $0x110] sm:$0xff]
        %v3217 = vld [vmem:[%s3 + $0x118] sm:$0xff]
        %v3218 = vld [vmem:[%s3 + $0x120] sm:$0xff]
        %v3219 = vld [vmem:[%s3 + $0x128] sm:$0xff]
        %v3220 = vld [vmem:[%s3 + $0x130] sm:$0xff]
        %v3221 = vld [vmem:[%s3 + $0x138] sm:$0xff]
        %v3222 = vld [vmem:[%s3 + $0x140] sm:$0xff]
        %v3223 = vld [vmem:[%s3 + $0x148] sm:$0xff]
        %v3224 = vld [vmem:[%s3 + $0x150] sm:$0xff]
        %v3225 = vld [vmem:[%s3 + $0x158] sm:$0xff]
        %v3226 = vld [vmem:[%s3 + $0x160] sm:$0xff]
        %v3227 = vld [vmem:[%s3 + $0x168] sm:$0xff]
        %v3228 = vld [vmem:[%s3 + $0x170] sm:$0xff]
        %v3229 = vld [vmem:[%s3 + $0x178] sm:$0xff]
        %v3230 = vld [vmem:[%s3 + $0x180] sm:$0xff]
        %v3231 = vld [vmem:[%s3 + $0x188] sm:$0xff]
        %v3232 = vld [vmem:[%s3 + $0x190] sm:$0xff]
        %v3233 = vld [vmem:[%s3 + $0x198] sm:$0xff]
        %v3234 = vld [vmem:[%s3 + $0x1a0] sm:$0xff]
        %v3235 = vld [vmem:[%s3 + $0x1a8] sm:$0xff]
        %v3236 = vld [vmem:[%s3 + $0x1b0] sm:$0xff]
        %v3237 = vld [vmem:[%s3 + $0x1b8] sm:$0xff]
        %v3238 = vld [vmem:[%s3 + $0x1c0] sm:$0xff]
        %v3239 = vld [vmem:[%s3 + $0x1c8] sm:$0xff]
        %v3240 = vld [vmem:[%s3 + $0x1d0] sm:$0xff]
        %v3241 = vld [vmem:[%s3 + $0x1d8] sm:$0xff]
        %v3242 = vld [vmem:[%s3 + $0x1e0] sm:$0xff]
        %v3243 = vld [vmem:[%s3 + $0x1e8] sm:$0xff]
        %v3244 = vld [vmem:[%s3 + $0x1f0] sm:$0xff]
        %v3245 = vld [vmem:[%s3 + $0x1f8] sm:$0xff]
        %v3246 = vld [vmem:[%s2182] sm:$0xff]
        %v3247 = vld [vmem:[%s2182 + $0x8] sm:$0xff]
        %v3248 = vld [vmem:[%s2182 + $0x10] sm:$0xff]
        %v3249 = vld [vmem:[%s2182 + $0x18] sm:$0xff]
        %v3250 = vld [vmem:[%s2182 + $0x20] sm:$0xff]
        %v3251 = vld [vmem:[%s2182 + $0x28] sm:$0xff]
        %v3252 = vld [vmem:[%s2182 + $0x30] sm:$0xff]
        %v3253 = vld [vmem:[%s2182 + $0x38] sm:$0xff]
        %v3254 = vld [vmem:[%s2182 + $0x40] sm:$0xff]
        %v3255 = vld [vmem:[%s2182 + $0x48] sm:$0xff]
        %v3256 = vld [vmem:[%s2182 + $0x50] sm:$0xff]
        %v3257 = vld [vmem:[%s2182 + $0x58] sm:$0xff]
        %v3258 = vld [vmem:[%s2182 + $0x60] sm:$0xff]
        %v3259 = vld [vmem:[%s2182 + $0x68] sm:$0xff]
        %v3260 = vld [vmem:[%s2182 + $0x70] sm:$0xff]
        %v3261 = vld [vmem:[%s2182 + $0x78] sm:$0xff]
        %v3262 = vld [vmem:[%s2182 + $0x80] sm:$0xff]
        %v3263 = vld [vmem:[%s2182 + $0x88] sm:$0xff]
        %v3264 = vld [vmem:[%s2182 + $0x90] sm:$0xff]
        %v3265 = vld [vmem:[%s2182 + $0x98] sm:$0xff]
        %v3266 = vld [vmem:[%s2182 + $0xa0] sm:$0xff]
        %v3267 = vld [vmem:[%s2182 + $0xa8] sm:$0xff]
        %v3268 = vld [vmem:[%s2182 + $0xb0] sm:$0xff]
        %v3269 = vld [vmem:[%s2182 + $0xb8] sm:$0xff]
        %v3270 = vld [vmem:[%s2182 + $0xc0] sm:$0xff]
        %v3271 = vld [vmem:[%s2182 + $0xc8] sm:$0xff]
        %v3272 = vld [vmem:[%s2182 + $0xd0] sm:$0xff]
        %v3273 = vld [vmem:[%s2182 + $0xd8] sm:$0xff]
        %v3274 = vld [vmem:[%s2182 + $0xe0] sm:$0xff]
        %v3275 = vld [vmem:[%s2182 + $0xe8] sm:$0xff]
        %v3276 = vld [vmem:[%s2182 + $0xf0] sm:$0xff]
        %v3277 = vld [vmem:[%s2182 + $0xf8] sm:$0xff]
        %v3278 = vld [vmem:[%s2182 + $0x100] sm:$0xff]
        %v3279 = vld [vmem:[%s2182 + $0x108] sm:$0xff]
        %v3280 = vld [vmem:[%s2182 + $0x110] sm:$0xff]
        %v3281 = vld [vmem:[%s2182 + $0x118] sm:$0xff]
        %v3282 = vld [vmem:[%s2182 + $0x120] sm:$0xff]
        %v3283 = vld [vmem:[%s2182 + $0x128] sm:$0xff]
        %v3284 = vld [vmem:[%s2182 + $0x130] sm:$0xff]
        %v3285 = vld [vmem:[%s2182 + $0x138] sm:$0xff]
        %v3286 = vld [vmem:[%s2182 + $0x140] sm:$0xff]
        %v3287 = vld [vmem:[%s2182 + $0x148] sm:$0xff]
        %v3288 = vld [vmem:[%s2182 + $0x150] sm:$0xff]
        %v3289 = vld [vmem:[%s2182 + $0x158] sm:$0xff]
        %v3290 = vld [vmem:[%s2182 + $0x160] sm:$0xff]
        %v3291 = vld [vmem:[%s2182 + $0x168] sm:$0xff]
        %v3292 = vld [vmem:[%s2182 + $0x170] sm:$0xff]
        %v3293 = vld [vmem:[%s2182 + $0x178] sm:$0xff]
        %v3294 = vld [vmem:[%s2182 + $0x180] sm:$0xff]
        %v3295 = vld [vmem:[%s2182 + $0x188] sm:$0xff]
        %v3296 = vld [vmem:[%s2182 + $0x190] sm:$0xff]
        %v3297 = vld [vmem:[%s2182 + $0x198] sm:$0xff]
        %v3298 = vld [vmem:[%s2182 + $0x1a0] sm:$0xff]
        %v3299 = vld [vmem:[%s2182 + $0x1a8] sm:$0xff]
        %v3300 = vld [vmem:[%s2182 + $0x1b0] sm:$0xff]
        %v3301 = vld [vmem:[%s2182 + $0x1b8] sm:$0xff]
        %v3302 = vld [vmem:[%s2182 + $0x1c0] sm:$0xff]
        %v3303 = vld [vmem:[%s2182 + $0x1c8] sm:$0xff]
        %v3304 = vld [vmem:[%s2182 + $0x1d0] sm:$0xff]
        %v3305 = vld [vmem:[%s2182 + $0x1d8] sm:$0xff]
        %v3306 = vld [vmem:[%s2182 + $0x1e0] sm:$0xff]
        %v3307 = vld [vmem:[%s2182 + $0x1e8] sm:$0xff]
        %v3308 = vld [vmem:[%s2182 + $0x1f0] sm:$0xff]
        %v3309 = vld [vmem:[%s2182 + $0x1f8] sm:$0xff]
        %v3310 = vld [vmem:[%s2247] sm:$0xff]
        %v3311 = vld [vmem:[%s2247 + $0x8] sm:$0xff]
        %v3312 = vld [vmem:[%s2247 + $0x10] sm:$0xff]
        %v3313 = vld [vmem:[%s2247 + $0x18] sm:$0xff]
        %v3314 = vld [vmem:[%s2247 + $0x20] sm:$0xff]
        %v3315 = vld [vmem:[%s2247 + $0x28] sm:$0xff]
        %v3316 = vld [vmem:[%s2247 + $0x30] sm:$0xff]
        %v3317 = vld [vmem:[%s2247 + $0x38] sm:$0xff]
        %v3318 = vld [vmem:[%s2247 + $0x40] sm:$0xff]
        %v3319 = vld [vmem:[%s2247 + $0x48] sm:$0xff]
        %v3320 = vld [vmem:[%s2247 + $0x50] sm:$0xff]
        %v3321 = vld [vmem:[%s2247 + $0x58] sm:$0xff]
        %v3322 = vld [vmem:[%s2247 + $0x60] sm:$0xff]
        %v3323 = vld [vmem:[%s2247 + $0x68] sm:$0xff]
        %v3324 = vld [vmem:[%s2247 + $0x70] sm:$0xff]
        %v3325 = vld [vmem:[%s2247 + $0x78] sm:$0xff]
        %v3326 = vld [vmem:[%s2247 + $0x80] sm:$0xff]
        %v3327 = vld [vmem:[%s2247 + $0x88] sm:$0xff]
        %v3328 = vld [vmem:[%s2247 + $0x90] sm:$0xff]
        %v3329 = vld [vmem:[%s2247 + $0x98] sm:$0xff]
        %v3330 = vld [vmem:[%s2247 + $0xa0] sm:$0xff]
        %v3331 = vld [vmem:[%s2247 + $0xa8] sm:$0xff]
        %v3332 = vld [vmem:[%s2247 + $0xb0] sm:$0xff]
        %v3333 = vld [vmem:[%s2247 + $0xb8] sm:$0xff]
        %v3334 = vld [vmem:[%s2247 + $0xc0] sm:$0xff]
        %v3335 = vld [vmem:[%s2247 + $0xc8] sm:$0xff]
        %v3336 = vld [vmem:[%s2247 + $0xd0] sm:$0xff]
        %v3337 = vld [vmem:[%s2247 + $0xd8] sm:$0xff]
        %v3338 = vld [vmem:[%s2247 + $0xe0] sm:$0xff]
        %v3339 = vld [vmem:[%s2247 + $0xe8] sm:$0xff]
        %v3340 = vld [vmem:[%s2247 + $0xf0] sm:$0xff]
        %v3341 = vld [vmem:[%s2247 + $0xf8] sm:$0xff]
        %v3342 = vld [vmem:[%s2247 + $0x100] sm:$0xff]
        %v3343 = vld [vmem:[%s2247 + $0x108] sm:$0xff]
        %v3344 = vld [vmem:[%s2247 + $0x110] sm:$0xff]
        %v3345 = vld [vmem:[%s2247 + $0x118] sm:$0xff]
        %v3346 = vld [vmem:[%s2247 + $0x120] sm:$0xff]
        %v3347 = vld [vmem:[%s2247 + $0x128] sm:$0xff]
        %v3348 = vld [vmem:[%s2247 + $0x130] sm:$0xff]
        %v3349 = vld [vmem:[%s2247 + $0x138] sm:$0xff]
        %v3350 = vld [vmem:[%s2247 + $0x140] sm:$0xff]
        %v3351 = vld [vmem:[%s2247 + $0x148] sm:$0xff]
        %v3352 = vld [vmem:[%s2247 + $0x150] sm:$0xff]
        %v3353 = vld [vmem:[%s2247 + $0x158] sm:$0xff]
        %v3354 = vld [vmem:[%s2247 + $0x160] sm:$0xff]
        %v3355 = vld [vmem:[%s2247 + $0x168] sm:$0xff]
        %v3356 = vld [vmem:[%s2247 + $0x170] sm:$0xff]
        %v3357 = vld [vmem:[%s2247 + $0x178] sm:$0xff]
        %v3358 = vld [vmem:[%s2247 + $0x180] sm:$0xff]
        %v3359 = vld [vmem:[%s2247 + $0x188] sm:$0xff]
        %v3360 = vld [vmem:[%s2247 + $0x190] sm:$0xff]
        %v3361 = vld [vmem:[%s2247 + $0x198] sm:$0xff]
        %v3362 = vld [vmem:[%s2247 + $0x1a0] sm:$0xff]
        %v3363 = vld [vmem:[%s2247 + $0x1a8] sm:$0xff]
        %v3364 = vld [vmem:[%s2247 + $0x1b0] sm:$0xff]
        %v3365 = vld [vmem:[%s2247 + $0x1b8] sm:$0xff]
        %v3366 = vld [vmem:[%s2247 + $0x1c0] sm:$0xff]
        %v3367 = vld [vmem:[%s2247 + $0x1c8] sm:$0xff]
        %v3368 = vld [vmem:[%s2247 + $0x1d0] sm:$0xff]
        %v3369 = vld [vmem:[%s2247 + $0x1d8] sm:$0xff]
        %v3370 = vld [vmem:[%s2247 + $0x1e0] sm:$0xff]
        %v3371 = vld [vmem:[%s2247 + $0x1e8] sm:$0xff]
        %v3372 = vld [vmem:[%s2247 + $0x1f0] sm:$0xff]
        %v3373 = vld [vmem:[%s2247 + $0x1f8] sm:$0xff]
        %v3374 = vld [vmem:[%s4] sm:$0xf]
        %3375 = vmatpush.msra.mxu0 %v3242
        %3376 = vmatpush.msra.mxu0 %v3238
        %3377 = vmatpush.msra.mxu0 %v3234
        %3378 = vmatpush.msra.mxu0 %v3230
        %3379 = vmatpush.msra.mxu0 %v3226
        %3380 = vmatpush.msra.mxu0 %v3222
        %3381 = vmatpush.msra.mxu0 %v3218
        %3382 = vmatpush.msra.mxu0 %v3214
        %3383 = vmatpush.msra.mxu0 %v3210
        %3384 = vmatpush.msra.mxu0 %v3206
        %3385 = vmatpush.msra.mxu0 %v3202
        %3386 = vmatpush.msra.mxu0 %v3198
        %3387 = vmatpush.msra.mxu0 %v3194
        %3388 = vmatpush.msra.mxu0 %v3190
        %3389 = vmatpush.msra.mxu0 %v3186
        %3390 = vmatpush.msra.mxu0 %v3182
        %3391 = vmatmul.f32.gmra.mxu0 %v3178
        %v3392 = vpop.f32.mrf.mxu0
        %v3393 = vadd.f32 0.0, %v3392
        %3394 = vmatmul.f32.gmra.mxu0 %v3179
        %v3395 = vpop.f32.mrf.mxu0
        %v3396 = vadd.f32 0.0, %v3395
        %3397 = vdwg.mxu0
        %3398 = vmatpush.msra.mxu0 %v3243
        %3399 = vmatpush.msra.mxu0 %v3239
        %3400 = vmatpush.msra.mxu0 %v3235
        %3401 = vmatpush.msra.mxu0 %v3231
        %3402 = vmatpush.msra.mxu0 %v3227
        %3403 = vmatpush.msra.mxu0 %v3223
        %3404 = vmatpush.msra.mxu0 %v3219
        %3405 = vmatpush.msra.mxu0 %v3215
        %3406 = vmatpush.msra.mxu0 %v3211
        %3407 = vmatpush.msra.mxu0 %v3207
        %3408 = vmatpush.msra.mxu0 %v3203
        %3409 = vmatpush.msra.mxu0 %v3199
        %3410 = vmatpush.msra.mxu0 %v3195
        %3411 = vmatpush.msra.mxu0 %v3191
        %3412 = vmatpush.msra.mxu0 %v3187
        %3413 = vmatpush.msra.mxu0 %v3183
        %3414 = vmatmul.f32.gmra.mxu0 %v3178
        %v3415 = vpop.f32.mrf.mxu0
        %v3416 = vadd.f32 0.0, %v3415
        %3417 = vmatmul.f32.gmra.mxu0 %v3179
        %v3418 = vpop.f32.mrf.mxu0
        %v3419 = vadd.f32 0.0, %v3418
        %3420 = vdwg.mxu0
        %3421 = vmatpush.msra.mxu0 %v3244
        %3422 = vmatpush.msra.mxu0 %v3240
        %3423 = vmatpush.msra.mxu0 %v3236
        %3424 = vmatpush.msra.mxu0 %v3232
        %3425 = vmatpush.msra.mxu0 %v3228
        %3426 = vmatpush.msra.mxu0 %v3224
        %3427 = vmatpush.msra.mxu0 %v3220
        %3428 = vmatpush.msra.mxu0 %v3216
        %3429 = vmatpush.msra.mxu0 %v3212
        %3430 = vmatpush.msra.mxu0 %v3208
        %3431 = vmatpush.msra.mxu0 %v3204
        %3432 = vmatpush.msra.mxu0 %v3200
        %3433 = vmatpush.msra.mxu0 %v3196
        %3434 = vmatpush.msra.mxu0 %v3192
        %3435 = vmatpush.msra.mxu0 %v3188
        %3436 = vmatpush.msra.mxu0 %v3184
        %3437 = vmatmul.f32.gmra.mxu0 %v3178
        %v3438 = vpop.f32.mrf.mxu0
        %v3439 = vadd.f32 0.0, %v3438
        %3440 = vmatmul.f32.gmra.mxu0 %v3179
        %v3441 = vpop.f32.mrf.mxu0
        %v3442 = vadd.f32 0.0, %v3441
        %3443 = vdwg.mxu0
        %3444 = vmatpush.msra.mxu0 %v3245
        %3445 = vmatpush.msra.mxu0 %v3241
        %3446 = vmatpush.msra.mxu0 %v3237
        %3447 = vmatpush.msra.mxu0 %v3233
        %3448 = vmatpush.msra.mxu0 %v3229
        %3449 = vmatpush.msra.mxu0 %v3225
        %3450 = vmatpush.msra.mxu0 %v3221
        %3451 = vmatpush.msra.mxu0 %v3217
        %3452 = vmatpush.msra.mxu0 %v3213
        %3453 = vmatpush.msra.mxu0 %v3209
        %3454 = vmatpush.msra.mxu0 %v3205
        %3455 = vmatpush.msra.mxu0 %v3201
        %3456 = vmatpush.msra.mxu0 %v3197
        %3457 = vmatpush.msra.mxu0 %v3193
        %3458 = vmatpush.msra.mxu0 %v3189
        %3459 = vmatpush.msra.mxu0 %v3185
        %3460 = vmatmul.f32.gmra.mxu0 %v3178
        %v3461 = vpop.f32.mrf.mxu0
        %v3462 = vadd.f32 0.0, %v3461
        %3463 = vmatmul.f32.gmra.mxu0 %v3179
        %v3464 = vpop.f32.mrf.mxu0
        %v3465 = vadd.f32 0.0, %v3464
        %3466 = vdwg.mxu0
        %3467 = vmatpush.msra.mxu0 %v3370
        %3468 = vmatpush.msra.mxu0 %v3366
        %3469 = vmatpush.msra.mxu0 %v3362
        %3470 = vmatpush.msra.mxu0 %v3358
        %3471 = vmatpush.msra.mxu0 %v3354
        %3472 = vmatpush.msra.mxu0 %v3350
        %3473 = vmatpush.msra.mxu0 %v3346
        %3474 = vmatpush.msra.mxu0 %v3342
        %3475 = vmatpush.msra.mxu0 %v3338
        %3476 = vmatpush.msra.mxu0 %v3334
        %3477 = vmatpush.msra.mxu0 %v3330
        %3478 = vmatpush.msra.mxu0 %v3326
        %3479 = vmatpush.msra.mxu0 %v3322
        %3480 = vmatpush.msra.mxu0 %v3318
        %3481 = vmatpush.msra.mxu0 %v3314
        %3482 = vmatpush.msra.mxu0 %v3310
        %3483 = vmatmul.f32.gmra.mxu0 %v3178
        %v3484 = vpop.f32.mrf.mxu0
        %v3485 = vadd.f32 0.0, %v3484
        %3486 = vmatmul.f32.gmra.mxu0 %v3179
        %v3487 = vpop.f32.mrf.mxu0
        %v3488 = vadd.f32 0.0, %v3487
        %3489 = vdwg.mxu0
        %3490 = vmatpush.msra.mxu0 %v3371
        %3491 = vmatpush.msra.mxu0 %v3367
        %3492 = vmatpush.msra.mxu0 %v3363
        %3493 = vmatpush.msra.mxu0 %v3359
        %3494 = vmatpush.msra.mxu0 %v3355
        %3495 = vmatpush.msra.mxu0 %v3351
        %3496 = vmatpush.msra.mxu0 %v3347
        %3497 = vmatpush.msra.mxu0 %v3343
        %3498 = vmatpush.msra.mxu0 %v3339
        %3499 = vmatpush.msra.mxu0 %v3335
        %3500 = vmatpush.msra.mxu0 %v3331
        %3501 = vmatpush.msra.mxu0 %v3327
        %3502 = vmatpush.msra.mxu0 %v3323
        %3503 = vmatpush.msra.mxu0 %v3319
        %3504 = vmatpush.msra.mxu0 %v3315
        %3505 = vmatpush.msra.mxu0 %v3311
        %3506 = vmatmul.f32.gmra.mxu0 %v3178
        %v3507 = vpop.f32.mrf.mxu0
        %v3508 = vadd.f32 0.0, %v3507
        %3509 = vmatmul.f32.gmra.mxu0 %v3179
        %v3510 = vpop.f32.mrf.mxu0
        %v3511 = vadd.f32 0.0, %v3510
        %3512 = vdwg.mxu0
        %3513 = vmatpush.msra.mxu0 %v3372
        %3514 = vmatpush.msra.mxu0 %v3368
        %3515 = vmatpush.msra.mxu0 %v3364
        %3516 = vmatpush.msra.mxu0 %v3360
        %3517 = vmatpush.msra.mxu0 %v3356
        %3518 = vmatpush.msra.mxu0 %v3352
        %3519 = vmatpush.msra.mxu0 %v3348
        %3520 = vmatpush.msra.mxu0 %v3344
        %3521 = vmatpush.msra.mxu0 %v3340
        %3522 = vmatpush.msra.mxu0 %v3336
        %3523 = vmatpush.msra.mxu0 %v3332
        %3524 = vmatpush.msra.mxu0 %v3328
        %3525 = vmatpush.msra.mxu0 %v3324
        %3526 = vmatpush.msra.mxu0 %v3320
        %3527 = vmatpush.msra.mxu0 %v3316
        %3528 = vmatpush.msra.mxu0 %v3312
        %3529 = vmatmul.f32.gmra.mxu0 %v3178
        %v3530 = vpop.f32.mrf.mxu0
        %v3531 = vadd.f32 0.0, %v3530
        %3532 = vmatmul.f32.gmra.mxu0 %v3179
        %v3533 = vpop.f32.mrf.mxu0
        %v3534 = vadd.f32 0.0, %v3533
        %3535 = vdwg.mxu0
        %3536 = vmatpush.msra.mxu0 %v3373
        %3537 = vmatpush.msra.mxu0 %v3369
        %3538 = vmatpush.msra.mxu0 %v3365
        %3539 = vmatpush.msra.mxu0 %v3361
        %3540 = vmatpush.msra.mxu0 %v3357
        %3541 = vmatpush.msra.mxu0 %v3353
        %3542 = vmatpush.msra.mxu0 %v3349
        %3543 = vmatpush.msra.mxu0 %v3345
        %3544 = vmatpush.msra.mxu0 %v3341
        %3545 = vmatpush.msra.mxu0 %v3337
        %3546 = vmatpush.msra.mxu0 %v3333
        %3547 = vmatpush.msra.mxu0 %v3329
        %3548 = vmatpush.msra.mxu0 %v3325
        %3549 = vmatpush.msra.mxu0 %v3321
        %3550 = vmatpush.msra.mxu0 %v3317
        %3551 = vmatpush.msra.mxu0 %v3313
        %3552 = vmatmul.f32.gmra.mxu0 %v3178
        %v3553 = vpop.f32.mrf.mxu0
        %v3554 = vadd.f32 0.0, %v3553
        %3555 = vmatmul.f32.gmra.mxu0 %v3179
        %v3556 = vpop.f32.mrf.mxu0
        %v3557 = vadd.f32 0.0, %v3556
        %3558 = vdwg.mxu0
        %v3567 = vrot.slane %v3393, 7
        %v3568 = vrot.slane %v3416, 7
        %v3569 = vrot.slane %v3439, 7
        %v3570 = vrot.slane %v3462, 7
        %v3571 = vrot.slane %v3396, 7
        %v3572 = vsel %vm491, %v3567, %v3571
        %v3573 = vrot.slane %v3419, 7
        %v3574 = vsel %vm491, %v3568, %v3573
        %v3575 = vrot.slane %v3442, 7
        %v3576 = vsel %vm491, %v3569, %v3575
        %v3577 = vrot.slane %v3465, 7
        %v3578 = vsel %vm491, %v3570, %v3577
        %v3587 = vsel %vm491, 0.0, %v3567
        %v3588 = vsel %vm491, 0.0, %v3568
        %v3589 = vsel %vm491, 0.0, %v3569
        %v3590 = vsel %vm491, 0.0, %v3570
        %3591 = vmatpush.msra.mxu0 %v3306
        %3592 = vmatpush.msra.mxu0 %v3302
        %3593 = vmatpush.msra.mxu0 %v3298
        %3594 = vmatpush.msra.mxu0 %v3294
        %3595 = vmatpush.msra.mxu0 %v3290
        %3596 = vmatpush.msra.mxu0 %v3286
        %3597 = vmatpush.msra.mxu0 %v3282
        %3598 = vmatpush.msra.mxu0 %v3278
        %3599 = vmatpush.msra.mxu0 %v3274
        %3600 = vmatpush.msra.mxu0 %v3270
        %3601 = vmatpush.msra.mxu0 %v3266
        %3602 = vmatpush.msra.mxu0 %v3262
        %3603 = vmatpush.msra.mxu0 %v3258
        %3604 = vmatpush.msra.mxu0 %v3254
        %3605 = vmatpush.msra.mxu0 %v3250
        %3606 = vmatpush.msra.mxu0 %v3246
        %3607 = vmatmul.f32.gmra.mxu0 %v3178
        %v3608 = vpop.f32.mrf.mxu0
        %v3609 = vadd.f32 %v3587, %v3608
        %3610 = vmatmul.f32.gmra.mxu0 %v3179
        %v3611 = vpop.f32.mrf.mxu0
        %v3612 = vadd.f32 %v3572, %v3611
        %3613 = vdwg.mxu0
        %3614 = vmatpush.msra.mxu0 %v3307
        %3615 = vmatpush.msra.mxu0 %v3303
        %3616 = vmatpush.msra.mxu0 %v3299
        %3617 = vmatpush.msra.mxu0 %v3295
        %3618 = vmatpush.msra.mxu0 %v3291
        %3619 = vmatpush.msra.mxu0 %v3287
        %3620 = vmatpush.msra.mxu0 %v3283
        %3621 = vmatpush.msra.mxu0 %v3279
        %3622 = vmatpush.msra.mxu0 %v3275
        %3623 = vmatpush.msra.mxu0 %v3271
        %3624 = vmatpush.msra.mxu0 %v3267
        %3625 = vmatpush.msra.mxu0 %v3263
        %3626 = vmatpush.msra.mxu0 %v3259
        %3627 = vmatpush.msra.mxu0 %v3255
        %3628 = vmatpush.msra.mxu0 %v3251
        %3629 = vmatpush.msra.mxu0 %v3247
        %3630 = vmatmul.f32.gmra.mxu0 %v3178
        %v3631 = vpop.f32.mrf.mxu0
        %v3632 = vadd.f32 %v3588, %v3631
        %3633 = vmatmul.f32.gmra.mxu0 %v3179
        %v3634 = vpop.f32.mrf.mxu0
        %v3635 = vadd.f32 %v3574, %v3634
        %3636 = vdwg.mxu0
        %3637 = vmatpush.msra.mxu0 %v3308
        %3638 = vmatpush.msra.mxu0 %v3304
        %3639 = vmatpush.msra.mxu0 %v3300
        %3640 = vmatpush.msra.mxu0 %v3296
        %3641 = vmatpush.msra.mxu0 %v3292
        %3642 = vmatpush.msra.mxu0 %v3288
        %3643 = vmatpush.msra.mxu0 %v3284
        %3644 = vmatpush.msra.mxu0 %v3280
        %3645 = vmatpush.msra.mxu0 %v3276
        %3646 = vmatpush.msra.mxu0 %v3272
        %3647 = vmatpush.msra.mxu0 %v3268
        %3648 = vmatpush.msra.mxu0 %v3264
        %3649 = vmatpush.msra.mxu0 %v3260
        %3650 = vmatpush.msra.mxu0 %v3256
        %3651 = vmatpush.msra.mxu0 %v3252
        %3652 = vmatpush.msra.mxu0 %v3248
        %3653 = vmatmul.f32.gmra.mxu0 %v3178
        %v3654 = vpop.f32.mrf.mxu0
        %v3655 = vadd.f32 %v3589, %v3654
        %3656 = vmatmul.f32.gmra.mxu0 %v3179
        %v3657 = vpop.f32.mrf.mxu0
        %v3658 = vadd.f32 %v3576, %v3657
        %3659 = vdwg.mxu0
        %3660 = vmatpush.msra.mxu0 %v3309
        %3661 = vmatpush.msra.mxu0 %v3305
        %3662 = vmatpush.msra.mxu0 %v3301
        %3663 = vmatpush.msra.mxu0 %v3297
        %3664 = vmatpush.msra.mxu0 %v3293
        %3665 = vmatpush.msra.mxu0 %v3289
        %3666 = vmatpush.msra.mxu0 %v3285
        %3667 = vmatpush.msra.mxu0 %v3281
        %3668 = vmatpush.msra.mxu0 %v3277
        %3669 = vmatpush.msra.mxu0 %v3273
        %3670 = vmatpush.msra.mxu0 %v3269
        %3671 = vmatpush.msra.mxu0 %v3265
        %3672 = vmatpush.msra.mxu0 %v3261
        %3673 = vmatpush.msra.mxu0 %v3257
        %3674 = vmatpush.msra.mxu0 %v3253
        %3675 = vmatpush.msra.mxu0 %v3249
        %3676 = vmatmul.f32.gmra.mxu0 %v3178
        %v3677 = vpop.f32.mrf.mxu0
        %v3678 = vadd.f32 %v3590, %v3677
        %3679 = vmatmul.f32.gmra.mxu0 %v3179
        %v3680 = vpop.f32.mrf.mxu0
        %v3681 = vadd.f32 %v3578, %v3680
        %3682 = vdwg.mxu0
        %v3691 = vrot.slane %v3485, 1
        %v3692 = vrot.slane %v3488, 1
        %v3693 = vsel %vm546, %v3691, %v3692
        %v3694 = vrot.slane %v3508, 1
        %v3695 = vrot.slane %v3511, 1
        %v3696 = vsel %vm546, %v3694, %v3695
        %v3697 = vrot.slane %v3531, 1
        %v3698 = vrot.slane %v3534, 1
        %v3699 = vsel %vm546, %v3697, %v3698
        %v3700 = vrot.slane %v3554, 1
        %v3701 = vrot.slane %v3557, 1
        %v3702 = vsel %vm546, %v3700, %v3701
        %v3711 = vsel %vm546, %v3692, 0.0
        %v3712 = vsel %vm546, %v3695, 0.0
        %v3713 = vsel %vm546, %v3698, 0.0
        %v3714 = vsel %vm546, %v3701, 0.0
        %v3715 = vadd.f32 %v3609, %v3693
        %v3716 = vadd.f32 %v3632, %v3696
        %v3717 = vadd.f32 %v3655, %v3699
        %v3718 = vadd.f32 %v3678, %v3702
        %v3719 = vadd.f32 %v3612, %v3711
        %v3720 = vadd.f32 %v3635, %v3712
        %v3721 = vadd.f32 %v3658, %v3713
        %v3722 = vadd.f32 %v3681, %v3714
        %v3724 = vperm.slane %v3374, 0
        %v3725 = vperm.slane %v3374, 1
        %v3726 = vperm.slane %v3374, 2
        %v3727 = vperm.slane %v3374, 3
        %v3732 = vadd.f32 %v3715, %v3724
        %v3733 = vadd.f32 %v3716, %v3725
        %v3734 = vadd.f32 %v3717, %v3726
        %v3735 = vadd.f32 %v3718, %v3727
        %v3736 = vadd.f32 %v3719, %v3724
        %v3737 = vadd.f32 %v3720, %v3725
        %v3738 = vadd.f32 %v3721, %v3726
        %v3739 = vadd.f32 %v3722, %v3727
        %v3740 = vmax.f32 %v3732, 0.0
        %v3741 = vmax.f32 %v3733, 0.0
        %v3742 = vmax.f32 %v3734, 0.0
        %v3743 = vmax.f32 %v3735, 0.0
        %v3744 = vmax.f32 %v3736, 0.0
        %v3745 = vmax.f32 %v3737, 0.0
        %v3746 = vmax.f32 %v3738, 0.0
        %v3747 = vmax.f32 %v3739, 0.0
        %v3748 = vld [vmem:[#allocation2] sm:$0xff]
        %v3749 = vld [vmem:[#allocation2 + $0x8] sm:$0xff]
        %v3750 = vld [vmem:[#allocation2 + $0x10] sm:$0xff]
        %v3751 = vld [vmem:[#allocation2 + $0x18] sm:$0xff]
        %v3752 = vld [vmem:[#allocation2 + $0x20] sm:$0xff]
        %v3753 = vld [vmem:[#allocation2 + $0x28] sm:$0xff]
        %v3754 = vld [vmem:[#allocation2 + $0x30] sm:$0xff]
        %v3755 = vld [vmem:[#allocation2 + $0x38] sm:$0xff]
        %v3756 = vld [vmem:[#allocation2 + $0x40] sm:$0xff]
        %v3757 = vld [vmem:[#allocation2 + $0x48] sm:$0xff]
        %v3758 = vld [vmem:[#allocation2 + $0x50] sm:$0xff]
        %v3759 = vld [vmem:[#allocation2 + $0x58] sm:$0xff]
        %v3760 = vld [vmem:[#allocation2 + $0x60] sm:$0xff]
        %v3761 = vld [vmem:[#allocation2 + $0x68] sm:$0xff]
        %v3762 = vld [vmem:[#allocation2 + $0x70] sm:$0xff]
        %v3763 = vld [vmem:[#allocation2 + $0x78] sm:$0xff]
        %v3764 = vld [vmem:[#allocation2 + $0x80] sm:$0xff]
        %v3765 = vld [vmem:[#allocation2 + $0x88] sm:$0xff]
        %v3766 = vld [vmem:[#allocation2 + $0x90] sm:$0xff]
        %v3767 = vld [vmem:[#allocation2 + $0x98] sm:$0xff]
        %v3768 = vld [vmem:[#allocation2 + $0xa0] sm:$0xff]
        %v3769 = vld [vmem:[#allocation2 + $0xa8] sm:$0xff]
        %v3770 = vld [vmem:[#allocation2 + $0xb0] sm:$0xff]
        %v3771 = vld [vmem:[#allocation2 + $0xb8] sm:$0xff]
        %v3772 = vld [vmem:[#allocation2 + $0xc0] sm:$0xff]
        %v3773 = vld [vmem:[#allocation2 + $0xc8] sm:$0xff]
        %v3774 = vld [vmem:[#allocation2 + $0xd0] sm:$0xff]
        %v3775 = vld [vmem:[#allocation2 + $0xd8] sm:$0xff]
        %v3776 = vld [vmem:[#allocation2 + $0xe0] sm:$0xff]
        %v3777 = vld [vmem:[#allocation2 + $0xe8] sm:$0xff]
        %v3778 = vld [vmem:[#allocation2 + $0xf0] sm:$0xff]
        %v3779 = vld [vmem:[#allocation2 + $0xf8] sm:$0xff]
        %v3780 = vld [vmem:[#allocation2 + $0x100] sm:$0xff]
        %v3781 = vld [vmem:[#allocation2 + $0x108] sm:$0xff]
        %v3782 = vld [vmem:[#allocation2 + $0x110] sm:$0xff]
        %v3783 = vld [vmem:[#allocation2 + $0x118] sm:$0xff]
        %v3784 = vld [vmem:[#allocation2 + $0x120] sm:$0xff]
        %v3785 = vld [vmem:[#allocation2 + $0x128] sm:$0xff]
        %v3786 = vld [vmem:[#allocation2 + $0x130] sm:$0xff]
        %v3787 = vld [vmem:[#allocation2 + $0x138] sm:$0xff]
        %v3788 = vld [vmem:[#allocation2 + $0x140] sm:$0xff]
        %v3789 = vld [vmem:[#allocation2 + $0x148] sm:$0xff]
        %v3790 = vld [vmem:[#allocation2 + $0x150] sm:$0xff]
        %v3791 = vld [vmem:[#allocation2 + $0x158] sm:$0xff]
        %v3792 = vld [vmem:[#allocation2 + $0x160] sm:$0xff]
        %v3793 = vld [vmem:[#allocation2 + $0x168] sm:$0xff]
        %v3794 = vld [vmem:[#allocation2 + $0x170] sm:$0xff]
        %v3795 = vld [vmem:[#allocation2 + $0x178] sm:$0xff]
        %v3796 = vld [vmem:[#allocation2 + $0x180] sm:$0xff]
        %v3797 = vld [vmem:[#allocation2 + $0x188] sm:$0xff]
        %v3798 = vld [vmem:[#allocation2 + $0x190] sm:$0xff]
        %v3799 = vld [vmem:[#allocation2 + $0x198] sm:$0xff]
        %v3800 = vld [vmem:[#allocation2 + $0x1a0] sm:$0xff]
        %v3801 = vld [vmem:[#allocation2 + $0x1a8] sm:$0xff]
        %v3802 = vld [vmem:[#allocation2 + $0x1b0] sm:$0xff]
        %v3803 = vld [vmem:[#allocation2 + $0x1b8] sm:$0xff]
        %v3804 = vld [vmem:[#allocation2 + $0x1c0] sm:$0xff]
        %v3805 = vld [vmem:[#allocation2 + $0x1c8] sm:$0xff]
        %v3806 = vld [vmem:[#allocation2 + $0x1d0] sm:$0xff]
        %v3807 = vld [vmem:[#allocation2 + $0x1d8] sm:$0xff]
        %v3808 = vld [vmem:[#allocation2 + $0x1e0] sm:$0xff]
        %v3809 = vld [vmem:[#allocation2 + $0x1e8] sm:$0xff]
        %v3810 = vld [vmem:[#allocation2 + $0x1f0] sm:$0xff]
        %v3811 = vld [vmem:[#allocation2 + $0x1f8] sm:$0xff]
        %v3812 = vld [vmem:[%s2750] sm:$0xff]
        %v3813 = vld [vmem:[%s2750 + $0x8] sm:$0xff]
        %v3814 = vld [vmem:[%s2750 + $0x10] sm:$0xff]
        %v3815 = vld [vmem:[%s2750 + $0x18] sm:$0xff]
        %v3816 = vld [vmem:[%s2750 + $0x20] sm:$0xff]
        %v3817 = vld [vmem:[%s2750 + $0x28] sm:$0xff]
        %v3818 = vld [vmem:[%s2750 + $0x30] sm:$0xff]
        %v3819 = vld [vmem:[%s2750 + $0x38] sm:$0xff]
        %v3820 = vld [vmem:[%s2750 + $0x40] sm:$0xff]
        %v3821 = vld [vmem:[%s2750 + $0x48] sm:$0xff]
        %v3822 = vld [vmem:[%s2750 + $0x50] sm:$0xff]
        %v3823 = vld [vmem:[%s2750 + $0x58] sm:$0xff]
        %v3824 = vld [vmem:[%s2750 + $0x60] sm:$0xff]
        %v3825 = vld [vmem:[%s2750 + $0x68] sm:$0xff]
        %v3826 = vld [vmem:[%s2750 + $0x70] sm:$0xff]
        %v3827 = vld [vmem:[%s2750 + $0x78] sm:$0xff]
        %v3828 = vld [vmem:[%s2750 + $0x80] sm:$0xff]
        %v3829 = vld [vmem:[%s2750 + $0x88] sm:$0xff]
        %v3830 = vld [vmem:[%s2750 + $0x90] sm:$0xff]
        %v3831 = vld [vmem:[%s2750 + $0x98] sm:$0xff]
        %v3832 = vld [vmem:[%s2750 + $0xa0] sm:$0xff]
        %v3833 = vld [vmem:[%s2750 + $0xa8] sm:$0xff]
        %v3834 = vld [vmem:[%s2750 + $0xb0] sm:$0xff]
        %v3835 = vld [vmem:[%s2750 + $0xb8] sm:$0xff]
        %v3836 = vld [vmem:[%s2750 + $0xc0] sm:$0xff]
        %v3837 = vld [vmem:[%s2750 + $0xc8] sm:$0xff]
        %v3838 = vld [vmem:[%s2750 + $0xd0] sm:$0xff]
        %v3839 = vld [vmem:[%s2750 + $0xd8] sm:$0xff]
        %v3840 = vld [vmem:[%s2750 + $0xe0] sm:$0xff]
        %v3841 = vld [vmem:[%s2750 + $0xe8] sm:$0xff]
        %v3842 = vld [vmem:[%s2750 + $0xf0] sm:$0xff]
        %v3843 = vld [vmem:[%s2750 + $0xf8] sm:$0xff]
        %v3844 = vld [vmem:[%s2750 + $0x100] sm:$0xff]
        %v3845 = vld [vmem:[%s2750 + $0x108] sm:$0xff]
        %v3846 = vld [vmem:[%s2750 + $0x110] sm:$0xff]
        %v3847 = vld [vmem:[%s2750 + $0x118] sm:$0xff]
        %v3848 = vld [vmem:[%s2750 + $0x120] sm:$0xff]
        %v3849 = vld [vmem:[%s2750 + $0x128] sm:$0xff]
        %v3850 = vld [vmem:[%s2750 + $0x130] sm:$0xff]
        %v3851 = vld [vmem:[%s2750 + $0x138] sm:$0xff]
        %v3852 = vld [vmem:[%s2750 + $0x140] sm:$0xff]
        %v3853 = vld [vmem:[%s2750 + $0x148] sm:$0xff]
        %v3854 = vld [vmem:[%s2750 + $0x150] sm:$0xff]
        %v3855 = vld [vmem:[%s2750 + $0x158] sm:$0xff]
        %v3856 = vld [vmem:[%s2750 + $0x160] sm:$0xff]
        %v3857 = vld [vmem:[%s2750 + $0x168] sm:$0xff]
        %v3858 = vld [vmem:[%s2750 + $0x170] sm:$0xff]
        %v3859 = vld [vmem:[%s2750 + $0x178] sm:$0xff]
        %v3860 = vld [vmem:[%s2750 + $0x180] sm:$0xff]
        %v3861 = vld [vmem:[%s2750 + $0x188] sm:$0xff]
        %v3862 = vld [vmem:[%s2750 + $0x190] sm:$0xff]
        %v3863 = vld [vmem:[%s2750 + $0x198] sm:$0xff]
        %v3864 = vld [vmem:[%s2750 + $0x1a0] sm:$0xff]
        %v3865 = vld [vmem:[%s2750 + $0x1a8] sm:$0xff]
        %v3866 = vld [vmem:[%s2750 + $0x1b0] sm:$0xff]
        %v3867 = vld [vmem:[%s2750 + $0x1b8] sm:$0xff]
        %v3868 = vld [vmem:[%s2750 + $0x1c0] sm:$0xff]
        %v3869 = vld [vmem:[%s2750 + $0x1c8] sm:$0xff]
        %v3870 = vld [vmem:[%s2750 + $0x1d0] sm:$0xff]
        %v3871 = vld [vmem:[%s2750 + $0x1d8] sm:$0xff]
        %v3872 = vld [vmem:[%s2750 + $0x1e0] sm:$0xff]
        %v3873 = vld [vmem:[%s2750 + $0x1e8] sm:$0xff]
        %v3874 = vld [vmem:[%s2750 + $0x1f0] sm:$0xff]
        %v3875 = vld [vmem:[%s2750 + $0x1f8] sm:$0xff]
        %v3876 = vld [vmem:[%s2815] sm:$0xff]
        %v3877 = vld [vmem:[%s2815 + $0x8] sm:$0xff]
        %v3878 = vld [vmem:[%s2815 + $0x10] sm:$0xff]
        %v3879 = vld [vmem:[%s2815 + $0x18] sm:$0xff]
        %v3880 = vld [vmem:[%s2815 + $0x20] sm:$0xff]
        %v3881 = vld [vmem:[%s2815 + $0x28] sm:$0xff]
        %v3882 = vld [vmem:[%s2815 + $0x30] sm:$0xff]
        %v3883 = vld [vmem:[%s2815 + $0x38] sm:$0xff]
        %v3884 = vld [vmem:[%s2815 + $0x40] sm:$0xff]
        %v3885 = vld [vmem:[%s2815 + $0x48] sm:$0xff]
        %v3886 = vld [vmem:[%s2815 + $0x50] sm:$0xff]
        %v3887 = vld [vmem:[%s2815 + $0x58] sm:$0xff]
        %v3888 = vld [vmem:[%s2815 + $0x60] sm:$0xff]
        %v3889 = vld [vmem:[%s2815 + $0x68] sm:$0xff]
        %v3890 = vld [vmem:[%s2815 + $0x70] sm:$0xff]
        %v3891 = vld [vmem:[%s2815 + $0x78] sm:$0xff]
        %v3892 = vld [vmem:[%s2815 + $0x80] sm:$0xff]
        %v3893 = vld [vmem:[%s2815 + $0x88] sm:$0xff]
        %v3894 = vld [vmem:[%s2815 + $0x90] sm:$0xff]
        %v3895 = vld [vmem:[%s2815 + $0x98] sm:$0xff]
        %v3896 = vld [vmem:[%s2815 + $0xa0] sm:$0xff]
        %v3897 = vld [vmem:[%s2815 + $0xa8] sm:$0xff]
        %v3898 = vld [vmem:[%s2815 + $0xb0] sm:$0xff]
        %v3899 = vld [vmem:[%s2815 + $0xb8] sm:$0xff]
        %v3900 = vld [vmem:[%s2815 + $0xc0] sm:$0xff]
        %v3901 = vld [vmem:[%s2815 + $0xc8] sm:$0xff]
        %v3902 = vld [vmem:[%s2815 + $0xd0] sm:$0xff]
        %v3903 = vld [vmem:[%s2815 + $0xd8] sm:$0xff]
        %v3904 = vld [vmem:[%s2815 + $0xe0] sm:$0xff]
        %v3905 = vld [vmem:[%s2815 + $0xe8] sm:$0xff]
        %v3906 = vld [vmem:[%s2815 + $0xf0] sm:$0xff]
        %v3907 = vld [vmem:[%s2815 + $0xf8] sm:$0xff]
        %v3908 = vld [vmem:[%s2815 + $0x100] sm:$0xff]
        %v3909 = vld [vmem:[%s2815 + $0x108] sm:$0xff]
        %v3910 = vld [vmem:[%s2815 + $0x110] sm:$0xff]
        %v3911 = vld [vmem:[%s2815 + $0x118] sm:$0xff]
        %v3912 = vld [vmem:[%s2815 + $0x120] sm:$0xff]
        %v3913 = vld [vmem:[%s2815 + $0x128] sm:$0xff]
        %v3914 = vld [vmem:[%s2815 + $0x130] sm:$0xff]
        %v3915 = vld [vmem:[%s2815 + $0x138] sm:$0xff]
        %v3916 = vld [vmem:[%s2815 + $0x140] sm:$0xff]
        %v3917 = vld [vmem:[%s2815 + $0x148] sm:$0xff]
        %v3918 = vld [vmem:[%s2815 + $0x150] sm:$0xff]
        %v3919 = vld [vmem:[%s2815 + $0x158] sm:$0xff]
        %v3920 = vld [vmem:[%s2815 + $0x160] sm:$0xff]
        %v3921 = vld [vmem:[%s2815 + $0x168] sm:$0xff]
        %v3922 = vld [vmem:[%s2815 + $0x170] sm:$0xff]
        %v3923 = vld [vmem:[%s2815 + $0x178] sm:$0xff]
        %v3924 = vld [vmem:[%s2815 + $0x180] sm:$0xff]
        %v3925 = vld [vmem:[%s2815 + $0x188] sm:$0xff]
        %v3926 = vld [vmem:[%s2815 + $0x190] sm:$0xff]
        %v3927 = vld [vmem:[%s2815 + $0x198] sm:$0xff]
        %v3928 = vld [vmem:[%s2815 + $0x1a0] sm:$0xff]
        %v3929 = vld [vmem:[%s2815 + $0x1a8] sm:$0xff]
        %v3930 = vld [vmem:[%s2815 + $0x1b0] sm:$0xff]
        %v3931 = vld [vmem:[%s2815 + $0x1b8] sm:$0xff]
        %v3932 = vld [vmem:[%s2815 + $0x1c0] sm:$0xff]
        %v3933 = vld [vmem:[%s2815 + $0x1c8] sm:$0xff]
        %v3934 = vld [vmem:[%s2815 + $0x1d0] sm:$0xff]
        %v3935 = vld [vmem:[%s2815 + $0x1d8] sm:$0xff]
        %v3936 = vld [vmem:[%s2815 + $0x1e0] sm:$0xff]
        %v3937 = vld [vmem:[%s2815 + $0x1e8] sm:$0xff]
        %v3938 = vld [vmem:[%s2815 + $0x1f0] sm:$0xff]
        %v3939 = vld [vmem:[%s2815 + $0x1f8] sm:$0xff]
        %v3940 = vld [vmem:[%s6] sm:$0x1]
        %3941 = vmatpush.msra.mxu0 %v3763
        %3942 = vmatpush.msra.mxu0 %v3762
        %3943 = vmatpush.msra.mxu0 %v3761
        %3944 = vmatpush.msra.mxu0 %v3760
        %3945 = vmatpush.msra.mxu0 %v3759
        %3946 = vmatpush.msra.mxu0 %v3758
        %3947 = vmatpush.msra.mxu0 %v3757
        %3948 = vmatpush.msra.mxu0 %v3756
        %3949 = vmatpush.msra.mxu0 %v3755
        %3950 = vmatpush.msra.mxu0 %v3754
        %3951 = vmatpush.msra.mxu0 %v3753
        %3952 = vmatpush.msra.mxu0 %v3752
        %3953 = vmatpush.msra.mxu0 %v3751
        %3954 = vmatpush.msra.mxu0 %v3750
        %3955 = vmatpush.msra.mxu0 %v3749
        %3956 = vmatpush.msra.mxu0 %v3748
        %3957 = vmatmul.f32.gmra.mxu0 %v3740
        %v3958 = vpop.f32.mrf.mxu0
        %v3959 = vadd.f32 0.0, %v3958
        %3960 = vmatmul.f32.gmra.mxu0 %v3744
        %v3961 = vpop.f32.mrf.mxu0
        %v3962 = vadd.f32 0.0, %v3961
        %3963 = vdwg.mxu0
        %3964 = vmatpush.msra.mxu0 %v3779
        %3965 = vmatpush.msra.mxu0 %v3778
        %3966 = vmatpush.msra.mxu0 %v3777
        %3967 = vmatpush.msra.mxu0 %v3776
        %3968 = vmatpush.msra.mxu0 %v3775
        %3969 = vmatpush.msra.mxu0 %v3774
        %3970 = vmatpush.msra.mxu0 %v3773
        %3971 = vmatpush.msra.mxu0 %v3772
        %3972 = vmatpush.msra.mxu0 %v3771
        %3973 = vmatpush.msra.mxu0 %v3770
        %3974 = vmatpush.msra.mxu0 %v3769
        %3975 = vmatpush.msra.mxu0 %v3768
        %3976 = vmatpush.msra.mxu0 %v3767
        %3977 = vmatpush.msra.mxu0 %v3766
        %3978 = vmatpush.msra.mxu0 %v3765
        %3979 = vmatpush.msra.mxu0 %v3764
        %3980 = vmatmul.f32.gmra.mxu0 %v3741
        %v3981 = vpop.f32.mrf.mxu0
        %v3982 = vadd.f32 %v3959, %v3981
        %3983 = vmatmul.f32.gmra.mxu0 %v3745
        %v3984 = vpop.f32.mrf.mxu0
        %v3985 = vadd.f32 %v3962, %v3984
        %3986 = vdwg.mxu0
        %3987 = vmatpush.msra.mxu0 %v3795
        %3988 = vmatpush.msra.mxu0 %v3794
        %3989 = vmatpush.msra.mxu0 %v3793
        %3990 = vmatpush.msra.mxu0 %v3792
        %3991 = vmatpush.msra.mxu0 %v3791
        %3992 = vmatpush.msra.mxu0 %v3790
        %3993 = vmatpush.msra.mxu0 %v3789
        %3994 = vmatpush.msra.mxu0 %v3788
        %3995 = vmatpush.msra.mxu0 %v3787
        %3996 = vmatpush.msra.mxu0 %v3786
        %3997 = vmatpush.msra.mxu0 %v3785
        %3998 = vmatpush.msra.mxu0 %v3784
        %3999 = vmatpush.msra.mxu0 %v3783
        %4000 = vmatpush.msra.mxu0 %v3782
        %4001 = vmatpush.msra.mxu0 %v3781
        %4002 = vmatpush.msra.mxu0 %v3780
        %4003 = vmatmul.f32.gmra.mxu0 %v3742
        %v4004 = vpop.f32.mrf.mxu0
        %v4005 = vadd.f32 %v3982, %v4004
        %4006 = vmatmul.f32.gmra.mxu0 %v3746
        %v4007 = vpop.f32.mrf.mxu0
        %v4008 = vadd.f32 %v3985, %v4007
        %4009 = vdwg.mxu0
        %4010 = vmatpush.msra.mxu0 %v3811
        %4011 = vmatpush.msra.mxu0 %v3810
        %4012 = vmatpush.msra.mxu0 %v3809
        %4013 = vmatpush.msra.mxu0 %v3808
        %4014 = vmatpush.msra.mxu0 %v3807
        %4015 = vmatpush.msra.mxu0 %v3806
        %4016 = vmatpush.msra.mxu0 %v3805
        %4017 = vmatpush.msra.mxu0 %v3804
        %4018 = vmatpush.msra.mxu0 %v3803
        %4019 = vmatpush.msra.mxu0 %v3802
        %4020 = vmatpush.msra.mxu0 %v3801
        %4021 = vmatpush.msra.mxu0 %v3800
        %4022 = vmatpush.msra.mxu0 %v3799
        %4023 = vmatpush.msra.mxu0 %v3798
        %4024 = vmatpush.msra.mxu0 %v3797
        %4025 = vmatpush.msra.mxu0 %v3796
        %4026 = vmatmul.f32.gmra.mxu0 %v3743
        %v4027 = vpop.f32.mrf.mxu0
        %v4028 = vadd.f32 %v4005, %v4027
        %4029 = vmatmul.f32.gmra.mxu0 %v3747
        %v4030 = vpop.f32.mrf.mxu0
        %v4031 = vadd.f32 %v4008, %v4030
        %4032 = vdwg.mxu0
        %4033 = vmatpush.msra.mxu0 %v3891
        %4034 = vmatpush.msra.mxu0 %v3890
        %4035 = vmatpush.msra.mxu0 %v3889
        %4036 = vmatpush.msra.mxu0 %v3888
        %4037 = vmatpush.msra.mxu0 %v3887
        %4038 = vmatpush.msra.mxu0 %v3886
        %4039 = vmatpush.msra.mxu0 %v3885
        %4040 = vmatpush.msra.mxu0 %v3884
        %4041 = vmatpush.msra.mxu0 %v3883
        %4042 = vmatpush.msra.mxu0 %v3882
        %4043 = vmatpush.msra.mxu0 %v3881
        %4044 = vmatpush.msra.mxu0 %v3880
        %4045 = vmatpush.msra.mxu0 %v3879
        %4046 = vmatpush.msra.mxu0 %v3878
        %4047 = vmatpush.msra.mxu0 %v3877
        %4048 = vmatpush.msra.mxu0 %v3876
        %4049 = vmatmul.f32.gmra.mxu0 %v3740
        %v4050 = vpop.f32.mrf.mxu0
        %v4051 = vadd.f32 0.0, %v4050
        %4052 = vmatmul.f32.gmra.mxu0 %v3744
        %v4053 = vpop.f32.mrf.mxu0
        %v4054 = vadd.f32 0.0, %v4053
        %4055 = vdwg.mxu0
        %4056 = vmatpush.msra.mxu0 %v3907
        %4057 = vmatpush.msra.mxu0 %v3906
        %4058 = vmatpush.msra.mxu0 %v3905
        %4059 = vmatpush.msra.mxu0 %v3904
        %4060 = vmatpush.msra.mxu0 %v3903
        %4061 = vmatpush.msra.mxu0 %v3902
        %4062 = vmatpush.msra.mxu0 %v3901
        %4063 = vmatpush.msra.mxu0 %v3900
        %4064 = vmatpush.msra.mxu0 %v3899
        %4065 = vmatpush.msra.mxu0 %v3898
        %4066 = vmatpush.msra.mxu0 %v3897
        %4067 = vmatpush.msra.mxu0 %v3896
        %4068 = vmatpush.msra.mxu0 %v3895
        %4069 = vmatpush.msra.mxu0 %v3894
        %4070 = vmatpush.msra.mxu0 %v3893
        %4071 = vmatpush.msra.mxu0 %v3892
        %4072 = vmatmul.f32.gmra.mxu0 %v3741
        %v4073 = vpop.f32.mrf.mxu0
        %v4074 = vadd.f32 %v4051, %v4073
        %4075 = vmatmul.f32.gmra.mxu0 %v3745
        %v4076 = vpop.f32.mrf.mxu0
        %v4077 = vadd.f32 %v4054, %v4076
        %4078 = vdwg.mxu0
        %4079 = vmatpush.msra.mxu0 %v3923
        %4080 = vmatpush.msra.mxu0 %v3922
        %4081 = vmatpush.msra.mxu0 %v3921
        %4082 = vmatpush.msra.mxu0 %v3920
        %4083 = vmatpush.msra.mxu0 %v3919
        %4084 = vmatpush.msra.mxu0 %v3918
        %4085 = vmatpush.msra.mxu0 %v3917
        %4086 = vmatpush.msra.mxu0 %v3916
        %4087 = vmatpush.msra.mxu0 %v3915
        %4088 = vmatpush.msra.mxu0 %v3914
        %4089 = vmatpush.msra.mxu0 %v3913
        %4090 = vmatpush.msra.mxu0 %v3912
        %4091 = vmatpush.msra.mxu0 %v3911
        %4092 = vmatpush.msra.mxu0 %v3910
        %4093 = vmatpush.msra.mxu0 %v3909
        %4094 = vmatpush.msra.mxu0 %v3908
        %4095 = vmatmul.f32.gmra.mxu0 %v3742
        %v4096 = vpop.f32.mrf.mxu0
        %v4097 = vadd.f32 %v4074, %v4096
        %4098 = vmatmul.f32.gmra.mxu0 %v3746
        %v4099 = vpop.f32.mrf.mxu0
        %v4100 = vadd.f32 %v4077, %v4099
        %4101 = vdwg.mxu0
        %4102 = vmatpush.msra.mxu0 %v3939
        %4103 = vmatpush.msra.mxu0 %v3938
        %4104 = vmatpush.msra.mxu0 %v3937
        %4105 = vmatpush.msra.mxu0 %v3936
        %4106 = vmatpush.msra.mxu0 %v3935
        %4107 = vmatpush.msra.mxu0 %v3934
        %4108 = vmatpush.msra.mxu0 %v3933
        %4109 = vmatpush.msra.mxu0 %v3932
        %4110 = vmatpush.msra.mxu0 %v3931
        %4111 = vmatpush.msra.mxu0 %v3930
        %4112 = vmatpush.msra.mxu0 %v3929
        %4113 = vmatpush.msra.mxu0 %v3928
        %4114 = vmatpush.msra.mxu0 %v3927
        %4115 = vmatpush.msra.mxu0 %v3926
        %4116 = vmatpush.msra.mxu0 %v3925
        %4117 = vmatpush.msra.mxu0 %v3924
        %4118 = vmatmul.f32.gmra.mxu0 %v3743
        %v4119 = vpop.f32.mrf.mxu0
        %v4120 = vadd.f32 %v4097, %v4119
        %4121 = vmatmul.f32.gmra.mxu0 %v3747
        %v4122 = vpop.f32.mrf.mxu0
        %v4123 = vadd.f32 %v4100, %v4122
        %4124 = vdwg.mxu0
        %v4127 = vrot.slane %v4028, 7
        %v4128 = vrot.slane %v4031, 7
        %v4129 = vsel %vm491, %v4127, %v4128
        %v4132 = vsel %vm491, 0.0, %v4127
        %4133 = vmatpush.msra.mxu0 %v3827
        %4134 = vmatpush.msra.mxu0 %v3826
        %4135 = vmatpush.msra.mxu0 %v3825
        %4136 = vmatpush.msra.mxu0 %v3824
        %4137 = vmatpush.msra.mxu0 %v3823
        %4138 = vmatpush.msra.mxu0 %v3822
        %4139 = vmatpush.msra.mxu0 %v3821
        %4140 = vmatpush.msra.mxu0 %v3820
        %4141 = vmatpush.msra.mxu0 %v3819
        %4142 = vmatpush.msra.mxu0 %v3818
        %4143 = vmatpush.msra.mxu0 %v3817
        %4144 = vmatpush.msra.mxu0 %v3816
        %4145 = vmatpush.msra.mxu0 %v3815
        %4146 = vmatpush.msra.mxu0 %v3814
        %4147 = vmatpush.msra.mxu0 %v3813
        %4148 = vmatpush.msra.mxu0 %v3812
        %4149 = vmatmul.f32.gmra.mxu0 %v3740
        %v4150 = vpop.f32.mrf.mxu0
        %v4151 = vadd.f32 %v4132, %v4150
        %4152 = vmatmul.f32.gmra.mxu0 %v3744
        %v4153 = vpop.f32.mrf.mxu0
        %v4154 = vadd.f32 %v4129, %v4153
        %4155 = vdwg.mxu0
        %4156 = vmatpush.msra.mxu0 %v3843
        %4157 = vmatpush.msra.mxu0 %v3842
        %4158 = vmatpush.msra.mxu0 %v3841
        %4159 = vmatpush.msra.mxu0 %v3840
        %4160 = vmatpush.msra.mxu0 %v3839
        %4161 = vmatpush.msra.mxu0 %v3838
        %4162 = vmatpush.msra.mxu0 %v3837
        %4163 = vmatpush.msra.mxu0 %v3836
        %4164 = vmatpush.msra.mxu0 %v3835
        %4165 = vmatpush.msra.mxu0 %v3834
        %4166 = vmatpush.msra.mxu0 %v3833
        %4167 = vmatpush.msra.mxu0 %v3832
        %4168 = vmatpush.msra.mxu0 %v3831
        %4169 = vmatpush.msra.mxu0 %v3830
        %4170 = vmatpush.msra.mxu0 %v3829
        %4171 = vmatpush.msra.mxu0 %v3828
        %4172 = vmatmul.f32.gmra.mxu0 %v3741
        %v4173 = vpop.f32.mrf.mxu0
        %v4174 = vadd.f32 %v4151, %v4173
        %4175 = vmatmul.f32.gmra.mxu0 %v3745
        %v4176 = vpop.f32.mrf.mxu0
        %v4177 = vadd.f32 %v4154, %v4176
        %4178 = vdwg.mxu0
        %4179 = vmatpush.msra.mxu0 %v3859
        %4180 = vmatpush.msra.mxu0 %v3858
        %4181 = vmatpush.msra.mxu0 %v3857
        %4182 = vmatpush.msra.mxu0 %v3856
        %4183 = vmatpush.msra.mxu0 %v3855
        %4184 = vmatpush.msra.mxu0 %v3854
        %4185 = vmatpush.msra.mxu0 %v3853
        %4186 = vmatpush.msra.mxu0 %v3852
        %4187 = vmatpush.msra.mxu0 %v3851
        %4188 = vmatpush.msra.mxu0 %v3850
        %4189 = vmatpush.msra.mxu0 %v3849
        %4190 = vmatpush.msra.mxu0 %v3848
        %4191 = vmatpush.msra.mxu0 %v3847
        %4192 = vmatpush.msra.mxu0 %v3846
        %4193 = vmatpush.msra.mxu0 %v3845
        %4194 = vmatpush.msra.mxu0 %v3844
        %4195 = vmatmul.f32.gmra.mxu0 %v3742
        %v4196 = vpop.f32.mrf.mxu0
        %v4197 = vadd.f32 %v4174, %v4196
        %4198 = vmatmul.f32.gmra.mxu0 %v3746
        %v4199 = vpop.f32.mrf.mxu0
        %v4200 = vadd.f32 %v4177, %v4199
        %4201 = vdwg.mxu0
        %4202 = vmatpush.msra.mxu0 %v3875
        %4203 = vmatpush.msra.mxu0 %v3874
        %4204 = vmatpush.msra.mxu0 %v3873
        %4205 = vmatpush.msra.mxu0 %v3872
        %4206 = vmatpush.msra.mxu0 %v3871
        %4207 = vmatpush.msra.mxu0 %v3870
        %4208 = vmatpush.msra.mxu0 %v3869
        %4209 = vmatpush.msra.mxu0 %v3868
        %4210 = vmatpush.msra.mxu0 %v3867
        %4211 = vmatpush.msra.mxu0 %v3866
        %4212 = vmatpush.msra.mxu0 %v3865
        %4213 = vmatpush.msra.mxu0 %v3864
        %4214 = vmatpush.msra.mxu0 %v3863
        %4215 = vmatpush.msra.mxu0 %v3862
        %4216 = vmatpush.msra.mxu0 %v3861
        %4217 = vmatpush.msra.mxu0 %v3860
        %4218 = vmatmul.f32.gmra.mxu0 %v3743
        %v4219 = vpop.f32.mrf.mxu0
        %v4220 = vadd.f32 %v4197, %v4219
        %4221 = vmatmul.f32.gmra.mxu0 %v3747
        %v4222 = vpop.f32.mrf.mxu0
        %v4223 = vadd.f32 %v4200, %v4222
        %4224 = vdwg.mxu0
        %v4227 = vrot.slane %v4120, 1
        %v4228 = vrot.slane %v4123, 1
        %v4229 = vsel %vm546, %v4227, %v4228
        %v4232 = vsel %vm546, %v4228, 0.0
        %v4233 = vadd.f32 %v4220, %v4229
        %v4234 = vadd.f32 %v4223, %v4232
        %v4236 = vperm.slane %v3940, 0
        %v4238 = vadd.f32 %v4233, %v4236
        %v4239 = vadd.f32 %v4234, %v4236
        %s4240 = scalar_lea.vmem %s295, 16
        %4241 = vst [vmem:[%s4240] sm:$0xff] %v4238
        %4242 = vst [vmem:[%s4240 + $0x8] sm:$0xff] %v4239
        %v4243 = vld [vmem:[%s3] sm:$0xff]
        %v4244 = vld [vmem:[%s3 + $0x8] sm:$0xff]
        %v4245 = vld [vmem:[%s3 + $0x10] sm:$0xff]
        %v4246 = vld [vmem:[%s3 + $0x18] sm:$0xff]
        %v4247 = vld [vmem:[%s3 + $0x20] sm:$0xff]
        %v4248 = vld [vmem:[%s3 + $0x28] sm:$0xff]
        %v4249 = vld [vmem:[%s3 + $0x30] sm:$0xff]
        %v4250 = vld [vmem:[%s3 + $0x38] sm:$0xff]
        %v4251 = vld [vmem:[%s3 + $0x40] sm:$0xff]
        %v4252 = vld [vmem:[%s3 + $0x48] sm:$0xff]
        %v4253 = vld [vmem:[%s3 + $0x50] sm:$0xff]
        %v4254 = vld [vmem:[%s3 + $0x58] sm:$0xff]
        %v4255 = vld [vmem:[%s3 + $0x60] sm:$0xff]
        %v4256 = vld [vmem:[%s3 + $0x68] sm:$0xff]
        %v4257 = vld [vmem:[%s3 + $0x70] sm:$0xff]
        %v4258 = vld [vmem:[%s3 + $0x78] sm:$0xff]
        %v4259 = vld [vmem:[%s3 + $0x80] sm:$0xff]
        %v4260 = vld [vmem:[%s3 + $0x88] sm:$0xff]
        %v4261 = vld [vmem:[%s3 + $0x90] sm:$0xff]
        %v4262 = vld [vmem:[%s3 + $0x98] sm:$0xff]
        %v4263 = vld [vmem:[%s3 + $0xa0] sm:$0xff]
        %v4264 = vld [vmem:[%s3 + $0xa8] sm:$0xff]
        %v4265 = vld [vmem:[%s3 + $0xb0] sm:$0xff]
        %v4266 = vld [vmem:[%s3 + $0xb8] sm:$0xff]
        %v4267 = vld [vmem:[%s3 + $0xc0] sm:$0xff]
        %v4268 = vld [vmem:[%s3 + $0xc8] sm:$0xff]
        %v4269 = vld [vmem:[%s3 + $0xd0] sm:$0xff]
        %v4270 = vld [vmem:[%s3 + $0xd8] sm:$0xff]
        %v4271 = vld [vmem:[%s3 + $0xe0] sm:$0xff]
        %v4272 = vld [vmem:[%s3 + $0xe8] sm:$0xff]
        %v4273 = vld [vmem:[%s3 + $0xf0] sm:$0xff]
        %v4274 = vld [vmem:[%s3 + $0xf8] sm:$0xff]
        %v4275 = vld [vmem:[%s3 + $0x100] sm:$0xff]
        %v4276 = vld [vmem:[%s3 + $0x108] sm:$0xff]
        %v4277 = vld [vmem:[%s3 + $0x110] sm:$0xff]
        %v4278 = vld [vmem:[%s3 + $0x118] sm:$0xff]
        %v4279 = vld [vmem:[%s3 + $0x120] sm:$0xff]
        %v4280 = vld [vmem:[%s3 + $0x128] sm:$0xff]
        %v4281 = vld [vmem:[%s3 + $0x130] sm:$0xff]
        %v4282 = vld [vmem:[%s3 + $0x138] sm:$0xff]
        %v4283 = vld [vmem:[%s3 + $0x140] sm:$0xff]
        %v4284 = vld [vmem:[%s3 + $0x148] sm:$0xff]
        %v4285 = vld [vmem:[%s3 + $0x150] sm:$0xff]
        %v4286 = vld [vmem:[%s3 + $0x158] sm:$0xff]
        %v4287 = vld [vmem:[%s3 + $0x160] sm:$0xff]
        %v4288 = vld [vmem:[%s3 + $0x168] sm:$0xff]
        %v4289 = vld [vmem:[%s3 + $0x170] sm:$0xff]
        %v4290 = vld [vmem:[%s3 + $0x178] sm:$0xff]
        %v4291 = vld [vmem:[%s3 + $0x180] sm:$0xff]
        %v4292 = vld [vmem:[%s3 + $0x188] sm:$0xff]
        %v4293 = vld [vmem:[%s3 + $0x190] sm:$0xff]
        %v4294 = vld [vmem:[%s3 + $0x198] sm:$0xff]
        %v4295 = vld [vmem:[%s3 + $0x1a0] sm:$0xff]
        %v4296 = vld [vmem:[%s3 + $0x1a8] sm:$0xff]
        %v4297 = vld [vmem:[%s3 + $0x1b0] sm:$0xff]
        %v4298 = vld [vmem:[%s3 + $0x1b8] sm:$0xff]
        %v4299 = vld [vmem:[%s3 + $0x1c0] sm:$0xff]
        %v4300 = vld [vmem:[%s3 + $0x1c8] sm:$0xff]
        %v4301 = vld [vmem:[%s3 + $0x1d0] sm:$0xff]
        %v4302 = vld [vmem:[%s3 + $0x1d8] sm:$0xff]
        %v4303 = vld [vmem:[%s3 + $0x1e0] sm:$0xff]
        %v4304 = vld [vmem:[%s3 + $0x1e8] sm:$0xff]
        %v4305 = vld [vmem:[%s3 + $0x1f0] sm:$0xff]
        %v4306 = vld [vmem:[%s3 + $0x1f8] sm:$0xff]
        %v4307 = vld [vmem:[%s2182] sm:$0xff]
        %v4308 = vld [vmem:[%s2182 + $0x8] sm:$0xff]
        %v4309 = vld [vmem:[%s2182 + $0x10] sm:$0xff]
        %v4310 = vld [vmem:[%s2182 + $0x18] sm:$0xff]
        %v4311 = vld [vmem:[%s2182 + $0x20] sm:$0xff]
        %v4312 = vld [vmem:[%s2182 + $0x28] sm:$0xff]
        %v4313 = vld [vmem:[%s2182 + $0x30] sm:$0xff]
        %v4314 = vld [vmem:[%s2182 + $0x38] sm:$0xff]
        %v4315 = vld [vmem:[%s2182 + $0x40] sm:$0xff]
        %v4316 = vld [vmem:[%s2182 + $0x48] sm:$0xff]
        %v4317 = vld [vmem:[%s2182 + $0x50] sm:$0xff]
        %v4318 = vld [vmem:[%s2182 + $0x58] sm:$0xff]
        %v4319 = vld [vmem:[%s2182 + $0x60] sm:$0xff]
        %v4320 = vld [vmem:[%s2182 + $0x68] sm:$0xff]
        %v4321 = vld [vmem:[%s2182 + $0x70] sm:$0xff]
        %v4322 = vld [vmem:[%s2182 + $0x78] sm:$0xff]
        %v4323 = vld [vmem:[%s2182 + $0x80] sm:$0xff]
        %v4324 = vld [vmem:[%s2182 + $0x88] sm:$0xff]
        %v4325 = vld [vmem:[%s2182 + $0x90] sm:$0xff]
        %v4326 = vld [vmem:[%s2182 + $0x98] sm:$0xff]
        %v4327 = vld [vmem:[%s2182 + $0xa0] sm:$0xff]
        %v4328 = vld [vmem:[%s2182 + $0xa8] sm:$0xff]
        %v4329 = vld [vmem:[%s2182 + $0xb0] sm:$0xff]
        %v4330 = vld [vmem:[%s2182 + $0xb8] sm:$0xff]
        %v4331 = vld [vmem:[%s2182 + $0xc0] sm:$0xff]
        %v4332 = vld [vmem:[%s2182 + $0xc8] sm:$0xff]
        %v4333 = vld [vmem:[%s2182 + $0xd0] sm:$0xff]
        %v4334 = vld [vmem:[%s2182 + $0xd8] sm:$0xff]
        %v4335 = vld [vmem:[%s2182 + $0xe0] sm:$0xff]
        %v4336 = vld [vmem:[%s2182 + $0xe8] sm:$0xff]
        %v4337 = vld [vmem:[%s2182 + $0xf0] sm:$0xff]
        %v4338 = vld [vmem:[%s2182 + $0xf8] sm:$0xff]
        %v4339 = vld [vmem:[%s2182 + $0x100] sm:$0xff]
        %v4340 = vld [vmem:[%s2182 + $0x108] sm:$0xff]
        %v4341 = vld [vmem:[%s2182 + $0x110] sm:$0xff]
        %v4342 = vld [vmem:[%s2182 + $0x118] sm:$0xff]
        %v4343 = vld [vmem:[%s2182 + $0x120] sm:$0xff]
        %v4344 = vld [vmem:[%s2182 + $0x128] sm:$0xff]
        %v4345 = vld [vmem:[%s2182 + $0x130] sm:$0xff]
        %v4346 = vld [vmem:[%s2182 + $0x138] sm:$0xff]
        %v4347 = vld [vmem:[%s2182 + $0x140] sm:$0xff]
        %v4348 = vld [vmem:[%s2182 + $0x148] sm:$0xff]
        %v4349 = vld [vmem:[%s2182 + $0x150] sm:$0xff]
        %v4350 = vld [vmem:[%s2182 + $0x158] sm:$0xff]
        %v4351 = vld [vmem:[%s2182 + $0x160] sm:$0xff]
        %v4352 = vld [vmem:[%s2182 + $0x168] sm:$0xff]
        %v4353 = vld [vmem:[%s2182 + $0x170] sm:$0xff]
        %v4354 = vld [vmem:[%s2182 + $0x178] sm:$0xff]
        %v4355 = vld [vmem:[%s2182 + $0x180] sm:$0xff]
        %v4356 = vld [vmem:[%s2182 + $0x188] sm:$0xff]
        %v4357 = vld [vmem:[%s2182 + $0x190] sm:$0xff]
        %v4358 = vld [vmem:[%s2182 + $0x198] sm:$0xff]
        %v4359 = vld [vmem:[%s2182 + $0x1a0] sm:$0xff]
        %v4360 = vld [vmem:[%s2182 + $0x1a8] sm:$0xff]
        %v4361 = vld [vmem:[%s2182 + $0x1b0] sm:$0xff]
        %v4362 = vld [vmem:[%s2182 + $0x1b8] sm:$0xff]
        %v4363 = vld [vmem:[%s2182 + $0x1c0] sm:$0xff]
        %v4364 = vld [vmem:[%s2182 + $0x1c8] sm:$0xff]
        %v4365 = vld [vmem:[%s2182 + $0x1d0] sm:$0xff]
        %v4366 = vld [vmem:[%s2182 + $0x1d8] sm:$0xff]
        %v4367 = vld [vmem:[%s2182 + $0x1e0] sm:$0xff]
        %v4368 = vld [vmem:[%s2182 + $0x1e8] sm:$0xff]
        %v4369 = vld [vmem:[%s2182 + $0x1f0] sm:$0xff]
        %v4370 = vld [vmem:[%s2182 + $0x1f8] sm:$0xff]
        %v4371 = vld [vmem:[%s2247] sm:$0xff]
        %v4372 = vld [vmem:[%s2247 + $0x8] sm:$0xff]
        %v4373 = vld [vmem:[%s2247 + $0x10] sm:$0xff]
        %v4374 = vld [vmem:[%s2247 + $0x18] sm:$0xff]
        %v4375 = vld [vmem:[%s2247 + $0x20] sm:$0xff]
        %v4376 = vld [vmem:[%s2247 + $0x28] sm:$0xff]
        %v4377 = vld [vmem:[%s2247 + $0x30] sm:$0xff]
        %v4378 = vld [vmem:[%s2247 + $0x38] sm:$0xff]
        %v4379 = vld [vmem:[%s2247 + $0x40] sm:$0xff]
        %v4380 = vld [vmem:[%s2247 + $0x48] sm:$0xff]
        %v4381 = vld [vmem:[%s2247 + $0x50] sm:$0xff]
        %v4382 = vld [vmem:[%s2247 + $0x58] sm:$0xff]
        %v4383 = vld [vmem:[%s2247 + $0x60] sm:$0xff]
        %v4384 = vld [vmem:[%s2247 + $0x68] sm:$0xff]
        %v4385 = vld [vmem:[%s2247 + $0x70] sm:$0xff]
        %v4386 = vld [vmem:[%s2247 + $0x78] sm:$0xff]
        %v4387 = vld [vmem:[%s2247 + $0x80] sm:$0xff]
        %v4388 = vld [vmem:[%s2247 + $0x88] sm:$0xff]
        %v4389 = vld [vmem:[%s2247 + $0x90] sm:$0xff]
        %v4390 = vld [vmem:[%s2247 + $0x98] sm:$0xff]
        %v4391 = vld [vmem:[%s2247 + $0xa0] sm:$0xff]
        %v4392 = vld [vmem:[%s2247 + $0xa8] sm:$0xff]
        %v4393 = vld [vmem:[%s2247 + $0xb0] sm:$0xff]
        %v4394 = vld [vmem:[%s2247 + $0xb8] sm:$0xff]
        %v4395 = vld [vmem:[%s2247 + $0xc0] sm:$0xff]
        %v4396 = vld [vmem:[%s2247 + $0xc8] sm:$0xff]
        %v4397 = vld [vmem:[%s2247 + $0xd0] sm:$0xff]
        %v4398 = vld [vmem:[%s2247 + $0xd8] sm:$0xff]
        %v4399 = vld [vmem:[%s2247 + $0xe0] sm:$0xff]
        %v4400 = vld [vmem:[%s2247 + $0xe8] sm:$0xff]
        %v4401 = vld [vmem:[%s2247 + $0xf0] sm:$0xff]
        %v4402 = vld [vmem:[%s2247 + $0xf8] sm:$0xff]
        %v4403 = vld [vmem:[%s2247 + $0x100] sm:$0xff]
        %v4404 = vld [vmem:[%s2247 + $0x108] sm:$0xff]
        %v4405 = vld [vmem:[%s2247 + $0x110] sm:$0xff]
        %v4406 = vld [vmem:[%s2247 + $0x118] sm:$0xff]
        %v4407 = vld [vmem:[%s2247 + $0x120] sm:$0xff]
        %v4408 = vld [vmem:[%s2247 + $0x128] sm:$0xff]
        %v4409 = vld [vmem:[%s2247 + $0x130] sm:$0xff]
        %v4410 = vld [vmem:[%s2247 + $0x138] sm:$0xff]
        %v4411 = vld [vmem:[%s2247 + $0x140] sm:$0xff]
        %v4412 = vld [vmem:[%s2247 + $0x148] sm:$0xff]
        %v4413 = vld [vmem:[%s2247 + $0x150] sm:$0xff]
        %v4414 = vld [vmem:[%s2247 + $0x158] sm:$0xff]
        %v4415 = vld [vmem:[%s2247 + $0x160] sm:$0xff]
        %v4416 = vld [vmem:[%s2247 + $0x168] sm:$0xff]
        %v4417 = vld [vmem:[%s2247 + $0x170] sm:$0xff]
        %v4418 = vld [vmem:[%s2247 + $0x178] sm:$0xff]
        %v4419 = vld [vmem:[%s2247 + $0x180] sm:$0xff]
        %v4420 = vld [vmem:[%s2247 + $0x188] sm:$0xff]
        %v4421 = vld [vmem:[%s2247 + $0x190] sm:$0xff]
        %v4422 = vld [vmem:[%s2247 + $0x198] sm:$0xff]
        %v4423 = vld [vmem:[%s2247 + $0x1a0] sm:$0xff]
        %v4424 = vld [vmem:[%s2247 + $0x1a8] sm:$0xff]
        %v4425 = vld [vmem:[%s2247 + $0x1b0] sm:$0xff]
        %v4426 = vld [vmem:[%s2247 + $0x1b8] sm:$0xff]
        %v4427 = vld [vmem:[%s2247 + $0x1c0] sm:$0xff]
        %v4428 = vld [vmem:[%s2247 + $0x1c8] sm:$0xff]
        %v4429 = vld [vmem:[%s2247 + $0x1d0] sm:$0xff]
        %v4430 = vld [vmem:[%s2247 + $0x1d8] sm:$0xff]
        %v4431 = vld [vmem:[%s2247 + $0x1e0] sm:$0xff]
        %v4432 = vld [vmem:[%s2247 + $0x1e8] sm:$0xff]
        %v4433 = vld [vmem:[%s2247 + $0x1f0] sm:$0xff]
        %v4434 = vld [vmem:[%s2247 + $0x1f8] sm:$0xff]
        %v4435 = vld [vmem:[%s4] sm:$0xf]
        %4436 = vmatpush.msra.mxu0 %v4303
        %4437 = vmatpush.msra.mxu0 %v4299
        %4438 = vmatpush.msra.mxu0 %v4295
        %4439 = vmatpush.msra.mxu0 %v4291
        %4440 = vmatpush.msra.mxu0 %v4287
        %4441 = vmatpush.msra.mxu0 %v4283
        %4442 = vmatpush.msra.mxu0 %v4279
        %4443 = vmatpush.msra.mxu0 %v4275
        %4444 = vmatpush.msra.mxu0 %v4271
        %4445 = vmatpush.msra.mxu0 %v4267
        %4446 = vmatpush.msra.mxu0 %v4263
        %4447 = vmatpush.msra.mxu0 %v4259
        %4448 = vmatpush.msra.mxu0 %v4255
        %4449 = vmatpush.msra.mxu0 %v4251
        %4450 = vmatpush.msra.mxu0 %v4247
        %4451 = vmatpush.msra.mxu0 %v4243
        %4452 = vmatmul.f32.gmra.mxu0 %v4238
        %v4453 = vpop.f32.mrf.mxu0
        %v4454 = vadd.f32 0.0, %v4453
        %4455 = vmatmul.f32.gmra.mxu0 %v4239
        %v4456 = vpop.f32.mrf.mxu0
        %v4457 = vadd.f32 0.0, %v4456
        %4458 = vdwg.mxu0
        %4459 = vmatpush.msra.mxu0 %v4304
        %4460 = vmatpush.msra.mxu0 %v4300
        %4461 = vmatpush.msra.mxu0 %v4296
        %4462 = vmatpush.msra.mxu0 %v4292
        %4463 = vmatpush.msra.mxu0 %v4288
        %4464 = vmatpush.msra.mxu0 %v4284
        %4465 = vmatpush.msra.mxu0 %v4280
        %4466 = vmatpush.msra.mxu0 %v4276
        %4467 = vmatpush.msra.mxu0 %v4272
        %4468 = vmatpush.msra.mxu0 %v4268
        %4469 = vmatpush.msra.mxu0 %v4264
        %4470 = vmatpush.msra.mxu0 %v4260
        %4471 = vmatpush.msra.mxu0 %v4256
        %4472 = vmatpush.msra.mxu0 %v4252
        %4473 = vmatpush.msra.mxu0 %v4248
        %4474 = vmatpush.msra.mxu0 %v4244
        %4475 = vmatmul.f32.gmra.mxu0 %v4238
        %v4476 = vpop.f32.mrf.mxu0
        %v4477 = vadd.f32 0.0, %v4476
        %4478 = vmatmul.f32.gmra.mxu0 %v4239
        %v4479 = vpop.f32.mrf.mxu0
        %v4480 = vadd.f32 0.0, %v4479
        %4481 = vdwg.mxu0
        %4482 = vmatpush.msra.mxu0 %v4305
        %4483 = vmatpush.msra.mxu0 %v4301
        %4484 = vmatpush.msra.mxu0 %v4297
        %4485 = vmatpush.msra.mxu0 %v4293
        %4486 = vmatpush.msra.mxu0 %v4289
        %4487 = vmatpush.msra.mxu0 %v4285
        %4488 = vmatpush.msra.mxu0 %v4281
        %4489 = vmatpush.msra.mxu0 %v4277
        %4490 = vmatpush.msra.mxu0 %v4273
        %4491 = vmatpush.msra.mxu0 %v4269
        %4492 = vmatpush.msra.mxu0 %v4265
        %4493 = vmatpush.msra.mxu0 %v4261
        %4494 = vmatpush.msra.mxu0 %v4257
        %4495 = vmatpush.msra.mxu0 %v4253
        %4496 = vmatpush.msra.mxu0 %v4249
        %4497 = vmatpush.msra.mxu0 %v4245
        %4498 = vmatmul.f32.gmra.mxu0 %v4238
        %v4499 = vpop.f32.mrf.mxu0
        %v4500 = vadd.f32 0.0, %v4499
        %4501 = vmatmul.f32.gmra.mxu0 %v4239
        %v4502 = vpop.f32.mrf.mxu0
        %v4503 = vadd.f32 0.0, %v4502
        %4504 = vdwg.mxu0
        %4505 = vmatpush.msra.mxu0 %v4306
        %4506 = vmatpush.msra.mxu0 %v4302
        %4507 = vmatpush.msra.mxu0 %v4298
        %4508 = vmatpush.msra.mxu0 %v4294
        %4509 = vmatpush.msra.mxu0 %v4290
        %4510 = vmatpush.msra.mxu0 %v4286
        %4511 = vmatpush.msra.mxu0 %v4282
        %4512 = vmatpush.msra.mxu0 %v4278
        %4513 = vmatpush.msra.mxu0 %v4274
        %4514 = vmatpush.msra.mxu0 %v4270
        %4515 = vmatpush.msra.mxu0 %v4266
        %4516 = vmatpush.msra.mxu0 %v4262
        %4517 = vmatpush.msra.mxu0 %v4258
        %4518 = vmatpush.msra.mxu0 %v4254
        %4519 = vmatpush.msra.mxu0 %v4250
        %4520 = vmatpush.msra.mxu0 %v4246
        %4521 = vmatmul.f32.gmra.mxu0 %v4238
        %v4522 = vpop.f32.mrf.mxu0
        %v4523 = vadd.f32 0.0, %v4522
        %4524 = vmatmul.f32.gmra.mxu0 %v4239
        %v4525 = vpop.f32.mrf.mxu0
        %v4526 = vadd.f32 0.0, %v4525
        %4527 = vdwg.mxu0
        %4528 = vmatpush.msra.mxu0 %v4431
        %4529 = vmatpush.msra.mxu0 %v4427
        %4530 = vmatpush.msra.mxu0 %v4423
        %4531 = vmatpush.msra.mxu0 %v4419
        %4532 = vmatpush.msra.mxu0 %v4415
        %4533 = vmatpush.msra.mxu0 %v4411
        %4534 = vmatpush.msra.mxu0 %v4407
        %4535 = vmatpush.msra.mxu0 %v4403
        %4536 = vmatpush.msra.mxu0 %v4399
        %4537 = vmatpush.msra.mxu0 %v4395
        %4538 = vmatpush.msra.mxu0 %v4391
        %4539 = vmatpush.msra.mxu0 %v4387
        %4540 = vmatpush.msra.mxu0 %v4383
        %4541 = vmatpush.msra.mxu0 %v4379
        %4542 = vmatpush.msra.mxu0 %v4375
        %4543 = vmatpush.msra.mxu0 %v4371
        %4544 = vmatmul.f32.gmra.mxu0 %v4238
        %v4545 = vpop.f32.mrf.mxu0
        %v4546 = vadd.f32 0.0, %v4545
        %4547 = vmatmul.f32.gmra.mxu0 %v4239
        %v4548 = vpop.f32.mrf.mxu0
        %v4549 = vadd.f32 0.0, %v4548
        %4550 = vdwg.mxu0
        %4551 = vmatpush.msra.mxu0 %v4432
        %4552 = vmatpush.msra.mxu0 %v4428
        %4553 = vmatpush.msra.mxu0 %v4424
        %4554 = vmatpush.msra.mxu0 %v4420
        %4555 = vmatpush.msra.mxu0 %v4416
        %4556 = vmatpush.msra.mxu0 %v4412
        %4557 = vmatpush.msra.mxu0 %v4408
        %4558 = vmatpush.msra.mxu0 %v4404
        %4559 = vmatpush.msra.mxu0 %v4400
        %4560 = vmatpush.msra.mxu0 %v4396
        %4561 = vmatpush.msra.mxu0 %v4392
        %4562 = vmatpush.msra.mxu0 %v4388
        %4563 = vmatpush.msra.mxu0 %v4384
        %4564 = vmatpush.msra.mxu0 %v4380
        %4565 = vmatpush.msra.mxu0 %v4376
        %4566 = vmatpush.msra.mxu0 %v4372
        %4567 = vmatmul.f32.gmra.mxu0 %v4238
        %v4568 = vpop.f32.mrf.mxu0
        %v4569 = vadd.f32 0.0, %v4568
        %4570 = vmatmul.f32.gmra.mxu0 %v4239
        %v4571 = vpop.f32.mrf.mxu0
        %v4572 = vadd.f32 0.0, %v4571
        %4573 = vdwg.mxu0
        %4574 = vmatpush.msra.mxu0 %v4433
        %4575 = vmatpush.msra.mxu0 %v4429
        %4576 = vmatpush.msra.mxu0 %v4425
        %4577 = vmatpush.msra.mxu0 %v4421
        %4578 = vmatpush.msra.mxu0 %v4417
        %4579 = vmatpush.msra.mxu0 %v4413
        %4580 = vmatpush.msra.mxu0 %v4409
        %4581 = vmatpush.msra.mxu0 %v4405
        %4582 = vmatpush.msra.mxu0 %v4401
        %4583 = vmatpush.msra.mxu0 %v4397
        %4584 = vmatpush.msra.mxu0 %v4393
        %4585 = vmatpush.msra.mxu0 %v4389
        %4586 = vmatpush.msra.mxu0 %v4385
        %4587 = vmatpush.msra.mxu0 %v4381
        %4588 = vmatpush.msra.mxu0 %v4377
        %4589 = vmatpush.msra.mxu0 %v4373
        %4590 = vmatmul.f32.gmra.mxu0 %v4238
        %v4591 = vpop.f32.mrf.mxu0
        %v4592 = vadd.f32 0.0, %v4591
        %4593 = vmatmul.f32.gmra.mxu0 %v4239
        %v4594 = vpop.f32.mrf.mxu0
        %v4595 = vadd.f32 0.0, %v4594
        %4596 = vdwg.mxu0
        %4597 = vmatpush.msra.mxu0 %v4434
        %4598 = vmatpush.msra.mxu0 %v4430
        %4599 = vmatpush.msra.mxu0 %v4426
        %4600 = vmatpush.msra.mxu0 %v4422
        %4601 = vmatpush.msra.mxu0 %v4418
        %4602 = vmatpush.msra.mxu0 %v4414
        %4603 = vmatpush.msra.mxu0 %v4410
        %4604 = vmatpush.msra.mxu0 %v4406
        %4605 = vmatpush.msra.mxu0 %v4402
        %4606 = vmatpush.msra.mxu0 %v4398
        %4607 = vmatpush.msra.mxu0 %v4394
        %4608 = vmatpush.msra.mxu0 %v4390
        %4609 = vmatpush.msra.mxu0 %v4386
        %4610 = vmatpush.msra.mxu0 %v4382
        %4611 = vmatpush.msra.mxu0 %v4378
        %4612 = vmatpush.msra.mxu0 %v4374
        %4613 = vmatmul.f32.gmra.mxu0 %v4238
        %v4614 = vpop.f32.mrf.mxu0
        %v4615 = vadd.f32 0.0, %v4614
        %4616 = vmatmul.f32.gmra.mxu0 %v4239
        %v4617 = vpop.f32.mrf.mxu0
        %v4618 = vadd.f32 0.0, %v4617
        %4619 = vdwg.mxu0
        %v4628 = vrot.slane %v4454, 7
        %v4629 = vrot.slane %v4477, 7
        %v4630 = vrot.slane %v4500, 7
        %v4631 = vrot.slane %v4523, 7
        %v4632 = vrot.slane %v4457, 7
        %v4633 = vsel %vm491, %v4628, %v4632
        %v4634 = vrot.slane %v4480, 7
        %v4635 = vsel %vm491, %v4629, %v4634
        %v4636 = vrot.slane %v4503, 7
        %v4637 = vsel %vm491, %v4630, %v4636
        %v4638 = vrot.slane %v4526, 7
        %v4639 = vsel %vm491, %v4631, %v4638
        %v4648 = vsel %vm491, 0.0, %v4628
        %v4649 = vsel %vm491, 0.0, %v4629
        %v4650 = vsel %vm491, 0.0, %v4630
        %v4651 = vsel %vm491, 0.0, %v4631
        %4652 = vmatpush.msra.mxu0 %v4367
        %4653 = vmatpush.msra.mxu0 %v4363
        %4654 = vmatpush.msra.mxu0 %v4359
        %4655 = vmatpush.msra.mxu0 %v4355
        %4656 = vmatpush.msra.mxu0 %v4351
        %4657 = vmatpush.msra.mxu0 %v4347
        %4658 = vmatpush.msra.mxu0 %v4343
        %4659 = vmatpush.msra.mxu0 %v4339
        %4660 = vmatpush.msra.mxu0 %v4335
        %4661 = vmatpush.msra.mxu0 %v4331
        %4662 = vmatpush.msra.mxu0 %v4327
        %4663 = vmatpush.msra.mxu0 %v4323
        %4664 = vmatpush.msra.mxu0 %v4319
        %4665 = vmatpush.msra.mxu0 %v4315
        %4666 = vmatpush.msra.mxu0 %v4311
        %4667 = vmatpush.msra.mxu0 %v4307
        %4668 = vmatmul.f32.gmra.mxu0 %v4238
        %v4669 = vpop.f32.mrf.mxu0
        %v4670 = vadd.f32 %v4648, %v4669
        %4671 = vmatmul.f32.gmra.mxu0 %v4239
        %v4672 = vpop.f32.mrf.mxu0
        %v4673 = vadd.f32 %v4633, %v4672
        %4674 = vdwg.mxu0
        %4675 = vmatpush.msra.mxu0 %v4368
        %4676 = vmatpush.msra.mxu0 %v4364
        %4677 = vmatpush.msra.mxu0 %v4360
        %4678 = vmatpush.msra.mxu0 %v4356
        %4679 = vmatpush.msra.mxu0 %v4352
        %4680 = vmatpush.msra.mxu0 %v4348
        %4681 = vmatpush.msra.mxu0 %v4344
        %4682 = vmatpush.msra.mxu0 %v4340
        %4683 = vmatpush.msra.mxu0 %v4336
        %4684 = vmatpush.msra.mxu0 %v4332
        %4685 = vmatpush.msra.mxu0 %v4328
        %4686 = vmatpush.msra.mxu0 %v4324
        %4687 = vmatpush.msra.mxu0 %v4320
        %4688 = vmatpush.msra.mxu0 %v4316
        %4689 = vmatpush.msra.mxu0 %v4312
        %4690 = vmatpush.msra.mxu0 %v4308
        %4691 = vmatmul.f32.gmra.mxu0 %v4238
        %v4692 = vpop.f32.mrf.mxu0
        %v4693 = vadd.f32 %v4649, %v4692
        %4694 = vmatmul.f32.gmra.mxu0 %v4239
        %v4695 = vpop.f32.mrf.mxu0
        %v4696 = vadd.f32 %v4635, %v4695
        %4697 = vdwg.mxu0
        %4698 = vmatpush.msra.mxu0 %v4369
        %4699 = vmatpush.msra.mxu0 %v4365
        %4700 = vmatpush.msra.mxu0 %v4361
        %4701 = vmatpush.msra.mxu0 %v4357
        %4702 = vmatpush.msra.mxu0 %v4353
        %4703 = vmatpush.msra.mxu0 %v4349
        %4704 = vmatpush.msra.mxu0 %v4345
        %4705 = vmatpush.msra.mxu0 %v4341
        %4706 = vmatpush.msra.mxu0 %v4337
        %4707 = vmatpush.msra.mxu0 %v4333
        %4708 = vmatpush.msra.mxu0 %v4329
        %4709 = vmatpush.msra.mxu0 %v4325
        %4710 = vmatpush.msra.mxu0 %v4321
        %4711 = vmatpush.msra.mxu0 %v4317
        %4712 = vmatpush.msra.mxu0 %v4313
        %4713 = vmatpush.msra.mxu0 %v4309
        %4714 = vmatmul.f32.gmra.mxu0 %v4238
        %v4715 = vpop.f32.mrf.mxu0
        %v4716 = vadd.f32 %v4650, %v4715
        %4717 = vmatmul.f32.gmra.mxu0 %v4239
        %v4718 = vpop.f32.mrf.mxu0
        %v4719 = vadd.f32 %v4637, %v4718
        %4720 = vdwg.mxu0
        %4721 = vmatpush.msra.mxu0 %v4370
        %4722 = vmatpush.msra.mxu0 %v4366
        %4723 = vmatpush.msra.mxu0 %v4362
        %4724 = vmatpush.msra.mxu0 %v4358
        %4725 = vmatpush.msra.mxu0 %v4354
        %4726 = vmatpush.msra.mxu0 %v4350
        %4727 = vmatpush.msra.mxu0 %v4346
        %4728 = vmatpush.msra.mxu0 %v4342
        %4729 = vmatpush.msra.mxu0 %v4338
        %4730 = vmatpush.msra.mxu0 %v4334
        %4731 = vmatpush.msra.mxu0 %v4330
        %4732 = vmatpush.msra.mxu0 %v4326
        %4733 = vmatpush.msra.mxu0 %v4322
        %4734 = vmatpush.msra.mxu0 %v4318
        %4735 = vmatpush.msra.mxu0 %v4314
        %4736 = vmatpush.msra.mxu0 %v4310
        %4737 = vmatmul.f32.gmra.mxu0 %v4238
        %v4738 = vpop.f32.mrf.mxu0
        %v4739 = vadd.f32 %v4651, %v4738
        %4740 = vmatmul.f32.gmra.mxu0 %v4239
        %v4741 = vpop.f32.mrf.mxu0
        %v4742 = vadd.f32 %v4639, %v4741
        %4743 = vdwg.mxu0
        %v4752 = vrot.slane %v4546, 1
        %v4753 = vrot.slane %v4549, 1
        %v4754 = vsel %vm546, %v4752, %v4753
        %v4755 = vrot.slane %v4569, 1
        %v4756 = vrot.slane %v4572, 1
        %v4757 = vsel %vm546, %v4755, %v4756
        %v4758 = vrot.slane %v4592, 1
        %v4759 = vrot.slane %v4595, 1
        %v4760 = vsel %vm546, %v4758, %v4759
        %v4761 = vrot.slane %v4615, 1
        %v4762 = vrot.slane %v4618, 1
        %v4763 = vsel %vm546, %v4761, %v4762
        %v4772 = vsel %vm546, %v4753, 0.0
        %v4773 = vsel %vm546, %v4756, 0.0
        %v4774 = vsel %vm546, %v4759, 0.0
        %v4775 = vsel %vm546, %v4762, 0.0
        %v4776 = vadd.f32 %v4670, %v4754
        %v4777 = vadd.f32 %v4693, %v4757
        %v4778 = vadd.f32 %v4716, %v4760
        %v4779 = vadd.f32 %v4739, %v4763
        %v4780 = vadd.f32 %v4673, %v4772
        %v4781 = vadd.f32 %v4696, %v4773
        %v4782 = vadd.f32 %v4719, %v4774
        %v4783 = vadd.f32 %v4742, %v4775
        %v4785 = vperm.slane %v4435, 0
        %v4786 = vperm.slane %v4435, 1
        %v4787 = vperm.slane %v4435, 2
        %v4788 = vperm.slane %v4435, 3
        %v4793 = vadd.f32 %v4776, %v4785
        %v4794 = vadd.f32 %v4777, %v4786
        %v4795 = vadd.f32 %v4778, %v4787
        %v4796 = vadd.f32 %v4779, %v4788
        %v4797 = vadd.f32 %v4780, %v4785
        %v4798 = vadd.f32 %v4781, %v4786
        %v4799 = vadd.f32 %v4782, %v4787
        %v4800 = vadd.f32 %v4783, %v4788
        %v4801 = vmax.f32 %v4793, 0.0
        %v4802 = vmax.f32 %v4794, 0.0
        %v4803 = vmax.f32 %v4795, 0.0
        %v4804 = vmax.f32 %v4796, 0.0
        %v4805 = vmax.f32 %v4797, 0.0
        %v4806 = vmax.f32 %v4798, 0.0
        %v4807 = vmax.f32 %v4799, 0.0
        %v4808 = vmax.f32 %v4800, 0.0
        %v4809 = vld [vmem:[#allocation2] sm:$0xff]
        %v4810 = vld [vmem:[#allocation2 + $0x8] sm:$0xff]
        %v4811 = vld [vmem:[#allocation2 + $0x10] sm:$0xff]
        %v4812 = vld [vmem:[#allocation2 + $0x18] sm:$0xff]
        %v4813 = vld [vmem:[#allocation2 + $0x20] sm:$0xff]
        %v4814 = vld [vmem:[#allocation2 + $0x28] sm:$0xff]
        %v4815 = vld [vmem:[#allocation2 + $0x30] sm:$0xff]
        %v4816 = vld [vmem:[#allocation2 + $0x38] sm:$0xff]
        %v4817 = vld [vmem:[#allocation2 + $0x40] sm:$0xff]
        %v4818 = vld [vmem:[#allocation2 + $0x48] sm:$0xff]
        %v4819 = vld [vmem:[#allocation2 + $0x50] sm:$0xff]
        %v4820 = vld [vmem:[#allocation2 + $0x58] sm:$0xff]
        %v4821 = vld [vmem:[#allocation2 + $0x60] sm:$0xff]
        %v4822 = vld [vmem:[#allocation2 + $0x68] sm:$0xff]
        %v4823 = vld [vmem:[#allocation2 + $0x70] sm:$0xff]
        %v4824 = vld [vmem:[#allocation2 + $0x78] sm:$0xff]
        %v4825 = vld [vmem:[#allocation2 + $0x80] sm:$0xff]
        %v4826 = vld [vmem:[#allocation2 + $0x88] sm:$0xff]
        %v4827 = vld [vmem:[#allocation2 + $0x90] sm:$0xff]
        %v4828 = vld [vmem:[#allocation2 + $0x98] sm:$0xff]
        %v4829 = vld [vmem:[#allocation2 + $0xa0] sm:$0xff]
        %v4830 = vld [vmem:[#allocation2 + $0xa8] sm:$0xff]
        %v4831 = vld [vmem:[#allocation2 + $0xb0] sm:$0xff]
        %v4832 = vld [vmem:[#allocation2 + $0xb8] sm:$0xff]
        %v4833 = vld [vmem:[#allocation2 + $0xc0] sm:$0xff]
        %v4834 = vld [vmem:[#allocation2 + $0xc8] sm:$0xff]
        %v4835 = vld [vmem:[#allocation2 + $0xd0] sm:$0xff]
        %v4836 = vld [vmem:[#allocation2 + $0xd8] sm:$0xff]
        %v4837 = vld [vmem:[#allocation2 + $0xe0] sm:$0xff]
        %v4838 = vld [vmem:[#allocation2 + $0xe8] sm:$0xff]
        %v4839 = vld [vmem:[#allocation2 + $0xf0] sm:$0xff]
        %v4840 = vld [vmem:[#allocation2 + $0xf8] sm:$0xff]
        %v4841 = vld [vmem:[#allocation2 + $0x100] sm:$0xff]
        %v4842 = vld [vmem:[#allocation2 + $0x108] sm:$0xff]
        %v4843 = vld [vmem:[#allocation2 + $0x110] sm:$0xff]
        %v4844 = vld [vmem:[#allocation2 + $0x118] sm:$0xff]
        %v4845 = vld [vmem:[#allocation2 + $0x120] sm:$0xff]
        %v4846 = vld [vmem:[#allocation2 + $0x128] sm:$0xff]
        %v4847 = vld [vmem:[#allocation2 + $0x130] sm:$0xff]
        %v4848 = vld [vmem:[#allocation2 + $0x138] sm:$0xff]
        %v4849 = vld [vmem:[#allocation2 + $0x140] sm:$0xff]
        %v4850 = vld [vmem:[#allocation2 + $0x148] sm:$0xff]
        %v4851 = vld [vmem:[#allocation2 + $0x150] sm:$0xff]
        %v4852 = vld [vmem:[#allocation2 + $0x158] sm:$0xff]
        %v4853 = vld [vmem:[#allocation2 + $0x160] sm:$0xff]
        %v4854 = vld [vmem:[#allocation2 + $0x168] sm:$0xff]
        %v4855 = vld [vmem:[#allocation2 + $0x170] sm:$0xff]
        %v4856 = vld [vmem:[#allocation2 + $0x178] sm:$0xff]
        %v4857 = vld [vmem:[#allocation2 + $0x180] sm:$0xff]
        %v4858 = vld [vmem:[#allocation2 + $0x188] sm:$0xff]
        %v4859 = vld [vmem:[#allocation2 + $0x190] sm:$0xff]
        %v4860 = vld [vmem:[#allocation2 + $0x198] sm:$0xff]
        %v4861 = vld [vmem:[#allocation2 + $0x1a0] sm:$0xff]
        %v4862 = vld [vmem:[#allocation2 + $0x1a8] sm:$0xff]
        %v4863 = vld [vmem:[#allocation2 + $0x1b0] sm:$0xff]
        %v4864 = vld [vmem:[#allocation2 + $0x1b8] sm:$0xff]
        %v4865 = vld [vmem:[#allocation2 + $0x1c0] sm:$0xff]
        %v4866 = vld [vmem:[#allocation2 + $0x1c8] sm:$0xff]
        %v4867 = vld [vmem:[#allocation2 + $0x1d0] sm:$0xff]
        %v4868 = vld [vmem:[#allocation2 + $0x1d8] sm:$0xff]
        %v4869 = vld [vmem:[#allocation2 + $0x1e0] sm:$0xff]
        %v4870 = vld [vmem:[#allocation2 + $0x1e8] sm:$0xff]
        %v4871 = vld [vmem:[#allocation2 + $0x1f0] sm:$0xff]
        %v4872 = vld [vmem:[#allocation2 + $0x1f8] sm:$0xff]
        %v4873 = vld [vmem:[%s2750] sm:$0xff]
        %v4874 = vld [vmem:[%s2750 + $0x8] sm:$0xff]
        %v4875 = vld [vmem:[%s2750 + $0x10] sm:$0xff]
        %v4876 = vld [vmem:[%s2750 + $0x18] sm:$0xff]
        %v4877 = vld [vmem:[%s2750 + $0x20] sm:$0xff]
        %v4878 = vld [vmem:[%s2750 + $0x28] sm:$0xff]
        %v4879 = vld [vmem:[%s2750 + $0x30] sm:$0xff]
        %v4880 = vld [vmem:[%s2750 + $0x38] sm:$0xff]
        %v4881 = vld [vmem:[%s2750 + $0x40] sm:$0xff]
        %v4882 = vld [vmem:[%s2750 + $0x48] sm:$0xff]
        %v4883 = vld [vmem:[%s2750 + $0x50] sm:$0xff]
        %v4884 = vld [vmem:[%s2750 + $0x58] sm:$0xff]
        %v4885 = vld [vmem:[%s2750 + $0x60] sm:$0xff]
        %v4886 = vld [vmem:[%s2750 + $0x68] sm:$0xff]
        %v4887 = vld [vmem:[%s2750 + $0x70] sm:$0xff]
        %v4888 = vld [vmem:[%s2750 + $0x78] sm:$0xff]
        %v4889 = vld [vmem:[%s2750 + $0x80] sm:$0xff]
        %v4890 = vld [vmem:[%s2750 + $0x88] sm:$0xff]
        %v4891 = vld [vmem:[%s2750 + $0x90] sm:$0xff]
        %v4892 = vld [vmem:[%s2750 + $0x98] sm:$0xff]
        %v4893 = vld [vmem:[%s2750 + $0xa0] sm:$0xff]
        %v4894 = vld [vmem:[%s2750 + $0xa8] sm:$0xff]
        %v4895 = vld [vmem:[%s2750 + $0xb0] sm:$0xff]
        %v4896 = vld [vmem:[%s2750 + $0xb8] sm:$0xff]
        %v4897 = vld [vmem:[%s2750 + $0xc0] sm:$0xff]
        %v4898 = vld [vmem:[%s2750 + $0xc8] sm:$0xff]
        %v4899 = vld [vmem:[%s2750 + $0xd0] sm:$0xff]
        %v4900 = vld [vmem:[%s2750 + $0xd8] sm:$0xff]
        %v4901 = vld [vmem:[%s2750 + $0xe0] sm:$0xff]
        %v4902 = vld [vmem:[%s2750 + $0xe8] sm:$0xff]
        %v4903 = vld [vmem:[%s2750 + $0xf0] sm:$0xff]
        %v4904 = vld [vmem:[%s2750 + $0xf8] sm:$0xff]
        %v4905 = vld [vmem:[%s2750 + $0x100] sm:$0xff]
        %v4906 = vld [vmem:[%s2750 + $0x108] sm:$0xff]
        %v4907 = vld [vmem:[%s2750 + $0x110] sm:$0xff]
        %v4908 = vld [vmem:[%s2750 + $0x118] sm:$0xff]
        %v4909 = vld [vmem:[%s2750 + $0x120] sm:$0xff]
        %v4910 = vld [vmem:[%s2750 + $0x128] sm:$0xff]
        %v4911 = vld [vmem:[%s2750 + $0x130] sm:$0xff]
        %v4912 = vld [vmem:[%s2750 + $0x138] sm:$0xff]
        %v4913 = vld [vmem:[%s2750 + $0x140] sm:$0xff]
        %v4914 = vld [vmem:[%s2750 + $0x148] sm:$0xff]
        %v4915 = vld [vmem:[%s2750 + $0x150] sm:$0xff]
        %v4916 = vld [vmem:[%s2750 + $0x158] sm:$0xff]
        %v4917 = vld [vmem:[%s2750 + $0x160] sm:$0xff]
        %v4918 = vld [vmem:[%s2750 + $0x168] sm:$0xff]
        %v4919 = vld [vmem:[%s2750 + $0x170] sm:$0xff]
        %v4920 = vld [vmem:[%s2750 + $0x178] sm:$0xff]
        %v4921 = vld [vmem:[%s2750 + $0x180] sm:$0xff]
        %v4922 = vld [vmem:[%s2750 + $0x188] sm:$0xff]
        %v4923 = vld [vmem:[%s2750 + $0x190] sm:$0xff]
        %v4924 = vld [vmem:[%s2750 + $0x198] sm:$0xff]
        %v4925 = vld [vmem:[%s2750 + $0x1a0] sm:$0xff]
        %v4926 = vld [vmem:[%s2750 + $0x1a8] sm:$0xff]
        %v4927 = vld [vmem:[%s2750 + $0x1b0] sm:$0xff]
        %v4928 = vld [vmem:[%s2750 + $0x1b8] sm:$0xff]
        %v4929 = vld [vmem:[%s2750 + $0x1c0] sm:$0xff]
        %v4930 = vld [vmem:[%s2750 + $0x1c8] sm:$0xff]
        %v4931 = vld [vmem:[%s2750 + $0x1d0] sm:$0xff]
        %v4932 = vld [vmem:[%s2750 + $0x1d8] sm:$0xff]
        %v4933 = vld [vmem:[%s2750 + $0x1e0] sm:$0xff]
        %v4934 = vld [vmem:[%s2750 + $0x1e8] sm:$0xff]
        %v4935 = vld [vmem:[%s2750 + $0x1f0] sm:$0xff]
        %v4936 = vld [vmem:[%s2750 + $0x1f8] sm:$0xff]
        %v4937 = vld [vmem:[%s2815] sm:$0xff]
        %v4938 = vld [vmem:[%s2815 + $0x8] sm:$0xff]
        %v4939 = vld [vmem:[%s2815 + $0x10] sm:$0xff]
        %v4940 = vld [vmem:[%s2815 + $0x18] sm:$0xff]
        %v4941 = vld [vmem:[%s2815 + $0x20] sm:$0xff]
        %v4942 = vld [vmem:[%s2815 + $0x28] sm:$0xff]
        %v4943 = vld [vmem:[%s2815 + $0x30] sm:$0xff]
        %v4944 = vld [vmem:[%s2815 + $0x38] sm:$0xff]
        %v4945 = vld [vmem:[%s2815 + $0x40] sm:$0xff]
        %v4946 = vld [vmem:[%s2815 + $0x48] sm:$0xff]
        %v4947 = vld [vmem:[%s2815 + $0x50] sm:$0xff]
        %v4948 = vld [vmem:[%s2815 + $0x58] sm:$0xff]
        %v4949 = vld [vmem:[%s2815 + $0x60] sm:$0xff]
        %v4950 = vld [vmem:[%s2815 + $0x68] sm:$0xff]
        %v4951 = vld [vmem:[%s2815 + $0x70] sm:$0xff]
        %v4952 = vld [vmem:[%s2815 + $0x78] sm:$0xff]
        %v4953 = vld [vmem:[%s2815 + $0x80] sm:$0xff]
        %v4954 = vld [vmem:[%s2815 + $0x88] sm:$0xff]
        %v4955 = vld [vmem:[%s2815 + $0x90] sm:$0xff]
        %v4956 = vld [vmem:[%s2815 + $0x98] sm:$0xff]
        %v4957 = vld [vmem:[%s2815 + $0xa0] sm:$0xff]
        %v4958 = vld [vmem:[%s2815 + $0xa8] sm:$0xff]
        %v4959 = vld [vmem:[%s2815 + $0xb0] sm:$0xff]
        %v4960 = vld [vmem:[%s2815 + $0xb8] sm:$0xff]
        %v4961 = vld [vmem:[%s2815 + $0xc0] sm:$0xff]
        %v4962 = vld [vmem:[%s2815 + $0xc8] sm:$0xff]
        %v4963 = vld [vmem:[%s2815 + $0xd0] sm:$0xff]
        %v4964 = vld [vmem:[%s2815 + $0xd8] sm:$0xff]
        %v4965 = vld [vmem:[%s2815 + $0xe0] sm:$0xff]
        %v4966 = vld [vmem:[%s2815 + $0xe8] sm:$0xff]
        %v4967 = vld [vmem:[%s2815 + $0xf0] sm:$0xff]
        %v4968 = vld [vmem:[%s2815 + $0xf8] sm:$0xff]
        %v4969 = vld [vmem:[%s2815 + $0x100] sm:$0xff]
        %v4970 = vld [vmem:[%s2815 + $0x108] sm:$0xff]
        %v4971 = vld [vmem:[%s2815 + $0x110] sm:$0xff]
        %v4972 = vld [vmem:[%s2815 + $0x118] sm:$0xff]
        %v4973 = vld [vmem:[%s2815 + $0x120] sm:$0xff]
        %v4974 = vld [vmem:[%s2815 + $0x128] sm:$0xff]
        %v4975 = vld [vmem:[%s2815 + $0x130] sm:$0xff]
        %v4976 = vld [vmem:[%s2815 + $0x138] sm:$0xff]
        %v4977 = vld [vmem:[%s2815 + $0x140] sm:$0xff]
        %v4978 = vld [vmem:[%s2815 + $0x148] sm:$0xff]
        %v4979 = vld [vmem:[%s2815 + $0x150] sm:$0xff]
        %v4980 = vld [vmem:[%s2815 + $0x158] sm:$0xff]
        %v4981 = vld [vmem:[%s2815 + $0x160] sm:$0xff]
        %v4982 = vld [vmem:[%s2815 + $0x168] sm:$0xff]
        %v4983 = vld [vmem:[%s2815 + $0x170] sm:$0xff]
        %v4984 = vld [vmem:[%s2815 + $0x178] sm:$0xff]
        %v4985 = vld [vmem:[%s2815 + $0x180] sm:$0xff]
        %v4986 = vld [vmem:[%s2815 + $0x188] sm:$0xff]
        %v4987 = vld [vmem:[%s2815 + $0x190] sm:$0xff]
        %v4988 = vld [vmem:[%s2815 + $0x198] sm:$0xff]
        %v4989 = vld [vmem:[%s2815 + $0x1a0] sm:$0xff]
        %v4990 = vld [vmem:[%s2815 + $0x1a8] sm:$0xff]
        %v4991 = vld [vmem:[%s2815 + $0x1b0] sm:$0xff]
        %v4992 = vld [vmem:[%s2815 + $0x1b8] sm:$0xff]
        %v4993 = vld [vmem:[%s2815 + $0x1c0] sm:$0xff]
        %v4994 = vld [vmem:[%s2815 + $0x1c8] sm:$0xff]
        %v4995 = vld [vmem:[%s2815 + $0x1d0] sm:$0xff]
        %v4996 = vld [vmem:[%s2815 + $0x1d8] sm:$0xff]
        %v4997 = vld [vmem:[%s2815 + $0x1e0] sm:$0xff]
        %v4998 = vld [vmem:[%s2815 + $0x1e8] sm:$0xff]
        %v4999 = vld [vmem:[%s2815 + $0x1f0] sm:$0xff]
        %v5000 = vld [vmem:[%s2815 + $0x1f8] sm:$0xff]
        %v5001 = vld [vmem:[%s6] sm:$0x1]
        %5002 = vmatpush.msra.mxu0 %v4824
        %5003 = vmatpush.msra.mxu0 %v4823
        %5004 = vmatpush.msra.mxu0 %v4822
        %5005 = vmatpush.msra.mxu0 %v4821
        %5006 = vmatpush.msra.mxu0 %v4820
        %5007 = vmatpush.msra.mxu0 %v4819
        %5008 = vmatpush.msra.mxu0 %v4818
        %5009 = vmatpush.msra.mxu0 %v4817
        %5010 = vmatpush.msra.mxu0 %v4816
        %5011 = vmatpush.msra.mxu0 %v4815
        %5012 = vmatpush.msra.mxu0 %v4814
        %5013 = vmatpush.msra.mxu0 %v4813
        %5014 = vmatpush.msra.mxu0 %v4812
        %5015 = vmatpush.msra.mxu0 %v4811
        %5016 = vmatpush.msra.mxu0 %v4810
        %5017 = vmatpush.msra.mxu0 %v4809
        %5018 = vmatmul.f32.gmra.mxu0 %v4801
        %v5019 = vpop.f32.mrf.mxu0
        %v5020 = vadd.f32 0.0, %v5019
        %5021 = vmatmul.f32.gmra.mxu0 %v4805
        %v5022 = vpop.f32.mrf.mxu0
        %v5023 = vadd.f32 0.0, %v5022
        %5024 = vdwg.mxu0
        %5025 = vmatpush.msra.mxu0 %v4840
        %5026 = vmatpush.msra.mxu0 %v4839
        %5027 = vmatpush.msra.mxu0 %v4838
        %5028 = vmatpush.msra.mxu0 %v4837
        %5029 = vmatpush.msra.mxu0 %v4836
        %5030 = vmatpush.msra.mxu0 %v4835
        %5031 = vmatpush.msra.mxu0 %v4834
        %5032 = vmatpush.msra.mxu0 %v4833
        %5033 = vmatpush.msra.mxu0 %v4832
        %5034 = vmatpush.msra.mxu0 %v4831
        %5035 = vmatpush.msra.mxu0 %v4830
        %5036 = vmatpush.msra.mxu0 %v4829
        %5037 = vmatpush.msra.mxu0 %v4828
        %5038 = vmatpush.msra.mxu0 %v4827
        %5039 = vmatpush.msra.mxu0 %v4826
        %5040 = vmatpush.msra.mxu0 %v4825
        %5041 = vmatmul.f32.gmra.mxu0 %v4802
        %v5042 = vpop.f32.mrf.mxu0
        %v5043 = vadd.f32 %v5020, %v5042
        %5044 = vmatmul.f32.gmra.mxu0 %v4806
        %v5045 = vpop.f32.mrf.mxu0
        %v5046 = vadd.f32 %v5023, %v5045
        %5047 = vdwg.mxu0
        %5048 = vmatpush.msra.mxu0 %v4856
        %5049 = vmatpush.msra.mxu0 %v4855
        %5050 = vmatpush.msra.mxu0 %v4854
        %5051 = vmatpush.msra.mxu0 %v4853
        %5052 = vmatpush.msra.mxu0 %v4852
        %5053 = vmatpush.msra.mxu0 %v4851
        %5054 = vmatpush.msra.mxu0 %v4850
        %5055 = vmatpush.msra.mxu0 %v4849
        %5056 = vmatpush.msra.mxu0 %v4848
        %5057 = vmatpush.msra.mxu0 %v4847
        %5058 = vmatpush.msra.mxu0 %v4846
        %5059 = vmatpush.msra.mxu0 %v4845
        %5060 = vmatpush.msra.mxu0 %v4844
        %5061 = vmatpush.msra.mxu0 %v4843
        %5062 = vmatpush.msra.mxu0 %v4842
        %5063 = vmatpush.msra.mxu0 %v4841
        %5064 = vmatmul.f32.gmra.mxu0 %v4803
        %v5065 = vpop.f32.mrf.mxu0
        %v5066 = vadd.f32 %v5043, %v5065
        %5067 = vmatmul.f32.gmra.mxu0 %v4807
        %v5068 = vpop.f32.mrf.mxu0
        %v5069 = vadd.f32 %v5046, %v5068
        %5070 = vdwg.mxu0
        %5071 = vmatpush.msra.mxu0 %v4872
        %5072 = vmatpush.msra.mxu0 %v4871
        %5073 = vmatpush.msra.mxu0 %v4870
        %5074 = vmatpush.msra.mxu0 %v4869
        %5075 = vmatpush.msra.mxu0 %v4868
        %5076 = vmatpush.msra.mxu0 %v4867
        %5077 = vmatpush.msra.mxu0 %v4866
        %5078 = vmatpush.msra.mxu0 %v4865
        %5079 = vmatpush.msra.mxu0 %v4864
        %5080 = vmatpush.msra.mxu0 %v4863
        %5081 = vmatpush.msra.mxu0 %v4862
        %5082 = vmatpush.msra.mxu0 %v4861
        %5083 = vmatpush.msra.mxu0 %v4860
        %5084 = vmatpush.msra.mxu0 %v4859
        %5085 = vmatpush.msra.mxu0 %v4858
        %5086 = vmatpush.msra.mxu0 %v4857
        %5087 = vmatmul.f32.gmra.mxu0 %v4804
        %v5088 = vpop.f32.mrf.mxu0
        %v5089 = vadd.f32 %v5066, %v5088
        %5090 = vmatmul.f32.gmra.mxu0 %v4808
        %v5091 = vpop.f32.mrf.mxu0
        %v5092 = vadd.f32 %v5069, %v5091
        %5093 = vdwg.mxu0
        %5094 = vmatpush.msra.mxu0 %v4952
        %5095 = vmatpush.msra.mxu0 %v4951
        %5096 = vmatpush.msra.mxu0 %v4950
        %5097 = vmatpush.msra.mxu0 %v4949
        %5098 = vmatpush.msra.mxu0 %v4948
        %5099 = vmatpush.msra.mxu0 %v4947
        %5100 = vmatpush.msra.mxu0 %v4946
        %5101 = vmatpush.msra.mxu0 %v4945
        %5102 = vmatpush.msra.mxu0 %v4944
        %5103 = vmatpush.msra.mxu0 %v4943
        %5104 = vmatpush.msra.mxu0 %v4942
        %5105 = vmatpush.msra.mxu0 %v4941
        %5106 = vmatpush.msra.mxu0 %v4940
        %5107 = vmatpush.msra.mxu0 %v4939
        %5108 = vmatpush.msra.mxu0 %v4938
        %5109 = vmatpush.msra.mxu0 %v4937
        %5110 = vmatmul.f32.gmra.mxu0 %v4801
        %v5111 = vpop.f32.mrf.mxu0
        %v5112 = vadd.f32 0.0, %v5111
        %5113 = vmatmul.f32.gmra.mxu0 %v4805
        %v5114 = vpop.f32.mrf.mxu0
        %v5115 = vadd.f32 0.0, %v5114
        %5116 = vdwg.mxu0
        %5117 = vmatpush.msra.mxu0 %v4968
        %5118 = vmatpush.msra.mxu0 %v4967
        %5119 = vmatpush.msra.mxu0 %v4966
        %5120 = vmatpush.msra.mxu0 %v4965
        %5121 = vmatpush.msra.mxu0 %v4964
        %5122 = vmatpush.msra.mxu0 %v4963
        %5123 = vmatpush.msra.mxu0 %v4962
        %5124 = vmatpush.msra.mxu0 %v4961
        %5125 = vmatpush.msra.mxu0 %v4960
        %5126 = vmatpush.msra.mxu0 %v4959
        %5127 = vmatpush.msra.mxu0 %v4958
        %5128 = vmatpush.msra.mxu0 %v4957
        %5129 = vmatpush.msra.mxu0 %v4956
        %5130 = vmatpush.msra.mxu0 %v4955
        %5131 = vmatpush.msra.mxu0 %v4954
        %5132 = vmatpush.msra.mxu0 %v4953
        %5133 = vmatmul.f32.gmra.mxu0 %v4802
        %v5134 = vpop.f32.mrf.mxu0
        %v5135 = vadd.f32 %v5112, %v5134
        %5136 = vmatmul.f32.gmra.mxu0 %v4806
        %v5137 = vpop.f32.mrf.mxu0
        %v5138 = vadd.f32 %v5115, %v5137
        %5139 = vdwg.mxu0
        %5140 = vmatpush.msra.mxu0 %v4984
        %5141 = vmatpush.msra.mxu0 %v4983
        %5142 = vmatpush.msra.mxu0 %v4982
        %5143 = vmatpush.msra.mxu0 %v4981
        %5144 = vmatpush.msra.mxu0 %v4980
        %5145 = vmatpush.msra.mxu0 %v4979
        %5146 = vmatpush.msra.mxu0 %v4978
        %5147 = vmatpush.msra.mxu0 %v4977
        %5148 = vmatpush.msra.mxu0 %v4976
        %5149 = vmatpush.msra.mxu0 %v4975
        %5150 = vmatpush.msra.mxu0 %v4974
        %5151 = vmatpush.msra.mxu0 %v4973
        %5152 = vmatpush.msra.mxu0 %v4972
        %5153 = vmatpush.msra.mxu0 %v4971
        %5154 = vmatpush.msra.mxu0 %v4970
        %5155 = vmatpush.msra.mxu0 %v4969
        %5156 = vmatmul.f32.gmra.mxu0 %v4803
        %v5157 = vpop.f32.mrf.mxu0
        %v5158 = vadd.f32 %v5135, %v5157
        %5159 = vmatmul.f32.gmra.mxu0 %v4807
        %v5160 = vpop.f32.mrf.mxu0
        %v5161 = vadd.f32 %v5138, %v5160
        %5162 = vdwg.mxu0
        %5163 = vmatpush.msra.mxu0 %v5000
        %5164 = vmatpush.msra.mxu0 %v4999
        %5165 = vmatpush.msra.mxu0 %v4998
        %5166 = vmatpush.msra.mxu0 %v4997
        %5167 = vmatpush.msra.mxu0 %v4996
        %5168 = vmatpush.msra.mxu0 %v4995
        %5169 = vmatpush.msra.mxu0 %v4994
        %5170 = vmatpush.msra.mxu0 %v4993
        %5171 = vmatpush.msra.mxu0 %v4992
        %5172 = vmatpush.msra.mxu0 %v4991
        %5173 = vmatpush.msra.mxu0 %v4990
        %5174 = vmatpush.msra.mxu0 %v4989
        %5175 = vmatpush.msra.mxu0 %v4988
        %5176 = vmatpush.msra.mxu0 %v4987
        %5177 = vmatpush.msra.mxu0 %v4986
        %5178 = vmatpush.msra.mxu0 %v4985
        %5179 = vmatmul.f32.gmra.mxu0 %v4804
        %v5180 = vpop.f32.mrf.mxu0
        %v5181 = vadd.f32 %v5158, %v5180
        %5182 = vmatmul.f32.gmra.mxu0 %v4808
        %v5183 = vpop.f32.mrf.mxu0
        %v5184 = vadd.f32 %v5161, %v5183
        %5185 = vdwg.mxu0
        %v5188 = vrot.slane %v5089, 7
        %v5189 = vrot.slane %v5092, 7
        %v5190 = vsel %vm491, %v5188, %v5189
        %v5193 = vsel %vm491, 0.0, %v5188
        %5194 = vmatpush.msra.mxu0 %v4888
        %5195 = vmatpush.msra.mxu0 %v4887
        %5196 = vmatpush.msra.mxu0 %v4886
        %5197 = vmatpush.msra.mxu0 %v4885
        %5198 = vmatpush.msra.mxu0 %v4884
        %5199 = vmatpush.msra.mxu0 %v4883
        %5200 = vmatpush.msra.mxu0 %v4882
        %5201 = vmatpush.msra.mxu0 %v4881
        %5202 = vmatpush.msra.mxu0 %v4880
        %5203 = vmatpush.msra.mxu0 %v4879
        %5204 = vmatpush.msra.mxu0 %v4878
        %5205 = vmatpush.msra.mxu0 %v4877
        %5206 = vmatpush.msra.mxu0 %v4876
        %5207 = vmatpush.msra.mxu0 %v4875
        %5208 = vmatpush.msra.mxu0 %v4874
        %5209 = vmatpush.msra.mxu0 %v4873
        %5210 = vmatmul.f32.gmra.mxu0 %v4801
        %v5211 = vpop.f32.mrf.mxu0
        %v5212 = vadd.f32 %v5193, %v5211
        %5213 = vmatmul.f32.gmra.mxu0 %v4805
        %v5214 = vpop.f32.mrf.mxu0
        %v5215 = vadd.f32 %v5190, %v5214
        %5216 = vdwg.mxu0
        %5217 = vmatpush.msra.mxu0 %v4904
        %5218 = vmatpush.msra.mxu0 %v4903
        %5219 = vmatpush.msra.mxu0 %v4902
        %5220 = vmatpush.msra.mxu0 %v4901
        %5221 = vmatpush.msra.mxu0 %v4900
        %5222 = vmatpush.msra.mxu0 %v4899
        %5223 = vmatpush.msra.mxu0 %v4898
        %5224 = vmatpush.msra.mxu0 %v4897
        %5225 = vmatpush.msra.mxu0 %v4896
        %5226 = vmatpush.msra.mxu0 %v4895
        %5227 = vmatpush.msra.mxu0 %v4894
        %5228 = vmatpush.msra.mxu0 %v4893
        %5229 = vmatpush.msra.mxu0 %v4892
        %5230 = vmatpush.msra.mxu0 %v4891
        %5231 = vmatpush.msra.mxu0 %v4890
        %5232 = vmatpush.msra.mxu0 %v4889
        %5233 = vmatmul.f32.gmra.mxu0 %v4802
        %v5234 = vpop.f32.mrf.mxu0
        %v5235 = vadd.f32 %v5212, %v5234
        %5236 = vmatmul.f32.gmra.mxu0 %v4806
        %v5237 = vpop.f32.mrf.mxu0
        %v5238 = vadd.f32 %v5215, %v5237
        %5239 = vdwg.mxu0
        %5240 = vmatpush.msra.mxu0 %v4920
        %5241 = vmatpush.msra.mxu0 %v4919
        %5242 = vmatpush.msra.mxu0 %v4918
        %5243 = vmatpush.msra.mxu0 %v4917
        %5244 = vmatpush.msra.mxu0 %v4916
        %5245 = vmatpush.msra.mxu0 %v4915
        %5246 = vmatpush.msra.mxu0 %v4914
        %5247 = vmatpush.msra.mxu0 %v4913
        %5248 = vmatpush.msra.mxu0 %v4912
        %5249 = vmatpush.msra.mxu0 %v4911
        %5250 = vmatpush.msra.mxu0 %v4910
        %5251 = vmatpush.msra.mxu0 %v4909
        %5252 = vmatpush.msra.mxu0 %v4908
        %5253 = vmatpush.msra.mxu0 %v4907
        %5254 = vmatpush.msra.mxu0 %v4906
        %5255 = vmatpush.msra.mxu0 %v4905
        %5256 = vmatmul.f32.gmra.mxu0 %v4803
        %v5257 = vpop.f32.mrf.mxu0
        %v5258 = vadd.f32 %v5235, %v5257
        %5259 = vmatmul.f32.gmra.mxu0 %v4807
        %v5260 = vpop.f32.mrf.mxu0
        %v5261 = vadd.f32 %v5238, %v5260
        %5262 = vdwg.mxu0
        %5263 = vmatpush.msra.mxu0 %v4936
        %5264 = vmatpush.msra.mxu0 %v4935
        %5265 = vmatpush.msra.mxu0 %v4934
        %5266 = vmatpush.msra.mxu0 %v4933
        %5267 = vmatpush.msra.mxu0 %v4932
        %5268 = vmatpush.msra.mxu0 %v4931
        %5269 = vmatpush.msra.mxu0 %v4930
        %5270 = vmatpush.msra.mxu0 %v4929
        %5271 = vmatpush.msra.mxu0 %v4928
        %5272 = vmatpush.msra.mxu0 %v4927
        %5273 = vmatpush.msra.mxu0 %v4926
        %5274 = vmatpush.msra.mxu0 %v4925
        %5275 = vmatpush.msra.mxu0 %v4924
        %5276 = vmatpush.msra.mxu0 %v4923
        %5277 = vmatpush.msra.mxu0 %v4922
        %5278 = vmatpush.msra.mxu0 %v4921
        %5279 = vmatmul.f32.gmra.mxu0 %v4804
        %v5280 = vpop.f32.mrf.mxu0
        %v5281 = vadd.f32 %v5258, %v5280
        %5282 = vmatmul.f32.gmra.mxu0 %v4808
        %v5283 = vpop.f32.mrf.mxu0
        %v5284 = vadd.f32 %v5261, %v5283
        %5285 = vdwg.mxu0
        %v5288 = vrot.slane %v5181, 1
        %v5289 = vrot.slane %v5184, 1
        %v5290 = vsel %vm546, %v5288, %v5289
        %v5293 = vsel %vm546, %v5289, 0.0
        %v5294 = vadd.f32 %v5281, %v5290
        %v5295 = vadd.f32 %v5284, %v5293
        %v5297 = vperm.slane %v5001, 0
        %v5299 = vadd.f32 %v5294, %v5297
        %v5300 = vadd.f32 %v5295, %v5297
        %s5301 = scalar_lea.vmem %s295, 32
        %5302 = vst [vmem:[%s5301] sm:$0xff] %v5299
        %5303 = vst [vmem:[%s5301 + $0x8] sm:$0xff] %v5300
        %v5304 = vld [vmem:[%s3] sm:$0xff]
        %v5305 = vld [vmem:[%s3 + $0x8] sm:$0xff]
        %v5306 = vld [vmem:[%s3 + $0x10] sm:$0xff]
        %v5307 = vld [vmem:[%s3 + $0x18] sm:$0xff]
        %v5308 = vld [vmem:[%s3 + $0x20] sm:$0xff]
        %v5309 = vld [vmem:[%s3 + $0x28] sm:$0xff]
        %v5310 = vld [vmem:[%s3 + $0x30] sm:$0xff]
        %v5311 = vld [vmem:[%s3 + $0x38] sm:$0xff]
        %v5312 = vld [vmem:[%s3 + $0x40] sm:$0xff]
        %v5313 = vld [vmem:[%s3 + $0x48] sm:$0xff]
        %v5314 = vld [vmem:[%s3 + $0x50] sm:$0xff]
        %v5315 = vld [vmem:[%s3 + $0x58] sm:$0xff]
        %v5316 = vld [vmem:[%s3 + $0x60] sm:$0xff]
        %v5317 = vld [vmem:[%s3 + $0x68] sm:$0xff]
        %v5318 = vld [vmem:[%s3 + $0x70] sm:$0xff]
        %v5319 = vld [vmem:[%s3 + $0x78] sm:$0xff]
        %v5320 = vld [vmem:[%s3 + $0x80] sm:$0xff]
        %v5321 = vld [vmem:[%s3 + $0x88] sm:$0xff]
        %v5322 = vld [vmem:[%s3 + $0x90] sm:$0xff]
        %v5323 = vld [vmem:[%s3 + $0x98] sm:$0xff]
        %v5324 = vld [vmem:[%s3 + $0xa0] sm:$0xff]
        %v5325 = vld [vmem:[%s3 + $0xa8] sm:$0xff]
        %v5326 = vld [vmem:[%s3 + $0xb0] sm:$0xff]
        %v5327 = vld [vmem:[%s3 + $0xb8] sm:$0xff]
        %v5328 = vld [vmem:[%s3 + $0xc0] sm:$0xff]
        %v5329 = vld [vmem:[%s3 + $0xc8] sm:$0xff]
        %v5330 = vld [vmem:[%s3 + $0xd0] sm:$0xff]
        %v5331 = vld [vmem:[%s3 + $0xd8] sm:$0xff]
        %v5332 = vld [vmem:[%s3 + $0xe0] sm:$0xff]
        %v5333 = vld [vmem:[%s3 + $0xe8] sm:$0xff]
        %v5334 = vld [vmem:[%s3 + $0xf0] sm:$0xff]
        %v5335 = vld [vmem:[%s3 + $0xf8] sm:$0xff]
        %v5336 = vld [vmem:[%s3 + $0x100] sm:$0xff]
        %v5337 = vld [vmem:[%s3 + $0x108] sm:$0xff]
        %v5338 = vld [vmem:[%s3 + $0x110] sm:$0xff]
        %v5339 = vld [vmem:[%s3 + $0x118] sm:$0xff]
        %v5340 = vld [vmem:[%s3 + $0x120] sm:$0xff]
        %v5341 = vld [vmem:[%s3 + $0x128] sm:$0xff]
        %v5342 = vld [vmem:[%s3 + $0x130] sm:$0xff]
        %v5343 = vld [vmem:[%s3 + $0x138] sm:$0xff]
        %v5344 = vld [vmem:[%s3 + $0x140] sm:$0xff]
        %v5345 = vld [vmem:[%s3 + $0x148] sm:$0xff]
        %v5346 = vld [vmem:[%s3 + $0x150] sm:$0xff]
        %v5347 = vld [vmem:[%s3 + $0x158] sm:$0xff]
        %v5348 = vld [vmem:[%s3 + $0x160] sm:$0xff]
        %v5349 = vld [vmem:[%s3 + $0x168] sm:$0xff]
        %v5350 = vld [vmem:[%s3 + $0x170] sm:$0xff]
        %v5351 = vld [vmem:[%s3 + $0x178] sm:$0xff]
        %v5352 = vld [vmem:[%s3 + $0x180] sm:$0xff]
        %v5353 = vld [vmem:[%s3 + $0x188] sm:$0xff]
        %v5354 = vld [vmem:[%s3 + $0x190] sm:$0xff]
        %v5355 = vld [vmem:[%s3 + $0x198] sm:$0xff]
        %v5356 = vld [vmem:[%s3 + $0x1a0] sm:$0xff]
        %v5357 = vld [vmem:[%s3 + $0x1a8] sm:$0xff]
        %v5358 = vld [vmem:[%s3 + $0x1b0] sm:$0xff]
        %v5359 = vld [vmem:[%s3 + $0x1b8] sm:$0xff]
        %v5360 = vld [vmem:[%s3 + $0x1c0] sm:$0xff]
        %v5361 = vld [vmem:[%s3 + $0x1c8] sm:$0xff]
        %v5362 = vld [vmem:[%s3 + $0x1d0] sm:$0xff]
        %v5363 = vld [vmem:[%s3 + $0x1d8] sm:$0xff]
        %v5364 = vld [vmem:[%s3 + $0x1e0] sm:$0xff]
        %v5365 = vld [vmem:[%s3 + $0x1e8] sm:$0xff]
        %v5366 = vld [vmem:[%s3 + $0x1f0] sm:$0xff]
        %v5367 = vld [vmem:[%s3 + $0x1f8] sm:$0xff]
        %v5368 = vld [vmem:[%s2182] sm:$0xff]
        %v5369 = vld [vmem:[%s2182 + $0x8] sm:$0xff]
        %v5370 = vld [vmem:[%s2182 + $0x10] sm:$0xff]
        %v5371 = vld [vmem:[%s2182 + $0x18] sm:$0xff]
        %v5372 = vld [vmem:[%s2182 + $0x20] sm:$0xff]
        %v5373 = vld [vmem:[%s2182 + $0x28] sm:$0xff]
        %v5374 = vld [vmem:[%s2182 + $0x30] sm:$0xff]
        %v5375 = vld [vmem:[%s2182 + $0x38] sm:$0xff]
        %v5376 = vld [vmem:[%s2182 + $0x40] sm:$0xff]
        %v5377 = vld [vmem:[%s2182 + $0x48] sm:$0xff]
        %v5378 = vld [vmem:[%s2182 + $0x50] sm:$0xff]
        %v5379 = vld [vmem:[%s2182 + $0x58] sm:$0xff]
        %v5380 = vld [vmem:[%s2182 + $0x60] sm:$0xff]
        %v5381 = vld [vmem:[%s2182 + $0x68] sm:$0xff]
        %v5382 = vld [vmem:[%s2182 + $0x70] sm:$0xff]
        %v5383 = vld [vmem:[%s2182 + $0x78] sm:$0xff]
        %v5384 = vld [vmem:[%s2182 + $0x80] sm:$0xff]
        %v5385 = vld [vmem:[%s2182 + $0x88] sm:$0xff]
        %v5386 = vld [vmem:[%s2182 + $0x90] sm:$0xff]
        %v5387 = vld [vmem:[%s2182 + $0x98] sm:$0xff]
        %v5388 = vld [vmem:[%s2182 + $0xa0] sm:$0xff]
        %v5389 = vld [vmem:[%s2182 + $0xa8] sm:$0xff]
        %v5390 = vld [vmem:[%s2182 + $0xb0] sm:$0xff]
        %v5391 = vld [vmem:[%s2182 + $0xb8] sm:$0xff]
        %v5392 = vld [vmem:[%s2182 + $0xc0] sm:$0xff]
        %v5393 = vld [vmem:[%s2182 + $0xc8] sm:$0xff]
        %v5394 = vld [vmem:[%s2182 + $0xd0] sm:$0xff]
        %v5395 = vld [vmem:[%s2182 + $0xd8] sm:$0xff]
        %v5396 = vld [vmem:[%s2182 + $0xe0] sm:$0xff]
        %v5397 = vld [vmem:[%s2182 + $0xe8] sm:$0xff]
        %v5398 = vld [vmem:[%s2182 + $0xf0] sm:$0xff]
        %v5399 = vld [vmem:[%s2182 + $0xf8] sm:$0xff]
        %v5400 = vld [vmem:[%s2182 + $0x100] sm:$0xff]
        %v5401 = vld [vmem:[%s2182 + $0x108] sm:$0xff]
        %v5402 = vld [vmem:[%s2182 + $0x110] sm:$0xff]
        %v5403 = vld [vmem:[%s2182 + $0x118] sm:$0xff]
        %v5404 = vld [vmem:[%s2182 + $0x120] sm:$0xff]
        %v5405 = vld [vmem:[%s2182 + $0x128] sm:$0xff]
        %v5406 = vld [vmem:[%s2182 + $0x130] sm:$0xff]
        %v5407 = vld [vmem:[%s2182 + $0x138] sm:$0xff]
        %v5408 = vld [vmem:[%s2182 + $0x140] sm:$0xff]
        %v5409 = vld [vmem:[%s2182 + $0x148] sm:$0xff]
        %v5410 = vld [vmem:[%s2182 + $0x150] sm:$0xff]
        %v5411 = vld [vmem:[%s2182 + $0x158] sm:$0xff]
        %v5412 = vld [vmem:[%s2182 + $0x160] sm:$0xff]
        %v5413 = vld [vmem:[%s2182 + $0x168] sm:$0xff]
        %v5414 = vld [vmem:[%s2182 + $0x170] sm:$0xff]
        %v5415 = vld [vmem:[%s2182 + $0x178] sm:$0xff]
        %v5416 = vld [vmem:[%s2182 + $0x180] sm:$0xff]
        %v5417 = vld [vmem:[%s2182 + $0x188] sm:$0xff]
        %v5418 = vld [vmem:[%s2182 + $0x190] sm:$0xff]
        %v5419 = vld [vmem:[%s2182 + $0x198] sm:$0xff]
        %v5420 = vld [vmem:[%s2182 + $0x1a0] sm:$0xff]
        %v5421 = vld [vmem:[%s2182 + $0x1a8] sm:$0xff]
        %v5422 = vld [vmem:[%s2182 + $0x1b0] sm:$0xff]
        %v5423 = vld [vmem:[%s2182 + $0x1b8] sm:$0xff]
        %v5424 = vld [vmem:[%s2182 + $0x1c0] sm:$0xff]
        %v5425 = vld [vmem:[%s2182 + $0x1c8] sm:$0xff]
        %v5426 = vld [vmem:[%s2182 + $0x1d0] sm:$0xff]
        %v5427 = vld [vmem:[%s2182 + $0x1d8] sm:$0xff]
        %v5428 = vld [vmem:[%s2182 + $0x1e0] sm:$0xff]
        %v5429 = vld [vmem:[%s2182 + $0x1e8] sm:$0xff]
        %v5430 = vld [vmem:[%s2182 + $0x1f0] sm:$0xff]
        %v5431 = vld [vmem:[%s2182 + $0x1f8] sm:$0xff]
        %v5432 = vld [vmem:[%s2247] sm:$0xff]
        %v5433 = vld [vmem:[%s2247 + $0x8] sm:$0xff]
        %v5434 = vld [vmem:[%s2247 + $0x10] sm:$0xff]
        %v5435 = vld [vmem:[%s2247 + $0x18] sm:$0xff]
        %v5436 = vld [vmem:[%s2247 + $0x20] sm:$0xff]
        %v5437 = vld [vmem:[%s2247 + $0x28] sm:$0xff]
        %v5438 = vld [vmem:[%s2247 + $0x30] sm:$0xff]
        %v5439 = vld [vmem:[%s2247 + $0x38] sm:$0xff]
        %v5440 = vld [vmem:[%s2247 + $0x40] sm:$0xff]
        %v5441 = vld [vmem:[%s2247 + $0x48] sm:$0xff]
        %v5442 = vld [vmem:[%s2247 + $0x50] sm:$0xff]
        %v5443 = vld [vmem:[%s2247 + $0x58] sm:$0xff]
        %v5444 = vld [vmem:[%s2247 + $0x60] sm:$0xff]
        %v5445 = vld [vmem:[%s2247 + $0x68] sm:$0xff]
        %v5446 = vld [vmem:[%s2247 + $0x70] sm:$0xff]
        %v5447 = vld [vmem:[%s2247 + $0x78] sm:$0xff]
        %v5448 = vld [vmem:[%s2247 + $0x80] sm:$0xff]
        %v5449 = vld [vmem:[%s2247 + $0x88] sm:$0xff]
        %v5450 = vld [vmem:[%s2247 + $0x90] sm:$0xff]
        %v5451 = vld [vmem:[%s2247 + $0x98] sm:$0xff]
        %v5452 = vld [vmem:[%s2247 + $0xa0] sm:$0xff]
        %v5453 = vld [vmem:[%s2247 + $0xa8] sm:$0xff]
        %v5454 = vld [vmem:[%s2247 + $0xb0] sm:$0xff]
        %v5455 = vld [vmem:[%s2247 + $0xb8] sm:$0xff]
        %v5456 = vld [vmem:[%s2247 + $0xc0] sm:$0xff]
        %v5457 = vld [vmem:[%s2247 + $0xc8] sm:$0xff]
        %v5458 = vld [vmem:[%s2247 + $0xd0] sm:$0xff]
        %v5459 = vld [vmem:[%s2247 + $0xd8] sm:$0xff]
        %v5460 = vld [vmem:[%s2247 + $0xe0] sm:$0xff]
        %v5461 = vld [vmem:[%s2247 + $0xe8] sm:$0xff]
        %v5462 = vld [vmem:[%s2247 + $0xf0] sm:$0xff]
        %v5463 = vld [vmem:[%s2247 + $0xf8] sm:$0xff]
        %v5464 = vld [vmem:[%s2247 + $0x100] sm:$0xff]
        %v5465 = vld [vmem:[%s2247 + $0x108] sm:$0xff]
        %v5466 = vld [vmem:[%s2247 + $0x110] sm:$0xff]
        %v5467 = vld [vmem:[%s2247 + $0x118] sm:$0xff]
        %v5468 = vld [vmem:[%s2247 + $0x120] sm:$0xff]
        %v5469 = vld [vmem:[%s2247 + $0x128] sm:$0xff]
        %v5470 = vld [vmem:[%s2247 + $0x130] sm:$0xff]
        %v5471 = vld [vmem:[%s2247 + $0x138] sm:$0xff]
        %v5472 = vld [vmem:[%s2247 + $0x140] sm:$0xff]
        %v5473 = vld [vmem:[%s2247 + $0x148] sm:$0xff]
        %v5474 = vld [vmem:[%s2247 + $0x150] sm:$0xff]
        %v5475 = vld [vmem:[%s2247 + $0x158] sm:$0xff]
        %v5476 = vld [vmem:[%s2247 + $0x160] sm:$0xff]
        %v5477 = vld [vmem:[%s2247 + $0x168] sm:$0xff]
        %v5478 = vld [vmem:[%s2247 + $0x170] sm:$0xff]
        %v5479 = vld [vmem:[%s2247 + $0x178] sm:$0xff]
        %v5480 = vld [vmem:[%s2247 + $0x180] sm:$0xff]
        %v5481 = vld [vmem:[%s2247 + $0x188] sm:$0xff]
        %v5482 = vld [vmem:[%s2247 + $0x190] sm:$0xff]
        %v5483 = vld [vmem:[%s2247 + $0x198] sm:$0xff]
        %v5484 = vld [vmem:[%s2247 + $0x1a0] sm:$0xff]
        %v5485 = vld [vmem:[%s2247 + $0x1a8] sm:$0xff]
        %v5486 = vld [vmem:[%s2247 + $0x1b0] sm:$0xff]
        %v5487 = vld [vmem:[%s2247 + $0x1b8] sm:$0xff]
        %v5488 = vld [vmem:[%s2247 + $0x1c0] sm:$0xff]
        %v5489 = vld [vmem:[%s2247 + $0x1c8] sm:$0xff]
        %v5490 = vld [vmem:[%s2247 + $0x1d0] sm:$0xff]
        %v5491 = vld [vmem:[%s2247 + $0x1d8] sm:$0xff]
        %v5492 = vld [vmem:[%s2247 + $0x1e0] sm:$0xff]
        %v5493 = vld [vmem:[%s2247 + $0x1e8] sm:$0xff]
        %v5494 = vld [vmem:[%s2247 + $0x1f0] sm:$0xff]
        %v5495 = vld [vmem:[%s2247 + $0x1f8] sm:$0xff]
        %v5496 = vld [vmem:[%s4] sm:$0xf]
        %5497 = vmatpush.msra.mxu0 %v5364
        %5498 = vmatpush.msra.mxu0 %v5360
        %5499 = vmatpush.msra.mxu0 %v5356
        %5500 = vmatpush.msra.mxu0 %v5352
        %5501 = vmatpush.msra.mxu0 %v5348
        %5502 = vmatpush.msra.mxu0 %v5344
        %5503 = vmatpush.msra.mxu0 %v5340
        %5504 = vmatpush.msra.mxu0 %v5336
        %5505 = vmatpush.msra.mxu0 %v5332
        %5506 = vmatpush.msra.mxu0 %v5328
        %5507 = vmatpush.msra.mxu0 %v5324
        %5508 = vmatpush.msra.mxu0 %v5320
        %5509 = vmatpush.msra.mxu0 %v5316
        %5510 = vmatpush.msra.mxu0 %v5312
        %5511 = vmatpush.msra.mxu0 %v5308
        %5512 = vmatpush.msra.mxu0 %v5304
        %5513 = vmatmul.f32.gmra.mxu0 %v5299
        %v5514 = vpop.f32.mrf.mxu0
        %v5515 = vadd.f32 0.0, %v5514
        %5516 = vmatmul.f32.gmra.mxu0 %v5300
        %v5517 = vpop.f32.mrf.mxu0
        %v5518 = vadd.f32 0.0, %v5517
        %5519 = vdwg.mxu0
        %5520 = vmatpush.msra.mxu0 %v5365
        %5521 = vmatpush.msra.mxu0 %v5361
        %5522 = vmatpush.msra.mxu0 %v5357
        %5523 = vmatpush.msra.mxu0 %v5353
        %5524 = vmatpush.msra.mxu0 %v5349
        %5525 = vmatpush.msra.mxu0 %v5345
        %5526 = vmatpush.msra.mxu0 %v5341
        %5527 = vmatpush.msra.mxu0 %v5337
        %5528 = vmatpush.msra.mxu0 %v5333
        %5529 = vmatpush.msra.mxu0 %v5329
        %5530 = vmatpush.msra.mxu0 %v5325
        %5531 = vmatpush.msra.mxu0 %v5321
        %5532 = vmatpush.msra.mxu0 %v5317
        %5533 = vmatpush.msra.mxu0 %v5313
        %5534 = vmatpush.msra.mxu0 %v5309
        %5535 = vmatpush.msra.mxu0 %v5305
        %5536 = vmatmul.f32.gmra.mxu0 %v5299
        %v5537 = vpop.f32.mrf.mxu0
        %v5538 = vadd.f32 0.0, %v5537
        %5539 = vmatmul.f32.gmra.mxu0 %v5300
        %v5540 = vpop.f32.mrf.mxu0
        %v5541 = vadd.f32 0.0, %v5540
        %5542 = vdwg.mxu0
        %5543 = vmatpush.msra.mxu0 %v5366
        %5544 = vmatpush.msra.mxu0 %v5362
        %5545 = vmatpush.msra.mxu0 %v5358
        %5546 = vmatpush.msra.mxu0 %v5354
        %5547 = vmatpush.msra.mxu0 %v5350
        %5548 = vmatpush.msra.mxu0 %v5346
        %5549 = vmatpush.msra.mxu0 %v5342
        %5550 = vmatpush.msra.mxu0 %v5338
        %5551 = vmatpush.msra.mxu0 %v5334
        %5552 = vmatpush.msra.mxu0 %v5330
        %5553 = vmatpush.msra.mxu0 %v5326
        %5554 = vmatpush.msra.mxu0 %v5322
        %5555 = vmatpush.msra.mxu0 %v5318
        %5556 = vmatpush.msra.mxu0 %v5314
        %5557 = vmatpush.msra.mxu0 %v5310
        %5558 = vmatpush.msra.mxu0 %v5306
        %5559 = vmatmul.f32.gmra.mxu0 %v5299
        %v5560 = vpop.f32.mrf.mxu0
        %v5561 = vadd.f32 0.0, %v5560
        %5562 = vmatmul.f32.gmra.mxu0 %v5300
        %v5563 = vpop.f32.mrf.mxu0
        %v5564 = vadd.f32 0.0, %v5563
        %5565 = vdwg.mxu0
        %5566 = vmatpush.msra.mxu0 %v5367
        %5567 = vmatpush.msra.mxu0 %v5363
        %5568 = vmatpush.msra.mxu0 %v5359
        %5569 = vmatpush.msra.mxu0 %v5355
        %5570 = vmatpush.msra.mxu0 %v5351
        %5571 = vmatpush.msra.mxu0 %v5347
        %5572 = vmatpush.msra.mxu0 %v5343
        %5573 = vmatpush.msra.mxu0 %v5339
        %5574 = vmatpush.msra.mxu0 %v5335
        %5575 = vmatpush.msra.mxu0 %v5331
        %5576 = vmatpush.msra.mxu0 %v5327
        %5577 = vmatpush.msra.mxu0 %v5323
        %5578 = vmatpush.msra.mxu0 %v5319
        %5579 = vmatpush.msra.mxu0 %v5315
        %5580 = vmatpush.msra.mxu0 %v5311
        %5581 = vmatpush.msra.mxu0 %v5307
        %5582 = vmatmul.f32.gmra.mxu0 %v5299
        %v5583 = vpop.f32.mrf.mxu0
        %v5584 = vadd.f32 0.0, %v5583
        %5585 = vmatmul.f32.gmra.mxu0 %v5300
        %v5586 = vpop.f32.mrf.mxu0
        %v5587 = vadd.f32 0.0, %v5586
        %5588 = vdwg.mxu0
        %5589 = vmatpush.msra.mxu0 %v5492
        %5590 = vmatpush.msra.mxu0 %v5488
        %5591 = vmatpush.msra.mxu0 %v5484
        %5592 = vmatpush.msra.mxu0 %v5480
        %5593 = vmatpush.msra.mxu0 %v5476
        %5594 = vmatpush.msra.mxu0 %v5472
        %5595 = vmatpush.msra.mxu0 %v5468
        %5596 = vmatpush.msra.mxu0 %v5464
        %5597 = vmatpush.msra.mxu0 %v5460
        %5598 = vmatpush.msra.mxu0 %v5456
        %5599 = vmatpush.msra.mxu0 %v5452
        %5600 = vmatpush.msra.mxu0 %v5448
        %5601 = vmatpush.msra.mxu0 %v5444
        %5602 = vmatpush.msra.mxu0 %v5440
        %5603 = vmatpush.msra.mxu0 %v5436
        %5604 = vmatpush.msra.mxu0 %v5432
        %5605 = vmatmul.f32.gmra.mxu0 %v5299
        %v5606 = vpop.f32.mrf.mxu0
        %v5607 = vadd.f32 0.0, %v5606
        %5608 = vmatmul.f32.gmra.mxu0 %v5300
        %v5609 = vpop.f32.mrf.mxu0
        %v5610 = vadd.f32 0.0, %v5609
        %5611 = vdwg.mxu0
        %5612 = vmatpush.msra.mxu0 %v5493
        %5613 = vmatpush.msra.mxu0 %v5489
        %5614 = vmatpush.msra.mxu0 %v5485
        %5615 = vmatpush.msra.mxu0 %v5481
        %5616 = vmatpush.msra.mxu0 %v5477
        %5617 = vmatpush.msra.mxu0 %v5473
        %5618 = vmatpush.msra.mxu0 %v5469
        %5619 = vmatpush.msra.mxu0 %v5465
        %5620 = vmatpush.msra.mxu0 %v5461
        %5621 = vmatpush.msra.mxu0 %v5457
        %5622 = vmatpush.msra.mxu0 %v5453
        %5623 = vmatpush.msra.mxu0 %v5449
        %5624 = vmatpush.msra.mxu0 %v5445
        %5625 = vmatpush.msra.mxu0 %v5441
        %5626 = vmatpush.msra.mxu0 %v5437
        %5627 = vmatpush.msra.mxu0 %v5433
        %5628 = vmatmul.f32.gmra.mxu0 %v5299
        %v5629 = vpop.f32.mrf.mxu0
        %v5630 = vadd.f32 0.0, %v5629
        %5631 = vmatmul.f32.gmra.mxu0 %v5300
        %v5632 = vpop.f32.mrf.mxu0
        %v5633 = vadd.f32 0.0, %v5632
        %5634 = vdwg.mxu0
        %5635 = vmatpush.msra.mxu0 %v5494
        %5636 = vmatpush.msra.mxu0 %v5490
        %5637 = vmatpush.msra.mxu0 %v5486
        %5638 = vmatpush.msra.mxu0 %v5482
        %5639 = vmatpush.msra.mxu0 %v5478
        %5640 = vmatpush.msra.mxu0 %v5474
        %5641 = vmatpush.msra.mxu0 %v5470
        %5642 = vmatpush.msra.mxu0 %v5466
        %5643 = vmatpush.msra.mxu0 %v5462
        %5644 = vmatpush.msra.mxu0 %v5458
        %5645 = vmatpush.msra.mxu0 %v5454
        %5646 = vmatpush.msra.mxu0 %v5450
        %5647 = vmatpush.msra.mxu0 %v5446
        %5648 = vmatpush.msra.mxu0 %v5442
        %5649 = vmatpush.msra.mxu0 %v5438
        %5650 = vmatpush.msra.mxu0 %v5434
        %5651 = vmatmul.f32.gmra.mxu0 %v5299
        %v5652 = vpop.f32.mrf.mxu0
        %v5653 = vadd.f32 0.0, %v5652
        %5654 = vmatmul.f32.gmra.mxu0 %v5300
        %v5655 = vpop.f32.mrf.mxu0
        %v5656 = vadd.f32 0.0, %v5655
        %5657 = vdwg.mxu0
        %5658 = vmatpush.msra.mxu0 %v5495
        %5659 = vmatpush.msra.mxu0 %v5491
        %5660 = vmatpush.msra.mxu0 %v5487
        %5661 = vmatpush.msra.mxu0 %v5483
        %5662 = vmatpush.msra.mxu0 %v5479
        %5663 = vmatpush.msra.mxu0 %v5475
        %5664 = vmatpush.msra.mxu0 %v5471
        %5665 = vmatpush.msra.mxu0 %v5467
        %5666 = vmatpush.msra.mxu0 %v5463
        %5667 = vmatpush.msra.mxu0 %v5459
        %5668 = vmatpush.msra.mxu0 %v5455
        %5669 = vmatpush.msra.mxu0 %v5451
        %5670 = vmatpush.msra.mxu0 %v5447
        %5671 = vmatpush.msra.mxu0 %v5443
        %5672 = vmatpush.msra.mxu0 %v5439
        %5673 = vmatpush.msra.mxu0 %v5435
        %5674 = vmatmul.f32.gmra.mxu0 %v5299
        %v5675 = vpop.f32.mrf.mxu0
        %v5676 = vadd.f32 0.0, %v5675
        %5677 = vmatmul.f32.gmra.mxu0 %v5300
        %v5678 = vpop.f32.mrf.mxu0
        %v5679 = vadd.f32 0.0, %v5678
        %5680 = vdwg.mxu0
        %v5689 = vrot.slane %v5515, 7
        %v5690 = vrot.slane %v5538, 7
        %v5691 = vrot.slane %v5561, 7
        %v5692 = vrot.slane %v5584, 7
        %v5693 = vrot.slane %v5518, 7
        %v5694 = vsel %vm491, %v5689, %v5693
        %v5695 = vrot.slane %v5541, 7
        %v5696 = vsel %vm491, %v5690, %v5695
        %v5697 = vrot.slane %v5564, 7
        %v5698 = vsel %vm491, %v5691, %v5697
        %v5699 = vrot.slane %v5587, 7
        %v5700 = vsel %vm491, %v5692, %v5699
        %v5709 = vsel %vm491, 0.0, %v5689
        %v5710 = vsel %vm491, 0.0, %v5690
        %v5711 = vsel %vm491, 0.0, %v5691
        %v5712 = vsel %vm491, 0.0, %v5692
        %5713 = vmatpush.msra.mxu0 %v5428
        %5714 = vmatpush.msra.mxu0 %v5424
        %5715 = vmatpush.msra.mxu0 %v5420
        %5716 = vmatpush.msra.mxu0 %v5416
        %5717 = vmatpush.msra.mxu0 %v5412
        %5718 = vmatpush.msra.mxu0 %v5408
        %5719 = vmatpush.msra.mxu0 %v5404
        %5720 = vmatpush.msra.mxu0 %v5400
        %5721 = vmatpush.msra.mxu0 %v5396
        %5722 = vmatpush.msra.mxu0 %v5392
        %5723 = vmatpush.msra.mxu0 %v5388
        %5724 = vmatpush.msra.mxu0 %v5384
        %5725 = vmatpush.msra.mxu0 %v5380
        %5726 = vmatpush.msra.mxu0 %v5376
        %5727 = vmatpush.msra.mxu0 %v5372
        %5728 = vmatpush.msra.mxu0 %v5368
        %5729 = vmatmul.f32.gmra.mxu0 %v5299
        %v5730 = vpop.f32.mrf.mxu0
        %v5731 = vadd.f32 %v5709, %v5730
        %5732 = vmatmul.f32.gmra.mxu0 %v5300
        %v5733 = vpop.f32.mrf.mxu0
        %v5734 = vadd.f32 %v5694, %v5733
        %5735 = vdwg.mxu0
        %5736 = vmatpush.msra.mxu0 %v5429
        %5737 = vmatpush.msra.mxu0 %v5425
        %5738 = vmatpush.msra.mxu0 %v5421
        %5739 = vmatpush.msra.mxu0 %v5417
        %5740 = vmatpush.msra.mxu0 %v5413
        %5741 = vmatpush.msra.mxu0 %v5409
        %5742 = vmatpush.msra.mxu0 %v5405
        %5743 = vmatpush.msra.mxu0 %v5401
        %5744 = vmatpush.msra.mxu0 %v5397
        %5745 = vmatpush.msra.mxu0 %v5393
        %5746 = vmatpush.msra.mxu0 %v5389
        %5747 = vmatpush.msra.mxu0 %v5385
        %5748 = vmatpush.msra.mxu0 %v5381
        %5749 = vmatpush.msra.mxu0 %v5377
        %5750 = vmatpush.msra.mxu0 %v5373
        %5751 = vmatpush.msra.mxu0 %v5369
        %5752 = vmatmul.f32.gmra.mxu0 %v5299
        %v5753 = vpop.f32.mrf.mxu0
        %v5754 = vadd.f32 %v5710, %v5753
        %5755 = vmatmul.f32.gmra.mxu0 %v5300
        %v5756 = vpop.f32.mrf.mxu0
        %v5757 = vadd.f32 %v5696, %v5756
        %5758 = vdwg.mxu0
        %5759 = vmatpush.msra.mxu0 %v5430
        %5760 = vmatpush.msra.mxu0 %v5426
        %5761 = vmatpush.msra.mxu0 %v5422
        %5762 = vmatpush.msra.mxu0 %v5418
        %5763 = vmatpush.msra.mxu0 %v5414
        %5764 = vmatpush.msra.mxu0 %v5410
        %5765 = vmatpush.msra.mxu0 %v5406
        %5766 = vmatpush.msra.mxu0 %v5402
        %5767 = vmatpush.msra.mxu0 %v5398
        %5768 = vmatpush.msra.mxu0 %v5394
        %5769 = vmatpush.msra.mxu0 %v5390
        %5770 = vmatpush.msra.mxu0 %v5386
        %5771 = vmatpush.msra.mxu0 %v5382
        %5772 = vmatpush.msra.mxu0 %v5378
        %5773 = vmatpush.msra.mxu0 %v5374
        %5774 = vmatpush.msra.mxu0 %v5370
        %5775 = vmatmul.f32.gmra.mxu0 %v5299
        %v5776 = vpop.f32.mrf.mxu0
        %v5777 = vadd.f32 %v5711, %v5776
        %5778 = vmatmul.f32.gmra.mxu0 %v5300
        %v5779 = vpop.f32.mrf.mxu0
        %v5780 = vadd.f32 %v5698, %v5779
        %5781 = vdwg.mxu0
        %5782 = vmatpush.msra.mxu0 %v5431
        %5783 = vmatpush.msra.mxu0 %v5427
        %5784 = vmatpush.msra.mxu0 %v5423
        %5785 = vmatpush.msra.mxu0 %v5419
        %5786 = vmatpush.msra.mxu0 %v5415
        %5787 = vmatpush.msra.mxu0 %v5411
        %5788 = vmatpush.msra.mxu0 %v5407
        %5789 = vmatpush.msra.mxu0 %v5403
        %5790 = vmatpush.msra.mxu0 %v5399
        %5791 = vmatpush.msra.mxu0 %v5395
        %5792 = vmatpush.msra.mxu0 %v5391
        %5793 = vmatpush.msra.mxu0 %v5387
        %5794 = vmatpush.msra.mxu0 %v5383
        %5795 = vmatpush.msra.mxu0 %v5379
        %5796 = vmatpush.msra.mxu0 %v5375
        %5797 = vmatpush.msra.mxu0 %v5371
        %5798 = vmatmul.f32.gmra.mxu0 %v5299
        %v5799 = vpop.f32.mrf.mxu0
        %v5800 = vadd.f32 %v5712, %v5799
        %5801 = vmatmul.f32.gmra.mxu0 %v5300
        %v5802 = vpop.f32.mrf.mxu0
        %v5803 = vadd.f32 %v5700, %v5802
        %5804 = vdwg.mxu0
        %v5813 = vrot.slane %v5607, 1
        %v5814 = vrot.slane %v5610, 1
        %v5815 = vsel %vm546, %v5813, %v5814
        %v5816 = vrot.slane %v5630, 1
        %v5817 = vrot.slane %v5633, 1
        %v5818 = vsel %vm546, %v5816, %v5817
        %v5819 = vrot.slane %v5653, 1
        %v5820 = vrot.slane %v5656, 1
        %v5821 = vsel %vm546, %v5819, %v5820
        %v5822 = vrot.slane %v5676, 1
        %v5823 = vrot.slane %v5679, 1
        %v5824 = vsel %vm546, %v5822, %v5823
        %v5833 = vsel %vm546, %v5814, 0.0
        %v5834 = vsel %vm546, %v5817, 0.0
        %v5835 = vsel %vm546, %v5820, 0.0
        %v5836 = vsel %vm546, %v5823, 0.0
        %v5837 = vadd.f32 %v5731, %v5815
        %v5838 = vadd.f32 %v5754, %v5818
        %v5839 = vadd.f32 %v5777, %v5821
        %v5840 = vadd.f32 %v5800, %v5824
        %v5841 = vadd.f32 %v5734, %v5833
        %v5842 = vadd.f32 %v5757, %v5834
        %v5843 = vadd.f32 %v5780, %v5835
        %v5844 = vadd.f32 %v5803, %v5836
        %v5846 = vperm.slane %v5496, 0
        %v5847 = vperm.slane %v5496, 1
        %v5848 = vperm.slane %v5496, 2
        %v5849 = vperm.slane %v5496, 3
        %v5854 = vadd.f32 %v5837, %v5846
        %v5855 = vadd.f32 %v5838, %v5847
        %v5856 = vadd.f32 %v5839, %v5848
        %v5857 = vadd.f32 %v5840, %v5849
        %v5858 = vadd.f32 %v5841, %v5846
        %v5859 = vadd.f32 %v5842, %v5847
        %v5860 = vadd.f32 %v5843, %v5848
        %v5861 = vadd.f32 %v5844, %v5849
        %v5862 = vmax.f32 %v5854, 0.0
        %v5863 = vmax.f32 %v5855, 0.0
        %v5864 = vmax.f32 %v5856, 0.0
        %v5865 = vmax.f32 %v5857, 0.0
        %v5866 = vmax.f32 %v5858, 0.0
        %v5867 = vmax.f32 %v5859, 0.0
        %v5868 = vmax.f32 %v5860, 0.0
        %v5869 = vmax.f32 %v5861, 0.0
        %v5870 = vld [vmem:[#allocation2] sm:$0xff]
        %v5871 = vld [vmem:[#allocation2 + $0x8] sm:$0xff]
        %v5872 = vld [vmem:[#allocation2 + $0x10] sm:$0xff]
        %v5873 = vld [vmem:[#allocation2 + $0x18] sm:$0xff]
        %v5874 = vld [vmem:[#allocation2 + $0x20] sm:$0xff]
        %v5875 = vld [vmem:[#allocation2 + $0x28] sm:$0xff]
        %v5876 = vld [vmem:[#allocation2 + $0x30] sm:$0xff]
        %v5877 = vld [vmem:[#allocation2 + $0x38] sm:$0xff]
        %v5878 = vld [vmem:[#allocation2 + $0x40] sm:$0xff]
        %v5879 = vld [vmem:[#allocation2 + $0x48] sm:$0xff]
        %v5880 = vld [vmem:[#allocation2 + $0x50] sm:$0xff]
        %v5881 = vld [vmem:[#allocation2 + $0x58] sm:$0xff]
        %v5882 = vld [vmem:[#allocation2 + $0x60] sm:$0xff]
        %v5883 = vld [vmem:[#allocation2 + $0x68] sm:$0xff]
        %v5884 = vld [vmem:[#allocation2 + $0x70] sm:$0xff]
        %v5885 = vld [vmem:[#allocation2 + $0x78] sm:$0xff]
        %v5886 = vld [vmem:[#allocation2 + $0x80] sm:$0xff]
        %v5887 = vld [vmem:[#allocation2 + $0x88] sm:$0xff]
        %v5888 = vld [vmem:[#allocation2 + $0x90] sm:$0xff]
        %v5889 = vld [vmem:[#allocation2 + $0x98] sm:$0xff]
        %v5890 = vld [vmem:[#allocation2 + $0xa0] sm:$0xff]
        %v5891 = vld [vmem:[#allocation2 + $0xa8] sm:$0xff]
        %v5892 = vld [vmem:[#allocation2 + $0xb0] sm:$0xff]
        %v5893 = vld [vmem:[#allocation2 + $0xb8] sm:$0xff]
        %v5894 = vld [vmem:[#allocation2 + $0xc0] sm:$0xff]
        %v5895 = vld [vmem:[#allocation2 + $0xc8] sm:$0xff]
        %v5896 = vld [vmem:[#allocation2 + $0xd0] sm:$0xff]
        %v5897 = vld [vmem:[#allocation2 + $0xd8] sm:$0xff]
        %v5898 = vld [vmem:[#allocation2 + $0xe0] sm:$0xff]
        %v5899 = vld [vmem:[#allocation2 + $0xe8] sm:$0xff]
        %v5900 = vld [vmem:[#allocation2 + $0xf0] sm:$0xff]
        %v5901 = vld [vmem:[#allocation2 + $0xf8] sm:$0xff]
        %v5902 = vld [vmem:[#allocation2 + $0x100] sm:$0xff]
        %v5903 = vld [vmem:[#allocation2 + $0x108] sm:$0xff]
        %v5904 = vld [vmem:[#allocation2 + $0x110] sm:$0xff]
        %v5905 = vld [vmem:[#allocation2 + $0x118] sm:$0xff]
        %v5906 = vld [vmem:[#allocation2 + $0x120] sm:$0xff]
        %v5907 = vld [vmem:[#allocation2 + $0x128] sm:$0xff]
        %v5908 = vld [vmem:[#allocation2 + $0x130] sm:$0xff]
        %v5909 = vld [vmem:[#allocation2 + $0x138] sm:$0xff]
        %v5910 = vld [vmem:[#allocation2 + $0x140] sm:$0xff]
        %v5911 = vld [vmem:[#allocation2 + $0x148] sm:$0xff]
        %v5912 = vld [vmem:[#allocation2 + $0x150] sm:$0xff]
        %v5913 = vld [vmem:[#allocation2 + $0x158] sm:$0xff]
        %v5914 = vld [vmem:[#allocation2 + $0x160] sm:$0xff]
        %v5915 = vld [vmem:[#allocation2 + $0x168] sm:$0xff]
        %v5916 = vld [vmem:[#allocation2 + $0x170] sm:$0xff]
        %v5917 = vld [vmem:[#allocation2 + $0x178] sm:$0xff]
        %v5918 = vld [vmem:[#allocation2 + $0x180] sm:$0xff]
        %v5919 = vld [vmem:[#allocation2 + $0x188] sm:$0xff]
        %v5920 = vld [vmem:[#allocation2 + $0x190] sm:$0xff]
        %v5921 = vld [vmem:[#allocation2 + $0x198] sm:$0xff]
        %v5922 = vld [vmem:[#allocation2 + $0x1a0] sm:$0xff]
        %v5923 = vld [vmem:[#allocation2 + $0x1a8] sm:$0xff]
        %v5924 = vld [vmem:[#allocation2 + $0x1b0] sm:$0xff]
        %v5925 = vld [vmem:[#allocation2 + $0x1b8] sm:$0xff]
        %v5926 = vld [vmem:[#allocation2 + $0x1c0] sm:$0xff]
        %v5927 = vld [vmem:[#allocation2 + $0x1c8] sm:$0xff]
        %v5928 = vld [vmem:[#allocation2 + $0x1d0] sm:$0xff]
        %v5929 = vld [vmem:[#allocation2 + $0x1d8] sm:$0xff]
        %v5930 = vld [vmem:[#allocation2 + $0x1e0] sm:$0xff]
        %v5931 = vld [vmem:[#allocation2 + $0x1e8] sm:$0xff]
        %v5932 = vld [vmem:[#allocation2 + $0x1f0] sm:$0xff]
        %v5933 = vld [vmem:[#allocation2 + $0x1f8] sm:$0xff]
        %v5934 = vld [vmem:[%s2750] sm:$0xff]
        %v5935 = vld [vmem:[%s2750 + $0x8] sm:$0xff]
        %v5936 = vld [vmem:[%s2750 + $0x10] sm:$0xff]
        %v5937 = vld [vmem:[%s2750 + $0x18] sm:$0xff]
        %v5938 = vld [vmem:[%s2750 + $0x20] sm:$0xff]
        %v5939 = vld [vmem:[%s2750 + $0x28] sm:$0xff]
        %v5940 = vld [vmem:[%s2750 + $0x30] sm:$0xff]
        %v5941 = vld [vmem:[%s2750 + $0x38] sm:$0xff]
        %v5942 = vld [vmem:[%s2750 + $0x40] sm:$0xff]
        %v5943 = vld [vmem:[%s2750 + $0x48] sm:$0xff]
        %v5944 = vld [vmem:[%s2750 + $0x50] sm:$0xff]
        %v5945 = vld [vmem:[%s2750 + $0x58] sm:$0xff]
        %v5946 = vld [vmem:[%s2750 + $0x60] sm:$0xff]
        %v5947 = vld [vmem:[%s2750 + $0x68] sm:$0xff]
        %v5948 = vld [vmem:[%s2750 + $0x70] sm:$0xff]
        %v5949 = vld [vmem:[%s2750 + $0x78] sm:$0xff]
        %v5950 = vld [vmem:[%s2750 + $0x80] sm:$0xff]
        %v5951 = vld [vmem:[%s2750 + $0x88] sm:$0xff]
        %v5952 = vld [vmem:[%s2750 + $0x90] sm:$0xff]
        %v5953 = vld [vmem:[%s2750 + $0x98] sm:$0xff]
        %v5954 = vld [vmem:[%s2750 + $0xa0] sm:$0xff]
        %v5955 = vld [vmem:[%s2750 + $0xa8] sm:$0xff]
        %v5956 = vld [vmem:[%s2750 + $0xb0] sm:$0xff]
        %v5957 = vld [vmem:[%s2750 + $0xb8] sm:$0xff]
        %v5958 = vld [vmem:[%s2750 + $0xc0] sm:$0xff]
        %v5959 = vld [vmem:[%s2750 + $0xc8] sm:$0xff]
        %v5960 = vld [vmem:[%s2750 + $0xd0] sm:$0xff]
        %v5961 = vld [vmem:[%s2750 + $0xd8] sm:$0xff]
        %v5962 = vld [vmem:[%s2750 + $0xe0] sm:$0xff]
        %v5963 = vld [vmem:[%s2750 + $0xe8] sm:$0xff]
        %v5964 = vld [vmem:[%s2750 + $0xf0] sm:$0xff]
        %v5965 = vld [vmem:[%s2750 + $0xf8] sm:$0xff]
        %v5966 = vld [vmem:[%s2750 + $0x100] sm:$0xff]
        %v5967 = vld [vmem:[%s2750 + $0x108] sm:$0xff]
        %v5968 = vld [vmem:[%s2750 + $0x110] sm:$0xff]
        %v5969 = vld [vmem:[%s2750 + $0x118] sm:$0xff]
        %v5970 = vld [vmem:[%s2750 + $0x120] sm:$0xff]
        %v5971 = vld [vmem:[%s2750 + $0x128] sm:$0xff]
        %v5972 = vld [vmem:[%s2750 + $0x130] sm:$0xff]
        %v5973 = vld [vmem:[%s2750 + $0x138] sm:$0xff]
        %v5974 = vld [vmem:[%s2750 + $0x140] sm:$0xff]
        %v5975 = vld [vmem:[%s2750 + $0x148] sm:$0xff]
        %v5976 = vld [vmem:[%s2750 + $0x150] sm:$0xff]
        %v5977 = vld [vmem:[%s2750 + $0x158] sm:$0xff]
        %v5978 = vld [vmem:[%s2750 + $0x160] sm:$0xff]
        %v5979 = vld [vmem:[%s2750 + $0x168] sm:$0xff]
        %v5980 = vld [vmem:[%s2750 + $0x170] sm:$0xff]
        %v5981 = vld [vmem:[%s2750 + $0x178] sm:$0xff]
        %v5982 = vld [vmem:[%s2750 + $0x180] sm:$0xff]
        %v5983 = vld [vmem:[%s2750 + $0x188] sm:$0xff]
        %v5984 = vld [vmem:[%s2750 + $0x190] sm:$0xff]
        %v5985 = vld [vmem:[%s2750 + $0x198] sm:$0xff]
        %v5986 = vld [vmem:[%s2750 + $0x1a0] sm:$0xff]
        %v5987 = vld [vmem:[%s2750 + $0x1a8] sm:$0xff]
        %v5988 = vld [vmem:[%s2750 + $0x1b0] sm:$0xff]
        %v5989 = vld [vmem:[%s2750 + $0x1b8] sm:$0xff]
        %v5990 = vld [vmem:[%s2750 + $0x1c0] sm:$0xff]
        %v5991 = vld [vmem:[%s2750 + $0x1c8] sm:$0xff]
        %v5992 = vld [vmem:[%s2750 + $0x1d0] sm:$0xff]
        %v5993 = vld [vmem:[%s2750 + $0x1d8] sm:$0xff]
        %v5994 = vld [vmem:[%s2750 + $0x1e0] sm:$0xff]
        %v5995 = vld [vmem:[%s2750 + $0x1e8] sm:$0xff]
        %v5996 = vld [vmem:[%s2750 + $0x1f0] sm:$0xff]
        %v5997 = vld [vmem:[%s2750 + $0x1f8] sm:$0xff]
        %v5998 = vld [vmem:[%s2815] sm:$0xff]
        %v5999 = vld [vmem:[%s2815 + $0x8] sm:$0xff]
        %v6000 = vld [vmem:[%s2815 + $0x10] sm:$0xff]
        %v6001 = vld [vmem:[%s2815 + $0x18] sm:$0xff]
        %v6002 = vld [vmem:[%s2815 + $0x20] sm:$0xff]
        %v6003 = vld [vmem:[%s2815 + $0x28] sm:$0xff]
        %v6004 = vld [vmem:[%s2815 + $0x30] sm:$0xff]
        %v6005 = vld [vmem:[%s2815 + $0x38] sm:$0xff]
        %v6006 = vld [vmem:[%s2815 + $0x40] sm:$0xff]
        %v6007 = vld [vmem:[%s2815 + $0x48] sm:$0xff]
        %v6008 = vld [vmem:[%s2815 + $0x50] sm:$0xff]
        %v6009 = vld [vmem:[%s2815 + $0x58] sm:$0xff]
        %v6010 = vld [vmem:[%s2815 + $0x60] sm:$0xff]
        %v6011 = vld [vmem:[%s2815 + $0x68] sm:$0xff]
        %v6012 = vld [vmem:[%s2815 + $0x70] sm:$0xff]
        %v6013 = vld [vmem:[%s2815 + $0x78] sm:$0xff]
        %v6014 = vld [vmem:[%s2815 + $0x80] sm:$0xff]
        %v6015 = vld [vmem:[%s2815 + $0x88] sm:$0xff]
        %v6016 = vld [vmem:[%s2815 + $0x90] sm:$0xff]
        %v6017 = vld [vmem:[%s2815 + $0x98] sm:$0xff]
        %v6018 = vld [vmem:[%s2815 + $0xa0] sm:$0xff]
        %v6019 = vld [vmem:[%s2815 + $0xa8] sm:$0xff]
        %v6020 = vld [vmem:[%s2815 + $0xb0] sm:$0xff]
        %v6021 = vld [vmem:[%s2815 + $0xb8] sm:$0xff]
        %v6022 = vld [vmem:[%s2815 + $0xc0] sm:$0xff]
        %v6023 = vld [vmem:[%s2815 + $0xc8] sm:$0xff]
        %v6024 = vld [vmem:[%s2815 + $0xd0] sm:$0xff]
        %v6025 = vld [vmem:[%s2815 + $0xd8] sm:$0xff]
        %v6026 = vld [vmem:[%s2815 + $0xe0] sm:$0xff]
        %v6027 = vld [vmem:[%s2815 + $0xe8] sm:$0xff]
        %v6028 = vld [vmem:[%s2815 + $0xf0] sm:$0xff]
        %v6029 = vld [vmem:[%s2815 + $0xf8] sm:$0xff]
        %v6030 = vld [vmem:[%s2815 + $0x100] sm:$0xff]
        %v6031 = vld [vmem:[%s2815 + $0x108] sm:$0xff]
        %v6032 = vld [vmem:[%s2815 + $0x110] sm:$0xff]
        %v6033 = vld [vmem:[%s2815 + $0x118] sm:$0xff]
        %v6034 = vld [vmem:[%s2815 + $0x120] sm:$0xff]
        %v6035 = vld [vmem:[%s2815 + $0x128] sm:$0xff]
        %v6036 = vld [vmem:[%s2815 + $0x130] sm:$0xff]
        %v6037 = vld [vmem:[%s2815 + $0x138] sm:$0xff]
        %v6038 = vld [vmem:[%s2815 + $0x140] sm:$0xff]
        %v6039 = vld [vmem:[%s2815 + $0x148] sm:$0xff]
        %v6040 = vld [vmem:[%s2815 + $0x150] sm:$0xff]
        %v6041 = vld [vmem:[%s2815 + $0x158] sm:$0xff]
        %v6042 = vld [vmem:[%s2815 + $0x160] sm:$0xff]
        %v6043 = vld [vmem:[%s2815 + $0x168] sm:$0xff]
        %v6044 = vld [vmem:[%s2815 + $0x170] sm:$0xff]
        %v6045 = vld [vmem:[%s2815 + $0x178] sm:$0xff]
        %v6046 = vld [vmem:[%s2815 + $0x180] sm:$0xff]
        %v6047 = vld [vmem:[%s2815 + $0x188] sm:$0xff]
        %v6048 = vld [vmem:[%s2815 + $0x190] sm:$0xff]
        %v6049 = vld [vmem:[%s2815 + $0x198] sm:$0xff]
        %v6050 = vld [vmem:[%s2815 + $0x1a0] sm:$0xff]
        %v6051 = vld [vmem:[%s2815 + $0x1a8] sm:$0xff]
        %v6052 = vld [vmem:[%s2815 + $0x1b0] sm:$0xff]
        %v6053 = vld [vmem:[%s2815 + $0x1b8] sm:$0xff]
        %v6054 = vld [vmem:[%s2815 + $0x1c0] sm:$0xff]
        %v6055 = vld [vmem:[%s2815 + $0x1c8] sm:$0xff]
        %v6056 = vld [vmem:[%s2815 + $0x1d0] sm:$0xff]
        %v6057 = vld [vmem:[%s2815 + $0x1d8] sm:$0xff]
        %v6058 = vld [vmem:[%s2815 + $0x1e0] sm:$0xff]
        %v6059 = vld [vmem:[%s2815 + $0x1e8] sm:$0xff]
        %v6060 = vld [vmem:[%s2815 + $0x1f0] sm:$0xff]
        %v6061 = vld [vmem:[%s2815 + $0x1f8] sm:$0xff]
        %v6062 = vld [vmem:[%s6] sm:$0x1]
        %6063 = vmatpush.msra.mxu0 %v5885
        %6064 = vmatpush.msra.mxu0 %v5884
        %6065 = vmatpush.msra.mxu0 %v5883
        %6066 = vmatpush.msra.mxu0 %v5882
        %6067 = vmatpush.msra.mxu0 %v5881
        %6068 = vmatpush.msra.mxu0 %v5880
        %6069 = vmatpush.msra.mxu0 %v5879
        %6070 = vmatpush.msra.mxu0 %v5878
        %6071 = vmatpush.msra.mxu0 %v5877
        %6072 = vmatpush.msra.mxu0 %v5876
        %6073 = vmatpush.msra.mxu0 %v5875
        %6074 = vmatpush.msra.mxu0 %v5874
        %6075 = vmatpush.msra.mxu0 %v5873
        %6076 = vmatpush.msra.mxu0 %v5872
        %6077 = vmatpush.msra.mxu0 %v5871
        %6078 = vmatpush.msra.mxu0 %v5870
        %6079 = vmatmul.f32.gmra.mxu0 %v5862
        %v6080 = vpop.f32.mrf.mxu0
        %v6081 = vadd.f32 0.0, %v6080
        %6082 = vmatmul.f32.gmra.mxu0 %v5866
        %v6083 = vpop.f32.mrf.mxu0
        %v6084 = vadd.f32 0.0, %v6083
        %6085 = vdwg.mxu0
        %6086 = vmatpush.msra.mxu0 %v5901
        %6087 = vmatpush.msra.mxu0 %v5900
        %6088 = vmatpush.msra.mxu0 %v5899
        %6089 = vmatpush.msra.mxu0 %v5898
        %6090 = vmatpush.msra.mxu0 %v5897
        %6091 = vmatpush.msra.mxu0 %v5896
        %6092 = vmatpush.msra.mxu0 %v5895
        %6093 = vmatpush.msra.mxu0 %v5894
        %6094 = vmatpush.msra.mxu0 %v5893
        %6095 = vmatpush.msra.mxu0 %v5892
        %6096 = vmatpush.msra.mxu0 %v5891
        %6097 = vmatpush.msra.mxu0 %v5890
        %6098 = vmatpush.msra.mxu0 %v5889
        %6099 = vmatpush.msra.mxu0 %v5888
        %6100 = vmatpush.msra.mxu0 %v5887
        %6101 = vmatpush.msra.mxu0 %v5886
        %6102 = vmatmul.f32.gmra.mxu0 %v5863
        %v6103 = vpop.f32.mrf.mxu0
        %v6104 = vadd.f32 %v6081, %v6103
        %6105 = vmatmul.f32.gmra.mxu0 %v5867
        %v6106 = vpop.f32.mrf.mxu0
        %v6107 = vadd.f32 %v6084, %v6106
        %6108 = vdwg.mxu0
        %6109 = vmatpush.msra.mxu0 %v5917
        %6110 = vmatpush.msra.mxu0 %v5916
        %6111 = vmatpush.msra.mxu0 %v5915
        %6112 = vmatpush.msra.mxu0 %v5914
        %6113 = vmatpush.msra.mxu0 %v5913
        %6114 = vmatpush.msra.mxu0 %v5912
        %6115 = vmatpush.msra.mxu0 %v5911
        %6116 = vmatpush.msra.mxu0 %v5910
        %6117 = vmatpush.msra.mxu0 %v5909
        %6118 = vmatpush.msra.mxu0 %v5908
        %6119 = vmatpush.msra.mxu0 %v5907
        %6120 = vmatpush.msra.mxu0 %v5906
        %6121 = vmatpush.msra.mxu0 %v5905
        %6122 = vmatpush.msra.mxu0 %v5904
        %6123 = vmatpush.msra.mxu0 %v5903
        %6124 = vmatpush.msra.mxu0 %v5902
        %6125 = vmatmul.f32.gmra.mxu0 %v5864
        %v6126 = vpop.f32.mrf.mxu0
        %v6127 = vadd.f32 %v6104, %v6126
        %6128 = vmatmul.f32.gmra.mxu0 %v5868
        %v6129 = vpop.f32.mrf.mxu0
        %v6130 = vadd.f32 %v6107, %v6129
        %6131 = vdwg.mxu0
        %6132 = vmatpush.msra.mxu0 %v5933
        %6133 = vmatpush.msra.mxu0 %v5932
        %6134 = vmatpush.msra.mxu0 %v5931
        %6135 = vmatpush.msra.mxu0 %v5930
        %6136 = vmatpush.msra.mxu0 %v5929
        %6137 = vmatpush.msra.mxu0 %v5928
        %6138 = vmatpush.msra.mxu0 %v5927
        %6139 = vmatpush.msra.mxu0 %v5926
        %6140 = vmatpush.msra.mxu0 %v5925
        %6141 = vmatpush.msra.mxu0 %v5924
        %6142 = vmatpush.msra.mxu0 %v5923
        %6143 = vmatpush.msra.mxu0 %v5922
        %6144 = vmatpush.msra.mxu0 %v5921
        %6145 = vmatpush.msra.mxu0 %v5920
        %6146 = vmatpush.msra.mxu0 %v5919
        %6147 = vmatpush.msra.mxu0 %v5918
        %6148 = vmatmul.f32.gmra.mxu0 %v5865
        %v6149 = vpop.f32.mrf.mxu0
        %v6150 = vadd.f32 %v6127, %v6149
        %6151 = vmatmul.f32.gmra.mxu0 %v5869
        %v6152 = vpop.f32.mrf.mxu0
        %v6153 = vadd.f32 %v6130, %v6152
        %6154 = vdwg.mxu0
        %6155 = vmatpush.msra.mxu0 %v6013
        %6156 = vmatpush.msra.mxu0 %v6012
        %6157 = vmatpush.msra.mxu0 %v6011
        %6158 = vmatpush.msra.mxu0 %v6010
        %6159 = vmatpush.msra.mxu0 %v6009
        %6160 = vmatpush.msra.mxu0 %v6008
        %6161 = vmatpush.msra.mxu0 %v6007
        %6162 = vmatpush.msra.mxu0 %v6006
        %6163 = vmatpush.msra.mxu0 %v6005
        %6164 = vmatpush.msra.mxu0 %v6004
        %6165 = vmatpush.msra.mxu0 %v6003
        %6166 = vmatpush.msra.mxu0 %v6002
        %6167 = vmatpush.msra.mxu0 %v6001
        %6168 = vmatpush.msra.mxu0 %v6000
        %6169 = vmatpush.msra.mxu0 %v5999
        %6170 = vmatpush.msra.mxu0 %v5998
        %6171 = vmatmul.f32.gmra.mxu0 %v5862
        %v6172 = vpop.f32.mrf.mxu0
        %v6173 = vadd.f32 0.0, %v6172
        %6174 = vmatmul.f32.gmra.mxu0 %v5866
        %v6175 = vpop.f32.mrf.mxu0
        %v6176 = vadd.f32 0.0, %v6175
        %6177 = vdwg.mxu0
        %6178 = vmatpush.msra.mxu0 %v6029
        %6179 = vmatpush.msra.mxu0 %v6028
        %6180 = vmatpush.msra.mxu0 %v6027
        %6181 = vmatpush.msra.mxu0 %v6026
        %6182 = vmatpush.msra.mxu0 %v6025
        %6183 = vmatpush.msra.mxu0 %v6024
        %6184 = vmatpush.msra.mxu0 %v6023
        %6185 = vmatpush.msra.mxu0 %v6022
        %6186 = vmatpush.msra.mxu0 %v6021
        %6187 = vmatpush.msra.mxu0 %v6020
        %6188 = vmatpush.msra.mxu0 %v6019
        %6189 = vmatpush.msra.mxu0 %v6018
        %6190 = vmatpush.msra.mxu0 %v6017
        %6191 = vmatpush.msra.mxu0 %v6016
        %6192 = vmatpush.msra.mxu0 %v6015
        %6193 = vmatpush.msra.mxu0 %v6014
        %6194 = vmatmul.f32.gmra.mxu0 %v5863
        %v6195 = vpop.f32.mrf.mxu0
        %v6196 = vadd.f32 %v6173, %v6195
        %6197 = vmatmul.f32.gmra.mxu0 %v5867
        %v6198 = vpop.f32.mrf.mxu0
        %v6199 = vadd.f32 %v6176, %v6198
        %6200 = vdwg.mxu0
        %6201 = vmatpush.msra.mxu0 %v6045
        %6202 = vmatpush.msra.mxu0 %v6044
        %6203 = vmatpush.msra.mxu0 %v6043
        %6204 = vmatpush.msra.mxu0 %v6042
        %6205 = vmatpush.msra.mxu0 %v6041
        %6206 = vmatpush.msra.mxu0 %v6040
        %6207 = vmatpush.msra.mxu0 %v6039
        %6208 = vmatpush.msra.mxu0 %v6038
        %6209 = vmatpush.msra.mxu0 %v6037
        %6210 = vmatpush.msra.mxu0 %v6036
        %6211 = vmatpush.msra.mxu0 %v6035
        %6212 = vmatpush.msra.mxu0 %v6034
        %6213 = vmatpush.msra.mxu0 %v6033
        %6214 = vmatpush.msra.mxu0 %v6032
        %6215 = vmatpush.msra.mxu0 %v6031
        %6216 = vmatpush.msra.mxu0 %v6030
        %6217 = vmatmul.f32.gmra.mxu0 %v5864
        %v6218 = vpop.f32.mrf.mxu0
        %v6219 = vadd.f32 %v6196, %v6218
        %6220 = vmatmul.f32.gmra.mxu0 %v5868
        %v6221 = vpop.f32.mrf.mxu0
        %v6222 = vadd.f32 %v6199, %v6221
        %6223 = vdwg.mxu0
        %6224 = vmatpush.msra.mxu0 %v6061
        %6225 = vmatpush.msra.mxu0 %v6060
        %6226 = vmatpush.msra.mxu0 %v6059
        %6227 = vmatpush.msra.mxu0 %v6058
        %6228 = vmatpush.msra.mxu0 %v6057
        %6229 = vmatpush.msra.mxu0 %v6056
        %6230 = vmatpush.msra.mxu0 %v6055
        %6231 = vmatpush.msra.mxu0 %v6054
        %6232 = vmatpush.msra.mxu0 %v6053
        %6233 = vmatpush.msra.mxu0 %v6052
        %6234 = vmatpush.msra.mxu0 %v6051
        %6235 = vmatpush.msra.mxu0 %v6050
        %6236 = vmatpush.msra.mxu0 %v6049
        %6237 = vmatpush.msra.mxu0 %v6048
        %6238 = vmatpush.msra.mxu0 %v6047
        %6239 = vmatpush.msra.mxu0 %v6046
        %6240 = vmatmul.f32.gmra.mxu0 %v5865
        %v6241 = vpop.f32.mrf.mxu0
        %v6242 = vadd.f32 %v6219, %v6241
        %6243 = vmatmul.f32.gmra.mxu0 %v5869
        %v6244 = vpop.f32.mrf.mxu0
        %v6245 = vadd.f32 %v6222, %v6244
        %6246 = vdwg.mxu0
        %v6249 = vrot.slane %v6150, 7
        %v6250 = vrot.slane %v6153, 7
        %v6251 = vsel %vm491, %v6249, %v6250
        %v6254 = vsel %vm491, 0.0, %v6249
        %6255 = vmatpush.msra.mxu0 %v5949
        %6256 = vmatpush.msra.mxu0 %v5948
        %6257 = vmatpush.msra.mxu0 %v5947
        %6258 = vmatpush.msra.mxu0 %v5946
        %6259 = vmatpush.msra.mxu0 %v5945
        %6260 = vmatpush.msra.mxu0 %v5944
        %6261 = vmatpush.msra.mxu0 %v5943
        %6262 = vmatpush.msra.mxu0 %v5942
        %6263 = vmatpush.msra.mxu0 %v5941
        %6264 = vmatpush.msra.mxu0 %v5940
        %6265 = vmatpush.msra.mxu0 %v5939
        %6266 = vmatpush.msra.mxu0 %v5938
        %6267 = vmatpush.msra.mxu0 %v5937
        %6268 = vmatpush.msra.mxu0 %v5936
        %6269 = vmatpush.msra.mxu0 %v5935
        %6270 = vmatpush.msra.mxu0 %v5934
        %6271 = vmatmul.f32.gmra.mxu0 %v5862
        %v6272 = vpop.f32.mrf.mxu0
        %v6273 = vadd.f32 %v6254, %v6272
        %6274 = vmatmul.f32.gmra.mxu0 %v5866
        %v6275 = vpop.f32.mrf.mxu0
        %v6276 = vadd.f32 %v6251, %v6275
        %6277 = vdwg.mxu0
        %6278 = vmatpush.msra.mxu0 %v5965
        %6279 = vmatpush.msra.mxu0 %v5964
        %6280 = vmatpush.msra.mxu0 %v5963
        %6281 = vmatpush.msra.mxu0 %v5962
        %6282 = vmatpush.msra.mxu0 %v5961
        %6283 = vmatpush.msra.mxu0 %v5960
        %6284 = vmatpush.msra.mxu0 %v5959
        %6285 = vmatpush.msra.mxu0 %v5958
        %6286 = vmatpush.msra.mxu0 %v5957
        %6287 = vmatpush.msra.mxu0 %v5956
        %6288 = vmatpush.msra.mxu0 %v5955
        %6289 = vmatpush.msra.mxu0 %v5954
        %6290 = vmatpush.msra.mxu0 %v5953
        %6291 = vmatpush.msra.mxu0 %v5952
        %6292 = vmatpush.msra.mxu0 %v5951
        %6293 = vmatpush.msra.mxu0 %v5950
        %6294 = vmatmul.f32.gmra.mxu0 %v5863
        %v6295 = vpop.f32.mrf.mxu0
        %v6296 = vadd.f32 %v6273, %v6295
        %6297 = vmatmul.f32.gmra.mxu0 %v5867
        %v6298 = vpop.f32.mrf.mxu0
        %v6299 = vadd.f32 %v6276, %v6298
        %6300 = vdwg.mxu0
        %6301 = vmatpush.msra.mxu0 %v5981
        %6302 = vmatpush.msra.mxu0 %v5980
        %6303 = vmatpush.msra.mxu0 %v5979
        %6304 = vmatpush.msra.mxu0 %v5978
        %6305 = vmatpush.msra.mxu0 %v5977
        %6306 = vmatpush.msra.mxu0 %v5976
        %6307 = vmatpush.msra.mxu0 %v5975
        %6308 = vmatpush.msra.mxu0 %v5974
        %6309 = vmatpush.msra.mxu0 %v5973
        %6310 = vmatpush.msra.mxu0 %v5972
        %6311 = vmatpush.msra.mxu0 %v5971
        %6312 = vmatpush.msra.mxu0 %v5970
        %6313 = vmatpush.msra.mxu0 %v5969
        %6314 = vmatpush.msra.mxu0 %v5968
        %6315 = vmatpush.msra.mxu0 %v5967
        %6316 = vmatpush.msra.mxu0 %v5966
        %6317 = vmatmul.f32.gmra.mxu0 %v5864
        %v6318 = vpop.f32.mrf.mxu0
        %v6319 = vadd.f32 %v6296, %v6318
        %6320 = vmatmul.f32.gmra.mxu0 %v5868
        %v6321 = vpop.f32.mrf.mxu0
        %v6322 = vadd.f32 %v6299, %v6321
        %6323 = vdwg.mxu0
        %6324 = vmatpush.msra.mxu0 %v5997
        %6325 = vmatpush.msra.mxu0 %v5996
        %6326 = vmatpush.msra.mxu0 %v5995
        %6327 = vmatpush.msra.mxu0 %v5994
        %6328 = vmatpush.msra.mxu0 %v5993
        %6329 = vmatpush.msra.mxu0 %v5992
        %6330 = vmatpush.msra.mxu0 %v5991
        %6331 = vmatpush.msra.mxu0 %v5990
        %6332 = vmatpush.msra.mxu0 %v5989
        %6333 = vmatpush.msra.mxu0 %v5988
        %6334 = vmatpush.msra.mxu0 %v5987
        %6335 = vmatpush.msra.mxu0 %v5986
        %6336 = vmatpush.msra.mxu0 %v5985
        %6337 = vmatpush.msra.mxu0 %v5984
        %6338 = vmatpush.msra.mxu0 %v5983
        %6339 = vmatpush.msra.mxu0 %v5982
        %6340 = vmatmul.f32.gmra.mxu0 %v5865
        %v6341 = vpop.f32.mrf.mxu0
        %v6342 = vadd.f32 %v6319, %v6341
        %6343 = vmatmul.f32.gmra.mxu0 %v5869
        %v6344 = vpop.f32.mrf.mxu0
        %v6345 = vadd.f32 %v6322, %v6344
        %6346 = vdwg.mxu0
        %v6349 = vrot.slane %v6242, 1
        %v6350 = vrot.slane %v6245, 1
        %v6351 = vsel %vm546, %v6349, %v6350
        %v6354 = vsel %vm546, %v6350, 0.0
        %v6355 = vadd.f32 %v6342, %v6351
        %v6356 = vadd.f32 %v6345, %v6354
        %v6358 = vperm.slane %v6062, 0
        %v6360 = vadd.f32 %v6355, %v6358
        %v6361 = vadd.f32 %v6356, %v6358
        %s6362 = scalar_lea.vmem %s295, 48
        %6363 = vst [vmem:[%s6362] sm:$0xff] %v6360
        %6364 = vst [vmem:[%s6362 + $0x8] sm:$0xff] %v6361
        %p6365 = scmp.lt.s32.totalorder %s19, 1
        %s6366 = scalar_select %p6365, %s19, 1
        %s6367 = smul.addr %s6366, 8
        %s6368 = smul.addr %s6367, 8
        %s6369 = scalar_lea.vmem %s7, %s6368
        // Predicated region
        $region53: #{convlstm_forward.1} parent=47 // pred_check
          %p6370 = pneg %p189
        $region54: #{convlstm_forward.1} parent=47 // pred_check_branch
          %6372 = sbr.rel (%p6370) target = $region56
        $region55: #{convlstm_forward.1} parent=47 // pred_region
          _
        $region56: #{convlstm_forward.1} parent=47 // pred_fallthru
          _
      $region48: #{convlstm_forward.1} parent=5 // pred_fallthru
        _
      %p6373 = scmp.le.s32.totalorder 2, %s14
      // Predicated region
      $region57: #{convlstm_forward.1} parent=5 // pred_check
        %p6374 = pneg %p6373
      $region58: #{convlstm_forward.1} parent=5 // pred_check_branch
        %6376 = sbr.rel (%p6374) target = $region60
      $region59: #{convlstm_forward.1} parent=5 // pred_region
        %s6377 = ssub.s32 %s14, 2
        // Predicated region
        $region61: #{convlstm_forward.1} parent=59 // pred_check
          %p6378 = pneg %p195
        $region62: #{convlstm_forward.1} parent=59 // pred_check_branch
          %6380 = sbr.rel (%p6378) target = $region64
        $region63: #{convlstm_forward.1} parent=59 // pred_region
          %p6381 = scmp.lt.s32.totalorder %s20, 1
          %s6382 = scalar_select %p6381, %s20, 1
          %s6383 = smul.addr %s6382, 8
          %s6384 = smul.addr %s6383, 8
          %s6385 = scalar_lea.vmem %s7, %s6384
        $region64: #{convlstm_forward.1} parent=59 // pred_fallthru
          _
      $region60: #{convlstm_forward.1} parent=5 // pred_fallthru
        _
    $region6: #{convlstm_forward.1} parent=1 // loop_footer
      %s18 = sadd.s32 1, %s14
    $region7: #{convlstm_forward.1} parent=1 // loop_footer_branch
      %13 = sbr.rel target = $region3
    $region8: #{convlstm_forward.1} parent=1 // loop_exit
      _
    %6386 = vsyncpa [#allocation3], 1
    %s6387 = scalar_lea.sflag [#allocation3], 1
    %6388 = vsyncpa %s6387, 1

</llo_original>
